<compile_context>
chip_gen: v7x
topology: tpu7x:2x2x1
jax: 0.10.0
libtpu: 0.0.40
codegen_flags: <defaults>
</compile_context>

<pallas_src>
import functools

import jax
import jax.numpy as jnp
from jax.experimental import pallas as pl
from jax.experimental.pallas import tpu as pltpu


def _round_up(x, m):
    return (x + m - 1) // m * m


# ----------------------------------------------------------------------------
# Kernel: one row-tile of the whole STID hot path.
# ----------------------------------------------------------------------------
def stid_kernel(num_layer,
                x_ref,                       # (tm, Kin_pad)  bf16: [xts|node|diy|1|0pad]
                we_ref,                      # (Kin_pad, H)   bf16 (b_ts folded into row Kin)
                w1_ref, b1_ref,              # (L, H, H) bf16 / (L, 1, H) f32
                w2_ref, b2_ref,
                wr_ref, br_ref,              # (H, Cout_pad)  bf16 / (1, Cout_pad) f32
                out_ref):                    # (tm, Cout_pad) bf16
    # Fused "time-series conv + bias + concat(node, diy)" -> single MXU pass.
    h = jnp.dot(x_ref[...], we_ref[...], preferred_element_type=jnp.float32)

    # Encoder: num_layer residual MLP blocks (fc1 -> ReLU -> drop -> fc2 -> +x).
    # TODO(synk): nn.Dropout(p=0.15) is identity in eval mode; training-mode
    # stochastic dropout is not reproduced here.
    for l in range(num_layer):
        z = jnp.dot(h.astype(jnp.bfloat16), w1_ref[l],
                    preferred_element_type=jnp.float32) + b1_ref[l]
        z = jnp.maximum(z, 0.0)                              # f32 VPU (v5e-safe)
        z = jnp.dot(z.astype(jnp.bfloat16), w2_ref[l],
                    preferred_element_type=jnp.float32) + b2_ref[l]
        h = h + z                                            # f32 residual

    # Regression layer (lane-dense: Cout padded to 128); bf16 store halves the
    # dominant HBM writeback.
    out = jnp.dot(h.astype(jnp.bfloat16), wr_ref[...],
                  preferred_element_type=jnp.float32) + br_ref[...]
    out_ref[...] = out.astype(out_ref.dtype)


# ----------------------------------------------------------------------------
# Parameter init (PyTorch-equivalent layout, f32).
# ----------------------------------------------------------------------------
def init_params(key, *, num_nodes, node_dim, input_len, input_dim, embed_dim,
                output_len, num_layer, temp_dim_diy, day_in_year_size):
    cin = input_dim - 1
    hidden = embed_dim + node_dim + temp_dim_diy
    out_ch = output_len * cin
    ks = jax.random.split(key, 10)

    def xavier(k, shape):
        fan_in, fan_out = shape[-2], shape[-1]
        lim = (6.0 / (fan_in + fan_out)) ** 0.5
        return jax.random.uniform(k, shape, jnp.float32, -lim, lim)

    return {
        "node_emb": xavier(ks[0], (num_nodes, node_dim)),
        "day_in_year_emb": xavier(ks[1], (day_in_year_size, temp_dim_diy)),
        # Conv2d 1x1 weights stored as [Cin, Cout] (transposed vs torch [Cout,Cin,1,1]).
        "w_ts": xavier(ks[2], (input_len * cin, embed_dim)),
        "b_ts": jnp.zeros((1, embed_dim), jnp.float32),
        "w1": xavier(ks[3], (num_layer, hidden, hidden)),
        "b1": jnp.zeros((num_layer, 1, hidden), jnp.float32),
        "w2": xavier(ks[4], (num_layer, hidden, hidden)),
        "b2": jnp.zeros((num_layer, 1, hidden), jnp.float32),
        "w_r": xavier(ks[5], (hidden, out_ch)),
        "b_r": jnp.zeros((1, out_ch), jnp.float32),
    }


# ----------------------------------------------------------------------------
# Forward wrapper: glue (slicing / gather / packing / padding) + pallas_call.
# ----------------------------------------------------------------------------
def stid_forward(history, params, *, num_nodes, node_dim, input_len, input_dim,
                 embed_dim, output_len, num_layer, temp_dim_diy,
                 day_in_year_size, tm=1024):
    B, L, N, C = history.shape
    cin = input_dim - 1
    hidden = embed_dim + node_dim + temp_dim_diy
    out_ch = output_len * cin
    K_ts = input_len * cin
    Kin = K_ts + node_dim + temp_dim_diy

    # Lane-dense padded channel dims; +1 reserves a dead lane for the folded
    # embedding bias.
    Kin_pad = _round_up(Kin + 1, 128)
    H_pad = _round_up(hidden, 128)
    Cout_pad = _round_up(out_ch, 128)

    f32 = jnp.float32
    bf16 = jnp.bfloat16

    # --- glue: slicing / gather / single-pass bf16 concat+pad ----------------
    x_in = history[..., :cin]                                  # [B, L, N, cin]
    diy_data = history[:, -1, :, cin]                          # [B, N]
    idx = jnp.clip((diy_data * day_in_year_size).astype(jnp.int32),
                   0, day_in_year_size - 1)

    M = B * N
    # input_data.transpose(1,2).view(B,N,L*cin): time-major, channel-minor rows.
    xts = jnp.transpose(x_in, (0, 2, 1, 3)).reshape(M, K_ts).astype(bf16)
    node = jnp.broadcast_to(params["node_emb"].astype(bf16)[None],
                            (B, N, node_dim)).reshape(M, node_dim)
    diy = params["day_in_year_emb"].astype(bf16)[idx].reshape(M, temp_dim_diy)

    # One bf16 pass builds [xts | node | diy | 1 (bias lane) | 0-pad].
    lane_pad = Kin_pad - Kin - 1
    blocks = [xts, node, diy, jnp.ones((M, 1), bf16)]
    if lane_pad:
        blocks.append(jnp.zeros((M, lane_pad), bf16))
    x_cat = jnp.concatenate(blocks, axis=-1)                   # [M, Kin_pad] bf16

    # --- row tiling: fixed tile, pad M up to a multiple of tm ---------------
    # Keep tm large (grid-step overhead dominates this tiny kernel) but aim for
    # an even grid >= 4 so v7x's two TensorCores both get pipelined steps.
    tm = max(8, _round_up(min(tm, _round_up(M, 8)), 8))
    M_pad = _round_up(M, tm)
    if M_pad > M:
        x_cat = jnp.concatenate(
            [x_cat, jnp.zeros((M_pad - M, Kin_pad), bf16)], axis=0)

    # --- weight packing: fused embedding matrix (bias folded) + 128 padding --
    w_emb = jnp.zeros((Kin_pad, H_pad), f32)
    w_emb = w_emb.at[:K_ts, :embed_dim].set(params["w_ts"])
    w_emb = w_emb.at[K_ts:K_ts + node_dim,
                     embed_dim:embed_dim + node_dim].set(jnp.eye(node_dim, dtype=f32))
    w_emb = w_emb.at[K_ts + node_dim:Kin,
                     embed_dim + node_dim:hidden].set(jnp.eye(temp_dim_diy, dtype=f32))
    # Folded bias: x_cat lane Kin is 1.0 for real rows, 0 for padded rows.
    w_emb = w_emb.at[Kin, :embed_dim].set(params["b_ts"][0])
    w_emb = w_emb.astype(bf16)

    def pad_w(w, rows, cols):
        return jnp.pad(w, [(0, 0)] * (w.ndim - 2)
                       + [(0, rows - w.shape[-2]), (0, cols - w.shape[-1])])

    w1 = pad_w(params["w1"], H_pad, H_pad).astype(bf16)
    w2 = pad_w(params["w2"], H_pad, H_pad).astype(bf16)
    b1 = pad_w(params["b1"], 1, H_pad)
    b2 = pad_w(params["b2"], 1, H_pad)
    w_r = pad_w(params["w_r"], H_pad, Cout_pad).astype(bf16)
    b_r = pad_w(params["b_r"], 1, Cout_pad)

    weights = [w_emb, w1, b1, w2, b2, w_r, b_r]

    def full_spec(shape):
        nd = len(shape)
        return pl.BlockSpec(tuple(shape), lambda i, nd=nd: (0,) * nd)

    # --- cost estimate (advisory) --------------------------------------------
    flops = 2 * M_pad * (Kin_pad * H_pad
                         + 2 * num_layer * H_pad * H_pad
                         + H_pad * Cout_pad)
    bytes_accessed = (x_cat.size * 2 + M_pad * Cout_pad * 2
                      + sum(int(w.size) * w.dtype.itemsize for w in weights))
    cost = pl.CostEstimate(flops=flops, transcendentals=0,
                           bytes_accessed=bytes_accessed)

    out = pl.pallas_call(
        functools.partial(stid_kernel, num_layer),
        out_shape=jax.ShapeDtypeStruct((M_pad, Cout_pad), bf16),
        grid=(M_pad // tm,),
        in_specs=[pl.BlockSpec((tm, Kin_pad), lambda i: (i, 0))]
                 + [full_spec(w.shape) for w in weights],
        out_specs=pl.BlockSpec((tm, Cout_pad), lambda i: (i, 0)),
        compiler_params=pltpu.CompilerParams(
            dimension_semantics=("parallel",),
            vmem_limit_bytes=32 * 1024 * 1024),
        cost_estimate=cost,
    )(x_cat, *weights)

    # Drop padded rows/lanes; [M, out_ch] -> [B, N, T_out, cin] -> [B, T_out, N, cin].
    # NOTE: prediction precision is bf16 at the HBM store (cast back to f32 here).
    pred = out[:M, :out_ch].astype(f32).reshape(
        B, N, output_len, cin).transpose(0, 2, 1, 3)
    return pred


# ----------------------------------------------------------------------------
# Pure-JAX reference (PyTorch eval-mode forward).  matmul_dtype=bf16 mirrors
# the kernel's MXU feed precision (accumulation stays f32) so the comparison
# isolates kernel wiring; matmul_dtype=f32 gives the exact PyTorch-f32 math.
# ----------------------------------------------------------------------------
def reference_forward(history, params, cfg, matmul_dtype=jnp.float32):
    cin = cfg["input_dim"] - 1
    B, L, N, C = history.shape
    cast = lambda a: a.astype(matmul_dtype)
    x_in = history[..., :cin]
    idx = jnp.clip((history[:, -1, :, cin] * cfg["day_in_year_size"]).astype(jnp.int32),
                   0, cfg["day_in_year_size"] - 1)
    diy = params["day_in_year_emb"][idx].reshape(B * N, -1)
    xts = jnp.transpose(x_in, (0, 2, 1, 3)).reshape(B * N, L * cin)
    ts = jnp.dot(cast(xts), cast(params["w_ts"]),
                 preferred_element_type=jnp.float32) + params["b_ts"]
    node = jnp.broadcast_to(params["node_emb"][None],
                            (B, N, cfg["node_dim"])).reshape(B * N, -1)
    h = jnp.concatenate([ts,
                         cast(node).astype(jnp.float32),
                         cast(diy).astype(jnp.float32)], axis=-1)
    for l in range(cfg["num_layer"]):
        z = jnp.dot(cast(h), cast(params["w1"][l]),
                    preferred_element_type=jnp.float32) + params["b1"][l]
        z = jnp.maximum(z, 0.0)
        z = jnp.dot(cast(z), cast(params["w2"][l]),
                    preferred_element_type=jnp.float32) + params["b2"][l]
        h = h + z
    out = jnp.dot(cast(h), cast(params["w_r"]),
                  preferred_element_type=jnp.float32) + params["b_r"]
    return out.reshape(B, N, cfg["output_len"], cin).transpose(0, 2, 1, 3)


if __name__ == "__main__":
    # Ding defaults (model_type='stid'): channels=32, num_nodes=576,
    # input_len=output_len=12, num_layer=3, input_dim=3, day_in_year_size=366.
    cfg = dict(num_nodes=576, node_dim=32, input_len=12, input_dim=3,
               embed_dim=32, output_len=12, num_layer=3, temp_dim_diy=32,
               day_in_year_size=366)
    B, L, N, C = 7, cfg["input_len"], cfg["num_nodes"], cfg["input_dim"]

    key = jax.random.PRNGKey(0)
    k_feat, k_diy, k_param = jax.random.split(key, 3)
    feat = jax.random.normal(k_feat, (B, L, N, C - 1), jnp.float32)
    diy = jax.random.uniform(k_diy, (B, L, N, 1), jnp.float32)   # in [0, 1)
    history = jnp.concatenate([feat, diy], axis=-1)              # [B, L, N, C]

    params = init_params(k_param, **cfg)

    # M = 7*576 = 4032 -> padded to 4096 rows, grid = 4 tiles of 1024 rows
    # (even and >=4 so v7x's two TensorCores both get pipelined steps).
    pred = stid_forward(history, params, **cfg, tm=1024)
    pred = jax.block_until_ready(pred)
    assert pred.shape == (B, cfg["output_len"], N, C - 1), pred.shape

    # Reference with the same bf16 matmul-operand quantization (f32 accumulate).
    # Tolerance covers the bf16 output store (~one bf16 ulp at |out| <= ~5) on
    # top of the usual MXU-operand quantization.
    ref = reference_forward(history, params, cfg, matmul_dtype=jnp.bfloat16)
    assert jnp.allclose(pred, ref, atol=6e-2, rtol=2e-2), \
        float(jnp.max(jnp.abs(pred - ref)))

    print("KERNEL_OK")
</pallas_src>

<mosaic_0001>
module attributes {stable_mosaic.version = 11 : i64} {
  func.func @stid_kernel(%arg0: i32, %arg1: memref<1024x128xbf16, #tpu.memory_space<vmem>>, %arg2: memref<128x128xbf16, #tpu.memory_space<vmem>>, %arg3: memref<3x128x128xbf16, #tpu.memory_space<vmem>>, %arg4: memref<3x1x128xf32, #tpu.memory_space<vmem>>, %arg5: memref<3x128x128xbf16, #tpu.memory_space<vmem>>, %arg6: memref<3x1x128xf32, #tpu.memory_space<vmem>>, %arg7: memref<128x128xbf16, #tpu.memory_space<vmem>>, %arg8: memref<1x128xf32, #tpu.memory_space<vmem>>, %arg9: memref<1024x128xbf16, #tpu.memory_space<vmem>>) attributes {dimension_semantics = [#tpu.dimension_semantics<parallel>], iteration_bounds = array<i64: 4>, scalar_prefetch = 0 : i64, scratch_operands = 0 : i64, tpu.core_type = #tpu.core_type<tc>, window_params = [{transform_indices = @transform_0, window_bounds = array<i64: 1024, 128>}, {pipeline_mode = #tpu.pipeline_mode<synchronous>, transform_indices = @transform_1, window_bounds = array<i64: 128, 128>}, {pipeline_mode = #tpu.pipeline_mode<synchronous>, transform_indices = @transform_2, window_bounds = array<i64: 3, 128, 128>}, {pipeline_mode = #tpu.pipeline_mode<synchronous>, transform_indices = @transform_3, window_bounds = array<i64: 3, 1, 128>}, {pipeline_mode = #tpu.pipeline_mode<synchronous>, transform_indices = @transform_4, window_bounds = array<i64: 3, 128, 128>}, {pipeline_mode = #tpu.pipeline_mode<synchronous>, transform_indices = @transform_5, window_bounds = array<i64: 3, 1, 128>}, {pipeline_mode = #tpu.pipeline_mode<synchronous>, transform_indices = @transform_6, window_bounds = array<i64: 128, 128>}, {pipeline_mode = #tpu.pipeline_mode<synchronous>, transform_indices = @transform_7, window_bounds = array<i64: 1, 128>}, {transform_indices = @transform_8, window_bounds = array<i64: 1024, 128>}]} {
    %c0 = arith.constant 0 : index
    %c0_0 = arith.constant 0 : index
    %0 = vector.load %arg1[%c0, %c0_0] : memref<1024x128xbf16, #tpu.memory_space<vmem>>, vector<1024x128xbf16>
    %c0_1 = arith.constant 0 : index
    %c0_2 = arith.constant 0 : index
    %1 = vector.load %arg2[%c0_1, %c0_2] : memref<128x128xbf16, #tpu.memory_space<vmem>>, vector<128x128xbf16>
    %cst = arith.constant dense<0.000000e+00> : vector<1024x128xf32>
    %2 = tpu.matmul %0, %1, %cst {dimension_numbers = #tpu.dot_dimension_numbers<[1], [0], [0], [1], [0, 0, 1, 1], [], []>} : vector<1024x128xbf16>, vector<128x128xbf16>, vector<1024x128xf32> -> vector<1024x128xf32>
    %3 = arith.truncf %2 : vector<1024x128xf32> to vector<1024x128xbf16>
    %c0_3 = arith.constant 0 : index
    %c0_4 = arith.constant 0 : index
    %c0_5 = arith.constant 0 : index
    %4 = vector.load %arg3[%c0_3, %c0_4, %c0_5] : memref<3x128x128xbf16, #tpu.memory_space<vmem>>, vector<1x128x128xbf16>
    %5 = vector.shape_cast %4 : vector<1x128x128xbf16> to vector<128x128xbf16>
    %cst_6 = arith.constant dense<0.000000e+00> : vector<1024x128xf32>
    %6 = tpu.matmul %3, %5, %cst_6 {dimension_numbers = #tpu.dot_dimension_numbers<[1], [0], [0], [1], [0, 0, 1, 1], [], []>} : vector<1024x128xbf16>, vector<128x128xbf16>, vector<1024x128xf32> -> vector<1024x128xf32>
    %c0_7 = arith.constant 0 : index
    %c0_8 = arith.constant 0 : index
    %c0_9 = arith.constant 0 : index
    %7 = vector.load %arg4[%c0_7, %c0_8, %c0_9] : memref<3x1x128xf32, #tpu.memory_space<vmem>>, vector<1x1x128xf32>
    %8 = vector.shape_cast %7 : vector<1x1x128xf32> to vector<1x128xf32>
    %9 = vector.broadcast %8 : vector<1x128xf32> to vector<1024x128xf32>
    %10 = arith.addf %6, %9 : vector<1024x128xf32>
    %cst_10 = arith.constant 0.000000e+00 : f32
    %11 = vector.broadcast %cst_10 : f32 to vector<1024x128xf32>
    %12 = arith.maximumf %10, %11 : vector<1024x128xf32>
    %13 = arith.truncf %12 : vector<1024x128xf32> to vector<1024x128xbf16>
    %c0_11 = arith.constant 0 : index
    %c0_12 = arith.constant 0 : index
    %c0_13 = arith.constant 0 : index
    %14 = vector.load %arg5[%c0_11, %c0_12, %c0_13] : memref<3x128x128xbf16, #tpu.memory_space<vmem>>, vector<1x128x128xbf16>
    %15 = vector.shape_cast %14 : vector<1x128x128xbf16> to vector<128x128xbf16>
    %cst_14 = arith.constant dense<0.000000e+00> : vector<1024x128xf32>
    %16 = tpu.matmul %13, %15, %cst_14 {dimension_numbers = #tpu.dot_dimension_numbers<[1], [0], [0], [1], [0, 0, 1, 1], [], []>} : vector<1024x128xbf16>, vector<128x128xbf16>, vector<1024x128xf32> -> vector<1024x128xf32>
    %c0_15 = arith.constant 0 : index
    %c0_16 = arith.constant 0 : index
    %c0_17 = arith.constant 0 : index
    %17 = vector.load %arg6[%c0_15, %c0_16, %c0_17] : memref<3x1x128xf32, #tpu.memory_space<vmem>>, vector<1x1x128xf32>
    %18 = vector.shape_cast %17 : vector<1x1x128xf32> to vector<1x128xf32>
    %19 = vector.broadcast %18 : vector<1x128xf32> to vector<1024x128xf32>
    %20 = arith.addf %16, %19 : vector<1024x128xf32>
    %21 = arith.addf %2, %20 : vector<1024x128xf32>
    %22 = arith.truncf %21 : vector<1024x128xf32> to vector<1024x128xbf16>
    %c1 = arith.constant 1 : index
    %c0_18 = arith.constant 0 : index
    %c0_19 = arith.constant 0 : index
    %23 = vector.load %arg3[%c1, %c0_18, %c0_19] : memref<3x128x128xbf16, #tpu.memory_space<vmem>>, vector<1x128x128xbf16>
    %24 = vector.shape_cast %23 : vector<1x128x128xbf16> to vector<128x128xbf16>
    %cst_20 = arith.constant dense<0.000000e+00> : vector<1024x128xf32>
    %25 = tpu.matmul %22, %24, %cst_20 {dimension_numbers = #tpu.dot_dimension_numbers<[1], [0], [0], [1], [0, 0, 1, 1], [], []>} : vector<1024x128xbf16>, vector<128x128xbf16>, vector<1024x128xf32> -> vector<1024x128xf32>
    %c1_21 = arith.constant 1 : index
    %c0_22 = arith.constant 0 : index
    %c0_23 = arith.constant 0 : index
    %26 = vector.load %arg4[%c1_21, %c0_22, %c0_23] : memref<3x1x128xf32, #tpu.memory_space<vmem>>, vector<1x1x128xf32>
    %27 = vector.shape_cast %26 : vector<1x1x128xf32> to vector<1x128xf32>
    %28 = vector.broadcast %27 : vector<1x128xf32> to vector<1024x128xf32>
    %29 = arith.addf %25, %28 : vector<1024x128xf32>
    %cst_24 = arith.constant 0.000000e+00 : f32
    %30 = vector.broadcast %cst_24 : f32 to vector<1024x128xf32>
    %31 = arith.maximumf %29, %30 : vector<1024x128xf32>
    %32 = arith.truncf %31 : vector<1024x128xf32> to vector<1024x128xbf16>
    %c1_25 = arith.constant 1 : index
    %c0_26 = arith.constant 0 : index
    %c0_27 = arith.constant 0 : index
    %33 = vector.load %arg5[%c1_25, %c0_26, %c0_27] : memref<3x128x128xbf16, #tpu.memory_space<vmem>>, vector<1x128x128xbf16>
    %34 = vector.shape_cast %33 : vector<1x128x128xbf16> to vector<128x128xbf16>
    %cst_28 = arith.constant dense<0.000000e+00> : vector<1024x128xf32>
    %35 = tpu.matmul %32, %34, %cst_28 {dimension_numbers = #tpu.dot_dimension_numbers<[1], [0], [0], [1], [0, 0, 1, 1], [], []>} : vector<1024x128xbf16>, vector<128x128xbf16>, vector<1024x128xf32> -> vector<1024x128xf32>
    %c1_29 = arith.constant 1 : index
    %c0_30 = arith.constant 0 : index
    %c0_31 = arith.constant 0 : index
    %36 = vector.load %arg6[%c1_29, %c0_30, %c0_31] : memref<3x1x128xf32, #tpu.memory_space<vmem>>, vector<1x1x128xf32>
    %37 = vector.shape_cast %36 : vector<1x1x128xf32> to vector<1x128xf32>
    %38 = vector.broadcast %37 : vector<1x128xf32> to vector<1024x128xf32>
    %39 = arith.addf %35, %38 : vector<1024x128xf32>
    %40 = arith.addf %21, %39 : vector<1024x128xf32>
    %41 = arith.truncf %40 : vector<1024x128xf32> to vector<1024x128xbf16>
    %c2 = arith.constant 2 : index
    %c0_32 = arith.constant 0 : index
    %c0_33 = arith.constant 0 : index
    %42 = vector.load %arg3[%c2, %c0_32, %c0_33] : memref<3x128x128xbf16, #tpu.memory_space<vmem>>, vector<1x128x128xbf16>
    %43 = vector.shape_cast %42 : vector<1x128x128xbf16> to vector<128x128xbf16>
    %cst_34 = arith.constant dense<0.000000e+00> : vector<1024x128xf32>
    %44 = tpu.matmul %41, %43, %cst_34 {dimension_numbers = #tpu.dot_dimension_numbers<[1], [0], [0], [1], [0, 0, 1, 1], [], []>} : vector<1024x128xbf16>, vector<128x128xbf16>, vector<1024x128xf32> -> vector<1024x128xf32>
    %c2_35 = arith.constant 2 : index
    %c0_36 = arith.constant 0 : index
    %c0_37 = arith.constant 0 : index
    %45 = vector.load %arg4[%c2_35, %c0_36, %c0_37] : memref<3x1x128xf32, #tpu.memory_space<vmem>>, vector<1x1x128xf32>
    %46 = vector.shape_cast %45 : vector<1x1x128xf32> to vector<1x128xf32>
    %47 = vector.broadcast %46 : vector<1x128xf32> to vector<1024x128xf32>
    %48 = arith.addf %44, %47 : vector<1024x128xf32>
    %cst_38 = arith.constant 0.000000e+00 : f32
    %49 = vector.broadcast %cst_38 : f32 to vector<1024x128xf32>
    %50 = arith.maximumf %48, %49 : vector<1024x128xf32>
    %51 = arith.truncf %50 : vector<1024x128xf32> to vector<1024x128xbf16>
    %c2_39 = arith.constant 2 : index
    %c0_40 = arith.constant 0 : index
    %c0_41 = arith.constant 0 : index
    %52 = vector.load %arg5[%c2_39, %c0_40, %c0_41] : memref<3x128x128xbf16, #tpu.memory_space<vmem>>, vector<1x128x128xbf16>
    %53 = vector.shape_cast %52 : vector<1x128x128xbf16> to vector<128x128xbf16>
    %cst_42 = arith.constant dense<0.000000e+00> : vector<1024x128xf32>
    %54 = tpu.matmul %51, %53, %cst_42 {dimension_numbers = #tpu.dot_dimension_numbers<[1], [0], [0], [1], [0, 0, 1, 1], [], []>} : vector<1024x128xbf16>, vector<128x128xbf16>, vector<1024x128xf32> -> vector<1024x128xf32>
    %c2_43 = arith.constant 2 : index
    %c0_44 = arith.constant 0 : index
    %c0_45 = arith.constant 0 : index
    %55 = vector.load %arg6[%c2_43, %c0_44, %c0_45] : memref<3x1x128xf32, #tpu.memory_space<vmem>>, vector<1x1x128xf32>
    %56 = vector.shape_cast %55 : vector<1x1x128xf32> to vector<1x128xf32>
    %57 = vector.broadcast %56 : vector<1x128xf32> to vector<1024x128xf32>
    %58 = arith.addf %54, %57 : vector<1024x128xf32>
    %59 = arith.addf %40, %58 : vector<1024x128xf32>
    %60 = arith.truncf %59 : vector<1024x128xf32> to vector<1024x128xbf16>
    %c0_46 = arith.constant 0 : index
    %c0_47 = arith.constant 0 : index
    %61 = vector.load %arg7[%c0_46, %c0_47] : memref<128x128xbf16, #tpu.memory_space<vmem>>, vector<128x128xbf16>
    %cst_48 = arith.constant dense<0.000000e+00> : vector<1024x128xf32>
    %62 = tpu.matmul %60, %61, %cst_48 {dimension_numbers = #tpu.dot_dimension_numbers<[1], [0], [0], [1], [0, 0, 1, 1], [], []>} : vector<1024x128xbf16>, vector<128x128xbf16>, vector<1024x128xf32> -> vector<1024x128xf32>
    %c0_49 = arith.constant 0 : index
    %c0_50 = arith.constant 0 : index
    %63 = vector.load %arg8[%c0_49, %c0_50] : memref<1x128xf32, #tpu.memory_space<vmem>>, vector<1x128xf32>
    %64 = vector.broadcast %63 : vector<1x128xf32> to vector<1024x128xf32>
    %65 = arith.addf %62, %64 : vector<1024x128xf32>
    %66 = arith.truncf %65 : vector<1024x128xf32> to vector<1024x128xbf16>
    %c0_51 = arith.constant 0 : index
    %c0_52 = arith.constant 0 : index
    %67 = vector.load %arg9[%c0_51, %c0_52] : memref<1024x128xbf16, #tpu.memory_space<vmem>>, vector<1024x128xbf16>
    tpu.vector_store %arg9[%c0_51, %c0_52], %66 {strides = array<i32>} : memref<1024x128xbf16, #tpu.memory_space<vmem>>, vector<1024x128xbf16>,
    return
  }
  func.func @transform_0(%arg0: i32) -> (i32, i32) {
    %c0_i32 = arith.constant 0 : i32
    %c0_i32_0 = arith.constant 0 : i32
    return %arg0, %c0_i32 : i32, i32
  }
  func.func @transform_1(%arg0: i32) -> (i32, i32) {
    %c0_i32 = arith.constant 0 : i32
    %c0_i32_0 = arith.constant 0 : i32
    %c0_i32_1 = arith.constant 0 : i32
    return %c0_i32, %c0_i32_0 : i32, i32
  }
  func.func @transform_2(%arg0: i32) -> (i32, i32, i32) {
    %c0_i32 = arith.constant 0 : i32
    %c0_i32_0 = arith.constant 0 : i32
    %c0_i32_1 = arith.constant 0 : i32
    %c0_i32_2 = arith.constant 0 : i32
    return %c0_i32, %c0_i32_0, %c0_i32_1 : i32, i32, i32
  }
  func.func @transform_3(%arg0: i32) -> (i32, i32, i32) {
    %c0_i32 = arith.constant 0 : i32
    %c0_i32_0 = arith.constant 0 : i32
    %c0_i32_1 = arith.constant 0 : i32
    %c0_i32_2 = arith.constant 0 : i32
    return %c0_i32, %c0_i32_0, %c0_i32_1 : i32, i32, i32
  }
  func.func @transform_4(%arg0: i32) -> (i32, i32, i32) {
    %c0_i32 = arith.constant 0 : i32
    %c0_i32_0 = arith.constant 0 : i32
    %c0_i32_1 = arith.constant 0 : i32
    %c0_i32_2 = arith.constant 0 : i32
    return %c0_i32, %c0_i32_0, %c0_i32_1 : i32, i32, i32
  }
  func.func @transform_5(%arg0: i32) -> (i32, i32, i32) {
    %c0_i32 = arith.constant 0 : i32
    %c0_i32_0 = arith.constant 0 : i32
    %c0_i32_1 = arith.constant 0 : i32
    %c0_i32_2 = arith.constant 0 : i32
    return %c0_i32, %c0_i32_0, %c0_i32_1 : i32, i32, i32
  }
  func.func @transform_6(%arg0: i32) -> (i32, i32) {
    %c0_i32 = arith.constant 0 : i32
    %c0_i32_0 = arith.constant 0 : i32
    %c0_i32_1 = arith.constant 0 : i32
    return %c0_i32, %c0_i32_0 : i32, i32
  }
  func.func @transform_7(%arg0: i32) -> (i32, i32) {
    %c0_i32 = arith.constant 0 : i32
    %c0_i32_0 = arith.constant 0 : i32
    %c0_i32_1 = arith.constant 0 : i32
    return %c0_i32, %c0_i32_0 : i32, i32
  }
  func.func @transform_8(%arg0: i32) -> (i32, i32) {
    %c0_i32 = arith.constant 0 : i32
    %c0_i32_0 = arith.constant 0 : i32
    return %arg0, %c0_i32 : i32, i32
  }
}

</mosaic_0001>

<llo_original>
// kernel: tpu_custom_call.1
$region0: #{tpu_custom_call.1}
  #allocation0 [shape = 'u32[]', space=smem, size = 0x4, offset = 0x4, fixed_abs, tag = 'smem constant byte address 0x4 - core index']
  #allocation1 [shape = 'u32[144,128]{1,0:T(1,128)}', space=vmem, size = 0x12000, scoped, tag = 'internal scratch']
  %s0 = inlined_call_operand.hbm [shape: bf16[4096,128], index: 0, kind: input, shape index: {}]
  %s1 = inlined_call_operand.hbm [shape: bf16[128,128], index: 1, kind: input, shape index: {}]
  %s2 = inlined_call_operand.hbm [shape: bf16[3,128,128], index: 2, kind: input, shape index: {}]
  %s3 = inlined_call_operand.vmem [shape: f32[3,1,128], index: 3, kind: input, shape index: {}]
  %s4 = inlined_call_operand.hbm [shape: bf16[3,128,128], index: 4, kind: input, shape index: {}]
  %s5 = inlined_call_operand.vmem [shape: f32[3,1,128], index: 5, kind: input, shape index: {}]
  %s6 = inlined_call_operand.hbm [shape: bf16[128,128], index: 6, kind: input, shape index: {}]
  %s7 = inlined_call_operand.vmem [shape: f32[1,128], index: 7, kind: input, shape index: {}]
  %s8 = inlined_call_operand.hbm [shape: bf16[4096,128], index: 8, kind: output, shape index: {}]
  %s9 = sld [smem:[#allocation0]]
  $region85: #{tpu_custom_call.1} parent=0
    _
  %s11 = ssub.s32 1, %s9
  %s12 = scalar_select 0, %s11, %s9
  $region1: #{tpu_custom_call.1} parent=0
    #allocation2 [shape = 'u8[524288]{0}', space=vmem, size = 0x80000, scoped, tag = 'input window, operand 0']
    #allocation3 [shape = 's32[2]{0}', space=sflag, size = 0x8, scoped, tag = 'scoped memory for tpu_custom_call.1']
    #allocation4 [shape = 's32[2]{0}', space=sflag, size = 0x8, scoped, tag = 'scoped memory for tpu_custom_call.1']
    #allocation5 [shape = 'u8[32768]{0}', space=vmem, size = 0x8000, scoped, tag = 'input window, operand 1, single buffered']
    #allocation6 [shape = 's32[1]{0}', space=sflag, size = 0x4, scoped, tag = 'scoped memory for tpu_custom_call.1']
    #allocation7 [shape = 'u8[98304]{0}', space=vmem, size = 0x18000, scoped, tag = 'input window, operand 2, single buffered']
    #allocation8 [shape = 'u8[98304]{0}', space=vmem, size = 0x18000, scoped, tag = 'input window, operand 4, single buffered']
    #allocation9 [shape = 's32[1]{0}', space=sflag, size = 0x4, scoped, tag = 'scoped memory for tpu_custom_call.1']
    #allocation10 [shape = 'u8[32768]{0}', space=vmem, size = 0x8000, scoped, tag = 'input window, operand 6, single buffered']
    #allocation11 [shape = 'u8[524288]{0}', space=vmem, size = 0x80000, scoped, tag = 'output window, operand 0']
    %13 = vsyncpa [#allocation3], 0
    %s14 = scalar_lea.sflag [#allocation3], 1
    %15 = vsyncpa %s14, 0
    %16 = vsyncpa [#allocation6], 0
    %17 = vsyncpa [#allocation9], 0
    %18 = vsyncpa [#allocation4], 0
    %s19 = scalar_lea.sflag [#allocation4], 1
    %20 = vsyncpa %s19, 0
    loop: start=0, step=1, limit=6
    $region2: #{tpu_custom_call.1} parent=1 // loop_pre_header
      _
    $region3: #{tpu_custom_call.1} parent=1 // loop_header
      %s22 = sphi 0, %s26
      %p23 = scmp.ge.s32.totalorder %s22, 6
      %s32 = sphi 0, %s34
      %s35 = sphi 0, %s32
      %s36 = sphi 0, %s35
      %s52 = sphi 0, %s36
      %s56 = sphi 0, %s56
      %s58 = sphi 0, %s56
      %s59 = sphi 0, %s58
      %s73 = sphi 0, %s59
      %s77 = sphi 0, %s77
      %s79 = sphi 0, %s77
      %s80 = sphi 0, %s79
      %s94 = sphi 0, %s80
      %s98 = sphi 0, %s98
      %s100 = sphi 0, %s98
      %s101 = sphi 0, %s100
      %s115 = sphi 0, %s101
      %s119 = sphi 0, %s119
      %s121 = sphi 0, %s119
      %s122 = sphi 0, %s121
      %s136 = sphi 0, %s122
      %s140 = sphi 0, %s140
      %s142 = sphi 0, %s140
      %s143 = sphi 0, %s142
      %s157 = sphi 0, %s143
      %s161 = sphi 0, %s161
      %s163 = sphi 0, %s161
      %s164 = sphi 0, %s163
      %s178 = sphi 0, %s164
      %s182 = sphi 0, %s182
      %s184 = sphi 0, %s182
      %s185 = sphi 0, %s184
      %s199 = sphi 0, %s185
      %s205 = sphi 0, %s207
      %s208 = sphi 0, %s205
      %s209 = sphi 0, %s208
      %s225 = sphi 0, %s209
    $region4: #{tpu_custom_call.1} parent=1 // loop_header_branch
      %25 = sbr.rel (%p23) target = $region8
    $region5: #{tpu_custom_call.1} parent=1 // loop_body
      %s27 = ssub.s32 %s22, 1
      %s28 = ssub.s32 %s22, 2
      %s29 = sadd.s32 %s22, 1
      %s30 = ssub.s32 %s22, %s29
      %p31 = scmp.eq.s32.totalorder %s30, 0
      %s33 = sadd.s32 %s32, 1
      %s34 = scalar_select %p31, %s32, %s33
      %p37 = pneg %p31
      %p38 = scmp.eq.s32.totalorder %s22, 3
      %p39 = por %p37, %p38
      %p40 = scmp.ne.s32.totalorder %s32, %s35
      %p41 = scmp.eq.s32.totalorder %s22, 0
      %p42 = por %p40, %p41
      %p43 = scmp.ne.s32.totalorder %s32, %s35
      %p44 = scmp.eq.s32.totalorder %s27, 3
      %p45 = por %p43, %p44
      %p46 = scmp.ne.s32.totalorder %s35, %s36
      %p47 = scmp.eq.s32.totalorder %s27, 0
      %p48 = por %p46, %p47
      %p49 = scmp.ne.s32.totalorder %s35, %s36
      %p50 = scmp.eq.s32.totalorder %s28, 3
      %p51 = por %p49, %p50
      %p53 = scmp.ne.s32.totalorder %s36, %s52
      %p54 = scmp.eq.s32.totalorder %s28, 0
      %p55 = por %p53, %p54
      %s57 = sadd.s32 %s56, 1
      %p60 = scmp.eq.s32.totalorder %s22, 3
      %p61 = scmp.ne.s32.totalorder %s56, %s58
      %p62 = scmp.eq.s32.totalorder %s22, 0
      %p63 = por %p61, %p62
      %p64 = scmp.ne.s32.totalorder %s56, %s58
      %p65 = scmp.eq.s32.totalorder %s27, 3
      %p66 = por %p64, %p65
      %p67 = scmp.ne.s32.totalorder %s58, %s59
      %p68 = scmp.eq.s32.totalorder %s27, 0
      %p69 = por %p67, %p68
      %p70 = scmp.ne.s32.totalorder %s58, %s59
      %p71 = scmp.eq.s32.totalorder %s28, 3
      %p72 = por %p70, %p71
      %p74 = scmp.ne.s32.totalorder %s59, %s73
      %p75 = scmp.eq.s32.totalorder %s28, 0
      %p76 = por %p74, %p75
      %s78 = sadd.s32 %s77, 1
      %p81 = scmp.eq.s32.totalorder %s22, 3
      %p82 = scmp.ne.s32.totalorder %s77, %s79
      %p83 = scmp.eq.s32.totalorder %s22, 0
      %p84 = por %p82, %p83
      %p85 = scmp.ne.s32.totalorder %s77, %s79
      %p86 = scmp.eq.s32.totalorder %s27, 3
      %p87 = por %p85, %p86
      %p88 = scmp.ne.s32.totalorder %s79, %s80
      %p89 = scmp.eq.s32.totalorder %s27, 0
      %p90 = por %p88, %p89
      %p91 = scmp.ne.s32.totalorder %s79, %s80
      %p92 = scmp.eq.s32.totalorder %s28, 3
      %p93 = por %p91, %p92
      %p95 = scmp.ne.s32.totalorder %s80, %s94
      %p96 = scmp.eq.s32.totalorder %s28, 0
      %p97 = por %p95, %p96
      %s99 = sadd.s32 %s98, 1
      %p102 = scmp.eq.s32.totalorder %s22, 3
      %p103 = scmp.ne.s32.totalorder %s98, %s100
      %p104 = scmp.eq.s32.totalorder %s22, 0
      %p105 = por %p103, %p104
      %p106 = scmp.ne.s32.totalorder %s98, %s100
      %p107 = scmp.eq.s32.totalorder %s27, 3
      %p108 = por %p106, %p107
      %p109 = scmp.ne.s32.totalorder %s100, %s101
      %p110 = scmp.eq.s32.totalorder %s27, 0
      %p111 = por %p109, %p110
      %p112 = scmp.ne.s32.totalorder %s100, %s101
      %p113 = scmp.eq.s32.totalorder %s28, 3
      %p114 = por %p112, %p113
      %p116 = scmp.ne.s32.totalorder %s101, %s115
      %p117 = scmp.eq.s32.totalorder %s28, 0
      %p118 = por %p116, %p117
      %s120 = sadd.s32 %s119, 1
      %p123 = scmp.eq.s32.totalorder %s22, 3
      %p124 = scmp.ne.s32.totalorder %s119, %s121
      %p125 = scmp.eq.s32.totalorder %s22, 0
      %p126 = por %p124, %p125
      %p127 = scmp.ne.s32.totalorder %s119, %s121
      %p128 = scmp.eq.s32.totalorder %s27, 3
      %p129 = por %p127, %p128
      %p130 = scmp.ne.s32.totalorder %s121, %s122
      %p131 = scmp.eq.s32.totalorder %s27, 0
      %p132 = por %p130, %p131
      %p133 = scmp.ne.s32.totalorder %s121, %s122
      %p134 = scmp.eq.s32.totalorder %s28, 3
      %p135 = por %p133, %p134
      %p137 = scmp.ne.s32.totalorder %s122, %s136
      %p138 = scmp.eq.s32.totalorder %s28, 0
      %p139 = por %p137, %p138
      %s141 = sadd.s32 %s140, 1
      %p144 = scmp.eq.s32.totalorder %s22, 3
      %p145 = scmp.ne.s32.totalorder %s140, %s142
      %p146 = scmp.eq.s32.totalorder %s22, 0
      %p147 = por %p145, %p146
      %p148 = scmp.ne.s32.totalorder %s140, %s142
      %p149 = scmp.eq.s32.totalorder %s27, 3
      %p150 = por %p148, %p149
      %p151 = scmp.ne.s32.totalorder %s142, %s143
      %p152 = scmp.eq.s32.totalorder %s27, 0
      %p153 = por %p151, %p152
      %p154 = scmp.ne.s32.totalorder %s142, %s143
      %p155 = scmp.eq.s32.totalorder %s28, 3
      %p156 = por %p154, %p155
      %p158 = scmp.ne.s32.totalorder %s143, %s157
      %p159 = scmp.eq.s32.totalorder %s28, 0
      %p160 = por %p158, %p159
      %s162 = sadd.s32 %s161, 1
      %p165 = scmp.eq.s32.totalorder %s22, 3
      %p166 = scmp.ne.s32.totalorder %s161, %s163
      %p167 = scmp.eq.s32.totalorder %s22, 0
      %p168 = por %p166, %p167
      %p169 = scmp.ne.s32.totalorder %s161, %s163
      %p170 = scmp.eq.s32.totalorder %s27, 3
      %p171 = por %p169, %p170
      %p172 = scmp.ne.s32.totalorder %s163, %s164
      %p173 = scmp.eq.s32.totalorder %s27, 0
      %p174 = por %p172, %p173
      %p175 = scmp.ne.s32.totalorder %s163, %s164
      %p176 = scmp.eq.s32.totalorder %s28, 3
      %p177 = por %p175, %p176
      %p179 = scmp.ne.s32.totalorder %s164, %s178
      %p180 = scmp.eq.s32.totalorder %s28, 0
      %p181 = por %p179, %p180
      %s183 = sadd.s32 %s182, 1
      %p186 = scmp.eq.s32.totalorder %s22, 3
      %p187 = scmp.ne.s32.totalorder %s182, %s184
      %p188 = scmp.eq.s32.totalorder %s22, 0
      %p189 = por %p187, %p188
      %p190 = scmp.ne.s32.totalorder %s182, %s184
      %p191 = scmp.eq.s32.totalorder %s27, 3
      %p192 = por %p190, %p191
      %p193 = scmp.ne.s32.totalorder %s184, %s185
      %p194 = scmp.eq.s32.totalorder %s27, 0
      %p195 = por %p193, %p194
      %p196 = scmp.ne.s32.totalorder %s184, %s185
      %p197 = scmp.eq.s32.totalorder %s28, 3
      %p198 = por %p196, %p197
      %p200 = scmp.ne.s32.totalorder %s185, %s199
      %p201 = scmp.eq.s32.totalorder %s28, 0
      %p202 = por %p200, %p201
      %s203 = ssub.s32 %s22, %s29
      %p204 = scmp.eq.s32.totalorder %s203, 0
      %s206 = sadd.s32 %s205, 1
      %s207 = scalar_select %p204, %s205, %s206
      %p210 = pneg %p204
      %p211 = scmp.eq.s32.totalorder %s22, 3
      %p212 = por %p210, %p211
      %p213 = scmp.ne.s32.totalorder %s205, %s208
      %p214 = scmp.eq.s32.totalorder %s22, 0
      %p215 = por %p213, %p214
      %p216 = scmp.ne.s32.totalorder %s205, %s208
      %p217 = scmp.eq.s32.totalorder %s27, 3
      %p218 = por %p216, %p217
      %p219 = scmp.ne.s32.totalorder %s208, %s209
      %p220 = scmp.eq.s32.totalorder %s27, 0
      %p221 = por %p219, %p220
      %p222 = scmp.ne.s32.totalorder %s208, %s209
      %p223 = scmp.eq.s32.totalorder %s28, 3
      %p224 = por %p222, %p223
      %p226 = scmp.ne.s32.totalorder %s209, %s225
      %p227 = scmp.eq.s32.totalorder %s28, 0
      %p228 = por %p226, %p227
      %p229 = scmp.le.s32.totalorder 1, %s22
      %p230 = scmp.lt.s32.totalorder %s22, 5
      %p231 = pnand %p229, %p230
      %p232 = pneg %p231
      // Predicated region
      $region9: #{tpu_custom_call.1} parent=5 // pred_check
        _
      $region10: #{tpu_custom_call.1} parent=5 // pred_check_branch
        %234 = sbr.rel (%p231) target = $region12
      $region11: #{tpu_custom_call.1} parent=5 // pred_region
        %s235 = ssub.s32 %s22, 1
        // Predicated region
        $region13: #{tpu_custom_call.1} parent=11 // pred_check
          %p236 = pneg %p69
        $region14: #{tpu_custom_call.1} parent=11 // pred_check_branch
          %238 = sbr.rel (%p236) target = $region16
        $region15: #{tpu_custom_call.1} parent=11 // pred_region
          %s240 = ssub.s32 1024, 1024
          %241 = vsyncadd [#allocation6], %s240
          %s242 = sshll.u32 [#allocation5], 4
          %s243 = int_to_ptr.vmem [resolvable:$true] %s242
          %248 = dma.hbm_to_vmem [thread:$0]  %s1, 1024, %s243, [#allocation6], 64, 64, 4
        $region16: #{tpu_custom_call.1} parent=11 // pred_fallthru
          _
        // Predicated region
        $region17: #{tpu_custom_call.1} parent=11 // pred_check
          %p249 = pneg %p90
        $region18: #{tpu_custom_call.1} parent=11 // pred_check_branch
          %251 = sbr.rel (%p249) target = $region20
        $region19: #{tpu_custom_call.1} parent=11 // pred_region
          %s253 = ssub.s32 3072, 3072
          %254 = vsyncadd [#allocation6], %s253
          %s255 = sshll.u32 [#allocation7], 4
          %s256 = int_to_ptr.vmem [resolvable:$true] %s255
          %261 = dma.hbm_to_vmem [thread:$0]  %s2, 3072, %s256, [#allocation6], 64, 64, 4
        $region20: #{tpu_custom_call.1} parent=11 // pred_fallthru
          _
        // Predicated region
        $region21: #{tpu_custom_call.1} parent=11 // pred_check
          %p262 = pneg %p111
        $region22: #{tpu_custom_call.1} parent=11 // pred_check_branch
          %264 = sbr.rel (%p262) target = $region24
        $region23: #{tpu_custom_call.1} parent=11 // pred_region
          _
        $region24: #{tpu_custom_call.1} parent=11 // pred_fallthru
          _
        // Predicated region
        $region25: #{tpu_custom_call.1} parent=11 // pred_check
          %p265 = pneg %p132
        $region26: #{tpu_custom_call.1} parent=11 // pred_check_branch
          %267 = sbr.rel (%p265) target = $region28
        $region27: #{tpu_custom_call.1} parent=11 // pred_region
          %s269 = ssub.s32 3072, 3072
          %270 = vsyncadd [#allocation9], %s269
          %s271 = sshll.u32 [#allocation8], 4
          %s272 = int_to_ptr.vmem [resolvable:$true] %s271
          %277 = dma.hbm_to_vmem [thread:$0]  %s4, 3072, %s272, [#allocation9], 64, 64, 4
        $region28: #{tpu_custom_call.1} parent=11 // pred_fallthru
          _
        // Predicated region
        $region29: #{tpu_custom_call.1} parent=11 // pred_check
          %p278 = pneg %p153
        $region30: #{tpu_custom_call.1} parent=11 // pred_check_branch
          %280 = sbr.rel (%p278) target = $region32
        $region31: #{tpu_custom_call.1} parent=11 // pred_region
          _
        $region32: #{tpu_custom_call.1} parent=11 // pred_fallthru
          _
        // Predicated region
        $region33: #{tpu_custom_call.1} parent=11 // pred_check
          %p281 = pneg %p174
        $region34: #{tpu_custom_call.1} parent=11 // pred_check_branch
          %283 = sbr.rel (%p281) target = $region36
        $region35: #{tpu_custom_call.1} parent=11 // pred_region
          %s285 = ssub.s32 1024, 1024
          %286 = vsyncadd [#allocation9], %s285
          %s287 = sshll.u32 [#allocation10], 4
          %s288 = int_to_ptr.vmem [resolvable:$true] %s287
          %293 = dma.hbm_to_vmem [thread:$0]  %s6, 1024, %s288, [#allocation9], 64, 64, 4
        $region36: #{tpu_custom_call.1} parent=11 // pred_fallthru
          _
        // Predicated region
        $region37: #{tpu_custom_call.1} parent=11 // pred_check
          %p294 = pneg %p195
        $region38: #{tpu_custom_call.1} parent=11 // pred_check_branch
          %296 = sbr.rel (%p294) target = $region40
        $region39: #{tpu_custom_call.1} parent=11 // pred_region
          _
        $region40: #{tpu_custom_call.1} parent=11 // pred_fallthru
          _
      $region12: #{tpu_custom_call.1} parent=5 // pred_fallthru
        _
      %p297 = scmp.lt.s32.totalorder %s22, 4
      // Predicated region
      $region41: #{tpu_custom_call.1} parent=5 // pred_check
        %p298 = pneg %p297
      $region42: #{tpu_custom_call.1} parent=5 // pred_check_branch
        %300 = sbr.rel (%p298) target = $region44
      $region43: #{tpu_custom_call.1} parent=5 // pred_region
        // Predicated region
        $region45: #{tpu_custom_call.1} parent=43 // pred_check
          %p301 = pneg %p42
        $region46: #{tpu_custom_call.1} parent=43 // pred_check_branch
          %303 = sbr.rel (%p301) target = $region48
        $region47: #{tpu_custom_call.1} parent=43 // pred_region
          %s304 = sand.u32 %s32, 1
          %s305 = scalar_lea.sflag [#allocation3], %s304
          %s306 = sand.u32 %s32, 1
          %s307 = smul.addr %s306, 512
          %s308 = scalar_lea.vmem [#allocation2], %s307
          %s309 = smul.u32 128, %s22
          %s311 = ssub.s32 8192, 8192
          %312 = vsyncadd %s305, %s311
          %s313 = smul.addr %s309, 64
          %s314 = scalar_lea.hbm %s0, %s313
          %s315 = sshll.u32 %s308, 4
          %s316 = int_to_ptr.vmem [resolvable:$true] %s315
          %321 = dma.hbm_to_vmem [thread:$0]  %s314, 8192, %s316, %s305, 64, 64, 4
        $region48: #{tpu_custom_call.1} parent=43 // pred_fallthru
          _
      $region44: #{tpu_custom_call.1} parent=5 // pred_fallthru
        _
      %p322 = scmp.le.s32.totalorder 1, %s22
      %p323 = scmp.lt.s32.totalorder %s22, 5
      %p324 = pnand %p322, %p323
      %p325 = pneg %p324
      // Predicated region
      $region49: #{tpu_custom_call.1} parent=5 // pred_check
        _
      $region50: #{tpu_custom_call.1} parent=5 // pred_check_branch
        %327 = sbr.rel (%p324) target = $region52
      $region51: #{tpu_custom_call.1} parent=5 // pred_region
        %s328 = ssub.s32 %s22, 1
        %s329 = sand.u32 %s35, 1
        %s330 = scalar_lea.sflag [#allocation3], %s329
        %s331 = sand.u32 %s35, 1
        %s332 = smul.addr %s331, 512
        %s333 = scalar_lea.vmem [#allocation2], %s332
        // Predicated region
        $region53: #{tpu_custom_call.1} parent=51 // pred_check
          %p334 = pneg %p48
        $region54: #{tpu_custom_call.1} parent=51 // pred_check_branch
          %336 = sbr.rel (%p334) target = $region56
        $region55: #{tpu_custom_call.1} parent=51 // pred_region
          %337 = dma.done %s330, 8192
        $region56: #{tpu_custom_call.1} parent=51 // pred_fallthru
          _
        // Predicated region
        $region57: #{tpu_custom_call.1} parent=51 // pred_check
          %p338 = pneg %p69
        $region58: #{tpu_custom_call.1} parent=51 // pred_check_branch
          %340 = sbr.rel (%p338) target = $region60
        $region59: #{tpu_custom_call.1} parent=51 // pred_region
          %341 = dma.done [#allocation6], 1024
        $region60: #{tpu_custom_call.1} parent=51 // pred_fallthru
          _
        // Predicated region
        $region61: #{tpu_custom_call.1} parent=51 // pred_check
          %p342 = pneg %p90
        $region62: #{tpu_custom_call.1} parent=51 // pred_check_branch
          %344 = sbr.rel (%p342) target = $region64
        $region63: #{tpu_custom_call.1} parent=51 // pred_region
          %345 = dma.done [#allocation6], 3072
        $region64: #{tpu_custom_call.1} parent=51 // pred_fallthru
          _
        // Predicated region
        $region65: #{tpu_custom_call.1} parent=51 // pred_check
          %p346 = pneg %p132
        $region66: #{tpu_custom_call.1} parent=51 // pred_check_branch
          %348 = sbr.rel (%p346) target = $region68
        $region67: #{tpu_custom_call.1} parent=51 // pred_region
          %349 = dma.done [#allocation9], 3072
        $region68: #{tpu_custom_call.1} parent=51 // pred_fallthru
          _
        // Predicated region
        $region69: #{tpu_custom_call.1} parent=51 // pred_check
          %p350 = pneg %p174
        $region70: #{tpu_custom_call.1} parent=51 // pred_check_branch
          %352 = sbr.rel (%p350) target = $region72
        $region71: #{tpu_custom_call.1} parent=51 // pred_region
          %353 = dma.done [#allocation9], 1024
        $region72: #{tpu_custom_call.1} parent=51 // pred_fallthru
          _
        %s354 = sand.u32 %s35, 1
        %s355 = scalar_lea.sflag [#allocation3], %s354
        %s356 = sand.u32 %s35, 1
        %s357 = smul.addr %s356, 512
        %s358 = scalar_lea.vmem [#allocation2], %s357
        %p359 = pneg %p48
        %p360 = pneg %p45
        %p361 = pneg %p69
        %p362 = pneg %p66
        %p363 = pneg %p90
        %p364 = pneg %p87
        %p365 = pneg %p111
        %p366 = pneg %p108
        %p367 = pneg %p132
        %p368 = pneg %p129
        %p369 = pneg %p153
        %p370 = pneg %p150
        %p371 = pneg %p174
        %p372 = pneg %p171
        %p373 = pneg %p195
        %p374 = pneg %p192
        %p375 = pneg %p221
        %p376 = pneg %p218
        %s377 = sand.u32 %s208, 1
        %s378 = scalar_lea.sflag [#allocation4], %s377
        %s379 = sand.u32 %s208, 1
        %s380 = smul.addr %s379, 512
        %s381 = scalar_lea.vmem [#allocation11], %s380
        %s382 = smul.u32 128, %s27
        %s383 = smul.u32 128, %s27
        %v385 = vld [vmem:[%s333] sm:$0xf]
        %v386 = vld [vmem:[%s333 + $0x4] sm:$0xf]
        %v387 = vld [vmem:[%s333 + $0x8] sm:$0xf]
        %v388 = vld [vmem:[%s333 + $0xc] sm:$0xf]
        %v389 = vld [vmem:[%s333 + $0x10] sm:$0xf]
        %v390 = vld [vmem:[%s333 + $0x14] sm:$0xf]
        %v391 = vld [vmem:[%s333 + $0x18] sm:$0xf]
        %v392 = vld [vmem:[%s333 + $0x1c] sm:$0xf]
        %v393 = vld [vmem:[%s333 + $0x20] sm:$0xf]
        %v394 = vld [vmem:[%s333 + $0x24] sm:$0xf]
        %v395 = vld [vmem:[%s333 + $0x28] sm:$0xf]
        %v396 = vld [vmem:[%s333 + $0x2c] sm:$0xf]
        %v397 = vld [vmem:[%s333 + $0x30] sm:$0xf]
        %v398 = vld [vmem:[%s333 + $0x34] sm:$0xf]
        %v399 = vld [vmem:[%s333 + $0x38] sm:$0xf]
        %v400 = vld [vmem:[%s333 + $0x3c] sm:$0xf]
        %v401 = vld [vmem:[%s333 + $0x40] sm:$0xf]
        %v402 = vld [vmem:[%s333 + $0x44] sm:$0xf]
        %v403 = vld [vmem:[%s333 + $0x48] sm:$0xf]
        %v404 = vld [vmem:[%s333 + $0x4c] sm:$0xf]
        %v405 = vld [vmem:[%s333 + $0x50] sm:$0xf]
        %v406 = vld [vmem:[%s333 + $0x54] sm:$0xf]
        %v407 = vld [vmem:[%s333 + $0x58] sm:$0xf]
        %v408 = vld [vmem:[%s333 + $0x5c] sm:$0xf]
        %v409 = vld [vmem:[%s333 + $0x60] sm:$0xf]
        %v410 = vld [vmem:[%s333 + $0x64] sm:$0xf]
        %v411 = vld [vmem:[%s333 + $0x68] sm:$0xf]
        %v412 = vld [vmem:[%s333 + $0x6c] sm:$0xf]
        %v413 = vld [vmem:[%s333 + $0x70] sm:$0xf]
        %v414 = vld [vmem:[%s333 + $0x74] sm:$0xf]
        %v415 = vld [vmem:[%s333 + $0x78] sm:$0xf]
        %v416 = vld [vmem:[%s333 + $0x7c] sm:$0xf]
        %v417 = vld [vmem:[%s333 + $0x80] sm:$0xf]
        %v418 = vld [vmem:[%s333 + $0x84] sm:$0xf]
        %v419 = vld [vmem:[%s333 + $0x88] sm:$0xf]
        %v420 = vld [vmem:[%s333 + $0x8c] sm:$0xf]
        %v421 = vld [vmem:[%s333 + $0x90] sm:$0xf]
        %v422 = vld [vmem:[%s333 + $0x94] sm:$0xf]
        %v423 = vld [vmem:[%s333 + $0x98] sm:$0xf]
        %v424 = vld [vmem:[%s333 + $0x9c] sm:$0xf]
        %v425 = vld [vmem:[%s333 + $0xa0] sm:$0xf]
        %v426 = vld [vmem:[%s333 + $0xa4] sm:$0xf]
        %v427 = vld [vmem:[%s333 + $0xa8] sm:$0xf]
        %v428 = vld [vmem:[%s333 + $0xac] sm:$0xf]
        %v429 = vld [vmem:[%s333 + $0xb0] sm:$0xf]
        %v430 = vld [vmem:[%s333 + $0xb4] sm:$0xf]
        %v431 = vld [vmem:[%s333 + $0xb8] sm:$0xf]
        %v432 = vld [vmem:[%s333 + $0xbc] sm:$0xf]
        %v433 = vld [vmem:[%s333 + $0xc0] sm:$0xf]
        %v434 = vld [vmem:[%s333 + $0xc4] sm:$0xf]
        %v435 = vld [vmem:[%s333 + $0xc8] sm:$0xf]
        %v436 = vld [vmem:[%s333 + $0xcc] sm:$0xf]
        %v437 = vld [vmem:[%s333 + $0xd0] sm:$0xf]
        %v438 = vld [vmem:[%s333 + $0xd4] sm:$0xf]
        %v439 = vld [vmem:[%s333 + $0xd8] sm:$0xf]
        %v440 = vld [vmem:[%s333 + $0xdc] sm:$0xf]
        %v441 = vld [vmem:[%s333 + $0xe0] sm:$0xf]
        %v442 = vld [vmem:[%s333 + $0xe4] sm:$0xf]
        %v443 = vld [vmem:[%s333 + $0xe8] sm:$0xf]
        %v444 = vld [vmem:[%s333 + $0xec] sm:$0xf]
        %v445 = vld [vmem:[%s333 + $0xf0] sm:$0xf]
        %v446 = vld [vmem:[%s333 + $0xf4] sm:$0xf]
        %v447 = vld [vmem:[%s333 + $0xf8] sm:$0xf]
        %v448 = vld [vmem:[%s333 + $0xfc] sm:$0xf]
        %v449 = vld [vmem:[%s333 + $0x100] sm:$0xf]
        %v450 = vld [vmem:[%s333 + $0x104] sm:$0xf]
        %v451 = vld [vmem:[%s333 + $0x108] sm:$0xf]
        %v452 = vld [vmem:[%s333 + $0x10c] sm:$0xf]
        %v453 = vld [vmem:[%s333 + $0x110] sm:$0xf]
        %v454 = vld [vmem:[%s333 + $0x114] sm:$0xf]
        %v455 = vld [vmem:[%s333 + $0x118] sm:$0xf]
        %v456 = vld [vmem:[%s333 + $0x11c] sm:$0xf]
        %v457 = vld [vmem:[%s333 + $0x120] sm:$0xf]
        %v458 = vld [vmem:[%s333 + $0x124] sm:$0xf]
        %v459 = vld [vmem:[%s333 + $0x128] sm:$0xf]
        %v460 = vld [vmem:[%s333 + $0x12c] sm:$0xf]
        %v461 = vld [vmem:[%s333 + $0x130] sm:$0xf]
        %v462 = vld [vmem:[%s333 + $0x134] sm:$0xf]
        %v463 = vld [vmem:[%s333 + $0x138] sm:$0xf]
        %v464 = vld [vmem:[%s333 + $0x13c] sm:$0xf]
        %v465 = vld [vmem:[%s333 + $0x140] sm:$0xf]
        %v466 = vld [vmem:[%s333 + $0x144] sm:$0xf]
        %v467 = vld [vmem:[%s333 + $0x148] sm:$0xf]
        %v468 = vld [vmem:[%s333 + $0x14c] sm:$0xf]
        %v469 = vld [vmem:[%s333 + $0x150] sm:$0xf]
        %v470 = vld [vmem:[%s333 + $0x154] sm:$0xf]
        %v471 = vld [vmem:[%s333 + $0x158] sm:$0xf]
        %v472 = vld [vmem:[%s333 + $0x15c] sm:$0xf]
        %v473 = vld [vmem:[%s333 + $0x160] sm:$0xf]
        %v474 = vld [vmem:[%s333 + $0x164] sm:$0xf]
        %v475 = vld [vmem:[%s333 + $0x168] sm:$0xf]
        %v476 = vld [vmem:[%s333 + $0x16c] sm:$0xf]
        %v477 = vld [vmem:[%s333 + $0x170] sm:$0xf]
        %v478 = vld [vmem:[%s333 + $0x174] sm:$0xf]
        %v479 = vld [vmem:[%s333 + $0x178] sm:$0xf]
        %v480 = vld [vmem:[%s333 + $0x17c] sm:$0xf]
        %v481 = vld [vmem:[%s333 + $0x180] sm:$0xf]
        %v482 = vld [vmem:[%s333 + $0x184] sm:$0xf]
        %v483 = vld [vmem:[%s333 + $0x188] sm:$0xf]
        %v484 = vld [vmem:[%s333 + $0x18c] sm:$0xf]
        %v485 = vld [vmem:[%s333 + $0x190] sm:$0xf]
        %v486 = vld [vmem:[%s333 + $0x194] sm:$0xf]
        %v487 = vld [vmem:[%s333 + $0x198] sm:$0xf]
        %v488 = vld [vmem:[%s333 + $0x19c] sm:$0xf]
        %v489 = vld [vmem:[%s333 + $0x1a0] sm:$0xf]
        %v490 = vld [vmem:[%s333 + $0x1a4] sm:$0xf]
        %v491 = vld [vmem:[%s333 + $0x1a8] sm:$0xf]
        %v492 = vld [vmem:[%s333 + $0x1ac] sm:$0xf]
        %v493 = vld [vmem:[%s333 + $0x1b0] sm:$0xf]
        %v494 = vld [vmem:[%s333 + $0x1b4] sm:$0xf]
        %v495 = vld [vmem:[%s333 + $0x1b8] sm:$0xf]
        %v496 = vld [vmem:[%s333 + $0x1bc] sm:$0xf]
        %v497 = vld [vmem:[%s333 + $0x1c0] sm:$0xf]
        %v498 = vld [vmem:[%s333 + $0x1c4] sm:$0xf]
        %v499 = vld [vmem:[%s333 + $0x1c8] sm:$0xf]
        %v500 = vld [vmem:[%s333 + $0x1cc] sm:$0xf]
        %v501 = vld [vmem:[%s333 + $0x1d0] sm:$0xf]
        %v502 = vld [vmem:[%s333 + $0x1d4] sm:$0xf]
        %v503 = vld [vmem:[%s333 + $0x1d8] sm:$0xf]
        %v504 = vld [vmem:[%s333 + $0x1dc] sm:$0xf]
        %v505 = vld [vmem:[%s333 + $0x1e0] sm:$0xf]
        %v506 = vld [vmem:[%s333 + $0x1e4] sm:$0xf]
        %v507 = vld [vmem:[%s333 + $0x1e8] sm:$0xf]
        %v508 = vld [vmem:[%s333 + $0x1ec] sm:$0xf]
        %v509 = vld [vmem:[%s333 + $0x1f0] sm:$0xf]
        %v510 = vld [vmem:[%s333 + $0x1f4] sm:$0xf]
        %v511 = vld [vmem:[%s333 + $0x1f8] sm:$0xf]
        %v512 = vld [vmem:[%s333 + $0x1fc] sm:$0xf]
        %v513 = vld [vmem:[#allocation5] sm:$0xf]
        %v514 = vld [vmem:[#allocation5 + $0x4] sm:$0xf]
        %v515 = vld [vmem:[#allocation5 + $0x8] sm:$0xf]
        %v516 = vld [vmem:[#allocation5 + $0xc] sm:$0xf]
        %v517 = vld [vmem:[#allocation5 + $0x10] sm:$0xf]
        %v518 = vld [vmem:[#allocation5 + $0x14] sm:$0xf]
        %v519 = vld [vmem:[#allocation5 + $0x18] sm:$0xf]
        %v520 = vld [vmem:[#allocation5 + $0x1c] sm:$0xf]
        %v521 = vld [vmem:[#allocation5 + $0x20] sm:$0xf]
        %v522 = vld [vmem:[#allocation5 + $0x24] sm:$0xf]
        %v523 = vld [vmem:[#allocation5 + $0x28] sm:$0xf]
        %v524 = vld [vmem:[#allocation5 + $0x2c] sm:$0xf]
        %v525 = vld [vmem:[#allocation5 + $0x30] sm:$0xf]
        %v526 = vld [vmem:[#allocation5 + $0x34] sm:$0xf]
        %v527 = vld [vmem:[#allocation5 + $0x38] sm:$0xf]
        %v528 = vld [vmem:[#allocation5 + $0x3c] sm:$0xf]
        %v657 = vunpack.c.l.b16 %v385
        %v658 = vunpack.c.l.b16 %v386
        %v659 = vunpack.c.l.b16 %v387
        %v660 = vunpack.c.l.b16 %v388
        %v661 = vunpack.c.l.b16 %v389
        %v662 = vunpack.c.l.b16 %v390
        %v663 = vunpack.c.l.b16 %v391
        %v664 = vunpack.c.l.b16 %v392
        %v665 = vunpack.c.l.b16 %v393
        %v666 = vunpack.c.l.b16 %v394
        %v667 = vunpack.c.l.b16 %v395
        %v668 = vunpack.c.l.b16 %v396
        %v669 = vunpack.c.l.b16 %v397
        %v670 = vunpack.c.l.b16 %v398
        %v671 = vunpack.c.l.b16 %v399
        %v672 = vunpack.c.l.b16 %v400
        %v673 = vunpack.c.l.b16 %v401
        %v674 = vunpack.c.l.b16 %v402
        %v675 = vunpack.c.l.b16 %v403
        %v676 = vunpack.c.l.b16 %v404
        %v677 = vunpack.c.l.b16 %v405
        %v678 = vunpack.c.l.b16 %v406
        %v679 = vunpack.c.l.b16 %v407
        %v680 = vunpack.c.l.b16 %v408
        %v681 = vunpack.c.l.b16 %v409
        %v682 = vunpack.c.l.b16 %v410
        %v683 = vunpack.c.l.b16 %v411
        %v684 = vunpack.c.l.b16 %v412
        %v685 = vunpack.c.l.b16 %v413
        %v686 = vunpack.c.l.b16 %v414
        %v687 = vunpack.c.l.b16 %v415
        %v688 = vunpack.c.l.b16 %v416
        %v689 = vunpack.c.l.b16 %v417
        %v690 = vunpack.c.l.b16 %v418
        %v691 = vunpack.c.l.b16 %v419
        %v692 = vunpack.c.l.b16 %v420
        %v693 = vunpack.c.l.b16 %v421
        %v694 = vunpack.c.l.b16 %v422
        %v695 = vunpack.c.l.b16 %v423
        %v696 = vunpack.c.l.b16 %v424
        %v697 = vunpack.c.l.b16 %v425
        %v698 = vunpack.c.l.b16 %v426
        %v699 = vunpack.c.l.b16 %v427
        %v700 = vunpack.c.l.b16 %v428
        %v701 = vunpack.c.l.b16 %v429
        %v702 = vunpack.c.l.b16 %v430
        %v703 = vunpack.c.l.b16 %v431
        %v704 = vunpack.c.l.b16 %v432
        %v705 = vunpack.c.l.b16 %v433
        %v706 = vunpack.c.l.b16 %v434
        %v707 = vunpack.c.l.b16 %v435
        %v708 = vunpack.c.l.b16 %v436
        %v709 = vunpack.c.l.b16 %v437
        %v710 = vunpack.c.l.b16 %v438
        %v711 = vunpack.c.l.b16 %v439
        %v712 = vunpack.c.l.b16 %v440
        %v713 = vunpack.c.l.b16 %v441
        %v714 = vunpack.c.l.b16 %v442
        %v715 = vunpack.c.l.b16 %v443
        %v716 = vunpack.c.l.b16 %v444
        %v717 = vunpack.c.l.b16 %v445
        %v718 = vunpack.c.l.b16 %v446
        %v719 = vunpack.c.l.b16 %v447
        %v720 = vunpack.c.l.b16 %v448
        %v721 = vunpack.c.l.b16 %v449
        %v722 = vunpack.c.l.b16 %v450
        %v723 = vunpack.c.l.b16 %v451
        %v724 = vunpack.c.l.b16 %v452
        %v725 = vunpack.c.l.b16 %v453
        %v726 = vunpack.c.l.b16 %v454
        %v727 = vunpack.c.l.b16 %v455
        %v728 = vunpack.c.l.b16 %v456
        %v729 = vunpack.c.l.b16 %v457
        %v730 = vunpack.c.l.b16 %v458
        %v731 = vunpack.c.l.b16 %v459
        %v732 = vunpack.c.l.b16 %v460
        %v733 = vunpack.c.l.b16 %v461
        %v734 = vunpack.c.l.b16 %v462
        %v735 = vunpack.c.l.b16 %v463
        %v736 = vunpack.c.l.b16 %v464
        %v737 = vunpack.c.l.b16 %v465
        %v738 = vunpack.c.l.b16 %v466
        %v739 = vunpack.c.l.b16 %v467
        %v740 = vunpack.c.l.b16 %v468
        %v741 = vunpack.c.l.b16 %v469
        %v742 = vunpack.c.l.b16 %v470
        %v743 = vunpack.c.l.b16 %v471
        %v744 = vunpack.c.l.b16 %v472
        %v745 = vunpack.c.l.b16 %v473
        %v746 = vunpack.c.l.b16 %v474
        %v747 = vunpack.c.l.b16 %v475
        %v748 = vunpack.c.l.b16 %v476
        %v749 = vunpack.c.l.b16 %v477
        %v750 = vunpack.c.l.b16 %v478
        %v751 = vunpack.c.l.b16 %v479
        %v752 = vunpack.c.l.b16 %v480
        %v753 = vunpack.c.l.b16 %v481
        %v754 = vunpack.c.l.b16 %v482
        %v755 = vunpack.c.l.b16 %v483
        %v756 = vunpack.c.l.b16 %v484
        %v757 = vunpack.c.l.b16 %v485
        %v758 = vunpack.c.l.b16 %v486
        %v759 = vunpack.c.l.b16 %v487
        %v760 = vunpack.c.l.b16 %v488
        %v761 = vunpack.c.l.b16 %v489
        %v762 = vunpack.c.l.b16 %v490
        %v763 = vunpack.c.l.b16 %v491
        %v764 = vunpack.c.l.b16 %v492
        %v765 = vunpack.c.l.b16 %v493
        %v766 = vunpack.c.l.b16 %v494
        %v767 = vunpack.c.l.b16 %v495
        %v768 = vunpack.c.l.b16 %v496
        %v769 = vunpack.c.l.b16 %v497
        %v770 = vunpack.c.l.b16 %v498
        %v771 = vunpack.c.l.b16 %v499
        %v772 = vunpack.c.l.b16 %v500
        %v773 = vunpack.c.l.b16 %v501
        %v774 = vunpack.c.l.b16 %v502
        %v775 = vunpack.c.l.b16 %v503
        %v776 = vunpack.c.l.b16 %v504
        %v777 = vunpack.c.l.b16 %v505
        %v778 = vunpack.c.l.b16 %v506
        %v779 = vunpack.c.l.b16 %v507
        %v780 = vunpack.c.l.b16 %v508
        %v781 = vunpack.c.l.b16 %v509
        %v782 = vunpack.c.l.b16 %v510
        %v783 = vunpack.c.l.b16 %v511
        %v784 = vunpack.c.l.b16 %v512
        %v785 = vpack.c.b16 %v658, %v657
        %v786 = vpack.c.b16 %v660, %v659
        %v787 = vpack.c.b16 %v662, %v661
        %v788 = vpack.c.b16 %v664, %v663
        %v789 = vpack.c.b16 %v666, %v665
        %v790 = vpack.c.b16 %v668, %v667
        %v791 = vpack.c.b16 %v670, %v669
        %v792 = vpack.c.b16 %v672, %v671
        %v793 = vpack.c.b16 %v674, %v673
        %v794 = vpack.c.b16 %v676, %v675
        %v795 = vpack.c.b16 %v678, %v677
        %v796 = vpack.c.b16 %v680, %v679
        %v797 = vpack.c.b16 %v682, %v681
        %v798 = vpack.c.b16 %v684, %v683
        %v799 = vpack.c.b16 %v686, %v685
        %v800 = vpack.c.b16 %v688, %v687
        %v801 = vpack.c.b16 %v690, %v689
        %v802 = vpack.c.b16 %v692, %v691
        %v803 = vpack.c.b16 %v694, %v693
        %v804 = vpack.c.b16 %v696, %v695
        %v805 = vpack.c.b16 %v698, %v697
        %v806 = vpack.c.b16 %v700, %v699
        %v807 = vpack.c.b16 %v702, %v701
        %v808 = vpack.c.b16 %v704, %v703
        %v809 = vpack.c.b16 %v706, %v705
        %v810 = vpack.c.b16 %v708, %v707
        %v811 = vpack.c.b16 %v710, %v709
        %v812 = vpack.c.b16 %v712, %v711
        %v813 = vpack.c.b16 %v714, %v713
        %v814 = vpack.c.b16 %v716, %v715
        %v815 = vpack.c.b16 %v718, %v717
        %v816 = vpack.c.b16 %v720, %v719
        %v817 = vpack.c.b16 %v722, %v721
        %v818 = vpack.c.b16 %v724, %v723
        %v819 = vpack.c.b16 %v726, %v725
        %v820 = vpack.c.b16 %v728, %v727
        %v821 = vpack.c.b16 %v730, %v729
        %v822 = vpack.c.b16 %v732, %v731
        %v823 = vpack.c.b16 %v734, %v733
        %v824 = vpack.c.b16 %v736, %v735
        %v825 = vpack.c.b16 %v738, %v737
        %v826 = vpack.c.b16 %v740, %v739
        %v827 = vpack.c.b16 %v742, %v741
        %v828 = vpack.c.b16 %v744, %v743
        %v829 = vpack.c.b16 %v746, %v745
        %v830 = vpack.c.b16 %v748, %v747
        %v831 = vpack.c.b16 %v750, %v749
        %v832 = vpack.c.b16 %v752, %v751
        %v833 = vpack.c.b16 %v754, %v753
        %v834 = vpack.c.b16 %v756, %v755
        %v835 = vpack.c.b16 %v758, %v757
        %v836 = vpack.c.b16 %v760, %v759
        %v837 = vpack.c.b16 %v762, %v761
        %v838 = vpack.c.b16 %v764, %v763
        %v839 = vpack.c.b16 %v766, %v765
        %v840 = vpack.c.b16 %v768, %v767
        %v841 = vpack.c.b16 %v770, %v769
        %v842 = vpack.c.b16 %v772, %v771
        %v843 = vpack.c.b16 %v774, %v773
        %v844 = vpack.c.b16 %v776, %v775
        %v845 = vpack.c.b16 %v778, %v777
        %v846 = vpack.c.b16 %v780, %v779
        %v847 = vpack.c.b16 %v782, %v781
        %v848 = vpack.c.b16 %v784, %v783
        %v929 = vunpack.c.l.b16 %v513
        %v930 = vunpack.c.l.b16 %v514
        %v931 = vunpack.c.l.b16 %v515
        %v932 = vunpack.c.l.b16 %v516
        %v933 = vunpack.c.l.b16 %v517
        %v934 = vunpack.c.l.b16 %v518
        %v935 = vunpack.c.l.b16 %v519
        %v936 = vunpack.c.l.b16 %v520
        %v937 = vunpack.c.l.b16 %v521
        %v938 = vunpack.c.l.b16 %v522
        %v939 = vunpack.c.l.b16 %v523
        %v940 = vunpack.c.l.b16 %v524
        %v941 = vunpack.c.l.b16 %v525
        %v942 = vunpack.c.l.b16 %v526
        %v943 = vunpack.c.l.b16 %v527
        %v944 = vunpack.c.l.b16 %v528
        %v945 = vpack.c.b16 %v930, %v929
        %v946 = vpack.c.b16 %v932, %v931
        %v947 = vpack.c.b16 %v934, %v933
        %v948 = vpack.c.b16 %v936, %v935
        %v949 = vpack.c.b16 %v938, %v937
        %v950 = vpack.c.b16 %v940, %v939
        %v951 = vpack.c.b16 %v942, %v941
        %v952 = vpack.c.b16 %v944, %v943
        %961 = vmatprep.subr.bf16.mxu0 0
        %962 = vmatpush1.bf16.msra.mxu0 %v945
        %963 = vmatprep.subr.bf16.mxu0 0
        %964 = vmatpush1.bf16.msra.mxu0 %v946
        %965 = vmatprep.subr.bf16.mxu0 0
        %966 = vmatpush1.bf16.msra.mxu0 %v947
        %967 = vmatprep.subr.bf16.mxu0 0
        %968 = vmatpush1.bf16.msra.mxu0 %v948
        %969 = vmatprep.subr.bf16.mxu0 0
        %970 = vmatpush1.bf16.msra.mxu0 %v949
        %971 = vmatprep.subr.bf16.mxu0 0
        %972 = vmatpush1.bf16.msra.mxu0 %v950
        %973 = vmatprep.subr.bf16.mxu0 0
        %974 = vmatpush1.bf16.msra.mxu0 %v951
        %975 = vmatprep.subr.bf16.mxu0 0
        %976 = vmatpush1.bf16.msra.mxu0 %v952
        %977 = vmatprep.subr.bf16.mxu0 0
        %978 = vmatpush1.bf16.msra.mxu0 0
        %979 = vmatprep.subr.bf16.mxu0 0
        %980 = vmatpush1.bf16.msra.mxu0 0
        %981 = vmatprep.subr.bf16.mxu0 0
        %982 = vmatpush1.bf16.msra.mxu0 0
        %983 = vmatprep.subr.bf16.mxu0 0
        %984 = vmatpush1.bf16.msra.mxu0 0
        %985 = vmatprep.subr.bf16.mxu0 0
        %986 = vmatpush1.bf16.msra.mxu0 0
        %987 = vmatprep.subr.bf16.mxu0 0
        %988 = vmatpush1.bf16.msra.mxu0 0
        %989 = vmatprep.subr.bf16.mxu0 0
        %990 = vmatpush1.bf16.msra.mxu0 0
        %991 = vmatprep.subr.bf16.mxu0 0
        %992 = vmatpush1.bf16.msra.mxu0 0
        %993 = vmatprep.mubr.bf16.mxu0 0
        %994 = vmatmul.mubr.bf16.gmra.mrb[0].mxu0 %v785
        %v995 = vpop.f32.mrb[0].mxu0
        %v996 = vadd.f32 0.0, %v995
        %v997 = vpop.f32.mrb[0].mxu0
        %v998 = vpop.f32.mrb[0].mxu0
        %v999 = vadd.f32 0.0, %v998
        %v1000 = vpop.f32.mrb[0].mxu0
        %1001 = vmatprep.mubr.bf16.mxu0 0
        %1002 = vmatmul.mubr.bf16.gmra.mrb[0].mxu0 %v786
        %v1003 = vpop.f32.mrb[0].mxu0
        %v1004 = vadd.f32 0.0, %v1003
        %v1005 = vpop.f32.mrb[0].mxu0
        %v1006 = vpop.f32.mrb[0].mxu0
        %v1007 = vadd.f32 0.0, %v1006
        %v1008 = vpop.f32.mrb[0].mxu0
        %1009 = vmatprep.mubr.bf16.mxu0 0
        %1010 = vmatmul.mubr.bf16.gmra.mrb[0].mxu0 %v787
        %v1011 = vpop.f32.mrb[0].mxu0
        %v1012 = vadd.f32 0.0, %v1011
        %v1013 = vpop.f32.mrb[0].mxu0
        %v1014 = vpop.f32.mrb[0].mxu0
        %v1015 = vadd.f32 0.0, %v1014
        %v1016 = vpop.f32.mrb[0].mxu0
        %1017 = vmatprep.mubr.bf16.mxu0 0
        %1018 = vmatmul.mubr.bf16.gmra.mrb[0].mxu0 %v788
        %v1019 = vpop.f32.mrb[0].mxu0
        %v1020 = vadd.f32 0.0, %v1019
        %v1021 = vpop.f32.mrb[0].mxu0
        %v1022 = vpop.f32.mrb[0].mxu0
        %v1023 = vadd.f32 0.0, %v1022
        %v1024 = vpop.f32.mrb[0].mxu0
        %1025 = vmatprep.mubr.bf16.mxu0 0
        %1026 = vmatmul.mubr.bf16.gmra.mrb[0].mxu0 %v789
        %v1027 = vpop.f32.mrb[0].mxu0
        %v1028 = vadd.f32 0.0, %v1027
        %v1029 = vpop.f32.mrb[0].mxu0
        %v1030 = vpop.f32.mrb[0].mxu0
        %v1031 = vadd.f32 0.0, %v1030
        %v1032 = vpop.f32.mrb[0].mxu0
        %1033 = vmatprep.mubr.bf16.mxu0 0
        %1034 = vmatmul.mubr.bf16.gmra.mrb[0].mxu0 %v790
        %v1035 = vpop.f32.mrb[0].mxu0
        %v1036 = vadd.f32 0.0, %v1035
        %v1037 = vpop.f32.mrb[0].mxu0
        %v1038 = vpop.f32.mrb[0].mxu0
        %v1039 = vadd.f32 0.0, %v1038
        %v1040 = vpop.f32.mrb[0].mxu0
        %1041 = vmatprep.mubr.bf16.mxu0 0
        %1042 = vmatmul.mubr.bf16.gmra.mrb[0].mxu0 %v791
        %v1043 = vpop.f32.mrb[0].mxu0
        %v1044 = vadd.f32 0.0, %v1043
        %v1045 = vpop.f32.mrb[0].mxu0
        %v1046 = vpop.f32.mrb[0].mxu0
        %v1047 = vadd.f32 0.0, %v1046
        %v1048 = vpop.f32.mrb[0].mxu0
        %1049 = vmatprep.mubr.bf16.mxu0 0
        %1050 = vmatmul.mubr.bf16.gmra.mrb[0].mxu0 %v792
        %v1051 = vpop.f32.mrb[0].mxu0
        %v1052 = vadd.f32 0.0, %v1051
        %v1053 = vpop.f32.mrb[0].mxu0
        %v1054 = vpop.f32.mrb[0].mxu0
        %v1055 = vadd.f32 0.0, %v1054
        %v1056 = vpop.f32.mrb[0].mxu0
        %1057 = vmatprep.mubr.bf16.mxu0 0
        %1058 = vmatmul.mubr.bf16.gmra.mrb[0].mxu0 %v793
        %v1059 = vpop.f32.mrb[0].mxu0
        %v1060 = vadd.f32 0.0, %v1059
        %v1061 = vpop.f32.mrb[0].mxu0
        %v1062 = vpop.f32.mrb[0].mxu0
        %v1063 = vadd.f32 0.0, %v1062
        %v1064 = vpop.f32.mrb[0].mxu0
        %1065 = vmatprep.mubr.bf16.mxu0 0
        %1066 = vmatmul.mubr.bf16.gmra.mrb[0].mxu0 %v794
        %v1067 = vpop.f32.mrb[0].mxu0
        %v1068 = vadd.f32 0.0, %v1067
        %v1069 = vpop.f32.mrb[0].mxu0
        %v1070 = vpop.f32.mrb[0].mxu0
        %v1071 = vadd.f32 0.0, %v1070
        %v1072 = vpop.f32.mrb[0].mxu0
        %1073 = vmatprep.mubr.bf16.mxu0 0
        %1074 = vmatmul.mubr.bf16.gmra.mrb[0].mxu0 %v795
        %v1075 = vpop.f32.mrb[0].mxu0
        %v1076 = vadd.f32 0.0, %v1075
        %v1077 = vpop.f32.mrb[0].mxu0
        %v1078 = vpop.f32.mrb[0].mxu0
        %v1079 = vadd.f32 0.0, %v1078
        %v1080 = vpop.f32.mrb[0].mxu0
        %1081 = vmatprep.mubr.bf16.mxu0 0
        %1082 = vmatmul.mubr.bf16.gmra.mrb[0].mxu0 %v796
        %v1083 = vpop.f32.mrb[0].mxu0
        %v1084 = vadd.f32 0.0, %v1083
        %v1085 = vpop.f32.mrb[0].mxu0
        %v1086 = vpop.f32.mrb[0].mxu0
        %v1087 = vadd.f32 0.0, %v1086
        %v1088 = vpop.f32.mrb[0].mxu0
        %1089 = vmatprep.mubr.bf16.mxu0 0
        %1090 = vmatmul.mubr.bf16.gmra.mrb[0].mxu0 %v797
        %v1091 = vpop.f32.mrb[0].mxu0
        %v1092 = vadd.f32 0.0, %v1091
        %v1093 = vpop.f32.mrb[0].mxu0
        %v1094 = vpop.f32.mrb[0].mxu0
        %v1095 = vadd.f32 0.0, %v1094
        %v1096 = vpop.f32.mrb[0].mxu0
        %1097 = vmatprep.mubr.bf16.mxu0 0
        %1098 = vmatmul.mubr.bf16.gmra.mrb[0].mxu0 %v798
        %v1099 = vpop.f32.mrb[0].mxu0
        %v1100 = vadd.f32 0.0, %v1099
        %v1101 = vpop.f32.mrb[0].mxu0
        %v1102 = vpop.f32.mrb[0].mxu0
        %v1103 = vadd.f32 0.0, %v1102
        %v1104 = vpop.f32.mrb[0].mxu0
        %1105 = vmatprep.mubr.bf16.mxu0 0
        %1106 = vmatmul.mubr.bf16.gmra.mrb[0].mxu0 %v799
        %v1107 = vpop.f32.mrb[0].mxu0
        %v1108 = vadd.f32 0.0, %v1107
        %v1109 = vpop.f32.mrb[0].mxu0
        %v1110 = vpop.f32.mrb[0].mxu0
        %v1111 = vadd.f32 0.0, %v1110
        %v1112 = vpop.f32.mrb[0].mxu0
        %1113 = vmatprep.mubr.bf16.mxu0 0
        %1114 = vmatmul.mubr.bf16.gmra.mrb[0].mxu0 %v800
        %v1115 = vpop.f32.mrb[0].mxu0
        %v1116 = vadd.f32 0.0, %v1115
        %v1117 = vpop.f32.mrb[0].mxu0
        %v1118 = vpop.f32.mrb[0].mxu0
        %v1119 = vadd.f32 0.0, %v1118
        %v1120 = vpop.f32.mrb[0].mxu0
        %1121 = vmatprep.mubr.bf16.mxu0 0
        %1122 = vmatmul.mubr.bf16.gmra.mrb[0].mxu0 %v801
        %v1123 = vpop.f32.mrb[0].mxu0
        %v1124 = vadd.f32 0.0, %v1123
        %v1125 = vpop.f32.mrb[0].mxu0
        %v1126 = vpop.f32.mrb[0].mxu0
        %v1127 = vadd.f32 0.0, %v1126
        %v1128 = vpop.f32.mrb[0].mxu0
        %1129 = vmatprep.mubr.bf16.mxu0 0
        %1130 = vmatmul.mubr.bf16.gmra.mrb[0].mxu0 %v802
        %v1131 = vpop.f32.mrb[0].mxu0
        %v1132 = vadd.f32 0.0, %v1131
        %v1133 = vpop.f32.mrb[0].mxu0
        %v1134 = vpop.f32.mrb[0].mxu0
        %v1135 = vadd.f32 0.0, %v1134
        %v1136 = vpop.f32.mrb[0].mxu0
        %1137 = vmatprep.mubr.bf16.mxu0 0
        %1138 = vmatmul.mubr.bf16.gmra.mrb[0].mxu0 %v803
        %v1139 = vpop.f32.mrb[0].mxu0
        %v1140 = vadd.f32 0.0, %v1139
        %v1141 = vpop.f32.mrb[0].mxu0
        %v1142 = vpop.f32.mrb[0].mxu0
        %v1143 = vadd.f32 0.0, %v1142
        %v1144 = vpop.f32.mrb[0].mxu0
        %1145 = vmatprep.mubr.bf16.mxu0 0
        %1146 = vmatmul.mubr.bf16.gmra.mrb[0].mxu0 %v804
        %v1147 = vpop.f32.mrb[0].mxu0
        %v1148 = vadd.f32 0.0, %v1147
        %v1149 = vpop.f32.mrb[0].mxu0
        %v1150 = vpop.f32.mrb[0].mxu0
        %v1151 = vadd.f32 0.0, %v1150
        %v1152 = vpop.f32.mrb[0].mxu0
        %1153 = vmatprep.mubr.bf16.mxu0 0
        %1154 = vmatmul.mubr.bf16.gmra.mrb[0].mxu0 %v805
        %v1155 = vpop.f32.mrb[0].mxu0
        %v1156 = vadd.f32 0.0, %v1155
        %v1157 = vpop.f32.mrb[0].mxu0
        %v1158 = vpop.f32.mrb[0].mxu0
        %v1159 = vadd.f32 0.0, %v1158
        %v1160 = vpop.f32.mrb[0].mxu0
        %1161 = vmatprep.mubr.bf16.mxu0 0
        %1162 = vmatmul.mubr.bf16.gmra.mrb[0].mxu0 %v806
        %v1163 = vpop.f32.mrb[0].mxu0
        %v1164 = vadd.f32 0.0, %v1163
        %v1165 = vpop.f32.mrb[0].mxu0
        %v1166 = vpop.f32.mrb[0].mxu0
        %v1167 = vadd.f32 0.0, %v1166
        %v1168 = vpop.f32.mrb[0].mxu0
        %1169 = vmatprep.mubr.bf16.mxu0 0
        %1170 = vmatmul.mubr.bf16.gmra.mrb[0].mxu0 %v807
        %v1171 = vpop.f32.mrb[0].mxu0
        %v1172 = vadd.f32 0.0, %v1171
        %v1173 = vpop.f32.mrb[0].mxu0
        %v1174 = vpop.f32.mrb[0].mxu0
        %v1175 = vadd.f32 0.0, %v1174
        %v1176 = vpop.f32.mrb[0].mxu0
        %1177 = vmatprep.mubr.bf16.mxu0 0
        %1178 = vmatmul.mubr.bf16.gmra.mrb[0].mxu0 %v808
        %v1179 = vpop.f32.mrb[0].mxu0
        %v1180 = vadd.f32 0.0, %v1179
        %v1181 = vpop.f32.mrb[0].mxu0
        %v1182 = vpop.f32.mrb[0].mxu0
        %v1183 = vadd.f32 0.0, %v1182
        %v1184 = vpop.f32.mrb[0].mxu0
        %1185 = vmatprep.mubr.bf16.mxu0 0
        %1186 = vmatmul.mubr.bf16.gmra.mrb[0].mxu0 %v809
        %v1187 = vpop.f32.mrb[0].mxu0
        %v1188 = vadd.f32 0.0, %v1187
        %v1189 = vpop.f32.mrb[0].mxu0
        %v1190 = vpop.f32.mrb[0].mxu0
        %v1191 = vadd.f32 0.0, %v1190
        %v1192 = vpop.f32.mrb[0].mxu0
        %1193 = vmatprep.mubr.bf16.mxu0 0
        %1194 = vmatmul.mubr.bf16.gmra.mrb[0].mxu0 %v810
        %v1195 = vpop.f32.mrb[0].mxu0
        %v1196 = vadd.f32 0.0, %v1195
        %v1197 = vpop.f32.mrb[0].mxu0
        %v1198 = vpop.f32.mrb[0].mxu0
        %v1199 = vadd.f32 0.0, %v1198
        %v1200 = vpop.f32.mrb[0].mxu0
        %1201 = vmatprep.mubr.bf16.mxu0 0
        %1202 = vmatmul.mubr.bf16.gmra.mrb[0].mxu0 %v811
        %v1203 = vpop.f32.mrb[0].mxu0
        %v1204 = vadd.f32 0.0, %v1203
        %v1205 = vpop.f32.mrb[0].mxu0
        %v1206 = vpop.f32.mrb[0].mxu0
        %v1207 = vadd.f32 0.0, %v1206
        %v1208 = vpop.f32.mrb[0].mxu0
        %1209 = vmatprep.mubr.bf16.mxu0 0
        %1210 = vmatmul.mubr.bf16.gmra.mrb[0].mxu0 %v812
        %v1211 = vpop.f32.mrb[0].mxu0
        %v1212 = vadd.f32 0.0, %v1211
        %v1213 = vpop.f32.mrb[0].mxu0
        %v1214 = vpop.f32.mrb[0].mxu0
        %v1215 = vadd.f32 0.0, %v1214
        %v1216 = vpop.f32.mrb[0].mxu0
        %1217 = vmatprep.mubr.bf16.mxu0 0
        %1218 = vmatmul.mubr.bf16.gmra.mrb[0].mxu0 %v813
        %v1219 = vpop.f32.mrb[0].mxu0
        %v1220 = vadd.f32 0.0, %v1219
        %v1221 = vpop.f32.mrb[0].mxu0
        %v1222 = vpop.f32.mrb[0].mxu0
        %v1223 = vadd.f32 0.0, %v1222
        %v1224 = vpop.f32.mrb[0].mxu0
        %1225 = vmatprep.mubr.bf16.mxu0 0
        %1226 = vmatmul.mubr.bf16.gmra.mrb[0].mxu0 %v814
        %v1227 = vpop.f32.mrb[0].mxu0
        %v1228 = vadd.f32 0.0, %v1227
        %v1229 = vpop.f32.mrb[0].mxu0
        %v1230 = vpop.f32.mrb[0].mxu0
        %v1231 = vadd.f32 0.0, %v1230
        %v1232 = vpop.f32.mrb[0].mxu0
        %1233 = vmatprep.mubr.bf16.mxu0 0
        %1234 = vmatmul.mubr.bf16.gmra.mrb[0].mxu0 %v815
        %v1235 = vpop.f32.mrb[0].mxu0
        %v1236 = vadd.f32 0.0, %v1235
        %v1237 = vpop.f32.mrb[0].mxu0
        %v1238 = vpop.f32.mrb[0].mxu0
        %v1239 = vadd.f32 0.0, %v1238
        %v1240 = vpop.f32.mrb[0].mxu0
        %1241 = vmatprep.mubr.bf16.mxu0 0
        %1242 = vmatmul.mubr.bf16.gmra.mrb[0].mxu0 %v816
        %v1243 = vpop.f32.mrb[0].mxu0
        %v1244 = vadd.f32 0.0, %v1243
        %v1245 = vpop.f32.mrb[0].mxu0
        %v1246 = vpop.f32.mrb[0].mxu0
        %v1247 = vadd.f32 0.0, %v1246
        %v1248 = vpop.f32.mrb[0].mxu0
        %1249 = vmatprep.mubr.bf16.mxu0 0
        %1250 = vmatmul.mubr.bf16.gmra.mrb[0].mxu0 %v817
        %v1251 = vpop.f32.mrb[0].mxu0
        %v1252 = vadd.f32 0.0, %v1251
        %v1253 = vpop.f32.mrb[0].mxu0
        %v1254 = vpop.f32.mrb[0].mxu0
        %v1255 = vadd.f32 0.0, %v1254
        %v1256 = vpop.f32.mrb[0].mxu0
        %1257 = vmatprep.mubr.bf16.mxu0 0
        %1258 = vmatmul.mubr.bf16.gmra.mrb[0].mxu0 %v818
        %v1259 = vpop.f32.mrb[0].mxu0
        %v1260 = vadd.f32 0.0, %v1259
        %v1261 = vpop.f32.mrb[0].mxu0
        %v1262 = vpop.f32.mrb[0].mxu0
        %v1263 = vadd.f32 0.0, %v1262
        %v1264 = vpop.f32.mrb[0].mxu0
        %1265 = vmatprep.mubr.bf16.mxu0 0
        %1266 = vmatmul.mubr.bf16.gmra.mrb[0].mxu0 %v819
        %v1267 = vpop.f32.mrb[0].mxu0
        %v1268 = vadd.f32 0.0, %v1267
        %v1269 = vpop.f32.mrb[0].mxu0
        %v1270 = vpop.f32.mrb[0].mxu0
        %v1271 = vadd.f32 0.0, %v1270
        %v1272 = vpop.f32.mrb[0].mxu0
        %1273 = vmatprep.mubr.bf16.mxu0 0
        %1274 = vmatmul.mubr.bf16.gmra.mrb[0].mxu0 %v820
        %v1275 = vpop.f32.mrb[0].mxu0
        %v1276 = vadd.f32 0.0, %v1275
        %v1277 = vpop.f32.mrb[0].mxu0
        %v1278 = vpop.f32.mrb[0].mxu0
        %v1279 = vadd.f32 0.0, %v1278
        %v1280 = vpop.f32.mrb[0].mxu0
        %1281 = vmatprep.mubr.bf16.mxu0 0
        %1282 = vmatmul.mubr.bf16.gmra.mrb[0].mxu0 %v821
        %v1283 = vpop.f32.mrb[0].mxu0
        %v1284 = vadd.f32 0.0, %v1283
        %v1285 = vpop.f32.mrb[0].mxu0
        %v1286 = vpop.f32.mrb[0].mxu0
        %v1287 = vadd.f32 0.0, %v1286
        %v1288 = vpop.f32.mrb[0].mxu0
        %1289 = vmatprep.mubr.bf16.mxu0 0
        %1290 = vmatmul.mubr.bf16.gmra.mrb[0].mxu0 %v822
        %v1291 = vpop.f32.mrb[0].mxu0
        %v1292 = vadd.f32 0.0, %v1291
        %v1293 = vpop.f32.mrb[0].mxu0
        %v1294 = vpop.f32.mrb[0].mxu0
        %v1295 = vadd.f32 0.0, %v1294
        %v1296 = vpop.f32.mrb[0].mxu0
        %1297 = vmatprep.mubr.bf16.mxu0 0
        %1298 = vmatmul.mubr.bf16.gmra.mrb[0].mxu0 %v823
        %v1299 = vpop.f32.mrb[0].mxu0
        %v1300 = vadd.f32 0.0, %v1299
        %v1301 = vpop.f32.mrb[0].mxu0
        %v1302 = vpop.f32.mrb[0].mxu0
        %v1303 = vadd.f32 0.0, %v1302
        %v1304 = vpop.f32.mrb[0].mxu0
        %1305 = vmatprep.mubr.bf16.mxu0 0
        %1306 = vmatmul.mubr.bf16.gmra.mrb[0].mxu0 %v824
        %v1307 = vpop.f32.mrb[0].mxu0
        %v1308 = vadd.f32 0.0, %v1307
        %v1309 = vpop.f32.mrb[0].mxu0
        %v1310 = vpop.f32.mrb[0].mxu0
        %v1311 = vadd.f32 0.0, %v1310
        %v1312 = vpop.f32.mrb[0].mxu0
        %1313 = vmatprep.mubr.bf16.mxu0 0
        %1314 = vmatmul.mubr.bf16.gmra.mrb[0].mxu0 %v825
        %v1315 = vpop.f32.mrb[0].mxu0
        %v1316 = vadd.f32 0.0, %v1315
        %v1317 = vpop.f32.mrb[0].mxu0
        %v1318 = vpop.f32.mrb[0].mxu0
        %v1319 = vadd.f32 0.0, %v1318
        %v1320 = vpop.f32.mrb[0].mxu0
        %1321 = vmatprep.mubr.bf16.mxu0 0
        %1322 = vmatmul.mubr.bf16.gmra.mrb[0].mxu0 %v826
        %v1323 = vpop.f32.mrb[0].mxu0
        %v1324 = vadd.f32 0.0, %v1323
        %v1325 = vpop.f32.mrb[0].mxu0
        %v1326 = vpop.f32.mrb[0].mxu0
        %v1327 = vadd.f32 0.0, %v1326
        %v1328 = vpop.f32.mrb[0].mxu0
        %1329 = vmatprep.mubr.bf16.mxu0 0
        %1330 = vmatmul.mubr.bf16.gmra.mrb[0].mxu0 %v827
        %v1331 = vpop.f32.mrb[0].mxu0
        %v1332 = vadd.f32 0.0, %v1331
        %v1333 = vpop.f32.mrb[0].mxu0
        %v1334 = vpop.f32.mrb[0].mxu0
        %v1335 = vadd.f32 0.0, %v1334
        %v1336 = vpop.f32.mrb[0].mxu0
        %1337 = vmatprep.mubr.bf16.mxu0 0
        %1338 = vmatmul.mubr.bf16.gmra.mrb[0].mxu0 %v828
        %v1339 = vpop.f32.mrb[0].mxu0
        %v1340 = vadd.f32 0.0, %v1339
        %v1341 = vpop.f32.mrb[0].mxu0
        %v1342 = vpop.f32.mrb[0].mxu0
        %v1343 = vadd.f32 0.0, %v1342
        %v1344 = vpop.f32.mrb[0].mxu0
        %1345 = vmatprep.mubr.bf16.mxu0 0
        %1346 = vmatmul.mubr.bf16.gmra.mrb[0].mxu0 %v829
        %v1347 = vpop.f32.mrb[0].mxu0
        %v1348 = vadd.f32 0.0, %v1347
        %v1349 = vpop.f32.mrb[0].mxu0
        %v1350 = vpop.f32.mrb[0].mxu0
        %v1351 = vadd.f32 0.0, %v1350
        %v1352 = vpop.f32.mrb[0].mxu0
        %1353 = vmatprep.mubr.bf16.mxu0 0
        %1354 = vmatmul.mubr.bf16.gmra.mrb[0].mxu0 %v830
        %v1355 = vpop.f32.mrb[0].mxu0
        %v1356 = vadd.f32 0.0, %v1355
        %v1357 = vpop.f32.mrb[0].mxu0
        %v1358 = vpop.f32.mrb[0].mxu0
        %v1359 = vadd.f32 0.0, %v1358
        %v1360 = vpop.f32.mrb[0].mxu0
        %1361 = vmatprep.mubr.bf16.mxu0 0
        %1362 = vmatmul.mubr.bf16.gmra.mrb[0].mxu0 %v831
        %v1363 = vpop.f32.mrb[0].mxu0
        %v1364 = vadd.f32 0.0, %v1363
        %v1365 = vpop.f32.mrb[0].mxu0
        %v1366 = vpop.f32.mrb[0].mxu0
        %v1367 = vadd.f32 0.0, %v1366
        %v1368 = vpop.f32.mrb[0].mxu0
        %1369 = vmatprep.mubr.bf16.mxu0 0
        %1370 = vmatmul.mubr.bf16.gmra.mrb[0].mxu0 %v832
        %v1371 = vpop.f32.mrb[0].mxu0
        %v1372 = vadd.f32 0.0, %v1371
        %v1373 = vpop.f32.mrb[0].mxu0
        %v1374 = vpop.f32.mrb[0].mxu0
        %v1375 = vadd.f32 0.0, %v1374
        %v1376 = vpop.f32.mrb[0].mxu0
        %1377 = vmatprep.mubr.bf16.mxu0 0
        %1378 = vmatmul.mubr.bf16.gmra.mrb[0].mxu0 %v833
        %v1379 = vpop.f32.mrb[0].mxu0
        %v1380 = vadd.f32 0.0, %v1379
        %v1381 = vpop.f32.mrb[0].mxu0
        %v1382 = vpop.f32.mrb[0].mxu0
        %v1383 = vadd.f32 0.0, %v1382
        %v1384 = vpop.f32.mrb[0].mxu0
        %1385 = vmatprep.mubr.bf16.mxu0 0
        %1386 = vmatmul.mubr.bf16.gmra.mrb[0].mxu0 %v834
        %v1387 = vpop.f32.mrb[0].mxu0
        %v1388 = vadd.f32 0.0, %v1387
        %v1389 = vpop.f32.mrb[0].mxu0
        %v1390 = vpop.f32.mrb[0].mxu0
        %v1391 = vadd.f32 0.0, %v1390
        %v1392 = vpop.f32.mrb[0].mxu0
        %1393 = vmatprep.mubr.bf16.mxu0 0
        %1394 = vmatmul.mubr.bf16.gmra.mrb[0].mxu0 %v835
        %v1395 = vpop.f32.mrb[0].mxu0
        %v1396 = vadd.f32 0.0, %v1395
        %v1397 = vpop.f32.mrb[0].mxu0
        %v1398 = vpop.f32.mrb[0].mxu0
        %v1399 = vadd.f32 0.0, %v1398
        %v1400 = vpop.f32.mrb[0].mxu0
        %1401 = vmatprep.mubr.bf16.mxu0 0
        %1402 = vmatmul.mubr.bf16.gmra.mrb[0].mxu0 %v836
        %v1403 = vpop.f32.mrb[0].mxu0
        %v1404 = vadd.f32 0.0, %v1403
        %v1405 = vpop.f32.mrb[0].mxu0
        %v1406 = vpop.f32.mrb[0].mxu0
        %v1407 = vadd.f32 0.0, %v1406
        %v1408 = vpop.f32.mrb[0].mxu0
        %1409 = vmatprep.mubr.bf16.mxu0 0
        %1410 = vmatmul.mubr.bf16.gmra.mrb[0].mxu0 %v837
        %v1411 = vpop.f32.mrb[0].mxu0
        %v1412 = vadd.f32 0.0, %v1411
        %v1413 = vpop.f32.mrb[0].mxu0
        %v1414 = vpop.f32.mrb[0].mxu0
        %v1415 = vadd.f32 0.0, %v1414
        %v1416 = vpop.f32.mrb[0].mxu0
        %1417 = vmatprep.mubr.bf16.mxu0 0
        %1418 = vmatmul.mubr.bf16.gmra.mrb[0].mxu0 %v838
        %v1419 = vpop.f32.mrb[0].mxu0
        %v1420 = vadd.f32 0.0, %v1419
        %v1421 = vpop.f32.mrb[0].mxu0
        %v1422 = vpop.f32.mrb[0].mxu0
        %v1423 = vadd.f32 0.0, %v1422
        %v1424 = vpop.f32.mrb[0].mxu0
        %1425 = vmatprep.mubr.bf16.mxu0 0
        %1426 = vmatmul.mubr.bf16.gmra.mrb[0].mxu0 %v839
        %v1427 = vpop.f32.mrb[0].mxu0
        %v1428 = vadd.f32 0.0, %v1427
        %v1429 = vpop.f32.mrb[0].mxu0
        %v1430 = vpop.f32.mrb[0].mxu0
        %v1431 = vadd.f32 0.0, %v1430
        %v1432 = vpop.f32.mrb[0].mxu0
        %1433 = vmatprep.mubr.bf16.mxu0 0
        %1434 = vmatmul.mubr.bf16.gmra.mrb[0].mxu0 %v840
        %v1435 = vpop.f32.mrb[0].mxu0
        %v1436 = vadd.f32 0.0, %v1435
        %v1437 = vpop.f32.mrb[0].mxu0
        %v1438 = vpop.f32.mrb[0].mxu0
        %v1439 = vadd.f32 0.0, %v1438
        %v1440 = vpop.f32.mrb[0].mxu0
        %1441 = vmatprep.mubr.bf16.mxu0 0
        %1442 = vmatmul.mubr.bf16.gmra.mrb[0].mxu0 %v841
        %v1443 = vpop.f32.mrb[0].mxu0
        %v1444 = vadd.f32 0.0, %v1443
        %v1445 = vpop.f32.mrb[0].mxu0
        %v1446 = vpop.f32.mrb[0].mxu0
        %v1447 = vadd.f32 0.0, %v1446
        %v1448 = vpop.f32.mrb[0].mxu0
        %1449 = vmatprep.mubr.bf16.mxu0 0
        %1450 = vmatmul.mubr.bf16.gmra.mrb[0].mxu0 %v842
        %v1451 = vpop.f32.mrb[0].mxu0
        %v1452 = vadd.f32 0.0, %v1451
        %v1453 = vpop.f32.mrb[0].mxu0
        %v1454 = vpop.f32.mrb[0].mxu0
        %v1455 = vadd.f32 0.0, %v1454
        %v1456 = vpop.f32.mrb[0].mxu0
        %1457 = vmatprep.mubr.bf16.mxu0 0
        %1458 = vmatmul.mubr.bf16.gmra.mrb[0].mxu0 %v843
        %v1459 = vpop.f32.mrb[0].mxu0
        %v1460 = vadd.f32 0.0, %v1459
        %v1461 = vpop.f32.mrb[0].mxu0
        %v1462 = vpop.f32.mrb[0].mxu0
        %v1463 = vadd.f32 0.0, %v1462
        %v1464 = vpop.f32.mrb[0].mxu0
        %1465 = vmatprep.mubr.bf16.mxu0 0
        %1466 = vmatmul.mubr.bf16.gmra.mrb[0].mxu0 %v844
        %v1467 = vpop.f32.mrb[0].mxu0
        %v1468 = vadd.f32 0.0, %v1467
        %v1469 = vpop.f32.mrb[0].mxu0
        %v1470 = vpop.f32.mrb[0].mxu0
        %v1471 = vadd.f32 0.0, %v1470
        %v1472 = vpop.f32.mrb[0].mxu0
        %1473 = vmatprep.mubr.bf16.mxu0 0
        %1474 = vmatmul.mubr.bf16.gmra.mrb[0].mxu0 %v845
        %v1475 = vpop.f32.mrb[0].mxu0
        %v1476 = vadd.f32 0.0, %v1475
        %v1477 = vpop.f32.mrb[0].mxu0
        %v1478 = vpop.f32.mrb[0].mxu0
        %v1479 = vadd.f32 0.0, %v1478
        %v1480 = vpop.f32.mrb[0].mxu0
        %1481 = vmatprep.mubr.bf16.mxu0 0
        %1482 = vmatmul.mubr.bf16.gmra.mrb[0].mxu0 %v846
        %v1483 = vpop.f32.mrb[0].mxu0
        %v1484 = vadd.f32 0.0, %v1483
        %v1485 = vpop.f32.mrb[0].mxu0
        %v1486 = vpop.f32.mrb[0].mxu0
        %v1487 = vadd.f32 0.0, %v1486
        %v1488 = vpop.f32.mrb[0].mxu0
        %1489 = vmatprep.mubr.bf16.mxu0 0
        %1490 = vmatmul.mubr.bf16.gmra.mrb[0].mxu0 %v847
        %v1491 = vpop.f32.mrb[0].mxu0
        %v1492 = vadd.f32 0.0, %v1491
        %v1493 = vpop.f32.mrb[0].mxu0
        %v1494 = vpop.f32.mrb[0].mxu0
        %v1495 = vadd.f32 0.0, %v1494
        %v1496 = vpop.f32.mrb[0].mxu0
        %1497 = vmatprep.mubr.bf16.mxu0 0
        %1498 = vmatmul.mubr.bf16.gmra.mrb[0].mxu0 %v848
        %v1499 = vpop.f32.mrb[0].mxu0
        %v1500 = vadd.f32 0.0, %v1499
        %v1501 = vpop.f32.mrb[0].mxu0
        %v1502 = vpop.f32.mrb[0].mxu0
        %v1503 = vadd.f32 0.0, %v1502
        %v1504 = vpop.f32.mrb[0].mxu0
        %1505 = vdwg.mxu0
        %v1506 = vpack.c.bf16 %v999, %v996
        %v1507 = vpack.c.bf16 %v1007, %v1004
        %v1508 = vpack.c.bf16 %v1015, %v1012
        %v1509 = vpack.c.bf16 %v1023, %v1020
        %v1510 = vpack.c.bf16 %v1031, %v1028
        %v1511 = vpack.c.bf16 %v1039, %v1036
        %v1512 = vpack.c.bf16 %v1047, %v1044
        %v1513 = vpack.c.bf16 %v1055, %v1052
        %v1514 = vpack.c.bf16 %v1063, %v1060
        %v1515 = vpack.c.bf16 %v1071, %v1068
        %v1516 = vpack.c.bf16 %v1079, %v1076
        %v1517 = vpack.c.bf16 %v1087, %v1084
        %v1518 = vpack.c.bf16 %v1095, %v1092
        %v1519 = vpack.c.bf16 %v1103, %v1100
        %v1520 = vpack.c.bf16 %v1111, %v1108
        %v1521 = vpack.c.bf16 %v1119, %v1116
        %v1522 = vpack.c.bf16 %v1127, %v1124
        %v1523 = vpack.c.bf16 %v1135, %v1132
        %v1524 = vpack.c.bf16 %v1143, %v1140
        %v1525 = vpack.c.bf16 %v1151, %v1148
        %v1526 = vpack.c.bf16 %v1159, %v1156
        %v1527 = vpack.c.bf16 %v1167, %v1164
        %v1528 = vpack.c.bf16 %v1175, %v1172
        %v1529 = vpack.c.bf16 %v1183, %v1180
        %v1530 = vpack.c.bf16 %v1191, %v1188
        %v1531 = vpack.c.bf16 %v1199, %v1196
        %v1532 = vpack.c.bf16 %v1207, %v1204
        %v1533 = vpack.c.bf16 %v1215, %v1212
        %v1534 = vpack.c.bf16 %v1223, %v1220
        %v1535 = vpack.c.bf16 %v1231, %v1228
        %v1536 = vpack.c.bf16 %v1239, %v1236
        %v1537 = vpack.c.bf16 %v1247, %v1244
        %v1538 = vpack.c.bf16 %v1255, %v1252
        %v1539 = vpack.c.bf16 %v1263, %v1260
        %v1540 = vpack.c.bf16 %v1271, %v1268
        %v1541 = vpack.c.bf16 %v1279, %v1276
        %v1542 = vpack.c.bf16 %v1287, %v1284
        %v1543 = vpack.c.bf16 %v1295, %v1292
        %v1544 = vpack.c.bf16 %v1303, %v1300
        %v1545 = vpack.c.bf16 %v1311, %v1308
        %v1546 = vpack.c.bf16 %v1319, %v1316
        %v1547 = vpack.c.bf16 %v1327, %v1324
        %v1548 = vpack.c.bf16 %v1335, %v1332
        %v1549 = vpack.c.bf16 %v1343, %v1340
        %v1550 = vpack.c.bf16 %v1351, %v1348
        %v1551 = vpack.c.bf16 %v1359, %v1356
        %v1552 = vpack.c.bf16 %v1367, %v1364
        %v1553 = vpack.c.bf16 %v1375, %v1372
        %v1554 = vpack.c.bf16 %v1383, %v1380
        %v1555 = vpack.c.bf16 %v1391, %v1388
        %v1556 = vpack.c.bf16 %v1399, %v1396
        %v1557 = vpack.c.bf16 %v1407, %v1404
        %v1558 = vpack.c.bf16 %v1415, %v1412
        %v1559 = vpack.c.bf16 %v1423, %v1420
        %v1560 = vpack.c.bf16 %v1431, %v1428
        %v1561 = vpack.c.bf16 %v1439, %v1436
        %v1562 = vpack.c.bf16 %v1447, %v1444
        %v1563 = vpack.c.bf16 %v1455, %v1452
        %v1564 = vpack.c.bf16 %v1463, %v1460
        %v1565 = vpack.c.bf16 %v1471, %v1468
        %v1566 = vpack.c.bf16 %v1479, %v1476
        %v1567 = vpack.c.bf16 %v1487, %v1484
        %v1568 = vpack.c.bf16 %v1495, %v1492
        %v1569 = vpack.c.bf16 %v1503, %v1500
        %v1570 = vld [vmem:[#allocation7] sm:$0xf]
        %v1571 = vld [vmem:[#allocation7 + $0x4] sm:$0xf]
        %v1572 = vld [vmem:[#allocation7 + $0x8] sm:$0xf]
        %v1573 = vld [vmem:[#allocation7 + $0xc] sm:$0xf]
        %v1574 = vld [vmem:[#allocation7 + $0x10] sm:$0xf]
        %v1575 = vld [vmem:[#allocation7 + $0x14] sm:$0xf]
        %v1576 = vld [vmem:[#allocation7 + $0x18] sm:$0xf]
        %v1577 = vld [vmem:[#allocation7 + $0x1c] sm:$0xf]
        %v1578 = vld [vmem:[#allocation7 + $0x20] sm:$0xf]
        %v1579 = vld [vmem:[#allocation7 + $0x24] sm:$0xf]
        %v1580 = vld [vmem:[#allocation7 + $0x28] sm:$0xf]
        %v1581 = vld [vmem:[#allocation7 + $0x2c] sm:$0xf]
        %v1582 = vld [vmem:[#allocation7 + $0x30] sm:$0xf]
        %v1583 = vld [vmem:[#allocation7 + $0x34] sm:$0xf]
        %v1584 = vld [vmem:[#allocation7 + $0x38] sm:$0xf]
        %v1585 = vld [vmem:[#allocation7 + $0x3c] sm:$0xf]
        %v1586 = vld [vmem:[%s3] sm:$0x1]
        %v1588 = vlaneseq
        %v1589 = vshrl.u32 %v1588, 7
        %v1590 = vsub.s32 0, %v1589
        %v1591 = vrot.slane %v1586, %v1590
        %v1609 = vunpack.c.l.b16 %v1570
        %v1610 = vunpack.c.l.b16 %v1571
        %v1611 = vunpack.c.l.b16 %v1572
        %v1612 = vunpack.c.l.b16 %v1573
        %v1613 = vunpack.c.l.b16 %v1574
        %v1614 = vunpack.c.l.b16 %v1575
        %v1615 = vunpack.c.l.b16 %v1576
        %v1616 = vunpack.c.l.b16 %v1577
        %v1617 = vunpack.c.l.b16 %v1578
        %v1618 = vunpack.c.l.b16 %v1579
        %v1619 = vunpack.c.l.b16 %v1580
        %v1620 = vunpack.c.l.b16 %v1581
        %v1621 = vunpack.c.l.b16 %v1582
        %v1622 = vunpack.c.l.b16 %v1583
        %v1623 = vunpack.c.l.b16 %v1584
        %v1624 = vunpack.c.l.b16 %v1585
        %v1625 = vpack.c.b16 %v1610, %v1609
        %v1626 = vpack.c.b16 %v1612, %v1611
        %v1627 = vpack.c.b16 %v1614, %v1613
        %v1628 = vpack.c.b16 %v1616, %v1615
        %v1629 = vpack.c.b16 %v1618, %v1617
        %v1630 = vpack.c.b16 %v1620, %v1619
        %v1631 = vpack.c.b16 %v1622, %v1621
        %v1632 = vpack.c.b16 %v1624, %v1623
        %1641 = vmatprep.subr.bf16.mxu0 0
        %1642 = vmatpush1.bf16.msra.mxu0 %v1625
        %1643 = vmatprep.subr.bf16.mxu0 0
        %1644 = vmatpush1.bf16.msra.mxu0 %v1626
        %1645 = vmatprep.subr.bf16.mxu0 0
        %1646 = vmatpush1.bf16.msra.mxu0 %v1627
        %1647 = vmatprep.subr.bf16.mxu0 0
        %1648 = vmatpush1.bf16.msra.mxu0 %v1628
        %1649 = vmatprep.subr.bf16.mxu0 0
        %1650 = vmatpush1.bf16.msra.mxu0 %v1629
        %1651 = vmatprep.subr.bf16.mxu0 0
        %1652 = vmatpush1.bf16.msra.mxu0 %v1630
        %1653 = vmatprep.subr.bf16.mxu0 0
        %1654 = vmatpush1.bf16.msra.mxu0 %v1631
        %1655 = vmatprep.subr.bf16.mxu0 0
        %1656 = vmatpush1.bf16.msra.mxu0 %v1632
        %1657 = vmatprep.subr.bf16.mxu0 0
        %1658 = vmatpush1.bf16.msra.mxu0 0
        %1659 = vmatprep.subr.bf16.mxu0 0
        %1660 = vmatpush1.bf16.msra.mxu0 0
        %1661 = vmatprep.subr.bf16.mxu0 0
        %1662 = vmatpush1.bf16.msra.mxu0 0
        %1663 = vmatprep.subr.bf16.mxu0 0
        %1664 = vmatpush1.bf16.msra.mxu0 0
        %1665 = vmatprep.subr.bf16.mxu0 0
        %1666 = vmatpush1.bf16.msra.mxu0 0
        %1667 = vmatprep.subr.bf16.mxu0 0
        %1668 = vmatpush1.bf16.msra.mxu0 0
        %1669 = vmatprep.subr.bf16.mxu0 0
        %1670 = vmatpush1.bf16.msra.mxu0 0
        %1671 = vmatprep.subr.bf16.mxu0 0
        %1672 = vmatpush1.bf16.msra.mxu0 0
        %1673 = vmatprep.mubr.bf16.mxu0 0
        %1674 = vmatmul.mubr.bf16.gmra.mrb[0].mxu0 %v1506
        %v1675 = vpop.f32.mrb[0].mxu0
        %v1676 = vadd.f32 %v1591, %v1675
        %v1677 = vpop.f32.mrb[0].mxu0
        %v1678 = vpop.f32.mrb[0].mxu0
        %v1679 = vadd.f32 %v1591, %v1678
        %v1680 = vpop.f32.mrb[0].mxu0
        %1681 = vmatprep.mubr.bf16.mxu0 0
        %1682 = vmatmul.mubr.bf16.gmra.mrb[0].mxu0 %v1507
        %v1683 = vpop.f32.mrb[0].mxu0
        %v1684 = vadd.f32 %v1591, %v1683
        %v1685 = vpop.f32.mrb[0].mxu0
        %v1686 = vpop.f32.mrb[0].mxu0
        %v1687 = vadd.f32 %v1591, %v1686
        %v1688 = vpop.f32.mrb[0].mxu0
        %1689 = vmatprep.mubr.bf16.mxu0 0
        %1690 = vmatmul.mubr.bf16.gmra.mrb[0].mxu0 %v1508
        %v1691 = vpop.f32.mrb[0].mxu0
        %v1692 = vadd.f32 %v1591, %v1691
        %v1693 = vpop.f32.mrb[0].mxu0
        %v1694 = vpop.f32.mrb[0].mxu0
        %v1695 = vadd.f32 %v1591, %v1694
        %v1696 = vpop.f32.mrb[0].mxu0
        %1697 = vmatprep.mubr.bf16.mxu0 0
        %1698 = vmatmul.mubr.bf16.gmra.mrb[0].mxu0 %v1509
        %v1699 = vpop.f32.mrb[0].mxu0
        %v1700 = vadd.f32 %v1591, %v1699
        %v1701 = vpop.f32.mrb[0].mxu0
        %v1702 = vpop.f32.mrb[0].mxu0
        %v1703 = vadd.f32 %v1591, %v1702
        %v1704 = vpop.f32.mrb[0].mxu0
        %1705 = vmatprep.mubr.bf16.mxu0 0
        %1706 = vmatmul.mubr.bf16.gmra.mrb[0].mxu0 %v1510
        %v1707 = vpop.f32.mrb[0].mxu0
        %v1708 = vadd.f32 %v1591, %v1707
        %v1709 = vpop.f32.mrb[0].mxu0
        %v1710 = vpop.f32.mrb[0].mxu0
        %v1711 = vadd.f32 %v1591, %v1710
        %v1712 = vpop.f32.mrb[0].mxu0
        %1713 = vmatprep.mubr.bf16.mxu0 0
        %1714 = vmatmul.mubr.bf16.gmra.mrb[0].mxu0 %v1511
        %v1715 = vpop.f32.mrb[0].mxu0
        %v1716 = vadd.f32 %v1591, %v1715
        %v1717 = vpop.f32.mrb[0].mxu0
        %v1718 = vpop.f32.mrb[0].mxu0
        %v1719 = vadd.f32 %v1591, %v1718
        %v1720 = vpop.f32.mrb[0].mxu0
        %1721 = vmatprep.mubr.bf16.mxu0 0
        %1722 = vmatmul.mubr.bf16.gmra.mrb[0].mxu0 %v1512
        %v1723 = vpop.f32.mrb[0].mxu0
        %v1724 = vadd.f32 %v1591, %v1723
        %v1725 = vpop.f32.mrb[0].mxu0
        %v1726 = vpop.f32.mrb[0].mxu0
        %v1727 = vadd.f32 %v1591, %v1726
        %v1728 = vpop.f32.mrb[0].mxu0
        %1729 = vmatprep.mubr.bf16.mxu0 0
        %1730 = vmatmul.mubr.bf16.gmra.mrb[0].mxu0 %v1513
        %v1731 = vpop.f32.mrb[0].mxu0
        %v1732 = vadd.f32 %v1591, %v1731
        %v1733 = vpop.f32.mrb[0].mxu0
        %v1734 = vpop.f32.mrb[0].mxu0
        %v1735 = vadd.f32 %v1591, %v1734
        %v1736 = vpop.f32.mrb[0].mxu0
        %1737 = vmatprep.mubr.bf16.mxu0 0
        %1738 = vmatmul.mubr.bf16.gmra.mrb[0].mxu0 %v1514
        %v1739 = vpop.f32.mrb[0].mxu0
        %v1740 = vadd.f32 %v1591, %v1739
        %v1741 = vpop.f32.mrb[0].mxu0
        %v1742 = vpop.f32.mrb[0].mxu0
        %v1743 = vadd.f32 %v1591, %v1742
        %v1744 = vpop.f32.mrb[0].mxu0
        %1745 = vmatprep.mubr.bf16.mxu0 0
        %1746 = vmatmul.mubr.bf16.gmra.mrb[0].mxu0 %v1515
        %v1747 = vpop.f32.mrb[0].mxu0
        %v1748 = vadd.f32 %v1591, %v1747
        %v1749 = vpop.f32.mrb[0].mxu0
        %v1750 = vpop.f32.mrb[0].mxu0
        %v1751 = vadd.f32 %v1591, %v1750
        %v1752 = vpop.f32.mrb[0].mxu0
        %1753 = vmatprep.mubr.bf16.mxu0 0
        %1754 = vmatmul.mubr.bf16.gmra.mrb[0].mxu0 %v1516
        %v1755 = vpop.f32.mrb[0].mxu0
        %v1756 = vadd.f32 %v1591, %v1755
        %v1757 = vpop.f32.mrb[0].mxu0
        %v1758 = vpop.f32.mrb[0].mxu0
        %v1759 = vadd.f32 %v1591, %v1758
        %v1760 = vpop.f32.mrb[0].mxu0
        %1761 = vmatprep.mubr.bf16.mxu0 0
        %1762 = vmatmul.mubr.bf16.gmra.mrb[0].mxu0 %v1517
        %v1763 = vpop.f32.mrb[0].mxu0
        %v1764 = vadd.f32 %v1591, %v1763
        %v1765 = vpop.f32.mrb[0].mxu0
        %v1766 = vpop.f32.mrb[0].mxu0
        %v1767 = vadd.f32 %v1591, %v1766
        %v1768 = vpop.f32.mrb[0].mxu0
        %1769 = vmatprep.mubr.bf16.mxu0 0
        %1770 = vmatmul.mubr.bf16.gmra.mrb[0].mxu0 %v1518
        %v1771 = vpop.f32.mrb[0].mxu0
        %v1772 = vadd.f32 %v1591, %v1771
        %v1773 = vpop.f32.mrb[0].mxu0
        %v1774 = vpop.f32.mrb[0].mxu0
        %v1775 = vadd.f32 %v1591, %v1774
        %v1776 = vpop.f32.mrb[0].mxu0
        %1777 = vmatprep.mubr.bf16.mxu0 0
        %1778 = vmatmul.mubr.bf16.gmra.mrb[0].mxu0 %v1519
        %v1779 = vpop.f32.mrb[0].mxu0
        %v1780 = vadd.f32 %v1591, %v1779
        %v1781 = vpop.f32.mrb[0].mxu0
        %v1782 = vpop.f32.mrb[0].mxu0
        %v1783 = vadd.f32 %v1591, %v1782
        %v1784 = vpop.f32.mrb[0].mxu0
        %1785 = vmatprep.mubr.bf16.mxu0 0
        %1786 = vmatmul.mubr.bf16.gmra.mrb[0].mxu0 %v1520
        %v1787 = vpop.f32.mrb[0].mxu0
        %v1788 = vadd.f32 %v1591, %v1787
        %v1789 = vpop.f32.mrb[0].mxu0
        %v1790 = vpop.f32.mrb[0].mxu0
        %v1791 = vadd.f32 %v1591, %v1790
        %v1792 = vpop.f32.mrb[0].mxu0
        %1793 = vmatprep.mubr.bf16.mxu0 0
        %1794 = vmatmul.mubr.bf16.gmra.mrb[0].mxu0 %v1521
        %v1795 = vpop.f32.mrb[0].mxu0
        %v1796 = vadd.f32 %v1591, %v1795
        %v1797 = vpop.f32.mrb[0].mxu0
        %v1798 = vpop.f32.mrb[0].mxu0
        %v1799 = vadd.f32 %v1591, %v1798
        %v1800 = vpop.f32.mrb[0].mxu0
        %1801 = vmatprep.mubr.bf16.mxu0 0
        %1802 = vmatmul.mubr.bf16.gmra.mrb[0].mxu0 %v1522
        %v1803 = vpop.f32.mrb[0].mxu0
        %v1804 = vadd.f32 %v1591, %v1803
        %v1805 = vpop.f32.mrb[0].mxu0
        %v1806 = vpop.f32.mrb[0].mxu0
        %v1807 = vadd.f32 %v1591, %v1806
        %v1808 = vpop.f32.mrb[0].mxu0
        %1809 = vmatprep.mubr.bf16.mxu0 0
        %1810 = vmatmul.mubr.bf16.gmra.mrb[0].mxu0 %v1523
        %v1811 = vpop.f32.mrb[0].mxu0
        %v1812 = vadd.f32 %v1591, %v1811
        %v1813 = vpop.f32.mrb[0].mxu0
        %v1814 = vpop.f32.mrb[0].mxu0
        %v1815 = vadd.f32 %v1591, %v1814
        %v1816 = vpop.f32.mrb[0].mxu0
        %1817 = vmatprep.mubr.bf16.mxu0 0
        %1818 = vmatmul.mubr.bf16.gmra.mrb[0].mxu0 %v1524
        %v1819 = vpop.f32.mrb[0].mxu0
        %v1820 = vadd.f32 %v1591, %v1819
        %v1821 = vpop.f32.mrb[0].mxu0
        %v1822 = vpop.f32.mrb[0].mxu0
        %v1823 = vadd.f32 %v1591, %v1822
        %v1824 = vpop.f32.mrb[0].mxu0
        %1825 = vmatprep.mubr.bf16.mxu0 0
        %1826 = vmatmul.mubr.bf16.gmra.mrb[0].mxu0 %v1525
        %v1827 = vpop.f32.mrb[0].mxu0
        %v1828 = vadd.f32 %v1591, %v1827
        %v1829 = vpop.f32.mrb[0].mxu0
        %v1830 = vpop.f32.mrb[0].mxu0
        %v1831 = vadd.f32 %v1591, %v1830
        %v1832 = vpop.f32.mrb[0].mxu0
        %1833 = vmatprep.mubr.bf16.mxu0 0
        %1834 = vmatmul.mubr.bf16.gmra.mrb[0].mxu0 %v1526
        %v1835 = vpop.f32.mrb[0].mxu0
        %v1836 = vadd.f32 %v1591, %v1835
        %v1837 = vpop.f32.mrb[0].mxu0
        %v1838 = vpop.f32.mrb[0].mxu0
        %v1839 = vadd.f32 %v1591, %v1838
        %v1840 = vpop.f32.mrb[0].mxu0
        %1841 = vmatprep.mubr.bf16.mxu0 0
        %1842 = vmatmul.mubr.bf16.gmra.mrb[0].mxu0 %v1527
        %v1843 = vpop.f32.mrb[0].mxu0
        %v1844 = vadd.f32 %v1591, %v1843
        %v1845 = vpop.f32.mrb[0].mxu0
        %v1846 = vpop.f32.mrb[0].mxu0
        %v1847 = vadd.f32 %v1591, %v1846
        %v1848 = vpop.f32.mrb[0].mxu0
        %1849 = vmatprep.mubr.bf16.mxu0 0
        %1850 = vmatmul.mubr.bf16.gmra.mrb[0].mxu0 %v1528
        %v1851 = vpop.f32.mrb[0].mxu0
        %v1852 = vadd.f32 %v1591, %v1851
        %v1853 = vpop.f32.mrb[0].mxu0
        %v1854 = vpop.f32.mrb[0].mxu0
        %v1855 = vadd.f32 %v1591, %v1854
        %v1856 = vpop.f32.mrb[0].mxu0
        %1857 = vmatprep.mubr.bf16.mxu0 0
        %1858 = vmatmul.mubr.bf16.gmra.mrb[0].mxu0 %v1529
        %v1859 = vpop.f32.mrb[0].mxu0
        %v1860 = vadd.f32 %v1591, %v1859
        %v1861 = vpop.f32.mrb[0].mxu0
        %v1862 = vpop.f32.mrb[0].mxu0
        %v1863 = vadd.f32 %v1591, %v1862
        %v1864 = vpop.f32.mrb[0].mxu0
        %1865 = vmatprep.mubr.bf16.mxu0 0
        %1866 = vmatmul.mubr.bf16.gmra.mrb[0].mxu0 %v1530
        %v1867 = vpop.f32.mrb[0].mxu0
        %v1868 = vadd.f32 %v1591, %v1867
        %v1869 = vpop.f32.mrb[0].mxu0
        %v1870 = vpop.f32.mrb[0].mxu0
        %v1871 = vadd.f32 %v1591, %v1870
        %v1872 = vpop.f32.mrb[0].mxu0
        %1873 = vmatprep.mubr.bf16.mxu0 0
        %1874 = vmatmul.mubr.bf16.gmra.mrb[0].mxu0 %v1531
        %v1875 = vpop.f32.mrb[0].mxu0
        %v1876 = vadd.f32 %v1591, %v1875
        %v1877 = vpop.f32.mrb[0].mxu0
        %v1878 = vpop.f32.mrb[0].mxu0
        %v1879 = vadd.f32 %v1591, %v1878
        %v1880 = vpop.f32.mrb[0].mxu0
        %1881 = vmatprep.mubr.bf16.mxu0 0
        %1882 = vmatmul.mubr.bf16.gmra.mrb[0].mxu0 %v1532
        %v1883 = vpop.f32.mrb[0].mxu0
        %v1884 = vadd.f32 %v1591, %v1883
        %v1885 = vpop.f32.mrb[0].mxu0
        %v1886 = vpop.f32.mrb[0].mxu0
        %v1887 = vadd.f32 %v1591, %v1886
        %v1888 = vpop.f32.mrb[0].mxu0
        %1889 = vmatprep.mubr.bf16.mxu0 0
        %1890 = vmatmul.mubr.bf16.gmra.mrb[0].mxu0 %v1533
        %v1891 = vpop.f32.mrb[0].mxu0
        %v1892 = vadd.f32 %v1591, %v1891
        %v1893 = vpop.f32.mrb[0].mxu0
        %v1894 = vpop.f32.mrb[0].mxu0
        %v1895 = vadd.f32 %v1591, %v1894
        %v1896 = vpop.f32.mrb[0].mxu0
        %1897 = vmatprep.mubr.bf16.mxu0 0
        %1898 = vmatmul.mubr.bf16.gmra.mrb[0].mxu0 %v1534
        %v1899 = vpop.f32.mrb[0].mxu0
        %v1900 = vadd.f32 %v1591, %v1899
        %v1901 = vpop.f32.mrb[0].mxu0
        %v1902 = vpop.f32.mrb[0].mxu0
        %v1903 = vadd.f32 %v1591, %v1902
        %v1904 = vpop.f32.mrb[0].mxu0
        %1905 = vmatprep.mubr.bf16.mxu0 0
        %1906 = vmatmul.mubr.bf16.gmra.mrb[0].mxu0 %v1535
        %v1907 = vpop.f32.mrb[0].mxu0
        %v1908 = vadd.f32 %v1591, %v1907
        %v1909 = vpop.f32.mrb[0].mxu0
        %v1910 = vpop.f32.mrb[0].mxu0
        %v1911 = vadd.f32 %v1591, %v1910
        %v1912 = vpop.f32.mrb[0].mxu0
        %1913 = vmatprep.mubr.bf16.mxu0 0
        %1914 = vmatmul.mubr.bf16.gmra.mrb[0].mxu0 %v1536
        %v1915 = vpop.f32.mrb[0].mxu0
        %v1916 = vadd.f32 %v1591, %v1915
        %v1917 = vpop.f32.mrb[0].mxu0
        %v1918 = vpop.f32.mrb[0].mxu0
        %v1919 = vadd.f32 %v1591, %v1918
        %v1920 = vpop.f32.mrb[0].mxu0
        %1921 = vmatprep.mubr.bf16.mxu0 0
        %1922 = vmatmul.mubr.bf16.gmra.mrb[0].mxu0 %v1537
        %v1923 = vpop.f32.mrb[0].mxu0
        %v1924 = vadd.f32 %v1591, %v1923
        %v1925 = vpop.f32.mrb[0].mxu0
        %v1926 = vpop.f32.mrb[0].mxu0
        %v1927 = vadd.f32 %v1591, %v1926
        %v1928 = vpop.f32.mrb[0].mxu0
        %1929 = vmatprep.mubr.bf16.mxu0 0
        %1930 = vmatmul.mubr.bf16.gmra.mrb[0].mxu0 %v1538
        %v1931 = vpop.f32.mrb[0].mxu0
        %v1932 = vadd.f32 %v1591, %v1931
        %v1933 = vpop.f32.mrb[0].mxu0
        %v1934 = vpop.f32.mrb[0].mxu0
        %v1935 = vadd.f32 %v1591, %v1934
        %v1936 = vpop.f32.mrb[0].mxu0
        %1937 = vmatprep.mubr.bf16.mxu0 0
        %1938 = vmatmul.mubr.bf16.gmra.mrb[0].mxu0 %v1539
        %v1939 = vpop.f32.mrb[0].mxu0
        %v1940 = vadd.f32 %v1591, %v1939
        %v1941 = vpop.f32.mrb[0].mxu0
        %v1942 = vpop.f32.mrb[0].mxu0
        %v1943 = vadd.f32 %v1591, %v1942
        %v1944 = vpop.f32.mrb[0].mxu0
        %1945 = vmatprep.mubr.bf16.mxu0 0
        %1946 = vmatmul.mubr.bf16.gmra.mrb[0].mxu0 %v1540
        %v1947 = vpop.f32.mrb[0].mxu0
        %v1948 = vadd.f32 %v1591, %v1947
        %v1949 = vpop.f32.mrb[0].mxu0
        %v1950 = vpop.f32.mrb[0].mxu0
        %v1951 = vadd.f32 %v1591, %v1950
        %v1952 = vpop.f32.mrb[0].mxu0
        %1953 = vmatprep.mubr.bf16.mxu0 0
        %1954 = vmatmul.mubr.bf16.gmra.mrb[0].mxu0 %v1541
        %v1955 = vpop.f32.mrb[0].mxu0
        %v1956 = vadd.f32 %v1591, %v1955
        %v1957 = vpop.f32.mrb[0].mxu0
        %v1958 = vpop.f32.mrb[0].mxu0
        %v1959 = vadd.f32 %v1591, %v1958
        %v1960 = vpop.f32.mrb[0].mxu0
        %1961 = vmatprep.mubr.bf16.mxu0 0
        %1962 = vmatmul.mubr.bf16.gmra.mrb[0].mxu0 %v1542
        %v1963 = vpop.f32.mrb[0].mxu0
        %v1964 = vadd.f32 %v1591, %v1963
        %v1965 = vpop.f32.mrb[0].mxu0
        %v1966 = vpop.f32.mrb[0].mxu0
        %v1967 = vadd.f32 %v1591, %v1966
        %v1968 = vpop.f32.mrb[0].mxu0
        %1969 = vmatprep.mubr.bf16.mxu0 0
        %1970 = vmatmul.mubr.bf16.gmra.mrb[0].mxu0 %v1543
        %v1971 = vpop.f32.mrb[0].mxu0
        %v1972 = vadd.f32 %v1591, %v1971
        %v1973 = vpop.f32.mrb[0].mxu0
        %v1974 = vpop.f32.mrb[0].mxu0
        %v1975 = vadd.f32 %v1591, %v1974
        %v1976 = vpop.f32.mrb[0].mxu0
        %1977 = vmatprep.mubr.bf16.mxu0 0
        %1978 = vmatmul.mubr.bf16.gmra.mrb[0].mxu0 %v1544
        %v1979 = vpop.f32.mrb[0].mxu0
        %v1980 = vadd.f32 %v1591, %v1979
        %v1981 = vpop.f32.mrb[0].mxu0
        %v1982 = vpop.f32.mrb[0].mxu0
        %v1983 = vadd.f32 %v1591, %v1982
        %v1984 = vpop.f32.mrb[0].mxu0
        %1985 = vmatprep.mubr.bf16.mxu0 0
        %1986 = vmatmul.mubr.bf16.gmra.mrb[0].mxu0 %v1545
        %v1987 = vpop.f32.mrb[0].mxu0
        %v1988 = vadd.f32 %v1591, %v1987
        %v1989 = vpop.f32.mrb[0].mxu0
        %v1990 = vpop.f32.mrb[0].mxu0
        %v1991 = vadd.f32 %v1591, %v1990
        %v1992 = vpop.f32.mrb[0].mxu0
        %1993 = vmatprep.mubr.bf16.mxu0 0
        %1994 = vmatmul.mubr.bf16.gmra.mrb[0].mxu0 %v1546
        %v1995 = vpop.f32.mrb[0].mxu0
        %v1996 = vadd.f32 %v1591, %v1995
        %v1997 = vpop.f32.mrb[0].mxu0
        %v1998 = vpop.f32.mrb[0].mxu0
        %v1999 = vadd.f32 %v1591, %v1998
        %v2000 = vpop.f32.mrb[0].mxu0
        %2001 = vmatprep.mubr.bf16.mxu0 0
        %2002 = vmatmul.mubr.bf16.gmra.mrb[0].mxu0 %v1547
        %v2003 = vpop.f32.mrb[0].mxu0
        %v2004 = vadd.f32 %v1591, %v2003
        %v2005 = vpop.f32.mrb[0].mxu0
        %v2006 = vpop.f32.mrb[0].mxu0
        %v2007 = vadd.f32 %v1591, %v2006
        %v2008 = vpop.f32.mrb[0].mxu0
        %2009 = vmatprep.mubr.bf16.mxu0 0
        %2010 = vmatmul.mubr.bf16.gmra.mrb[0].mxu0 %v1548
        %v2011 = vpop.f32.mrb[0].mxu0
        %v2012 = vadd.f32 %v1591, %v2011
        %v2013 = vpop.f32.mrb[0].mxu0
        %v2014 = vpop.f32.mrb[0].mxu0
        %v2015 = vadd.f32 %v1591, %v2014
        %v2016 = vpop.f32.mrb[0].mxu0
        %2017 = vmatprep.mubr.bf16.mxu0 0
        %2018 = vmatmul.mubr.bf16.gmra.mrb[0].mxu0 %v1549
        %v2019 = vpop.f32.mrb[0].mxu0
        %v2020 = vadd.f32 %v1591, %v2019
        %v2021 = vpop.f32.mrb[0].mxu0
        %v2022 = vpop.f32.mrb[0].mxu0
        %v2023 = vadd.f32 %v1591, %v2022
        %v2024 = vpop.f32.mrb[0].mxu0
        %2025 = vmatprep.mubr.bf16.mxu0 0
        %2026 = vmatmul.mubr.bf16.gmra.mrb[0].mxu0 %v1550
        %v2027 = vpop.f32.mrb[0].mxu0
        %v2028 = vadd.f32 %v1591, %v2027
        %v2029 = vpop.f32.mrb[0].mxu0
        %v2030 = vpop.f32.mrb[0].mxu0
        %v2031 = vadd.f32 %v1591, %v2030
        %v2032 = vpop.f32.mrb[0].mxu0
        %2033 = vmatprep.mubr.bf16.mxu0 0
        %2034 = vmatmul.mubr.bf16.gmra.mrb[0].mxu0 %v1551
        %v2035 = vpop.f32.mrb[0].mxu0
        %v2036 = vadd.f32 %v1591, %v2035
        %v2037 = vpop.f32.mrb[0].mxu0
        %v2038 = vpop.f32.mrb[0].mxu0
        %v2039 = vadd.f32 %v1591, %v2038
        %v2040 = vpop.f32.mrb[0].mxu0
        %2041 = vmatprep.mubr.bf16.mxu0 0
        %2042 = vmatmul.mubr.bf16.gmra.mrb[0].mxu0 %v1552
        %v2043 = vpop.f32.mrb[0].mxu0
        %v2044 = vadd.f32 %v1591, %v2043
        %v2045 = vpop.f32.mrb[0].mxu0
        %v2046 = vpop.f32.mrb[0].mxu0
        %v2047 = vadd.f32 %v1591, %v2046
        %v2048 = vpop.f32.mrb[0].mxu0
        %2049 = vmatprep.mubr.bf16.mxu0 0
        %2050 = vmatmul.mubr.bf16.gmra.mrb[0].mxu0 %v1553
        %v2051 = vpop.f32.mrb[0].mxu0
        %v2052 = vadd.f32 %v1591, %v2051
        %v2053 = vpop.f32.mrb[0].mxu0
        %v2054 = vpop.f32.mrb[0].mxu0
        %v2055 = vadd.f32 %v1591, %v2054
        %v2056 = vpop.f32.mrb[0].mxu0
        %2057 = vmatprep.mubr.bf16.mxu0 0
        %2058 = vmatmul.mubr.bf16.gmra.mrb[0].mxu0 %v1554
        %v2059 = vpop.f32.mrb[0].mxu0
        %v2060 = vadd.f32 %v1591, %v2059
        %v2061 = vpop.f32.mrb[0].mxu0
        %v2062 = vpop.f32.mrb[0].mxu0
        %v2063 = vadd.f32 %v1591, %v2062
        %v2064 = vpop.f32.mrb[0].mxu0
        %2065 = vmatprep.mubr.bf16.mxu0 0
        %2066 = vmatmul.mubr.bf16.gmra.mrb[0].mxu0 %v1555
        %v2067 = vpop.f32.mrb[0].mxu0
        %v2068 = vadd.f32 %v1591, %v2067
        %v2069 = vpop.f32.mrb[0].mxu0
        %v2070 = vpop.f32.mrb[0].mxu0
        %v2071 = vadd.f32 %v1591, %v2070
        %v2072 = vpop.f32.mrb[0].mxu0
        %2073 = vmatprep.mubr.bf16.mxu0 0
        %2074 = vmatmul.mubr.bf16.gmra.mrb[0].mxu0 %v1556
        %v2075 = vpop.f32.mrb[0].mxu0
        %v2076 = vadd.f32 %v1591, %v2075
        %v2077 = vpop.f32.mrb[0].mxu0
        %v2078 = vpop.f32.mrb[0].mxu0
        %v2079 = vadd.f32 %v1591, %v2078
        %v2080 = vpop.f32.mrb[0].mxu0
        %2081 = vmatprep.mubr.bf16.mxu0 0
        %2082 = vmatmul.mubr.bf16.gmra.mrb[0].mxu0 %v1557
        %v2083 = vpop.f32.mrb[0].mxu0
        %v2084 = vadd.f32 %v1591, %v2083
        %v2085 = vpop.f32.mrb[0].mxu0
        %v2086 = vpop.f32.mrb[0].mxu0
        %v2087 = vadd.f32 %v1591, %v2086
        %v2088 = vpop.f32.mrb[0].mxu0
        %2089 = vmatprep.mubr.bf16.mxu0 0
        %2090 = vmatmul.mubr.bf16.gmra.mrb[0].mxu0 %v1558
        %v2091 = vpop.f32.mrb[0].mxu0
        %v2092 = vadd.f32 %v1591, %v2091
        %v2093 = vpop.f32.mrb[0].mxu0
        %v2094 = vpop.f32.mrb[0].mxu0
        %v2095 = vadd.f32 %v1591, %v2094
        %v2096 = vpop.f32.mrb[0].mxu0
        %2097 = vmatprep.mubr.bf16.mxu0 0
        %2098 = vmatmul.mubr.bf16.gmra.mrb[0].mxu0 %v1559
        %v2099 = vpop.f32.mrb[0].mxu0
        %v2100 = vadd.f32 %v1591, %v2099
        %v2101 = vpop.f32.mrb[0].mxu0
        %v2102 = vpop.f32.mrb[0].mxu0
        %v2103 = vadd.f32 %v1591, %v2102
        %v2104 = vpop.f32.mrb[0].mxu0
        %2105 = vmatprep.mubr.bf16.mxu0 0
        %2106 = vmatmul.mubr.bf16.gmra.mrb[0].mxu0 %v1560
        %v2107 = vpop.f32.mrb[0].mxu0
        %v2108 = vadd.f32 %v1591, %v2107
        %v2109 = vpop.f32.mrb[0].mxu0
        %v2110 = vpop.f32.mrb[0].mxu0
        %v2111 = vadd.f32 %v1591, %v2110
        %v2112 = vpop.f32.mrb[0].mxu0
        %2113 = vmatprep.mubr.bf16.mxu0 0
        %2114 = vmatmul.mubr.bf16.gmra.mrb[0].mxu0 %v1561
        %v2115 = vpop.f32.mrb[0].mxu0
        %v2116 = vadd.f32 %v1591, %v2115
        %v2117 = vpop.f32.mrb[0].mxu0
        %v2118 = vpop.f32.mrb[0].mxu0
        %v2119 = vadd.f32 %v1591, %v2118
        %v2120 = vpop.f32.mrb[0].mxu0
        %2121 = vmatprep.mubr.bf16.mxu0 0
        %2122 = vmatmul.mubr.bf16.gmra.mrb[0].mxu0 %v1562
        %v2123 = vpop.f32.mrb[0].mxu0
        %v2124 = vadd.f32 %v1591, %v2123
        %v2125 = vpop.f32.mrb[0].mxu0
        %v2126 = vpop.f32.mrb[0].mxu0
        %v2127 = vadd.f32 %v1591, %v2126
        %v2128 = vpop.f32.mrb[0].mxu0
        %2129 = vmatprep.mubr.bf16.mxu0 0
        %2130 = vmatmul.mubr.bf16.gmra.mrb[0].mxu0 %v1563
        %v2131 = vpop.f32.mrb[0].mxu0
        %v2132 = vadd.f32 %v1591, %v2131
        %v2133 = vpop.f32.mrb[0].mxu0
        %v2134 = vpop.f32.mrb[0].mxu0
        %v2135 = vadd.f32 %v1591, %v2134
        %v2136 = vpop.f32.mrb[0].mxu0
        %2137 = vmatprep.mubr.bf16.mxu0 0
        %2138 = vmatmul.mubr.bf16.gmra.mrb[0].mxu0 %v1564
        %v2139 = vpop.f32.mrb[0].mxu0
        %v2140 = vadd.f32 %v1591, %v2139
        %v2141 = vpop.f32.mrb[0].mxu0
        %v2142 = vpop.f32.mrb[0].mxu0
        %v2143 = vadd.f32 %v1591, %v2142
        %v2144 = vpop.f32.mrb[0].mxu0
        %2145 = vmatprep.mubr.bf16.mxu0 0
        %2146 = vmatmul.mubr.bf16.gmra.mrb[0].mxu0 %v1565
        %v2147 = vpop.f32.mrb[0].mxu0
        %v2148 = vadd.f32 %v1591, %v2147
        %v2149 = vpop.f32.mrb[0].mxu0
        %v2150 = vpop.f32.mrb[0].mxu0
        %v2151 = vadd.f32 %v1591, %v2150
        %v2152 = vpop.f32.mrb[0].mxu0
        %2153 = vmatprep.mubr.bf16.mxu0 0
        %2154 = vmatmul.mubr.bf16.gmra.mrb[0].mxu0 %v1566
        %v2155 = vpop.f32.mrb[0].mxu0
        %v2156 = vadd.f32 %v1591, %v2155
        %v2157 = vpop.f32.mrb[0].mxu0
        %v2158 = vpop.f32.mrb[0].mxu0
        %v2159 = vadd.f32 %v1591, %v2158
        %v2160 = vpop.f32.mrb[0].mxu0
        %2161 = vmatprep.mubr.bf16.mxu0 0
        %2162 = vmatmul.mubr.bf16.gmra.mrb[0].mxu0 %v1567
        %v2163 = vpop.f32.mrb[0].mxu0
        %v2164 = vadd.f32 %v1591, %v2163
        %v2165 = vpop.f32.mrb[0].mxu0
        %v2166 = vpop.f32.mrb[0].mxu0
        %v2167 = vadd.f32 %v1591, %v2166
        %v2168 = vpop.f32.mrb[0].mxu0
        %2169 = vmatprep.mubr.bf16.mxu0 0
        %2170 = vmatmul.mubr.bf16.gmra.mrb[0].mxu0 %v1568
        %v2171 = vpop.f32.mrb[0].mxu0
        %v2172 = vadd.f32 %v1591, %v2171
        %v2173 = vpop.f32.mrb[0].mxu0
        %v2174 = vpop.f32.mrb[0].mxu0
        %v2175 = vadd.f32 %v1591, %v2174
        %v2176 = vpop.f32.mrb[0].mxu0
        %2177 = vmatprep.mubr.bf16.mxu0 0
        %2178 = vmatmul.mubr.bf16.gmra.mrb[0].mxu0 %v1569
        %v2179 = vpop.f32.mrb[0].mxu0
        %v2180 = vadd.f32 %v1591, %v2179
        %v2181 = vpop.f32.mrb[0].mxu0
        %v2182 = vpop.f32.mrb[0].mxu0
        %v2183 = vadd.f32 %v1591, %v2182
        %v2184 = vpop.f32.mrb[0].mxu0
        %2185 = vdwg.mxu0
        %v2186 = vmax.f32 %v1676, 0.0
        %v2187 = vmax.f32 %v1679, 0.0
        %v2188 = vmax.f32 %v1684, 0.0
        %v2189 = vmax.f32 %v1687, 0.0
        %v2190 = vmax.f32 %v1692, 0.0
        %v2191 = vmax.f32 %v1695, 0.0
        %v2192 = vmax.f32 %v1700, 0.0
        %v2193 = vmax.f32 %v1703, 0.0
        %v2194 = vmax.f32 %v1708, 0.0
        %v2195 = vmax.f32 %v1711, 0.0
        %v2196 = vmax.f32 %v1716, 0.0
        %v2197 = vmax.f32 %v1719, 0.0
        %v2198 = vmax.f32 %v1724, 0.0
        %v2199 = vmax.f32 %v1727, 0.0
        %v2200 = vmax.f32 %v1732, 0.0
        %v2201 = vmax.f32 %v1735, 0.0
        %v2202 = vmax.f32 %v1740, 0.0
        %v2203 = vmax.f32 %v1743, 0.0
        %v2204 = vmax.f32 %v1748, 0.0
        %v2205 = vmax.f32 %v1751, 0.0
        %v2206 = vmax.f32 %v1756, 0.0
        %v2207 = vmax.f32 %v1759, 0.0
        %v2208 = vmax.f32 %v1764, 0.0
        %v2209 = vmax.f32 %v1767, 0.0
        %v2210 = vmax.f32 %v1772, 0.0
        %v2211 = vmax.f32 %v1775, 0.0
        %v2212 = vmax.f32 %v1780, 0.0
        %v2213 = vmax.f32 %v1783, 0.0
        %v2214 = vmax.f32 %v1788, 0.0
        %v2215 = vmax.f32 %v1791, 0.0
        %v2216 = vmax.f32 %v1796, 0.0
        %v2217 = vmax.f32 %v1799, 0.0
        %v2218 = vmax.f32 %v1804, 0.0
        %v2219 = vmax.f32 %v1807, 0.0
        %v2220 = vmax.f32 %v1812, 0.0
        %v2221 = vmax.f32 %v1815, 0.0
        %v2222 = vmax.f32 %v1820, 0.0
        %v2223 = vmax.f32 %v1823, 0.0
        %v2224 = vmax.f32 %v1828, 0.0
        %v2225 = vmax.f32 %v1831, 0.0
        %v2226 = vmax.f32 %v1836, 0.0
        %v2227 = vmax.f32 %v1839, 0.0
        %v2228 = vmax.f32 %v1844, 0.0
        %v2229 = vmax.f32 %v1847, 0.0
        %v2230 = vmax.f32 %v1852, 0.0
        %v2231 = vmax.f32 %v1855, 0.0
        %v2232 = vmax.f32 %v1860, 0.0
        %v2233 = vmax.f32 %v1863, 0.0
        %v2234 = vmax.f32 %v1868, 0.0
        %v2235 = vmax.f32 %v1871, 0.0
        %v2236 = vmax.f32 %v1876, 0.0
        %v2237 = vmax.f32 %v1879, 0.0
        %v2238 = vmax.f32 %v1884, 0.0
        %v2239 = vmax.f32 %v1887, 0.0
        %v2240 = vmax.f32 %v1892, 0.0
        %v2241 = vmax.f32 %v1895, 0.0
        %v2242 = vmax.f32 %v1900, 0.0
        %v2243 = vmax.f32 %v1903, 0.0
        %v2244 = vmax.f32 %v1908, 0.0
        %v2245 = vmax.f32 %v1911, 0.0
        %v2246 = vmax.f32 %v1916, 0.0
        %v2247 = vmax.f32 %v1919, 0.0
        %v2248 = vmax.f32 %v1924, 0.0
        %v2249 = vmax.f32 %v1927, 0.0
        %v2250 = vmax.f32 %v1932, 0.0
        %v2251 = vmax.f32 %v1935, 0.0
        %v2252 = vmax.f32 %v1940, 0.0
        %v2253 = vmax.f32 %v1943, 0.0
        %v2254 = vmax.f32 %v1948, 0.0
        %v2255 = vmax.f32 %v1951, 0.0
        %v2256 = vmax.f32 %v1956, 0.0
        %v2257 = vmax.f32 %v1959, 0.0
        %v2258 = vmax.f32 %v1964, 0.0
        %v2259 = vmax.f32 %v1967, 0.0
        %v2260 = vmax.f32 %v1972, 0.0
        %v2261 = vmax.f32 %v1975, 0.0
        %v2262 = vmax.f32 %v1980, 0.0
        %v2263 = vmax.f32 %v1983, 0.0
        %v2264 = vmax.f32 %v1988, 0.0
        %v2265 = vmax.f32 %v1991, 0.0
        %v2266 = vmax.f32 %v1996, 0.0
        %v2267 = vmax.f32 %v1999, 0.0
        %v2268 = vmax.f32 %v2004, 0.0
        %v2269 = vmax.f32 %v2007, 0.0
        %v2270 = vmax.f32 %v2012, 0.0
        %v2271 = vmax.f32 %v2015, 0.0
        %v2272 = vmax.f32 %v2020, 0.0
        %v2273 = vmax.f32 %v2023, 0.0
        %v2274 = vmax.f32 %v2028, 0.0
        %v2275 = vmax.f32 %v2031, 0.0
        %v2276 = vmax.f32 %v2036, 0.0
        %v2277 = vmax.f32 %v2039, 0.0
        %v2278 = vmax.f32 %v2044, 0.0
        %v2279 = vmax.f32 %v2047, 0.0
        %v2280 = vmax.f32 %v2052, 0.0
        %v2281 = vmax.f32 %v2055, 0.0
        %v2282 = vmax.f32 %v2060, 0.0
        %v2283 = vmax.f32 %v2063, 0.0
        %v2284 = vmax.f32 %v2068, 0.0
        %v2285 = vmax.f32 %v2071, 0.0
        %v2286 = vmax.f32 %v2076, 0.0
        %v2287 = vmax.f32 %v2079, 0.0
        %v2288 = vmax.f32 %v2084, 0.0
        %v2289 = vmax.f32 %v2087, 0.0
        %v2290 = vmax.f32 %v2092, 0.0
        %v2291 = vmax.f32 %v2095, 0.0
        %v2292 = vmax.f32 %v2100, 0.0
        %v2293 = vmax.f32 %v2103, 0.0
        %v2294 = vmax.f32 %v2108, 0.0
        %v2295 = vmax.f32 %v2111, 0.0
        %v2296 = vmax.f32 %v2116, 0.0
        %v2297 = vmax.f32 %v2119, 0.0
        %v2298 = vmax.f32 %v2124, 0.0
        %v2299 = vmax.f32 %v2127, 0.0
        %v2300 = vmax.f32 %v2132, 0.0
        %v2301 = vmax.f32 %v2135, 0.0
        %v2302 = vmax.f32 %v2140, 0.0
        %v2303 = vmax.f32 %v2143, 0.0
        %v2304 = vmax.f32 %v2148, 0.0
        %v2305 = vmax.f32 %v2151, 0.0
        %v2306 = vmax.f32 %v2156, 0.0
        %v2307 = vmax.f32 %v2159, 0.0
        %v2308 = vmax.f32 %v2164, 0.0
        %v2309 = vmax.f32 %v2167, 0.0
        %v2310 = vmax.f32 %v2172, 0.0
        %v2311 = vmax.f32 %v2175, 0.0
        %v2312 = vmax.f32 %v2180, 0.0
        %v2313 = vmax.f32 %v2183, 0.0
        %v2314 = vpack.c.bf16 %v2187, %v2186
        %v2315 = vpack.c.bf16 %v2189, %v2188
        %v2316 = vpack.c.bf16 %v2191, %v2190
        %v2317 = vpack.c.bf16 %v2193, %v2192
        %v2318 = vpack.c.bf16 %v2195, %v2194
        %v2319 = vpack.c.bf16 %v2197, %v2196
        %v2320 = vpack.c.bf16 %v2199, %v2198
        %v2321 = vpack.c.bf16 %v2201, %v2200
        %v2322 = vpack.c.bf16 %v2203, %v2202
        %v2323 = vpack.c.bf16 %v2205, %v2204
        %v2324 = vpack.c.bf16 %v2207, %v2206
        %v2325 = vpack.c.bf16 %v2209, %v2208
        %v2326 = vpack.c.bf16 %v2211, %v2210
        %v2327 = vpack.c.bf16 %v2213, %v2212
        %v2328 = vpack.c.bf16 %v2215, %v2214
        %v2329 = vpack.c.bf16 %v2217, %v2216
        %v2330 = vpack.c.bf16 %v2219, %v2218
        %v2331 = vpack.c.bf16 %v2221, %v2220
        %v2332 = vpack.c.bf16 %v2223, %v2222
        %v2333 = vpack.c.bf16 %v2225, %v2224
        %v2334 = vpack.c.bf16 %v2227, %v2226
        %v2335 = vpack.c.bf16 %v2229, %v2228
        %v2336 = vpack.c.bf16 %v2231, %v2230
        %v2337 = vpack.c.bf16 %v2233, %v2232
        %v2338 = vpack.c.bf16 %v2235, %v2234
        %v2339 = vpack.c.bf16 %v2237, %v2236
        %v2340 = vpack.c.bf16 %v2239, %v2238
        %v2341 = vpack.c.bf16 %v2241, %v2240
        %v2342 = vpack.c.bf16 %v2243, %v2242
        %v2343 = vpack.c.bf16 %v2245, %v2244
        %v2344 = vpack.c.bf16 %v2247, %v2246
        %v2345 = vpack.c.bf16 %v2249, %v2248
        %v2346 = vpack.c.bf16 %v2251, %v2250
        %v2347 = vpack.c.bf16 %v2253, %v2252
        %v2348 = vpack.c.bf16 %v2255, %v2254
        %v2349 = vpack.c.bf16 %v2257, %v2256
        %v2350 = vpack.c.bf16 %v2259, %v2258
        %v2351 = vpack.c.bf16 %v2261, %v2260
        %v2352 = vpack.c.bf16 %v2263, %v2262
        %v2353 = vpack.c.bf16 %v2265, %v2264
        %v2354 = vpack.c.bf16 %v2267, %v2266
        %v2355 = vpack.c.bf16 %v2269, %v2268
        %v2356 = vpack.c.bf16 %v2271, %v2270
        %v2357 = vpack.c.bf16 %v2273, %v2272
        %v2358 = vpack.c.bf16 %v2275, %v2274
        %v2359 = vpack.c.bf16 %v2277, %v2276
        %v2360 = vpack.c.bf16 %v2279, %v2278
        %v2361 = vpack.c.bf16 %v2281, %v2280
        %v2362 = vpack.c.bf16 %v2283, %v2282
        %v2363 = vpack.c.bf16 %v2285, %v2284
        %v2364 = vpack.c.bf16 %v2287, %v2286
        %v2365 = vpack.c.bf16 %v2289, %v2288
        %v2366 = vpack.c.bf16 %v2291, %v2290
        %v2367 = vpack.c.bf16 %v2293, %v2292
        %v2368 = vpack.c.bf16 %v2295, %v2294
        %v2369 = vpack.c.bf16 %v2297, %v2296
        %v2370 = vpack.c.bf16 %v2299, %v2298
        %v2371 = vpack.c.bf16 %v2301, %v2300
        %v2372 = vpack.c.bf16 %v2303, %v2302
        %v2373 = vpack.c.bf16 %v2305, %v2304
        %v2374 = vpack.c.bf16 %v2307, %v2306
        %v2375 = vpack.c.bf16 %v2309, %v2308
        %v2376 = vpack.c.bf16 %v2311, %v2310
        %v2377 = vpack.c.bf16 %v2313, %v2312
        %v2378 = vld [vmem:[#allocation8] sm:$0xf]
        %v2379 = vld [vmem:[#allocation8 + $0x4] sm:$0xf]
        %v2380 = vld [vmem:[#allocation8 + $0x8] sm:$0xf]
        %v2381 = vld [vmem:[#allocation8 + $0xc] sm:$0xf]
        %v2382 = vld [vmem:[#allocation8 + $0x10] sm:$0xf]
        %v2383 = vld [vmem:[#allocation8 + $0x14] sm:$0xf]
        %v2384 = vld [vmem:[#allocation8 + $0x18] sm:$0xf]
        %v2385 = vld [vmem:[#allocation8 + $0x1c] sm:$0xf]
        %v2386 = vld [vmem:[#allocation8 + $0x20] sm:$0xf]
        %v2387 = vld [vmem:[#allocation8 + $0x24] sm:$0xf]
        %v2388 = vld [vmem:[#allocation8 + $0x28] sm:$0xf]
        %v2389 = vld [vmem:[#allocation8 + $0x2c] sm:$0xf]
        %v2390 = vld [vmem:[#allocation8 + $0x30] sm:$0xf]
        %v2391 = vld [vmem:[#allocation8 + $0x34] sm:$0xf]
        %v2392 = vld [vmem:[#allocation8 + $0x38] sm:$0xf]
        %v2393 = vld [vmem:[#allocation8 + $0x3c] sm:$0xf]
        %v2394 = vld [vmem:[%s5] sm:$0x1]
        %v2396 = vlaneseq
        %v2397 = vshrl.u32 %v2396, 7
        %v2398 = vsub.s32 0, %v2397
        %v2399 = vrot.slane %v2394, %v2398
        %v2417 = vunpack.c.l.b16 %v2378
        %v2418 = vunpack.c.l.b16 %v2379
        %v2419 = vunpack.c.l.b16 %v2380
        %v2420 = vunpack.c.l.b16 %v2381
        %v2421 = vunpack.c.l.b16 %v2382
        %v2422 = vunpack.c.l.b16 %v2383
        %v2423 = vunpack.c.l.b16 %v2384
        %v2424 = vunpack.c.l.b16 %v2385
        %v2425 = vunpack.c.l.b16 %v2386
        %v2426 = vunpack.c.l.b16 %v2387
        %v2427 = vunpack.c.l.b16 %v2388
        %v2428 = vunpack.c.l.b16 %v2389
        %v2429 = vunpack.c.l.b16 %v2390
        %v2430 = vunpack.c.l.b16 %v2391
        %v2431 = vunpack.c.l.b16 %v2392
        %v2432 = vunpack.c.l.b16 %v2393
        %v2433 = vpack.c.b16 %v2418, %v2417
        %v2434 = vpack.c.b16 %v2420, %v2419
        %v2435 = vpack.c.b16 %v2422, %v2421
        %v2436 = vpack.c.b16 %v2424, %v2423
        %v2437 = vpack.c.b16 %v2426, %v2425
        %v2438 = vpack.c.b16 %v2428, %v2427
        %v2439 = vpack.c.b16 %v2430, %v2429
        %v2440 = vpack.c.b16 %v2432, %v2431
        %2449 = vmatprep.subr.bf16.mxu0 0
        %2450 = vmatpush1.bf16.msra.mxu0 %v2433
        %2451 = vmatprep.subr.bf16.mxu0 0
        %2452 = vmatpush1.bf16.msra.mxu0 %v2434
        %2453 = vmatprep.subr.bf16.mxu0 0
        %2454 = vmatpush1.bf16.msra.mxu0 %v2435
        %2455 = vmatprep.subr.bf16.mxu0 0
        %2456 = vmatpush1.bf16.msra.mxu0 %v2436
        %2457 = vmatprep.subr.bf16.mxu0 0
        %2458 = vmatpush1.bf16.msra.mxu0 %v2437
        %2459 = vmatprep.subr.bf16.mxu0 0
        %2460 = vmatpush1.bf16.msra.mxu0 %v2438
        %2461 = vmatprep.subr.bf16.mxu0 0
        %2462 = vmatpush1.bf16.msra.mxu0 %v2439
        %2463 = vmatprep.subr.bf16.mxu0 0
        %2464 = vmatpush1.bf16.msra.mxu0 %v2440
        %2465 = vmatprep.subr.bf16.mxu0 0
        %2466 = vmatpush1.bf16.msra.mxu0 0
        %2467 = vmatprep.subr.bf16.mxu0 0
        %2468 = vmatpush1.bf16.msra.mxu0 0
        %2469 = vmatprep.subr.bf16.mxu0 0
        %2470 = vmatpush1.bf16.msra.mxu0 0
        %2471 = vmatprep.subr.bf16.mxu0 0
        %2472 = vmatpush1.bf16.msra.mxu0 0
        %2473 = vmatprep.subr.bf16.mxu0 0
        %2474 = vmatpush1.bf16.msra.mxu0 0
        %2475 = vmatprep.subr.bf16.mxu0 0
        %2476 = vmatpush1.bf16.msra.mxu0 0
        %2477 = vmatprep.subr.bf16.mxu0 0
        %2478 = vmatpush1.bf16.msra.mxu0 0
        %2479 = vmatprep.subr.bf16.mxu0 0
        %2480 = vmatpush1.bf16.msra.mxu0 0
        %2481 = vmatprep.mubr.bf16.mxu0 0
        %2482 = vmatmul.mubr.bf16.gmra.mrb[0].mxu0 %v2314
        %v2483 = vpop.f32.mrb[0].mxu0
        %v2484 = vadd.f32 %v2399, %v2483
        %v2485 = vpop.f32.mrb[0].mxu0
        %v2486 = vpop.f32.mrb[0].mxu0
        %v2487 = vadd.f32 %v2399, %v2486
        %v2488 = vpop.f32.mrb[0].mxu0
        %2489 = vmatprep.mubr.bf16.mxu0 0
        %2490 = vmatmul.mubr.bf16.gmra.mrb[0].mxu0 %v2315
        %v2491 = vpop.f32.mrb[0].mxu0
        %v2492 = vadd.f32 %v2399, %v2491
        %v2493 = vpop.f32.mrb[0].mxu0
        %v2494 = vpop.f32.mrb[0].mxu0
        %v2495 = vadd.f32 %v2399, %v2494
        %v2496 = vpop.f32.mrb[0].mxu0
        %2497 = vmatprep.mubr.bf16.mxu0 0
        %2498 = vmatmul.mubr.bf16.gmra.mrb[0].mxu0 %v2316
        %v2499 = vpop.f32.mrb[0].mxu0
        %v2500 = vadd.f32 %v2399, %v2499
        %v2501 = vpop.f32.mrb[0].mxu0
        %v2502 = vpop.f32.mrb[0].mxu0
        %v2503 = vadd.f32 %v2399, %v2502
        %v2504 = vpop.f32.mrb[0].mxu0
        %2505 = vmatprep.mubr.bf16.mxu0 0
        %2506 = vmatmul.mubr.bf16.gmra.mrb[0].mxu0 %v2317
        %v2507 = vpop.f32.mrb[0].mxu0
        %v2508 = vadd.f32 %v2399, %v2507
        %v2509 = vpop.f32.mrb[0].mxu0
        %v2510 = vpop.f32.mrb[0].mxu0
        %v2511 = vadd.f32 %v2399, %v2510
        %v2512 = vpop.f32.mrb[0].mxu0
        %2513 = vmatprep.mubr.bf16.mxu0 0
        %2514 = vmatmul.mubr.bf16.gmra.mrb[0].mxu0 %v2318
        %v2515 = vpop.f32.mrb[0].mxu0
        %v2516 = vadd.f32 %v2399, %v2515
        %v2517 = vpop.f32.mrb[0].mxu0
        %v2518 = vpop.f32.mrb[0].mxu0
        %v2519 = vadd.f32 %v2399, %v2518
        %v2520 = vpop.f32.mrb[0].mxu0
        %2521 = vmatprep.mubr.bf16.mxu0 0
        %2522 = vmatmul.mubr.bf16.gmra.mrb[0].mxu0 %v2319
        %v2523 = vpop.f32.mrb[0].mxu0
        %v2524 = vadd.f32 %v2399, %v2523
        %v2525 = vpop.f32.mrb[0].mxu0
        %v2526 = vpop.f32.mrb[0].mxu0
        %v2527 = vadd.f32 %v2399, %v2526
        %v2528 = vpop.f32.mrb[0].mxu0
        %2529 = vmatprep.mubr.bf16.mxu0 0
        %2530 = vmatmul.mubr.bf16.gmra.mrb[0].mxu0 %v2320
        %v2531 = vpop.f32.mrb[0].mxu0
        %v2532 = vadd.f32 %v2399, %v2531
        %v2533 = vpop.f32.mrb[0].mxu0
        %v2534 = vpop.f32.mrb[0].mxu0
        %v2535 = vadd.f32 %v2399, %v2534
        %v2536 = vpop.f32.mrb[0].mxu0
        %2537 = vmatprep.mubr.bf16.mxu0 0
        %2538 = vmatmul.mubr.bf16.gmra.mrb[0].mxu0 %v2321
        %v2539 = vpop.f32.mrb[0].mxu0
        %v2540 = vadd.f32 %v2399, %v2539
        %v2541 = vpop.f32.mrb[0].mxu0
        %v2542 = vpop.f32.mrb[0].mxu0
        %v2543 = vadd.f32 %v2399, %v2542
        %v2544 = vpop.f32.mrb[0].mxu0
        %2545 = vmatprep.mubr.bf16.mxu0 0
        %2546 = vmatmul.mubr.bf16.gmra.mrb[0].mxu0 %v2322
        %v2547 = vpop.f32.mrb[0].mxu0
        %v2548 = vadd.f32 %v2399, %v2547
        %v2549 = vpop.f32.mrb[0].mxu0
        %v2550 = vpop.f32.mrb[0].mxu0
        %v2551 = vadd.f32 %v2399, %v2550
        %v2552 = vpop.f32.mrb[0].mxu0
        %2553 = vmatprep.mubr.bf16.mxu0 0
        %2554 = vmatmul.mubr.bf16.gmra.mrb[0].mxu0 %v2323
        %v2555 = vpop.f32.mrb[0].mxu0
        %v2556 = vadd.f32 %v2399, %v2555
        %v2557 = vpop.f32.mrb[0].mxu0
        %v2558 = vpop.f32.mrb[0].mxu0
        %v2559 = vadd.f32 %v2399, %v2558
        %v2560 = vpop.f32.mrb[0].mxu0
        %2561 = vmatprep.mubr.bf16.mxu0 0
        %2562 = vmatmul.mubr.bf16.gmra.mrb[0].mxu0 %v2324
        %v2563 = vpop.f32.mrb[0].mxu0
        %v2564 = vadd.f32 %v2399, %v2563
        %v2565 = vpop.f32.mrb[0].mxu0
        %v2566 = vpop.f32.mrb[0].mxu0
        %v2567 = vadd.f32 %v2399, %v2566
        %v2568 = vpop.f32.mrb[0].mxu0
        %2569 = vmatprep.mubr.bf16.mxu0 0
        %2570 = vmatmul.mubr.bf16.gmra.mrb[0].mxu0 %v2325
        %v2571 = vpop.f32.mrb[0].mxu0
        %v2572 = vadd.f32 %v2399, %v2571
        %v2573 = vpop.f32.mrb[0].mxu0
        %v2574 = vpop.f32.mrb[0].mxu0
        %v2575 = vadd.f32 %v2399, %v2574
        %v2576 = vpop.f32.mrb[0].mxu0
        %2577 = vmatprep.mubr.bf16.mxu0 0
        %2578 = vmatmul.mubr.bf16.gmra.mrb[0].mxu0 %v2326
        %v2579 = vpop.f32.mrb[0].mxu0
        %v2580 = vadd.f32 %v2399, %v2579
        %v2581 = vpop.f32.mrb[0].mxu0
        %v2582 = vpop.f32.mrb[0].mxu0
        %v2583 = vadd.f32 %v2399, %v2582
        %v2584 = vpop.f32.mrb[0].mxu0
        %2585 = vmatprep.mubr.bf16.mxu0 0
        %2586 = vmatmul.mubr.bf16.gmra.mrb[0].mxu0 %v2327
        %v2587 = vpop.f32.mrb[0].mxu0
        %v2588 = vadd.f32 %v2399, %v2587
        %v2589 = vpop.f32.mrb[0].mxu0
        %v2590 = vpop.f32.mrb[0].mxu0
        %v2591 = vadd.f32 %v2399, %v2590
        %v2592 = vpop.f32.mrb[0].mxu0
        %2593 = vmatprep.mubr.bf16.mxu0 0
        %2594 = vmatmul.mubr.bf16.gmra.mrb[0].mxu0 %v2328
        %v2595 = vpop.f32.mrb[0].mxu0
        %v2596 = vadd.f32 %v2399, %v2595
        %v2597 = vpop.f32.mrb[0].mxu0
        %v2598 = vpop.f32.mrb[0].mxu0
        %v2599 = vadd.f32 %v2399, %v2598
        %v2600 = vpop.f32.mrb[0].mxu0
        %2601 = vmatprep.mubr.bf16.mxu0 0
        %2602 = vmatmul.mubr.bf16.gmra.mrb[0].mxu0 %v2329
        %v2603 = vpop.f32.mrb[0].mxu0
        %v2604 = vadd.f32 %v2399, %v2603
        %v2605 = vpop.f32.mrb[0].mxu0
        %v2606 = vpop.f32.mrb[0].mxu0
        %v2607 = vadd.f32 %v2399, %v2606
        %v2608 = vpop.f32.mrb[0].mxu0
        %2609 = vmatprep.mubr.bf16.mxu0 0
        %2610 = vmatmul.mubr.bf16.gmra.mrb[0].mxu0 %v2330
        %v2611 = vpop.f32.mrb[0].mxu0
        %v2612 = vadd.f32 %v2399, %v2611
        %v2613 = vpop.f32.mrb[0].mxu0
        %v2614 = vpop.f32.mrb[0].mxu0
        %v2615 = vadd.f32 %v2399, %v2614
        %v2616 = vpop.f32.mrb[0].mxu0
        %2617 = vmatprep.mubr.bf16.mxu0 0
        %2618 = vmatmul.mubr.bf16.gmra.mrb[0].mxu0 %v2331
        %v2619 = vpop.f32.mrb[0].mxu0
        %v2620 = vadd.f32 %v2399, %v2619
        %v2621 = vpop.f32.mrb[0].mxu0
        %v2622 = vpop.f32.mrb[0].mxu0
        %v2623 = vadd.f32 %v2399, %v2622
        %v2624 = vpop.f32.mrb[0].mxu0
        %2625 = vmatprep.mubr.bf16.mxu0 0
        %2626 = vmatmul.mubr.bf16.gmra.mrb[0].mxu0 %v2332
        %v2627 = vpop.f32.mrb[0].mxu0
        %v2628 = vadd.f32 %v2399, %v2627
        %v2629 = vpop.f32.mrb[0].mxu0
        %v2630 = vpop.f32.mrb[0].mxu0
        %v2631 = vadd.f32 %v2399, %v2630
        %v2632 = vpop.f32.mrb[0].mxu0
        %2633 = vmatprep.mubr.bf16.mxu0 0
        %2634 = vmatmul.mubr.bf16.gmra.mrb[0].mxu0 %v2333
        %v2635 = vpop.f32.mrb[0].mxu0
        %v2636 = vadd.f32 %v2399, %v2635
        %v2637 = vpop.f32.mrb[0].mxu0
        %v2638 = vpop.f32.mrb[0].mxu0
        %v2639 = vadd.f32 %v2399, %v2638
        %v2640 = vpop.f32.mrb[0].mxu0
        %2641 = vmatprep.mubr.bf16.mxu0 0
        %2642 = vmatmul.mubr.bf16.gmra.mrb[0].mxu0 %v2334
        %v2643 = vpop.f32.mrb[0].mxu0
        %v2644 = vadd.f32 %v2399, %v2643
        %v2645 = vpop.f32.mrb[0].mxu0
        %v2646 = vpop.f32.mrb[0].mxu0
        %v2647 = vadd.f32 %v2399, %v2646
        %v2648 = vpop.f32.mrb[0].mxu0
        %2649 = vmatprep.mubr.bf16.mxu0 0
        %2650 = vmatmul.mubr.bf16.gmra.mrb[0].mxu0 %v2335
        %v2651 = vpop.f32.mrb[0].mxu0
        %v2652 = vadd.f32 %v2399, %v2651
        %v2653 = vpop.f32.mrb[0].mxu0
        %v2654 = vpop.f32.mrb[0].mxu0
        %v2655 = vadd.f32 %v2399, %v2654
        %v2656 = vpop.f32.mrb[0].mxu0
        %2657 = vmatprep.mubr.bf16.mxu0 0
        %2658 = vmatmul.mubr.bf16.gmra.mrb[0].mxu0 %v2336
        %v2659 = vpop.f32.mrb[0].mxu0
        %v2660 = vadd.f32 %v2399, %v2659
        %v2661 = vpop.f32.mrb[0].mxu0
        %v2662 = vpop.f32.mrb[0].mxu0
        %v2663 = vadd.f32 %v2399, %v2662
        %v2664 = vpop.f32.mrb[0].mxu0
        %2665 = vmatprep.mubr.bf16.mxu0 0
        %2666 = vmatmul.mubr.bf16.gmra.mrb[0].mxu0 %v2337
        %v2667 = vpop.f32.mrb[0].mxu0
        %v2668 = vadd.f32 %v2399, %v2667
        %v2669 = vpop.f32.mrb[0].mxu0
        %v2670 = vpop.f32.mrb[0].mxu0
        %v2671 = vadd.f32 %v2399, %v2670
        %v2672 = vpop.f32.mrb[0].mxu0
        %2673 = vmatprep.mubr.bf16.mxu0 0
        %2674 = vmatmul.mubr.bf16.gmra.mrb[0].mxu0 %v2338
        %v2675 = vpop.f32.mrb[0].mxu0
        %v2676 = vadd.f32 %v2399, %v2675
        %v2677 = vpop.f32.mrb[0].mxu0
        %v2678 = vpop.f32.mrb[0].mxu0
        %v2679 = vadd.f32 %v2399, %v2678
        %v2680 = vpop.f32.mrb[0].mxu0
        %2681 = vmatprep.mubr.bf16.mxu0 0
        %2682 = vmatmul.mubr.bf16.gmra.mrb[0].mxu0 %v2339
        %v2683 = vpop.f32.mrb[0].mxu0
        %v2684 = vadd.f32 %v2399, %v2683
        %v2685 = vpop.f32.mrb[0].mxu0
        %v2686 = vpop.f32.mrb[0].mxu0
        %v2687 = vadd.f32 %v2399, %v2686
        %v2688 = vpop.f32.mrb[0].mxu0
        %2689 = vmatprep.mubr.bf16.mxu0 0
        %2690 = vmatmul.mubr.bf16.gmra.mrb[0].mxu0 %v2340
        %v2691 = vpop.f32.mrb[0].mxu0
        %v2692 = vadd.f32 %v2399, %v2691
        %v2693 = vpop.f32.mrb[0].mxu0
        %v2694 = vpop.f32.mrb[0].mxu0
        %v2695 = vadd.f32 %v2399, %v2694
        %v2696 = vpop.f32.mrb[0].mxu0
        %2697 = vmatprep.mubr.bf16.mxu0 0
        %2698 = vmatmul.mubr.bf16.gmra.mrb[0].mxu0 %v2341
        %v2699 = vpop.f32.mrb[0].mxu0
        %v2700 = vadd.f32 %v2399, %v2699
        %v2701 = vpop.f32.mrb[0].mxu0
        %v2702 = vpop.f32.mrb[0].mxu0
        %v2703 = vadd.f32 %v2399, %v2702
        %v2704 = vpop.f32.mrb[0].mxu0
        %2705 = vmatprep.mubr.bf16.mxu0 0
        %2706 = vmatmul.mubr.bf16.gmra.mrb[0].mxu0 %v2342
        %v2707 = vpop.f32.mrb[0].mxu0
        %v2708 = vadd.f32 %v2399, %v2707
        %v2709 = vpop.f32.mrb[0].mxu0
        %v2710 = vpop.f32.mrb[0].mxu0
        %v2711 = vadd.f32 %v2399, %v2710
        %v2712 = vpop.f32.mrb[0].mxu0
        %2713 = vmatprep.mubr.bf16.mxu0 0
        %2714 = vmatmul.mubr.bf16.gmra.mrb[0].mxu0 %v2343
        %v2715 = vpop.f32.mrb[0].mxu0
        %v2716 = vadd.f32 %v2399, %v2715
        %v2717 = vpop.f32.mrb[0].mxu0
        %v2718 = vpop.f32.mrb[0].mxu0
        %v2719 = vadd.f32 %v2399, %v2718
        %v2720 = vpop.f32.mrb[0].mxu0
        %2721 = vmatprep.mubr.bf16.mxu0 0
        %2722 = vmatmul.mubr.bf16.gmra.mrb[0].mxu0 %v2344
        %v2723 = vpop.f32.mrb[0].mxu0
        %v2724 = vadd.f32 %v2399, %v2723
        %v2725 = vpop.f32.mrb[0].mxu0
        %v2726 = vpop.f32.mrb[0].mxu0
        %v2727 = vadd.f32 %v2399, %v2726
        %v2728 = vpop.f32.mrb[0].mxu0
        %2729 = vmatprep.mubr.bf16.mxu0 0
        %2730 = vmatmul.mubr.bf16.gmra.mrb[0].mxu0 %v2345
        %v2731 = vpop.f32.mrb[0].mxu0
        %v2732 = vadd.f32 %v2399, %v2731
        %v2733 = vpop.f32.mrb[0].mxu0
        %v2734 = vpop.f32.mrb[0].mxu0
        %v2735 = vadd.f32 %v2399, %v2734
        %v2736 = vpop.f32.mrb[0].mxu0
        %2737 = vmatprep.mubr.bf16.mxu0 0
        %2738 = vmatmul.mubr.bf16.gmra.mrb[0].mxu0 %v2346
        %v2739 = vpop.f32.mrb[0].mxu0
        %v2740 = vadd.f32 %v2399, %v2739
        %v2741 = vpop.f32.mrb[0].mxu0
        %v2742 = vpop.f32.mrb[0].mxu0
        %v2743 = vadd.f32 %v2399, %v2742
        %v2744 = vpop.f32.mrb[0].mxu0
        %2745 = vmatprep.mubr.bf16.mxu0 0
        %2746 = vmatmul.mubr.bf16.gmra.mrb[0].mxu0 %v2347
        %v2747 = vpop.f32.mrb[0].mxu0
        %v2748 = vadd.f32 %v2399, %v2747
        %v2749 = vpop.f32.mrb[0].mxu0
        %v2750 = vpop.f32.mrb[0].mxu0
        %v2751 = vadd.f32 %v2399, %v2750
        %v2752 = vpop.f32.mrb[0].mxu0
        %2753 = vmatprep.mubr.bf16.mxu0 0
        %2754 = vmatmul.mubr.bf16.gmra.mrb[0].mxu0 %v2348
        %v2755 = vpop.f32.mrb[0].mxu0
        %v2756 = vadd.f32 %v2399, %v2755
        %v2757 = vpop.f32.mrb[0].mxu0
        %v2758 = vpop.f32.mrb[0].mxu0
        %v2759 = vadd.f32 %v2399, %v2758
        %v2760 = vpop.f32.mrb[0].mxu0
        %2761 = vmatprep.mubr.bf16.mxu0 0
        %2762 = vmatmul.mubr.bf16.gmra.mrb[0].mxu0 %v2349
        %v2763 = vpop.f32.mrb[0].mxu0
        %v2764 = vadd.f32 %v2399, %v2763
        %v2765 = vpop.f32.mrb[0].mxu0
        %v2766 = vpop.f32.mrb[0].mxu0
        %v2767 = vadd.f32 %v2399, %v2766
        %v2768 = vpop.f32.mrb[0].mxu0
        %2769 = vmatprep.mubr.bf16.mxu0 0
        %2770 = vmatmul.mubr.bf16.gmra.mrb[0].mxu0 %v2350
        %v2771 = vpop.f32.mrb[0].mxu0
        %v2772 = vadd.f32 %v2399, %v2771
        %v2773 = vpop.f32.mrb[0].mxu0
        %v2774 = vpop.f32.mrb[0].mxu0
        %v2775 = vadd.f32 %v2399, %v2774
        %v2776 = vpop.f32.mrb[0].mxu0
        %2777 = vmatprep.mubr.bf16.mxu0 0
        %2778 = vmatmul.mubr.bf16.gmra.mrb[0].mxu0 %v2351
        %v2779 = vpop.f32.mrb[0].mxu0
        %v2780 = vadd.f32 %v2399, %v2779
        %v2781 = vpop.f32.mrb[0].mxu0
        %v2782 = vpop.f32.mrb[0].mxu0
        %v2783 = vadd.f32 %v2399, %v2782
        %v2784 = vpop.f32.mrb[0].mxu0
        %2785 = vmatprep.mubr.bf16.mxu0 0
        %2786 = vmatmul.mubr.bf16.gmra.mrb[0].mxu0 %v2352
        %v2787 = vpop.f32.mrb[0].mxu0
        %v2788 = vadd.f32 %v2399, %v2787
        %v2789 = vpop.f32.mrb[0].mxu0
        %v2790 = vpop.f32.mrb[0].mxu0
        %v2791 = vadd.f32 %v2399, %v2790
        %v2792 = vpop.f32.mrb[0].mxu0
        %2793 = vmatprep.mubr.bf16.mxu0 0
        %2794 = vmatmul.mubr.bf16.gmra.mrb[0].mxu0 %v2353
        %v2795 = vpop.f32.mrb[0].mxu0
        %v2796 = vadd.f32 %v2399, %v2795
        %v2797 = vpop.f32.mrb[0].mxu0
        %v2798 = vpop.f32.mrb[0].mxu0
        %v2799 = vadd.f32 %v2399, %v2798
        %v2800 = vpop.f32.mrb[0].mxu0
        %2801 = vmatprep.mubr.bf16.mxu0 0
        %2802 = vmatmul.mubr.bf16.gmra.mrb[0].mxu0 %v2354
        %v2803 = vpop.f32.mrb[0].mxu0
        %v2804 = vadd.f32 %v2399, %v2803
        %v2805 = vpop.f32.mrb[0].mxu0
        %v2806 = vpop.f32.mrb[0].mxu0
        %v2807 = vadd.f32 %v2399, %v2806
        %v2808 = vpop.f32.mrb[0].mxu0
        %2809 = vmatprep.mubr.bf16.mxu0 0
        %2810 = vmatmul.mubr.bf16.gmra.mrb[0].mxu0 %v2355
        %v2811 = vpop.f32.mrb[0].mxu0
        %v2812 = vadd.f32 %v2399, %v2811
        %v2813 = vpop.f32.mrb[0].mxu0
        %v2814 = vpop.f32.mrb[0].mxu0
        %v2815 = vadd.f32 %v2399, %v2814
        %v2816 = vpop.f32.mrb[0].mxu0
        %2817 = vmatprep.mubr.bf16.mxu0 0
        %2818 = vmatmul.mubr.bf16.gmra.mrb[0].mxu0 %v2356
        %v2819 = vpop.f32.mrb[0].mxu0
        %v2820 = vadd.f32 %v2399, %v2819
        %v2821 = vpop.f32.mrb[0].mxu0
        %v2822 = vpop.f32.mrb[0].mxu0
        %v2823 = vadd.f32 %v2399, %v2822
        %v2824 = vpop.f32.mrb[0].mxu0
        %2825 = vmatprep.mubr.bf16.mxu0 0
        %2826 = vmatmul.mubr.bf16.gmra.mrb[0].mxu0 %v2357
        %v2827 = vpop.f32.mrb[0].mxu0
        %v2828 = vadd.f32 %v2399, %v2827
        %v2829 = vpop.f32.mrb[0].mxu0
        %v2830 = vpop.f32.mrb[0].mxu0
        %v2831 = vadd.f32 %v2399, %v2830
        %v2832 = vpop.f32.mrb[0].mxu0
        %2833 = vmatprep.mubr.bf16.mxu0 0
        %2834 = vmatmul.mubr.bf16.gmra.mrb[0].mxu0 %v2358
        %v2835 = vpop.f32.mrb[0].mxu0
        %v2836 = vadd.f32 %v2399, %v2835
        %v2837 = vpop.f32.mrb[0].mxu0
        %v2838 = vpop.f32.mrb[0].mxu0
        %v2839 = vadd.f32 %v2399, %v2838
        %v2840 = vpop.f32.mrb[0].mxu0
        %2841 = vmatprep.mubr.bf16.mxu0 0
        %2842 = vmatmul.mubr.bf16.gmra.mrb[0].mxu0 %v2359
        %v2843 = vpop.f32.mrb[0].mxu0
        %v2844 = vadd.f32 %v2399, %v2843
        %v2845 = vpop.f32.mrb[0].mxu0
        %v2846 = vpop.f32.mrb[0].mxu0
        %v2847 = vadd.f32 %v2399, %v2846
        %v2848 = vpop.f32.mrb[0].mxu0
        %2849 = vmatprep.mubr.bf16.mxu0 0
        %2850 = vmatmul.mubr.bf16.gmra.mrb[0].mxu0 %v2360
        %v2851 = vpop.f32.mrb[0].mxu0
        %v2852 = vadd.f32 %v2399, %v2851
        %v2853 = vpop.f32.mrb[0].mxu0
        %v2854 = vpop.f32.mrb[0].mxu0
        %v2855 = vadd.f32 %v2399, %v2854
        %v2856 = vpop.f32.mrb[0].mxu0
        %2857 = vmatprep.mubr.bf16.mxu0 0
        %2858 = vmatmul.mubr.bf16.gmra.mrb[0].mxu0 %v2361
        %v2859 = vpop.f32.mrb[0].mxu0
        %v2860 = vadd.f32 %v2399, %v2859
        %v2861 = vpop.f32.mrb[0].mxu0
        %v2862 = vpop.f32.mrb[0].mxu0
        %v2863 = vadd.f32 %v2399, %v2862
        %v2864 = vpop.f32.mrb[0].mxu0
        %2865 = vmatprep.mubr.bf16.mxu0 0
        %2866 = vmatmul.mubr.bf16.gmra.mrb[0].mxu0 %v2362
        %v2867 = vpop.f32.mrb[0].mxu0
        %v2868 = vadd.f32 %v2399, %v2867
        %v2869 = vpop.f32.mrb[0].mxu0
        %v2870 = vpop.f32.mrb[0].mxu0
        %v2871 = vadd.f32 %v2399, %v2870
        %v2872 = vpop.f32.mrb[0].mxu0
        %2873 = vmatprep.mubr.bf16.mxu0 0
        %2874 = vmatmul.mubr.bf16.gmra.mrb[0].mxu0 %v2363
        %v2875 = vpop.f32.mrb[0].mxu0
        %v2876 = vadd.f32 %v2399, %v2875
        %v2877 = vpop.f32.mrb[0].mxu0
        %v2878 = vpop.f32.mrb[0].mxu0
        %v2879 = vadd.f32 %v2399, %v2878
        %v2880 = vpop.f32.mrb[0].mxu0
        %2881 = vmatprep.mubr.bf16.mxu0 0
        %2882 = vmatmul.mubr.bf16.gmra.mrb[0].mxu0 %v2364
        %v2883 = vpop.f32.mrb[0].mxu0
        %v2884 = vadd.f32 %v2399, %v2883
        %v2885 = vpop.f32.mrb[0].mxu0
        %v2886 = vpop.f32.mrb[0].mxu0
        %v2887 = vadd.f32 %v2399, %v2886
        %v2888 = vpop.f32.mrb[0].mxu0
        %2889 = vmatprep.mubr.bf16.mxu0 0
        %2890 = vmatmul.mubr.bf16.gmra.mrb[0].mxu0 %v2365
        %v2891 = vpop.f32.mrb[0].mxu0
        %v2892 = vadd.f32 %v2399, %v2891
        %v2893 = vpop.f32.mrb[0].mxu0
        %v2894 = vpop.f32.mrb[0].mxu0
        %v2895 = vadd.f32 %v2399, %v2894
        %v2896 = vpop.f32.mrb[0].mxu0
        %2897 = vmatprep.mubr.bf16.mxu0 0
        %2898 = vmatmul.mubr.bf16.gmra.mrb[0].mxu0 %v2366
        %v2899 = vpop.f32.mrb[0].mxu0
        %v2900 = vadd.f32 %v2399, %v2899
        %v2901 = vpop.f32.mrb[0].mxu0
        %v2902 = vpop.f32.mrb[0].mxu0
        %v2903 = vadd.f32 %v2399, %v2902
        %v2904 = vpop.f32.mrb[0].mxu0
        %2905 = vmatprep.mubr.bf16.mxu0 0
        %2906 = vmatmul.mubr.bf16.gmra.mrb[0].mxu0 %v2367
        %v2907 = vpop.f32.mrb[0].mxu0
        %v2908 = vadd.f32 %v2399, %v2907
        %v2909 = vpop.f32.mrb[0].mxu0
        %v2910 = vpop.f32.mrb[0].mxu0
        %v2911 = vadd.f32 %v2399, %v2910
        %v2912 = vpop.f32.mrb[0].mxu0
        %2913 = vmatprep.mubr.bf16.mxu0 0
        %2914 = vmatmul.mubr.bf16.gmra.mrb[0].mxu0 %v2368
        %v2915 = vpop.f32.mrb[0].mxu0
        %v2916 = vadd.f32 %v2399, %v2915
        %v2917 = vpop.f32.mrb[0].mxu0
        %v2918 = vpop.f32.mrb[0].mxu0
        %v2919 = vadd.f32 %v2399, %v2918
        %v2920 = vpop.f32.mrb[0].mxu0
        %2921 = vmatprep.mubr.bf16.mxu0 0
        %2922 = vmatmul.mubr.bf16.gmra.mrb[0].mxu0 %v2369
        %v2923 = vpop.f32.mrb[0].mxu0
        %v2924 = vadd.f32 %v2399, %v2923
        %v2925 = vpop.f32.mrb[0].mxu0
        %v2926 = vpop.f32.mrb[0].mxu0
        %v2927 = vadd.f32 %v2399, %v2926
        %v2928 = vpop.f32.mrb[0].mxu0
        %2929 = vmatprep.mubr.bf16.mxu0 0
        %2930 = vmatmul.mubr.bf16.gmra.mrb[0].mxu0 %v2370
        %v2931 = vpop.f32.mrb[0].mxu0
        %v2932 = vadd.f32 %v2399, %v2931
        %v2933 = vpop.f32.mrb[0].mxu0
        %v2934 = vpop.f32.mrb[0].mxu0
        %v2935 = vadd.f32 %v2399, %v2934
        %v2936 = vpop.f32.mrb[0].mxu0
        %2937 = vmatprep.mubr.bf16.mxu0 0
        %2938 = vmatmul.mubr.bf16.gmra.mrb[0].mxu0 %v2371
        %v2939 = vpop.f32.mrb[0].mxu0
        %v2940 = vadd.f32 %v2399, %v2939
        %v2941 = vpop.f32.mrb[0].mxu0
        %v2942 = vpop.f32.mrb[0].mxu0
        %v2943 = vadd.f32 %v2399, %v2942
        %v2944 = vpop.f32.mrb[0].mxu0
        %2945 = vmatprep.mubr.bf16.mxu0 0
        %2946 = vmatmul.mubr.bf16.gmra.mrb[0].mxu0 %v2372
        %v2947 = vpop.f32.mrb[0].mxu0
        %v2948 = vadd.f32 %v2399, %v2947
        %v2949 = vpop.f32.mrb[0].mxu0
        %v2950 = vpop.f32.mrb[0].mxu0
        %v2951 = vadd.f32 %v2399, %v2950
        %v2952 = vpop.f32.mrb[0].mxu0
        %2953 = vmatprep.mubr.bf16.mxu0 0
        %2954 = vmatmul.mubr.bf16.gmra.mrb[0].mxu0 %v2373
        %v2955 = vpop.f32.mrb[0].mxu0
        %v2956 = vadd.f32 %v2399, %v2955
        %v2957 = vpop.f32.mrb[0].mxu0
        %v2958 = vpop.f32.mrb[0].mxu0
        %v2959 = vadd.f32 %v2399, %v2958
        %v2960 = vpop.f32.mrb[0].mxu0
        %2961 = vmatprep.mubr.bf16.mxu0 0
        %2962 = vmatmul.mubr.bf16.gmra.mrb[0].mxu0 %v2374
        %v2963 = vpop.f32.mrb[0].mxu0
        %v2964 = vadd.f32 %v2399, %v2963
        %v2965 = vpop.f32.mrb[0].mxu0
        %v2966 = vpop.f32.mrb[0].mxu0
        %v2967 = vadd.f32 %v2399, %v2966
        %v2968 = vpop.f32.mrb[0].mxu0
        %2969 = vmatprep.mubr.bf16.mxu0 0
        %2970 = vmatmul.mubr.bf16.gmra.mrb[0].mxu0 %v2375
        %v2971 = vpop.f32.mrb[0].mxu0
        %v2972 = vadd.f32 %v2399, %v2971
        %v2973 = vpop.f32.mrb[0].mxu0
        %v2974 = vpop.f32.mrb[0].mxu0
        %v2975 = vadd.f32 %v2399, %v2974
        %v2976 = vpop.f32.mrb[0].mxu0
        %2977 = vmatprep.mubr.bf16.mxu0 0
        %2978 = vmatmul.mubr.bf16.gmra.mrb[0].mxu0 %v2376
        %v2979 = vpop.f32.mrb[0].mxu0
        %v2980 = vadd.f32 %v2399, %v2979
        %v2981 = vpop.f32.mrb[0].mxu0
        %v2982 = vpop.f32.mrb[0].mxu0
        %v2983 = vadd.f32 %v2399, %v2982
        %v2984 = vpop.f32.mrb[0].mxu0
        %2985 = vmatprep.mubr.bf16.mxu0 0
        %2986 = vmatmul.mubr.bf16.gmra.mrb[0].mxu0 %v2377
        %v2987 = vpop.f32.mrb[0].mxu0
        %v2988 = vadd.f32 %v2399, %v2987
        %v2989 = vpop.f32.mrb[0].mxu0
        %v2990 = vpop.f32.mrb[0].mxu0
        %v2991 = vadd.f32 %v2399, %v2990
        %v2992 = vpop.f32.mrb[0].mxu0
        %2993 = vdwg.mxu0
        %v2994 = vadd.f32 %v996, %v2484
        %v2995 = vadd.f32 %v999, %v2487
        %v2996 = vadd.f32 %v1004, %v2492
        %v2997 = vadd.f32 %v1007, %v2495
        %v2998 = vadd.f32 %v1012, %v2500
        %v2999 = vadd.f32 %v1015, %v2503
        %v3000 = vadd.f32 %v1020, %v2508
        %v3001 = vadd.f32 %v1023, %v2511
        %v3002 = vadd.f32 %v1028, %v2516
        %v3003 = vadd.f32 %v1031, %v2519
        %v3004 = vadd.f32 %v1036, %v2524
        %v3005 = vadd.f32 %v1039, %v2527
        %v3006 = vadd.f32 %v1044, %v2532
        %v3007 = vadd.f32 %v1047, %v2535
        %v3008 = vadd.f32 %v1052, %v2540
        %v3009 = vadd.f32 %v1055, %v2543
        %v3010 = vadd.f32 %v1060, %v2548
        %v3011 = vadd.f32 %v1063, %v2551
        %v3012 = vadd.f32 %v1068, %v2556
        %v3013 = vadd.f32 %v1071, %v2559
        %v3014 = vadd.f32 %v1076, %v2564
        %v3015 = vadd.f32 %v1079, %v2567
        %v3016 = vadd.f32 %v1084, %v2572
        %v3017 = vadd.f32 %v1087, %v2575
        %v3018 = vadd.f32 %v1092, %v2580
        %v3019 = vadd.f32 %v1095, %v2583
        %v3020 = vadd.f32 %v1100, %v2588
        %v3021 = vadd.f32 %v1103, %v2591
        %v3022 = vadd.f32 %v1108, %v2596
        %v3023 = vadd.f32 %v1111, %v2599
        %v3024 = vadd.f32 %v1116, %v2604
        %v3025 = vadd.f32 %v1119, %v2607
        %v3026 = vadd.f32 %v1124, %v2612
        %v3027 = vadd.f32 %v1127, %v2615
        %v3028 = vadd.f32 %v1132, %v2620
        %v3029 = vadd.f32 %v1135, %v2623
        %v3030 = vadd.f32 %v1140, %v2628
        %v3031 = vadd.f32 %v1143, %v2631
        %v3032 = vadd.f32 %v1148, %v2636
        %v3033 = vadd.f32 %v1151, %v2639
        %v3034 = vadd.f32 %v1156, %v2644
        %v3035 = vadd.f32 %v1159, %v2647
        %v3036 = vadd.f32 %v1164, %v2652
        %v3037 = vadd.f32 %v1167, %v2655
        %v3038 = vadd.f32 %v1172, %v2660
        %v3039 = vadd.f32 %v1175, %v2663
        %v3040 = vadd.f32 %v1180, %v2668
        %v3041 = vadd.f32 %v1183, %v2671
        %v3042 = vadd.f32 %v1188, %v2676
        %v3043 = vadd.f32 %v1191, %v2679
        %v3044 = vadd.f32 %v1196, %v2684
        %v3045 = vadd.f32 %v1199, %v2687
        %v3046 = vadd.f32 %v1204, %v2692
        %v3047 = vadd.f32 %v1207, %v2695
        %v3048 = vadd.f32 %v1212, %v2700
        %v3049 = vadd.f32 %v1215, %v2703
        %v3050 = vadd.f32 %v1220, %v2708
        %v3051 = vadd.f32 %v1223, %v2711
        %v3052 = vadd.f32 %v1228, %v2716
        %v3053 = vadd.f32 %v1231, %v2719
        %v3054 = vadd.f32 %v1236, %v2724
        %v3055 = vadd.f32 %v1239, %v2727
        %v3056 = vadd.f32 %v1244, %v2732
        %v3057 = vadd.f32 %v1247, %v2735
        %v3058 = vadd.f32 %v1252, %v2740
        %v3059 = vadd.f32 %v1255, %v2743
        %v3060 = vadd.f32 %v1260, %v2748
        %v3061 = vadd.f32 %v1263, %v2751
        %v3062 = vadd.f32 %v1268, %v2756
        %v3063 = vadd.f32 %v1271, %v2759
        %v3064 = vadd.f32 %v1276, %v2764
        %v3065 = vadd.f32 %v1279, %v2767
        %v3066 = vadd.f32 %v1284, %v2772
        %v3067 = vadd.f32 %v1287, %v2775
        %v3068 = vadd.f32 %v1292, %v2780
        %v3069 = vadd.f32 %v1295, %v2783
        %v3070 = vadd.f32 %v1300, %v2788
        %v3071 = vadd.f32 %v1303, %v2791
        %v3072 = vadd.f32 %v1308, %v2796
        %v3073 = vadd.f32 %v1311, %v2799
        %v3074 = vadd.f32 %v1316, %v2804
        %v3075 = vadd.f32 %v1319, %v2807
        %v3076 = vadd.f32 %v1324, %v2812
        %v3077 = vadd.f32 %v1327, %v2815
        %v3078 = vadd.f32 %v1332, %v2820
        %v3079 = vadd.f32 %v1335, %v2823
        %v3080 = vadd.f32 %v1340, %v2828
        %v3081 = vadd.f32 %v1343, %v2831
        %v3082 = vadd.f32 %v1348, %v2836
        %v3083 = vadd.f32 %v1351, %v2839
        %v3084 = vadd.f32 %v1356, %v2844
        %v3085 = vadd.f32 %v1359, %v2847
        %v3086 = vadd.f32 %v1364, %v2852
        %v3087 = vadd.f32 %v1367, %v2855
        %v3088 = vadd.f32 %v1372, %v2860
        %v3089 = vadd.f32 %v1375, %v2863
        %v3090 = vadd.f32 %v1380, %v2868
        %v3091 = vadd.f32 %v1383, %v2871
        %v3092 = vadd.f32 %v1388, %v2876
        %v3093 = vadd.f32 %v1391, %v2879
        %v3094 = vadd.f32 %v1396, %v2884
        %v3095 = vadd.f32 %v1399, %v2887
        %v3096 = vadd.f32 %v1404, %v2892
        %v3097 = vadd.f32 %v1407, %v2895
        %v3098 = vadd.f32 %v1412, %v2900
        %v3099 = vadd.f32 %v1415, %v2903
        %v3100 = vadd.f32 %v1420, %v2908
        %v3101 = vadd.f32 %v1423, %v2911
        %v3102 = vadd.f32 %v1428, %v2916
        %v3103 = vadd.f32 %v1431, %v2919
        %v3104 = vadd.f32 %v1436, %v2924
        %v3105 = vadd.f32 %v1439, %v2927
        %v3106 = vadd.f32 %v1444, %v2932
        %v3107 = vadd.f32 %v1447, %v2935
        %v3108 = vadd.f32 %v1452, %v2940
        %v3109 = vadd.f32 %v1455, %v2943
        %v3110 = vadd.f32 %v1460, %v2948
        %v3111 = vadd.f32 %v1463, %v2951
        %v3112 = vadd.f32 %v1468, %v2956
        %v3113 = vadd.f32 %v1471, %v2959
        %v3114 = vadd.f32 %v1476, %v2964
        %v3115 = vadd.f32 %v1479, %v2967
        %v3116 = vadd.f32 %v1484, %v2972
        %v3117 = vadd.f32 %v1487, %v2975
        %v3118 = vadd.f32 %v1492, %v2980
        %v3119 = vadd.f32 %v1495, %v2983
        %v3120 = vadd.f32 %v1500, %v2988
        %v3121 = vadd.f32 %v1503, %v2991
        %v3122 = vpack.c.bf16 %v2995, %v2994
        %v3123 = vpack.c.bf16 %v2997, %v2996
        %v3124 = vpack.c.bf16 %v2999, %v2998
        %v3125 = vpack.c.bf16 %v3001, %v3000
        %v3126 = vpack.c.bf16 %v3003, %v3002
        %v3127 = vpack.c.bf16 %v3005, %v3004
        %v3128 = vpack.c.bf16 %v3007, %v3006
        %v3129 = vpack.c.bf16 %v3009, %v3008
        %v3130 = vpack.c.bf16 %v3011, %v3010
        %v3131 = vpack.c.bf16 %v3013, %v3012
        %v3132 = vpack.c.bf16 %v3015, %v3014
        %v3133 = vpack.c.bf16 %v3017, %v3016
        %v3134 = vpack.c.bf16 %v3019, %v3018
        %v3135 = vpack.c.bf16 %v3021, %v3020
        %v3136 = vpack.c.bf16 %v3023, %v3022
        %v3137 = vpack.c.bf16 %v3025, %v3024
        %v3138 = vpack.c.bf16 %v3027, %v3026
        %v3139 = vpack.c.bf16 %v3029, %v3028
        %v3140 = vpack.c.bf16 %v3031, %v3030
        %v3141 = vpack.c.bf16 %v3033, %v3032
        %v3142 = vpack.c.bf16 %v3035, %v3034
        %v3143 = vpack.c.bf16 %v3037, %v3036
        %v3144 = vpack.c.bf16 %v3039, %v3038
        %v3145 = vpack.c.bf16 %v3041, %v3040
        %v3146 = vpack.c.bf16 %v3043, %v3042
        %v3147 = vpack.c.bf16 %v3045, %v3044
        %v3148 = vpack.c.bf16 %v3047, %v3046
        %v3149 = vpack.c.bf16 %v3049, %v3048
        %v3150 = vpack.c.bf16 %v3051, %v3050
        %v3151 = vpack.c.bf16 %v3053, %v3052
        %v3152 = vpack.c.bf16 %v3055, %v3054
        %v3153 = vpack.c.bf16 %v3057, %v3056
        %v3154 = vpack.c.bf16 %v3059, %v3058
        %v3155 = vpack.c.bf16 %v3061, %v3060
        %v3156 = vpack.c.bf16 %v3063, %v3062
        %v3157 = vpack.c.bf16 %v3065, %v3064
        %v3158 = vpack.c.bf16 %v3067, %v3066
        %v3159 = vpack.c.bf16 %v3069, %v3068
        %v3160 = vpack.c.bf16 %v3071, %v3070
        %v3161 = vpack.c.bf16 %v3073, %v3072
        %v3162 = vpack.c.bf16 %v3075, %v3074
        %v3163 = vpack.c.bf16 %v3077, %v3076
        %v3164 = vpack.c.bf16 %v3079, %v3078
        %v3165 = vpack.c.bf16 %v3081, %v3080
        %v3166 = vpack.c.bf16 %v3083, %v3082
        %v3167 = vpack.c.bf16 %v3085, %v3084
        %v3168 = vpack.c.bf16 %v3087, %v3086
        %v3169 = vpack.c.bf16 %v3089, %v3088
        %v3170 = vpack.c.bf16 %v3091, %v3090
        %v3171 = vpack.c.bf16 %v3093, %v3092
        %v3172 = vpack.c.bf16 %v3095, %v3094
        %v3173 = vpack.c.bf16 %v3097, %v3096
        %v3174 = vpack.c.bf16 %v3099, %v3098
        %v3175 = vpack.c.bf16 %v3101, %v3100
        %v3176 = vpack.c.bf16 %v3103, %v3102
        %v3177 = vpack.c.bf16 %v3105, %v3104
        %v3178 = vpack.c.bf16 %v3107, %v3106
        %v3179 = vpack.c.bf16 %v3109, %v3108
        %v3180 = vpack.c.bf16 %v3111, %v3110
        %v3181 = vpack.c.bf16 %v3113, %v3112
        %v3182 = vpack.c.bf16 %v3115, %v3114
        %v3183 = vpack.c.bf16 %v3117, %v3116
        %v3184 = vpack.c.bf16 %v3119, %v3118
        %v3185 = vpack.c.bf16 %v3121, %v3120
        %s3186 = scalar_lea.vmem [#allocation7], 64
        %v3187 = vld [vmem:[%s3186] sm:$0xf]
        %v3188 = vld [vmem:[%s3186 + $0x4] sm:$0xf]
        %v3189 = vld [vmem:[%s3186 + $0x8] sm:$0xf]
        %v3190 = vld [vmem:[%s3186 + $0xc] sm:$0xf]
        %v3191 = vld [vmem:[%s3186 + $0x10] sm:$0xf]
        %v3192 = vld [vmem:[%s3186 + $0x14] sm:$0xf]
        %v3193 = vld [vmem:[%s3186 + $0x18] sm:$0xf]
        %v3194 = vld [vmem:[%s3186 + $0x1c] sm:$0xf]
        %v3195 = vld [vmem:[%s3186 + $0x20] sm:$0xf]
        %v3196 = vld [vmem:[%s3186 + $0x24] sm:$0xf]
        %v3197 = vld [vmem:[%s3186 + $0x28] sm:$0xf]
        %v3198 = vld [vmem:[%s3186 + $0x2c] sm:$0xf]
        %v3199 = vld [vmem:[%s3186 + $0x30] sm:$0xf]
        %v3200 = vld [vmem:[%s3186 + $0x34] sm:$0xf]
        %v3201 = vld [vmem:[%s3186 + $0x38] sm:$0xf]
        %v3202 = vld [vmem:[%s3186 + $0x3c] sm:$0xf]
        %s3203 = scalar_lea.vmem %s3, 1
        %v3204 = vld [vmem:[%s3203] sm:$0x1]
        %v3206 = vlaneseq
        %v3207 = vshrl.u32 %v3206, 7
        %v3208 = vsub.s32 0, %v3207
        %v3209 = vrot.slane %v3204, %v3208
        %v3227 = vunpack.c.l.b16 %v3187
        %v3228 = vunpack.c.l.b16 %v3188
        %v3229 = vunpack.c.l.b16 %v3189
        %v3230 = vunpack.c.l.b16 %v3190
        %v3231 = vunpack.c.l.b16 %v3191
        %v3232 = vunpack.c.l.b16 %v3192
        %v3233 = vunpack.c.l.b16 %v3193
        %v3234 = vunpack.c.l.b16 %v3194
        %v3235 = vunpack.c.l.b16 %v3195
        %v3236 = vunpack.c.l.b16 %v3196
        %v3237 = vunpack.c.l.b16 %v3197
        %v3238 = vunpack.c.l.b16 %v3198
        %v3239 = vunpack.c.l.b16 %v3199
        %v3240 = vunpack.c.l.b16 %v3200
        %v3241 = vunpack.c.l.b16 %v3201
        %v3242 = vunpack.c.l.b16 %v3202
        %v3243 = vpack.c.b16 %v3228, %v3227
        %v3244 = vpack.c.b16 %v3230, %v3229
        %v3245 = vpack.c.b16 %v3232, %v3231
        %v3246 = vpack.c.b16 %v3234, %v3233
        %v3247 = vpack.c.b16 %v3236, %v3235
        %v3248 = vpack.c.b16 %v3238, %v3237
        %v3249 = vpack.c.b16 %v3240, %v3239
        %v3250 = vpack.c.b16 %v3242, %v3241
        %3259 = vmatprep.subr.bf16.mxu0 0
        %3260 = vmatpush1.bf16.msra.mxu0 %v3243
        %3261 = vmatprep.subr.bf16.mxu0 0
        %3262 = vmatpush1.bf16.msra.mxu0 %v3244
        %3263 = vmatprep.subr.bf16.mxu0 0
        %3264 = vmatpush1.bf16.msra.mxu0 %v3245
        %3265 = vmatprep.subr.bf16.mxu0 0
        %3266 = vmatpush1.bf16.msra.mxu0 %v3246
        %3267 = vmatprep.subr.bf16.mxu0 0
        %3268 = vmatpush1.bf16.msra.mxu0 %v3247
        %3269 = vmatprep.subr.bf16.mxu0 0
        %3270 = vmatpush1.bf16.msra.mxu0 %v3248
        %3271 = vmatprep.subr.bf16.mxu0 0
        %3272 = vmatpush1.bf16.msra.mxu0 %v3249
        %3273 = vmatprep.subr.bf16.mxu0 0
        %3274 = vmatpush1.bf16.msra.mxu0 %v3250
        %3275 = vmatprep.subr.bf16.mxu0 0
        %3276 = vmatpush1.bf16.msra.mxu0 0
        %3277 = vmatprep.subr.bf16.mxu0 0
        %3278 = vmatpush1.bf16.msra.mxu0 0
        %3279 = vmatprep.subr.bf16.mxu0 0
        %3280 = vmatpush1.bf16.msra.mxu0 0
        %3281 = vmatprep.subr.bf16.mxu0 0
        %3282 = vmatpush1.bf16.msra.mxu0 0
        %3283 = vmatprep.subr.bf16.mxu0 0
        %3284 = vmatpush1.bf16.msra.mxu0 0
        %3285 = vmatprep.subr.bf16.mxu0 0
        %3286 = vmatpush1.bf16.msra.mxu0 0
        %3287 = vmatprep.subr.bf16.mxu0 0
        %3288 = vmatpush1.bf16.msra.mxu0 0
        %3289 = vmatprep.subr.bf16.mxu0 0
        %3290 = vmatpush1.bf16.msra.mxu0 0
        %3291 = vmatprep.mubr.bf16.mxu0 0
        %3292 = vmatmul.mubr.bf16.gmra.mrb[0].mxu0 %v3122
        %v3293 = vpop.f32.mrb[0].mxu0
        %v3294 = vadd.f32 %v3209, %v3293
        %v3295 = vpop.f32.mrb[0].mxu0
        %v3296 = vpop.f32.mrb[0].mxu0
        %v3297 = vadd.f32 %v3209, %v3296
        %v3298 = vpop.f32.mrb[0].mxu0
        %3299 = vmatprep.mubr.bf16.mxu0 0
        %3300 = vmatmul.mubr.bf16.gmra.mrb[0].mxu0 %v3123
        %v3301 = vpop.f32.mrb[0].mxu0
        %v3302 = vadd.f32 %v3209, %v3301
        %v3303 = vpop.f32.mrb[0].mxu0
        %v3304 = vpop.f32.mrb[0].mxu0
        %v3305 = vadd.f32 %v3209, %v3304
        %v3306 = vpop.f32.mrb[0].mxu0
        %3307 = vmatprep.mubr.bf16.mxu0 0
        %3308 = vmatmul.mubr.bf16.gmra.mrb[0].mxu0 %v3124
        %v3309 = vpop.f32.mrb[0].mxu0
        %v3310 = vadd.f32 %v3209, %v3309
        %v3311 = vpop.f32.mrb[0].mxu0
        %v3312 = vpop.f32.mrb[0].mxu0
        %v3313 = vadd.f32 %v3209, %v3312
        %v3314 = vpop.f32.mrb[0].mxu0
        %3315 = vmatprep.mubr.bf16.mxu0 0
        %3316 = vmatmul.mubr.bf16.gmra.mrb[0].mxu0 %v3125
        %v3317 = vpop.f32.mrb[0].mxu0
        %v3318 = vadd.f32 %v3209, %v3317
        %v3319 = vpop.f32.mrb[0].mxu0
        %v3320 = vpop.f32.mrb[0].mxu0
        %v3321 = vadd.f32 %v3209, %v3320
        %v3322 = vpop.f32.mrb[0].mxu0
        %3323 = vmatprep.mubr.bf16.mxu0 0
        %3324 = vmatmul.mubr.bf16.gmra.mrb[0].mxu0 %v3126
        %v3325 = vpop.f32.mrb[0].mxu0
        %v3326 = vadd.f32 %v3209, %v3325
        %v3327 = vpop.f32.mrb[0].mxu0
        %v3328 = vpop.f32.mrb[0].mxu0
        %v3329 = vadd.f32 %v3209, %v3328
        %v3330 = vpop.f32.mrb[0].mxu0
        %3331 = vmatprep.mubr.bf16.mxu0 0
        %3332 = vmatmul.mubr.bf16.gmra.mrb[0].mxu0 %v3127
        %v3333 = vpop.f32.mrb[0].mxu0
        %v3334 = vadd.f32 %v3209, %v3333
        %v3335 = vpop.f32.mrb[0].mxu0
        %v3336 = vpop.f32.mrb[0].mxu0
        %v3337 = vadd.f32 %v3209, %v3336
        %v3338 = vpop.f32.mrb[0].mxu0
        %3339 = vmatprep.mubr.bf16.mxu0 0
        %3340 = vmatmul.mubr.bf16.gmra.mrb[0].mxu0 %v3128
        %v3341 = vpop.f32.mrb[0].mxu0
        %v3342 = vadd.f32 %v3209, %v3341
        %v3343 = vpop.f32.mrb[0].mxu0
        %v3344 = vpop.f32.mrb[0].mxu0
        %v3345 = vadd.f32 %v3209, %v3344
        %v3346 = vpop.f32.mrb[0].mxu0
        %3347 = vmatprep.mubr.bf16.mxu0 0
        %3348 = vmatmul.mubr.bf16.gmra.mrb[0].mxu0 %v3129
        %v3349 = vpop.f32.mrb[0].mxu0
        %v3350 = vadd.f32 %v3209, %v3349
        %v3351 = vpop.f32.mrb[0].mxu0
        %v3352 = vpop.f32.mrb[0].mxu0
        %v3353 = vadd.f32 %v3209, %v3352
        %v3354 = vpop.f32.mrb[0].mxu0
        %3355 = vmatprep.mubr.bf16.mxu0 0
        %3356 = vmatmul.mubr.bf16.gmra.mrb[0].mxu0 %v3130
        %v3357 = vpop.f32.mrb[0].mxu0
        %v3358 = vadd.f32 %v3209, %v3357
        %v3359 = vpop.f32.mrb[0].mxu0
        %v3360 = vpop.f32.mrb[0].mxu0
        %v3361 = vadd.f32 %v3209, %v3360
        %v3362 = vpop.f32.mrb[0].mxu0
        %3363 = vmatprep.mubr.bf16.mxu0 0
        %3364 = vmatmul.mubr.bf16.gmra.mrb[0].mxu0 %v3131
        %v3365 = vpop.f32.mrb[0].mxu0
        %v3366 = vadd.f32 %v3209, %v3365
        %v3367 = vpop.f32.mrb[0].mxu0
        %v3368 = vpop.f32.mrb[0].mxu0
        %v3369 = vadd.f32 %v3209, %v3368
        %v3370 = vpop.f32.mrb[0].mxu0
        %3371 = vmatprep.mubr.bf16.mxu0 0
        %3372 = vmatmul.mubr.bf16.gmra.mrb[0].mxu0 %v3132
        %v3373 = vpop.f32.mrb[0].mxu0
        %v3374 = vadd.f32 %v3209, %v3373
        %v3375 = vpop.f32.mrb[0].mxu0
        %v3376 = vpop.f32.mrb[0].mxu0
        %v3377 = vadd.f32 %v3209, %v3376
        %v3378 = vpop.f32.mrb[0].mxu0
        %3379 = vmatprep.mubr.bf16.mxu0 0
        %3380 = vmatmul.mubr.bf16.gmra.mrb[0].mxu0 %v3133
        %v3381 = vpop.f32.mrb[0].mxu0
        %v3382 = vadd.f32 %v3209, %v3381
        %v3383 = vpop.f32.mrb[0].mxu0
        %v3384 = vpop.f32.mrb[0].mxu0
        %v3385 = vadd.f32 %v3209, %v3384
        %v3386 = vpop.f32.mrb[0].mxu0
        %3387 = vmatprep.mubr.bf16.mxu0 0
        %3388 = vmatmul.mubr.bf16.gmra.mrb[0].mxu0 %v3134
        %v3389 = vpop.f32.mrb[0].mxu0
        %v3390 = vadd.f32 %v3209, %v3389
        %v3391 = vpop.f32.mrb[0].mxu0
        %v3392 = vpop.f32.mrb[0].mxu0
        %v3393 = vadd.f32 %v3209, %v3392
        %v3394 = vpop.f32.mrb[0].mxu0
        %3395 = vmatprep.mubr.bf16.mxu0 0
        %3396 = vmatmul.mubr.bf16.gmra.mrb[0].mxu0 %v3135
        %v3397 = vpop.f32.mrb[0].mxu0
        %v3398 = vadd.f32 %v3209, %v3397
        %v3399 = vpop.f32.mrb[0].mxu0
        %v3400 = vpop.f32.mrb[0].mxu0
        %v3401 = vadd.f32 %v3209, %v3400
        %v3402 = vpop.f32.mrb[0].mxu0
        %3403 = vmatprep.mubr.bf16.mxu0 0
        %3404 = vmatmul.mubr.bf16.gmra.mrb[0].mxu0 %v3136
        %v3405 = vpop.f32.mrb[0].mxu0
        %v3406 = vadd.f32 %v3209, %v3405
        %v3407 = vpop.f32.mrb[0].mxu0
        %v3408 = vpop.f32.mrb[0].mxu0
        %v3409 = vadd.f32 %v3209, %v3408
        %v3410 = vpop.f32.mrb[0].mxu0
        %3411 = vmatprep.mubr.bf16.mxu0 0
        %3412 = vmatmul.mubr.bf16.gmra.mrb[0].mxu0 %v3137
        %v3413 = vpop.f32.mrb[0].mxu0
        %v3414 = vadd.f32 %v3209, %v3413
        %v3415 = vpop.f32.mrb[0].mxu0
        %v3416 = vpop.f32.mrb[0].mxu0
        %v3417 = vadd.f32 %v3209, %v3416
        %v3418 = vpop.f32.mrb[0].mxu0
        %3419 = vmatprep.mubr.bf16.mxu0 0
        %3420 = vmatmul.mubr.bf16.gmra.mrb[0].mxu0 %v3138
        %v3421 = vpop.f32.mrb[0].mxu0
        %v3422 = vadd.f32 %v3209, %v3421
        %v3423 = vpop.f32.mrb[0].mxu0
        %v3424 = vpop.f32.mrb[0].mxu0
        %v3425 = vadd.f32 %v3209, %v3424
        %v3426 = vpop.f32.mrb[0].mxu0
        %3427 = vmatprep.mubr.bf16.mxu0 0
        %3428 = vmatmul.mubr.bf16.gmra.mrb[0].mxu0 %v3139
        %v3429 = vpop.f32.mrb[0].mxu0
        %v3430 = vadd.f32 %v3209, %v3429
        %v3431 = vpop.f32.mrb[0].mxu0
        %v3432 = vpop.f32.mrb[0].mxu0
        %v3433 = vadd.f32 %v3209, %v3432
        %v3434 = vpop.f32.mrb[0].mxu0
        %3435 = vmatprep.mubr.bf16.mxu0 0
        %3436 = vmatmul.mubr.bf16.gmra.mrb[0].mxu0 %v3140
        %v3437 = vpop.f32.mrb[0].mxu0
        %v3438 = vadd.f32 %v3209, %v3437
        %v3439 = vpop.f32.mrb[0].mxu0
        %v3440 = vpop.f32.mrb[0].mxu0
        %v3441 = vadd.f32 %v3209, %v3440
        %v3442 = vpop.f32.mrb[0].mxu0
        %3443 = vmatprep.mubr.bf16.mxu0 0
        %3444 = vmatmul.mubr.bf16.gmra.mrb[0].mxu0 %v3141
        %v3445 = vpop.f32.mrb[0].mxu0
        %v3446 = vadd.f32 %v3209, %v3445
        %v3447 = vpop.f32.mrb[0].mxu0
        %v3448 = vpop.f32.mrb[0].mxu0
        %v3449 = vadd.f32 %v3209, %v3448
        %v3450 = vpop.f32.mrb[0].mxu0
        %3451 = vmatprep.mubr.bf16.mxu0 0
        %3452 = vmatmul.mubr.bf16.gmra.mrb[0].mxu0 %v3142
        %v3453 = vpop.f32.mrb[0].mxu0
        %v3454 = vadd.f32 %v3209, %v3453
        %v3455 = vpop.f32.mrb[0].mxu0
        %v3456 = vpop.f32.mrb[0].mxu0
        %v3457 = vadd.f32 %v3209, %v3456
        %v3458 = vpop.f32.mrb[0].mxu0
        %3459 = vmatprep.mubr.bf16.mxu0 0
        %3460 = vmatmul.mubr.bf16.gmra.mrb[0].mxu0 %v3143
        %v3461 = vpop.f32.mrb[0].mxu0
        %v3462 = vadd.f32 %v3209, %v3461
        %v3463 = vpop.f32.mrb[0].mxu0
        %v3464 = vpop.f32.mrb[0].mxu0
        %v3465 = vadd.f32 %v3209, %v3464
        %v3466 = vpop.f32.mrb[0].mxu0
        %3467 = vmatprep.mubr.bf16.mxu0 0
        %3468 = vmatmul.mubr.bf16.gmra.mrb[0].mxu0 %v3144
        %v3469 = vpop.f32.mrb[0].mxu0
        %v3470 = vadd.f32 %v3209, %v3469
        %v3471 = vpop.f32.mrb[0].mxu0
        %v3472 = vpop.f32.mrb[0].mxu0
        %v3473 = vadd.f32 %v3209, %v3472
        %v3474 = vpop.f32.mrb[0].mxu0
        %3475 = vmatprep.mubr.bf16.mxu0 0
        %3476 = vmatmul.mubr.bf16.gmra.mrb[0].mxu0 %v3145
        %v3477 = vpop.f32.mrb[0].mxu0
        %v3478 = vadd.f32 %v3209, %v3477
        %v3479 = vpop.f32.mrb[0].mxu0
        %v3480 = vpop.f32.mrb[0].mxu0
        %v3481 = vadd.f32 %v3209, %v3480
        %v3482 = vpop.f32.mrb[0].mxu0
        %3483 = vmatprep.mubr.bf16.mxu0 0
        %3484 = vmatmul.mubr.bf16.gmra.mrb[0].mxu0 %v3146
        %v3485 = vpop.f32.mrb[0].mxu0
        %v3486 = vadd.f32 %v3209, %v3485
        %v3487 = vpop.f32.mrb[0].mxu0
        %v3488 = vpop.f32.mrb[0].mxu0
        %v3489 = vadd.f32 %v3209, %v3488
        %v3490 = vpop.f32.mrb[0].mxu0
        %3491 = vmatprep.mubr.bf16.mxu0 0
        %3492 = vmatmul.mubr.bf16.gmra.mrb[0].mxu0 %v3147
        %v3493 = vpop.f32.mrb[0].mxu0
        %v3494 = vadd.f32 %v3209, %v3493
        %v3495 = vpop.f32.mrb[0].mxu0
        %v3496 = vpop.f32.mrb[0].mxu0
        %v3497 = vadd.f32 %v3209, %v3496
        %v3498 = vpop.f32.mrb[0].mxu0
        %3499 = vmatprep.mubr.bf16.mxu0 0
        %3500 = vmatmul.mubr.bf16.gmra.mrb[0].mxu0 %v3148
        %v3501 = vpop.f32.mrb[0].mxu0
        %v3502 = vadd.f32 %v3209, %v3501
        %v3503 = vpop.f32.mrb[0].mxu0
        %v3504 = vpop.f32.mrb[0].mxu0
        %v3505 = vadd.f32 %v3209, %v3504
        %v3506 = vpop.f32.mrb[0].mxu0
        %3507 = vmatprep.mubr.bf16.mxu0 0
        %3508 = vmatmul.mubr.bf16.gmra.mrb[0].mxu0 %v3149
        %v3509 = vpop.f32.mrb[0].mxu0
        %v3510 = vadd.f32 %v3209, %v3509
        %v3511 = vpop.f32.mrb[0].mxu0
        %v3512 = vpop.f32.mrb[0].mxu0
        %v3513 = vadd.f32 %v3209, %v3512
        %v3514 = vpop.f32.mrb[0].mxu0
        %3515 = vmatprep.mubr.bf16.mxu0 0
        %3516 = vmatmul.mubr.bf16.gmra.mrb[0].mxu0 %v3150
        %v3517 = vpop.f32.mrb[0].mxu0
        %v3518 = vadd.f32 %v3209, %v3517
        %v3519 = vpop.f32.mrb[0].mxu0
        %v3520 = vpop.f32.mrb[0].mxu0
        %v3521 = vadd.f32 %v3209, %v3520
        %v3522 = vpop.f32.mrb[0].mxu0
        %3523 = vmatprep.mubr.bf16.mxu0 0
        %3524 = vmatmul.mubr.bf16.gmra.mrb[0].mxu0 %v3151
        %v3525 = vpop.f32.mrb[0].mxu0
        %v3526 = vadd.f32 %v3209, %v3525
        %v3527 = vpop.f32.mrb[0].mxu0
        %v3528 = vpop.f32.mrb[0].mxu0
        %v3529 = vadd.f32 %v3209, %v3528
        %v3530 = vpop.f32.mrb[0].mxu0
        %3531 = vmatprep.mubr.bf16.mxu0 0
        %3532 = vmatmul.mubr.bf16.gmra.mrb[0].mxu0 %v3152
        %v3533 = vpop.f32.mrb[0].mxu0
        %v3534 = vadd.f32 %v3209, %v3533
        %v3535 = vpop.f32.mrb[0].mxu0
        %v3536 = vpop.f32.mrb[0].mxu0
        %v3537 = vadd.f32 %v3209, %v3536
        %v3538 = vpop.f32.mrb[0].mxu0
        %3539 = vmatprep.mubr.bf16.mxu0 0
        %3540 = vmatmul.mubr.bf16.gmra.mrb[0].mxu0 %v3153
        %v3541 = vpop.f32.mrb[0].mxu0
        %v3542 = vadd.f32 %v3209, %v3541
        %v3543 = vpop.f32.mrb[0].mxu0
        %v3544 = vpop.f32.mrb[0].mxu0
        %v3545 = vadd.f32 %v3209, %v3544
        %v3546 = vpop.f32.mrb[0].mxu0
        %3547 = vmatprep.mubr.bf16.mxu0 0
        %3548 = vmatmul.mubr.bf16.gmra.mrb[0].mxu0 %v3154
        %v3549 = vpop.f32.mrb[0].mxu0
        %v3550 = vadd.f32 %v3209, %v3549
        %v3551 = vpop.f32.mrb[0].mxu0
        %v3552 = vpop.f32.mrb[0].mxu0
        %v3553 = vadd.f32 %v3209, %v3552
        %v3554 = vpop.f32.mrb[0].mxu0
        %3555 = vmatprep.mubr.bf16.mxu0 0
        %3556 = vmatmul.mubr.bf16.gmra.mrb[0].mxu0 %v3155
        %v3557 = vpop.f32.mrb[0].mxu0
        %v3558 = vadd.f32 %v3209, %v3557
        %v3559 = vpop.f32.mrb[0].mxu0
        %v3560 = vpop.f32.mrb[0].mxu0
        %v3561 = vadd.f32 %v3209, %v3560
        %v3562 = vpop.f32.mrb[0].mxu0
        %3563 = vmatprep.mubr.bf16.mxu0 0
        %3564 = vmatmul.mubr.bf16.gmra.mrb[0].mxu0 %v3156
        %v3565 = vpop.f32.mrb[0].mxu0
        %v3566 = vadd.f32 %v3209, %v3565
        %v3567 = vpop.f32.mrb[0].mxu0
        %v3568 = vpop.f32.mrb[0].mxu0
        %v3569 = vadd.f32 %v3209, %v3568
        %v3570 = vpop.f32.mrb[0].mxu0
        %3571 = vmatprep.mubr.bf16.mxu0 0
        %3572 = vmatmul.mubr.bf16.gmra.mrb[0].mxu0 %v3157
        %v3573 = vpop.f32.mrb[0].mxu0
        %v3574 = vadd.f32 %v3209, %v3573
        %v3575 = vpop.f32.mrb[0].mxu0
        %v3576 = vpop.f32.mrb[0].mxu0
        %v3577 = vadd.f32 %v3209, %v3576
        %v3578 = vpop.f32.mrb[0].mxu0
        %3579 = vmatprep.mubr.bf16.mxu0 0
        %3580 = vmatmul.mubr.bf16.gmra.mrb[0].mxu0 %v3158
        %v3581 = vpop.f32.mrb[0].mxu0
        %v3582 = vadd.f32 %v3209, %v3581
        %v3583 = vpop.f32.mrb[0].mxu0
        %v3584 = vpop.f32.mrb[0].mxu0
        %v3585 = vadd.f32 %v3209, %v3584
        %v3586 = vpop.f32.mrb[0].mxu0
        %3587 = vmatprep.mubr.bf16.mxu0 0
        %3588 = vmatmul.mubr.bf16.gmra.mrb[0].mxu0 %v3159
        %v3589 = vpop.f32.mrb[0].mxu0
        %v3590 = vadd.f32 %v3209, %v3589
        %v3591 = vpop.f32.mrb[0].mxu0
        %v3592 = vpop.f32.mrb[0].mxu0
        %v3593 = vadd.f32 %v3209, %v3592
        %v3594 = vpop.f32.mrb[0].mxu0
        %3595 = vmatprep.mubr.bf16.mxu0 0
        %3596 = vmatmul.mubr.bf16.gmra.mrb[0].mxu0 %v3160
        %v3597 = vpop.f32.mrb[0].mxu0
        %v3598 = vadd.f32 %v3209, %v3597
        %v3599 = vpop.f32.mrb[0].mxu0
        %v3600 = vpop.f32.mrb[0].mxu0
        %v3601 = vadd.f32 %v3209, %v3600
        %v3602 = vpop.f32.mrb[0].mxu0
        %3603 = vmatprep.mubr.bf16.mxu0 0
        %3604 = vmatmul.mubr.bf16.gmra.mrb[0].mxu0 %v3161
        %v3605 = vpop.f32.mrb[0].mxu0
        %v3606 = vadd.f32 %v3209, %v3605
        %v3607 = vpop.f32.mrb[0].mxu0
        %v3608 = vpop.f32.mrb[0].mxu0
        %v3609 = vadd.f32 %v3209, %v3608
        %v3610 = vpop.f32.mrb[0].mxu0
        %3611 = vmatprep.mubr.bf16.mxu0 0
        %3612 = vmatmul.mubr.bf16.gmra.mrb[0].mxu0 %v3162
        %v3613 = vpop.f32.mrb[0].mxu0
        %v3614 = vadd.f32 %v3209, %v3613
        %v3615 = vpop.f32.mrb[0].mxu0
        %v3616 = vpop.f32.mrb[0].mxu0
        %v3617 = vadd.f32 %v3209, %v3616
        %v3618 = vpop.f32.mrb[0].mxu0
        %3619 = vmatprep.mubr.bf16.mxu0 0
        %3620 = vmatmul.mubr.bf16.gmra.mrb[0].mxu0 %v3163
        %v3621 = vpop.f32.mrb[0].mxu0
        %v3622 = vadd.f32 %v3209, %v3621
        %v3623 = vpop.f32.mrb[0].mxu0
        %v3624 = vpop.f32.mrb[0].mxu0
        %v3625 = vadd.f32 %v3209, %v3624
        %v3626 = vpop.f32.mrb[0].mxu0
        %3627 = vmatprep.mubr.bf16.mxu0 0
        %3628 = vmatmul.mubr.bf16.gmra.mrb[0].mxu0 %v3164
        %v3629 = vpop.f32.mrb[0].mxu0
        %v3630 = vadd.f32 %v3209, %v3629
        %v3631 = vpop.f32.mrb[0].mxu0
        %v3632 = vpop.f32.mrb[0].mxu0
        %v3633 = vadd.f32 %v3209, %v3632
        %v3634 = vpop.f32.mrb[0].mxu0
        %3635 = vmatprep.mubr.bf16.mxu0 0
        %3636 = vmatmul.mubr.bf16.gmra.mrb[0].mxu0 %v3165
        %v3637 = vpop.f32.mrb[0].mxu0
        %v3638 = vadd.f32 %v3209, %v3637
        %v3639 = vpop.f32.mrb[0].mxu0
        %v3640 = vpop.f32.mrb[0].mxu0
        %v3641 = vadd.f32 %v3209, %v3640
        %v3642 = vpop.f32.mrb[0].mxu0
        %3643 = vmatprep.mubr.bf16.mxu0 0
        %3644 = vmatmul.mubr.bf16.gmra.mrb[0].mxu0 %v3166
        %v3645 = vpop.f32.mrb[0].mxu0
        %v3646 = vadd.f32 %v3209, %v3645
        %v3647 = vpop.f32.mrb[0].mxu0
        %v3648 = vpop.f32.mrb[0].mxu0
        %v3649 = vadd.f32 %v3209, %v3648
        %v3650 = vpop.f32.mrb[0].mxu0
        %3651 = vmatprep.mubr.bf16.mxu0 0
        %3652 = vmatmul.mubr.bf16.gmra.mrb[0].mxu0 %v3167
        %v3653 = vpop.f32.mrb[0].mxu0
        %v3654 = vadd.f32 %v3209, %v3653
        %v3655 = vpop.f32.mrb[0].mxu0
        %v3656 = vpop.f32.mrb[0].mxu0
        %v3657 = vadd.f32 %v3209, %v3656
        %v3658 = vpop.f32.mrb[0].mxu0
        %3659 = vmatprep.mubr.bf16.mxu0 0
        %3660 = vmatmul.mubr.bf16.gmra.mrb[0].mxu0 %v3168
        %v3661 = vpop.f32.mrb[0].mxu0
        %v3662 = vadd.f32 %v3209, %v3661
        %v3663 = vpop.f32.mrb[0].mxu0
        %v3664 = vpop.f32.mrb[0].mxu0
        %v3665 = vadd.f32 %v3209, %v3664
        %v3666 = vpop.f32.mrb[0].mxu0
        %3667 = vmatprep.mubr.bf16.mxu0 0
        %3668 = vmatmul.mubr.bf16.gmra.mrb[0].mxu0 %v3169
        %v3669 = vpop.f32.mrb[0].mxu0
        %v3670 = vadd.f32 %v3209, %v3669
        %v3671 = vpop.f32.mrb[0].mxu0
        %v3672 = vpop.f32.mrb[0].mxu0
        %v3673 = vadd.f32 %v3209, %v3672
        %v3674 = vpop.f32.mrb[0].mxu0
        %3675 = vmatprep.mubr.bf16.mxu0 0
        %3676 = vmatmul.mubr.bf16.gmra.mrb[0].mxu0 %v3170
        %v3677 = vpop.f32.mrb[0].mxu0
        %v3678 = vadd.f32 %v3209, %v3677
        %v3679 = vpop.f32.mrb[0].mxu0
        %v3680 = vpop.f32.mrb[0].mxu0
        %v3681 = vadd.f32 %v3209, %v3680
        %v3682 = vpop.f32.mrb[0].mxu0
        %3683 = vmatprep.mubr.bf16.mxu0 0
        %3684 = vmatmul.mubr.bf16.gmra.mrb[0].mxu0 %v3171
        %v3685 = vpop.f32.mrb[0].mxu0
        %v3686 = vadd.f32 %v3209, %v3685
        %v3687 = vpop.f32.mrb[0].mxu0
        %v3688 = vpop.f32.mrb[0].mxu0
        %v3689 = vadd.f32 %v3209, %v3688
        %v3690 = vpop.f32.mrb[0].mxu0
        %3691 = vmatprep.mubr.bf16.mxu0 0
        %3692 = vmatmul.mubr.bf16.gmra.mrb[0].mxu0 %v3172
        %v3693 = vpop.f32.mrb[0].mxu0
        %v3694 = vadd.f32 %v3209, %v3693
        %v3695 = vpop.f32.mrb[0].mxu0
        %v3696 = vpop.f32.mrb[0].mxu0
        %v3697 = vadd.f32 %v3209, %v3696
        %v3698 = vpop.f32.mrb[0].mxu0
        %3699 = vmatprep.mubr.bf16.mxu0 0
        %3700 = vmatmul.mubr.bf16.gmra.mrb[0].mxu0 %v3173
        %v3701 = vpop.f32.mrb[0].mxu0
        %v3702 = vadd.f32 %v3209, %v3701
        %v3703 = vpop.f32.mrb[0].mxu0
        %v3704 = vpop.f32.mrb[0].mxu0
        %v3705 = vadd.f32 %v3209, %v3704
        %v3706 = vpop.f32.mrb[0].mxu0
        %3707 = vmatprep.mubr.bf16.mxu0 0
        %3708 = vmatmul.mubr.bf16.gmra.mrb[0].mxu0 %v3174
        %v3709 = vpop.f32.mrb[0].mxu0
        %v3710 = vadd.f32 %v3209, %v3709
        %v3711 = vpop.f32.mrb[0].mxu0
        %v3712 = vpop.f32.mrb[0].mxu0
        %v3713 = vadd.f32 %v3209, %v3712
        %v3714 = vpop.f32.mrb[0].mxu0
        %3715 = vmatprep.mubr.bf16.mxu0 0
        %3716 = vmatmul.mubr.bf16.gmra.mrb[0].mxu0 %v3175
        %v3717 = vpop.f32.mrb[0].mxu0
        %v3718 = vadd.f32 %v3209, %v3717
        %v3719 = vpop.f32.mrb[0].mxu0
        %v3720 = vpop.f32.mrb[0].mxu0
        %v3721 = vadd.f32 %v3209, %v3720
        %v3722 = vpop.f32.mrb[0].mxu0
        %3723 = vmatprep.mubr.bf16.mxu0 0
        %3724 = vmatmul.mubr.bf16.gmra.mrb[0].mxu0 %v3176
        %v3725 = vpop.f32.mrb[0].mxu0
        %v3726 = vadd.f32 %v3209, %v3725
        %v3727 = vpop.f32.mrb[0].mxu0
        %v3728 = vpop.f32.mrb[0].mxu0
        %v3729 = vadd.f32 %v3209, %v3728
        %v3730 = vpop.f32.mrb[0].mxu0
        %3731 = vmatprep.mubr.bf16.mxu0 0
        %3732 = vmatmul.mubr.bf16.gmra.mrb[0].mxu0 %v3177
        %v3733 = vpop.f32.mrb[0].mxu0
        %v3734 = vadd.f32 %v3209, %v3733
        %v3735 = vpop.f32.mrb[0].mxu0
        %v3736 = vpop.f32.mrb[0].mxu0
        %v3737 = vadd.f32 %v3209, %v3736
        %v3738 = vpop.f32.mrb[0].mxu0
        %3739 = vmatprep.mubr.bf16.mxu0 0
        %3740 = vmatmul.mubr.bf16.gmra.mrb[0].mxu0 %v3178
        %v3741 = vpop.f32.mrb[0].mxu0
        %v3742 = vadd.f32 %v3209, %v3741
        %v3743 = vpop.f32.mrb[0].mxu0
        %v3744 = vpop.f32.mrb[0].mxu0
        %v3745 = vadd.f32 %v3209, %v3744
        %v3746 = vpop.f32.mrb[0].mxu0
        %3747 = vmatprep.mubr.bf16.mxu0 0
        %3748 = vmatmul.mubr.bf16.gmra.mrb[0].mxu0 %v3179
        %v3749 = vpop.f32.mrb[0].mxu0
        %v3750 = vadd.f32 %v3209, %v3749
        %v3751 = vpop.f32.mrb[0].mxu0
        %v3752 = vpop.f32.mrb[0].mxu0
        %v3753 = vadd.f32 %v3209, %v3752
        %v3754 = vpop.f32.mrb[0].mxu0
        %3755 = vmatprep.mubr.bf16.mxu0 0
        %3756 = vmatmul.mubr.bf16.gmra.mrb[0].mxu0 %v3180
        %v3757 = vpop.f32.mrb[0].mxu0
        %v3758 = vadd.f32 %v3209, %v3757
        %v3759 = vpop.f32.mrb[0].mxu0
        %v3760 = vpop.f32.mrb[0].mxu0
        %v3761 = vadd.f32 %v3209, %v3760
        %v3762 = vpop.f32.mrb[0].mxu0
        %3763 = vmatprep.mubr.bf16.mxu0 0
        %3764 = vmatmul.mubr.bf16.gmra.mrb[0].mxu0 %v3181
        %v3765 = vpop.f32.mrb[0].mxu0
        %v3766 = vadd.f32 %v3209, %v3765
        %v3767 = vpop.f32.mrb[0].mxu0
        %v3768 = vpop.f32.mrb[0].mxu0
        %v3769 = vadd.f32 %v3209, %v3768
        %v3770 = vpop.f32.mrb[0].mxu0
        %3771 = vmatprep.mubr.bf16.mxu0 0
        %3772 = vmatmul.mubr.bf16.gmra.mrb[0].mxu0 %v3182
        %v3773 = vpop.f32.mrb[0].mxu0
        %v3774 = vadd.f32 %v3209, %v3773
        %v3775 = vpop.f32.mrb[0].mxu0
        %v3776 = vpop.f32.mrb[0].mxu0
        %v3777 = vadd.f32 %v3209, %v3776
        %v3778 = vpop.f32.mrb[0].mxu0
        %3779 = vmatprep.mubr.bf16.mxu0 0
        %3780 = vmatmul.mubr.bf16.gmra.mrb[0].mxu0 %v3183
        %v3781 = vpop.f32.mrb[0].mxu0
        %v3782 = vadd.f32 %v3209, %v3781
        %v3783 = vpop.f32.mrb[0].mxu0
        %v3784 = vpop.f32.mrb[0].mxu0
        %v3785 = vadd.f32 %v3209, %v3784
        %v3786 = vpop.f32.mrb[0].mxu0
        %3787 = vmatprep.mubr.bf16.mxu0 0
        %3788 = vmatmul.mubr.bf16.gmra.mrb[0].mxu0 %v3184
        %v3789 = vpop.f32.mrb[0].mxu0
        %v3790 = vadd.f32 %v3209, %v3789
        %v3791 = vpop.f32.mrb[0].mxu0
        %v3792 = vpop.f32.mrb[0].mxu0
        %v3793 = vadd.f32 %v3209, %v3792
        %v3794 = vpop.f32.mrb[0].mxu0
        %3795 = vmatprep.mubr.bf16.mxu0 0
        %3796 = vmatmul.mubr.bf16.gmra.mrb[0].mxu0 %v3185
        %v3797 = vpop.f32.mrb[0].mxu0
        %v3798 = vadd.f32 %v3209, %v3797
        %v3799 = vpop.f32.mrb[0].mxu0
        %v3800 = vpop.f32.mrb[0].mxu0
        %v3801 = vadd.f32 %v3209, %v3800
        %v3802 = vpop.f32.mrb[0].mxu0
        %3803 = vdwg.mxu0
        %v3804 = vmax.f32 %v3294, 0.0
        %v3805 = vmax.f32 %v3297, 0.0
        %v3806 = vmax.f32 %v3302, 0.0
        %v3807 = vmax.f32 %v3305, 0.0
        %v3808 = vmax.f32 %v3310, 0.0
        %v3809 = vmax.f32 %v3313, 0.0
        %v3810 = vmax.f32 %v3318, 0.0
        %v3811 = vmax.f32 %v3321, 0.0
        %v3812 = vmax.f32 %v3326, 0.0
        %v3813 = vmax.f32 %v3329, 0.0
        %v3814 = vmax.f32 %v3334, 0.0
        %v3815 = vmax.f32 %v3337, 0.0
        %v3816 = vmax.f32 %v3342, 0.0
        %v3817 = vmax.f32 %v3345, 0.0
        %v3818 = vmax.f32 %v3350, 0.0
        %v3819 = vmax.f32 %v3353, 0.0
        %v3820 = vmax.f32 %v3358, 0.0
        %v3821 = vmax.f32 %v3361, 0.0
        %v3822 = vmax.f32 %v3366, 0.0
        %v3823 = vmax.f32 %v3369, 0.0
        %v3824 = vmax.f32 %v3374, 0.0
        %v3825 = vmax.f32 %v3377, 0.0
        %v3826 = vmax.f32 %v3382, 0.0
        %v3827 = vmax.f32 %v3385, 0.0
        %v3828 = vmax.f32 %v3390, 0.0
        %v3829 = vmax.f32 %v3393, 0.0
        %v3830 = vmax.f32 %v3398, 0.0
        %v3831 = vmax.f32 %v3401, 0.0
        %v3832 = vmax.f32 %v3406, 0.0
        %v3833 = vmax.f32 %v3409, 0.0
        %v3834 = vmax.f32 %v3414, 0.0
        %v3835 = vmax.f32 %v3417, 0.0
        %v3836 = vmax.f32 %v3422, 0.0
        %v3837 = vmax.f32 %v3425, 0.0
        %v3838 = vmax.f32 %v3430, 0.0
        %v3839 = vmax.f32 %v3433, 0.0
        %v3840 = vmax.f32 %v3438, 0.0
        %v3841 = vmax.f32 %v3441, 0.0
        %v3842 = vmax.f32 %v3446, 0.0
        %v3843 = vmax.f32 %v3449, 0.0
        %v3844 = vmax.f32 %v3454, 0.0
        %v3845 = vmax.f32 %v3457, 0.0
        %v3846 = vmax.f32 %v3462, 0.0
        %v3847 = vmax.f32 %v3465, 0.0
        %v3848 = vmax.f32 %v3470, 0.0
        %v3849 = vmax.f32 %v3473, 0.0
        %v3850 = vmax.f32 %v3478, 0.0
        %v3851 = vmax.f32 %v3481, 0.0
        %v3852 = vmax.f32 %v3486, 0.0
        %v3853 = vmax.f32 %v3489, 0.0
        %v3854 = vmax.f32 %v3494, 0.0
        %v3855 = vmax.f32 %v3497, 0.0
        %v3856 = vmax.f32 %v3502, 0.0
        %v3857 = vmax.f32 %v3505, 0.0
        %v3858 = vmax.f32 %v3510, 0.0
        %v3859 = vmax.f32 %v3513, 0.0
        %v3860 = vmax.f32 %v3518, 0.0
        %v3861 = vmax.f32 %v3521, 0.0
        %v3862 = vmax.f32 %v3526, 0.0
        %v3863 = vmax.f32 %v3529, 0.0
        %v3864 = vmax.f32 %v3534, 0.0
        %v3865 = vmax.f32 %v3537, 0.0
        %v3866 = vmax.f32 %v3542, 0.0
        %v3867 = vmax.f32 %v3545, 0.0
        %v3868 = vmax.f32 %v3550, 0.0
        %v3869 = vmax.f32 %v3553, 0.0
        %v3870 = vmax.f32 %v3558, 0.0
        %v3871 = vmax.f32 %v3561, 0.0
        %v3872 = vmax.f32 %v3566, 0.0
        %v3873 = vmax.f32 %v3569, 0.0
        %v3874 = vmax.f32 %v3574, 0.0
        %v3875 = vmax.f32 %v3577, 0.0
        %v3876 = vmax.f32 %v3582, 0.0
        %v3877 = vmax.f32 %v3585, 0.0
        %v3878 = vmax.f32 %v3590, 0.0
        %v3879 = vmax.f32 %v3593, 0.0
        %v3880 = vmax.f32 %v3598, 0.0
        %v3881 = vmax.f32 %v3601, 0.0
        %v3882 = vmax.f32 %v3606, 0.0
        %v3883 = vmax.f32 %v3609, 0.0
        %v3884 = vmax.f32 %v3614, 0.0
        %v3885 = vmax.f32 %v3617, 0.0
        %v3886 = vmax.f32 %v3622, 0.0
        %v3887 = vmax.f32 %v3625, 0.0
        %v3888 = vmax.f32 %v3630, 0.0
        %v3889 = vmax.f32 %v3633, 0.0
        %v3890 = vmax.f32 %v3638, 0.0
        %v3891 = vmax.f32 %v3641, 0.0
        %v3892 = vmax.f32 %v3646, 0.0
        %v3893 = vmax.f32 %v3649, 0.0
        %v3894 = vmax.f32 %v3654, 0.0
        %v3895 = vmax.f32 %v3657, 0.0
        %v3896 = vmax.f32 %v3662, 0.0
        %v3897 = vmax.f32 %v3665, 0.0
        %v3898 = vmax.f32 %v3670, 0.0
        %v3899 = vmax.f32 %v3673, 0.0
        %v3900 = vmax.f32 %v3678, 0.0
        %v3901 = vmax.f32 %v3681, 0.0
        %v3902 = vmax.f32 %v3686, 0.0
        %v3903 = vmax.f32 %v3689, 0.0
        %v3904 = vmax.f32 %v3694, 0.0
        %v3905 = vmax.f32 %v3697, 0.0
        %v3906 = vmax.f32 %v3702, 0.0
        %v3907 = vmax.f32 %v3705, 0.0
        %v3908 = vmax.f32 %v3710, 0.0
        %v3909 = vmax.f32 %v3713, 0.0
        %v3910 = vmax.f32 %v3718, 0.0
        %v3911 = vmax.f32 %v3721, 0.0
        %v3912 = vmax.f32 %v3726, 0.0
        %v3913 = vmax.f32 %v3729, 0.0
        %v3914 = vmax.f32 %v3734, 0.0
        %v3915 = vmax.f32 %v3737, 0.0
        %v3916 = vmax.f32 %v3742, 0.0
        %v3917 = vmax.f32 %v3745, 0.0
        %v3918 = vmax.f32 %v3750, 0.0
        %v3919 = vmax.f32 %v3753, 0.0
        %v3920 = vmax.f32 %v3758, 0.0
        %v3921 = vmax.f32 %v3761, 0.0
        %v3922 = vmax.f32 %v3766, 0.0
        %v3923 = vmax.f32 %v3769, 0.0
        %v3924 = vmax.f32 %v3774, 0.0
        %v3925 = vmax.f32 %v3777, 0.0
        %v3926 = vmax.f32 %v3782, 0.0
        %v3927 = vmax.f32 %v3785, 0.0
        %v3928 = vmax.f32 %v3790, 0.0
        %v3929 = vmax.f32 %v3793, 0.0
        %v3930 = vmax.f32 %v3798, 0.0
        %v3931 = vmax.f32 %v3801, 0.0
        %v3932 = vpack.c.bf16 %v3805, %v3804
        %v3933 = vpack.c.bf16 %v3807, %v3806
        %v3934 = vpack.c.bf16 %v3809, %v3808
        %v3935 = vpack.c.bf16 %v3811, %v3810
        %v3936 = vpack.c.bf16 %v3813, %v3812
        %v3937 = vpack.c.bf16 %v3815, %v3814
        %v3938 = vpack.c.bf16 %v3817, %v3816
        %v3939 = vpack.c.bf16 %v3819, %v3818
        %v3940 = vpack.c.bf16 %v3821, %v3820
        %v3941 = vpack.c.bf16 %v3823, %v3822
        %v3942 = vpack.c.bf16 %v3825, %v3824
        %v3943 = vpack.c.bf16 %v3827, %v3826
        %v3944 = vpack.c.bf16 %v3829, %v3828
        %v3945 = vpack.c.bf16 %v3831, %v3830
        %v3946 = vpack.c.bf16 %v3833, %v3832
        %v3947 = vpack.c.bf16 %v3835, %v3834
        %v3948 = vpack.c.bf16 %v3837, %v3836
        %v3949 = vpack.c.bf16 %v3839, %v3838
        %v3950 = vpack.c.bf16 %v3841, %v3840
        %v3951 = vpack.c.bf16 %v3843, %v3842
        %v3952 = vpack.c.bf16 %v3845, %v3844
        %v3953 = vpack.c.bf16 %v3847, %v3846
        %v3954 = vpack.c.bf16 %v3849, %v3848
        %v3955 = vpack.c.bf16 %v3851, %v3850
        %v3956 = vpack.c.bf16 %v3853, %v3852
        %v3957 = vpack.c.bf16 %v3855, %v3854
        %v3958 = vpack.c.bf16 %v3857, %v3856
        %v3959 = vpack.c.bf16 %v3859, %v3858
        %v3960 = vpack.c.bf16 %v3861, %v3860
        %v3961 = vpack.c.bf16 %v3863, %v3862
        %v3962 = vpack.c.bf16 %v3865, %v3864
        %v3963 = vpack.c.bf16 %v3867, %v3866
        %v3964 = vpack.c.bf16 %v3869, %v3868
        %v3965 = vpack.c.bf16 %v3871, %v3870
        %v3966 = vpack.c.bf16 %v3873, %v3872
        %v3967 = vpack.c.bf16 %v3875, %v3874
        %v3968 = vpack.c.bf16 %v3877, %v3876
        %v3969 = vpack.c.bf16 %v3879, %v3878
        %v3970 = vpack.c.bf16 %v3881, %v3880
        %v3971 = vpack.c.bf16 %v3883, %v3882
        %v3972 = vpack.c.bf16 %v3885, %v3884
        %v3973 = vpack.c.bf16 %v3887, %v3886
        %v3974 = vpack.c.bf16 %v3889, %v3888
        %v3975 = vpack.c.bf16 %v3891, %v3890
        %v3976 = vpack.c.bf16 %v3893, %v3892
        %v3977 = vpack.c.bf16 %v3895, %v3894
        %v3978 = vpack.c.bf16 %v3897, %v3896
        %v3979 = vpack.c.bf16 %v3899, %v3898
        %v3980 = vpack.c.bf16 %v3901, %v3900
        %v3981 = vpack.c.bf16 %v3903, %v3902
        %v3982 = vpack.c.bf16 %v3905, %v3904
        %v3983 = vpack.c.bf16 %v3907, %v3906
        %v3984 = vpack.c.bf16 %v3909, %v3908
        %v3985 = vpack.c.bf16 %v3911, %v3910
        %v3986 = vpack.c.bf16 %v3913, %v3912
        %v3987 = vpack.c.bf16 %v3915, %v3914
        %v3988 = vpack.c.bf16 %v3917, %v3916
        %v3989 = vpack.c.bf16 %v3919, %v3918
        %v3990 = vpack.c.bf16 %v3921, %v3920
        %v3991 = vpack.c.bf16 %v3923, %v3922
        %v3992 = vpack.c.bf16 %v3925, %v3924
        %v3993 = vpack.c.bf16 %v3927, %v3926
        %v3994 = vpack.c.bf16 %v3929, %v3928
        %v3995 = vpack.c.bf16 %v3931, %v3930
        %s3996 = scalar_lea.vmem [#allocation8], 64
        %v3997 = vld [vmem:[%s3996] sm:$0xf]
        %v3998 = vld [vmem:[%s3996 + $0x4] sm:$0xf]
        %v3999 = vld [vmem:[%s3996 + $0x8] sm:$0xf]
        %v4000 = vld [vmem:[%s3996 + $0xc] sm:$0xf]
        %v4001 = vld [vmem:[%s3996 + $0x10] sm:$0xf]
        %v4002 = vld [vmem:[%s3996 + $0x14] sm:$0xf]
        %v4003 = vld [vmem:[%s3996 + $0x18] sm:$0xf]
        %v4004 = vld [vmem:[%s3996 + $0x1c] sm:$0xf]
        %v4005 = vld [vmem:[%s3996 + $0x20] sm:$0xf]
        %v4006 = vld [vmem:[%s3996 + $0x24] sm:$0xf]
        %v4007 = vld [vmem:[%s3996 + $0x28] sm:$0xf]
        %v4008 = vld [vmem:[%s3996 + $0x2c] sm:$0xf]
        %v4009 = vld [vmem:[%s3996 + $0x30] sm:$0xf]
        %v4010 = vld [vmem:[%s3996 + $0x34] sm:$0xf]
        %v4011 = vld [vmem:[%s3996 + $0x38] sm:$0xf]
        %v4012 = vld [vmem:[%s3996 + $0x3c] sm:$0xf]
        %s4013 = scalar_lea.vmem %s5, 1
        %v4014 = vld [vmem:[%s4013] sm:$0x1]
        %v4016 = vlaneseq
        %v4017 = vshrl.u32 %v4016, 7
        %v4018 = vsub.s32 0, %v4017
        %v4019 = vrot.slane %v4014, %v4018
        %v4037 = vunpack.c.l.b16 %v3997
        %v4038 = vunpack.c.l.b16 %v3998
        %v4039 = vunpack.c.l.b16 %v3999
        %v4040 = vunpack.c.l.b16 %v4000
        %v4041 = vunpack.c.l.b16 %v4001
        %v4042 = vunpack.c.l.b16 %v4002
        %v4043 = vunpack.c.l.b16 %v4003
        %v4044 = vunpack.c.l.b16 %v4004
        %v4045 = vunpack.c.l.b16 %v4005
        %v4046 = vunpack.c.l.b16 %v4006
        %v4047 = vunpack.c.l.b16 %v4007
        %v4048 = vunpack.c.l.b16 %v4008
        %v4049 = vunpack.c.l.b16 %v4009
        %v4050 = vunpack.c.l.b16 %v4010
        %v4051 = vunpack.c.l.b16 %v4011
        %v4052 = vunpack.c.l.b16 %v4012
        %v4053 = vpack.c.b16 %v4038, %v4037
        %v4054 = vpack.c.b16 %v4040, %v4039
        %v4055 = vpack.c.b16 %v4042, %v4041
        %v4056 = vpack.c.b16 %v4044, %v4043
        %v4057 = vpack.c.b16 %v4046, %v4045
        %v4058 = vpack.c.b16 %v4048, %v4047
        %v4059 = vpack.c.b16 %v4050, %v4049
        %v4060 = vpack.c.b16 %v4052, %v4051
        %4069 = vmatprep.subr.bf16.mxu0 0
        %4070 = vmatpush1.bf16.msra.mxu0 %v4053
        %4071 = vmatprep.subr.bf16.mxu0 0
        %4072 = vmatpush1.bf16.msra.mxu0 %v4054
        %4073 = vmatprep.subr.bf16.mxu0 0
        %4074 = vmatpush1.bf16.msra.mxu0 %v4055
        %4075 = vmatprep.subr.bf16.mxu0 0
        %4076 = vmatpush1.bf16.msra.mxu0 %v4056
        %4077 = vmatprep.subr.bf16.mxu0 0
        %4078 = vmatpush1.bf16.msra.mxu0 %v4057
        %4079 = vmatprep.subr.bf16.mxu0 0
        %4080 = vmatpush1.bf16.msra.mxu0 %v4058
        %4081 = vmatprep.subr.bf16.mxu0 0
        %4082 = vmatpush1.bf16.msra.mxu0 %v4059
        %4083 = vmatprep.subr.bf16.mxu0 0
        %4084 = vmatpush1.bf16.msra.mxu0 %v4060
        %4085 = vmatprep.subr.bf16.mxu0 0
        %4086 = vmatpush1.bf16.msra.mxu0 0
        %4087 = vmatprep.subr.bf16.mxu0 0
        %4088 = vmatpush1.bf16.msra.mxu0 0
        %4089 = vmatprep.subr.bf16.mxu0 0
        %4090 = vmatpush1.bf16.msra.mxu0 0
        %4091 = vmatprep.subr.bf16.mxu0 0
        %4092 = vmatpush1.bf16.msra.mxu0 0
        %4093 = vmatprep.subr.bf16.mxu0 0
        %4094 = vmatpush1.bf16.msra.mxu0 0
        %4095 = vmatprep.subr.bf16.mxu0 0
        %4096 = vmatpush1.bf16.msra.mxu0 0
        %4097 = vmatprep.subr.bf16.mxu0 0
        %4098 = vmatpush1.bf16.msra.mxu0 0
        %4099 = vmatprep.subr.bf16.mxu0 0
        %4100 = vmatpush1.bf16.msra.mxu0 0
        %4101 = vmatprep.mubr.bf16.mxu0 0
        %4102 = vmatmul.mubr.bf16.gmra.mrb[0].mxu0 %v3932
        %v4103 = vpop.f32.mrb[0].mxu0
        %v4104 = vadd.f32 %v4019, %v4103
        %v4105 = vpop.f32.mrb[0].mxu0
        %v4106 = vpop.f32.mrb[0].mxu0
        %v4107 = vadd.f32 %v4019, %v4106
        %v4108 = vpop.f32.mrb[0].mxu0
        %4109 = vmatprep.mubr.bf16.mxu0 0
        %4110 = vmatmul.mubr.bf16.gmra.mrb[0].mxu0 %v3933
        %v4111 = vpop.f32.mrb[0].mxu0
        %v4112 = vadd.f32 %v4019, %v4111
        %v4113 = vpop.f32.mrb[0].mxu0
        %v4114 = vpop.f32.mrb[0].mxu0
        %v4115 = vadd.f32 %v4019, %v4114
        %v4116 = vpop.f32.mrb[0].mxu0
        %4117 = vmatprep.mubr.bf16.mxu0 0
        %4118 = vmatmul.mubr.bf16.gmra.mrb[0].mxu0 %v3934
        %v4119 = vpop.f32.mrb[0].mxu0
        %v4120 = vadd.f32 %v4019, %v4119
        %v4121 = vpop.f32.mrb[0].mxu0
        %v4122 = vpop.f32.mrb[0].mxu0
        %v4123 = vadd.f32 %v4019, %v4122
        %v4124 = vpop.f32.mrb[0].mxu0
        %4125 = vmatprep.mubr.bf16.mxu0 0
        %4126 = vmatmul.mubr.bf16.gmra.mrb[0].mxu0 %v3935
        %v4127 = vpop.f32.mrb[0].mxu0
        %v4128 = vadd.f32 %v4019, %v4127
        %v4129 = vpop.f32.mrb[0].mxu0
        %v4130 = vpop.f32.mrb[0].mxu0
        %v4131 = vadd.f32 %v4019, %v4130
        %v4132 = vpop.f32.mrb[0].mxu0
        %4133 = vmatprep.mubr.bf16.mxu0 0
        %4134 = vmatmul.mubr.bf16.gmra.mrb[0].mxu0 %v3936
        %v4135 = vpop.f32.mrb[0].mxu0
        %v4136 = vadd.f32 %v4019, %v4135
        %v4137 = vpop.f32.mrb[0].mxu0
        %v4138 = vpop.f32.mrb[0].mxu0
        %v4139 = vadd.f32 %v4019, %v4138
        %v4140 = vpop.f32.mrb[0].mxu0
        %4141 = vmatprep.mubr.bf16.mxu0 0
        %4142 = vmatmul.mubr.bf16.gmra.mrb[0].mxu0 %v3937
        %v4143 = vpop.f32.mrb[0].mxu0
        %v4144 = vadd.f32 %v4019, %v4143
        %v4145 = vpop.f32.mrb[0].mxu0
        %v4146 = vpop.f32.mrb[0].mxu0
        %v4147 = vadd.f32 %v4019, %v4146
        %v4148 = vpop.f32.mrb[0].mxu0
        %4149 = vmatprep.mubr.bf16.mxu0 0
        %4150 = vmatmul.mubr.bf16.gmra.mrb[0].mxu0 %v3938
        %v4151 = vpop.f32.mrb[0].mxu0
        %v4152 = vadd.f32 %v4019, %v4151
        %v4153 = vpop.f32.mrb[0].mxu0
        %v4154 = vpop.f32.mrb[0].mxu0
        %v4155 = vadd.f32 %v4019, %v4154
        %v4156 = vpop.f32.mrb[0].mxu0
        %4157 = vmatprep.mubr.bf16.mxu0 0
        %4158 = vmatmul.mubr.bf16.gmra.mrb[0].mxu0 %v3939
        %v4159 = vpop.f32.mrb[0].mxu0
        %v4160 = vadd.f32 %v4019, %v4159
        %v4161 = vpop.f32.mrb[0].mxu0
        %v4162 = vpop.f32.mrb[0].mxu0
        %v4163 = vadd.f32 %v4019, %v4162
        %v4164 = vpop.f32.mrb[0].mxu0
        %4165 = vmatprep.mubr.bf16.mxu0 0
        %4166 = vmatmul.mubr.bf16.gmra.mrb[0].mxu0 %v3940
        %v4167 = vpop.f32.mrb[0].mxu0
        %v4168 = vadd.f32 %v4019, %v4167
        %v4169 = vpop.f32.mrb[0].mxu0
        %v4170 = vpop.f32.mrb[0].mxu0
        %v4171 = vadd.f32 %v4019, %v4170
        %v4172 = vpop.f32.mrb[0].mxu0
        %4173 = vmatprep.mubr.bf16.mxu0 0
        %4174 = vmatmul.mubr.bf16.gmra.mrb[0].mxu0 %v3941
        %v4175 = vpop.f32.mrb[0].mxu0
        %v4176 = vadd.f32 %v4019, %v4175
        %v4177 = vpop.f32.mrb[0].mxu0
        %v4178 = vpop.f32.mrb[0].mxu0
        %v4179 = vadd.f32 %v4019, %v4178
        %v4180 = vpop.f32.mrb[0].mxu0
        %4181 = vmatprep.mubr.bf16.mxu0 0
        %4182 = vmatmul.mubr.bf16.gmra.mrb[0].mxu0 %v3942
        %v4183 = vpop.f32.mrb[0].mxu0
        %v4184 = vadd.f32 %v4019, %v4183
        %v4185 = vpop.f32.mrb[0].mxu0
        %v4186 = vpop.f32.mrb[0].mxu0
        %v4187 = vadd.f32 %v4019, %v4186
        %v4188 = vpop.f32.mrb[0].mxu0
        %4189 = vmatprep.mubr.bf16.mxu0 0
        %4190 = vmatmul.mubr.bf16.gmra.mrb[0].mxu0 %v3943
        %v4191 = vpop.f32.mrb[0].mxu0
        %v4192 = vadd.f32 %v4019, %v4191
        %v4193 = vpop.f32.mrb[0].mxu0
        %v4194 = vpop.f32.mrb[0].mxu0
        %v4195 = vadd.f32 %v4019, %v4194
        %v4196 = vpop.f32.mrb[0].mxu0
        %4197 = vmatprep.mubr.bf16.mxu0 0
        %4198 = vmatmul.mubr.bf16.gmra.mrb[0].mxu0 %v3944
        %v4199 = vpop.f32.mrb[0].mxu0
        %v4200 = vadd.f32 %v4019, %v4199
        %v4201 = vpop.f32.mrb[0].mxu0
        %v4202 = vpop.f32.mrb[0].mxu0
        %v4203 = vadd.f32 %v4019, %v4202
        %v4204 = vpop.f32.mrb[0].mxu0
        %4205 = vmatprep.mubr.bf16.mxu0 0
        %4206 = vmatmul.mubr.bf16.gmra.mrb[0].mxu0 %v3945
        %v4207 = vpop.f32.mrb[0].mxu0
        %v4208 = vadd.f32 %v4019, %v4207
        %v4209 = vpop.f32.mrb[0].mxu0
        %v4210 = vpop.f32.mrb[0].mxu0
        %v4211 = vadd.f32 %v4019, %v4210
        %v4212 = vpop.f32.mrb[0].mxu0
        %4213 = vmatprep.mubr.bf16.mxu0 0
        %4214 = vmatmul.mubr.bf16.gmra.mrb[0].mxu0 %v3946
        %v4215 = vpop.f32.mrb[0].mxu0
        %v4216 = vadd.f32 %v4019, %v4215
        %v4217 = vpop.f32.mrb[0].mxu0
        %v4218 = vpop.f32.mrb[0].mxu0
        %v4219 = vadd.f32 %v4019, %v4218
        %v4220 = vpop.f32.mrb[0].mxu0
        %4221 = vmatprep.mubr.bf16.mxu0 0
        %4222 = vmatmul.mubr.bf16.gmra.mrb[0].mxu0 %v3947
        %v4223 = vpop.f32.mrb[0].mxu0
        %v4224 = vadd.f32 %v4019, %v4223
        %v4225 = vpop.f32.mrb[0].mxu0
        %v4226 = vpop.f32.mrb[0].mxu0
        %v4227 = vadd.f32 %v4019, %v4226
        %v4228 = vpop.f32.mrb[0].mxu0
        %4229 = vmatprep.mubr.bf16.mxu0 0
        %4230 = vmatmul.mubr.bf16.gmra.mrb[0].mxu0 %v3948
        %v4231 = vpop.f32.mrb[0].mxu0
        %v4232 = vadd.f32 %v4019, %v4231
        %v4233 = vpop.f32.mrb[0].mxu0
        %v4234 = vpop.f32.mrb[0].mxu0
        %v4235 = vadd.f32 %v4019, %v4234
        %v4236 = vpop.f32.mrb[0].mxu0
        %4237 = vmatprep.mubr.bf16.mxu0 0
        %4238 = vmatmul.mubr.bf16.gmra.mrb[0].mxu0 %v3949
        %v4239 = vpop.f32.mrb[0].mxu0
        %v4240 = vadd.f32 %v4019, %v4239
        %v4241 = vpop.f32.mrb[0].mxu0
        %v4242 = vpop.f32.mrb[0].mxu0
        %v4243 = vadd.f32 %v4019, %v4242
        %v4244 = vpop.f32.mrb[0].mxu0
        %4245 = vmatprep.mubr.bf16.mxu0 0
        %4246 = vmatmul.mubr.bf16.gmra.mrb[0].mxu0 %v3950
        %v4247 = vpop.f32.mrb[0].mxu0
        %v4248 = vadd.f32 %v4019, %v4247
        %v4249 = vpop.f32.mrb[0].mxu0
        %v4250 = vpop.f32.mrb[0].mxu0
        %v4251 = vadd.f32 %v4019, %v4250
        %v4252 = vpop.f32.mrb[0].mxu0
        %4253 = vmatprep.mubr.bf16.mxu0 0
        %4254 = vmatmul.mubr.bf16.gmra.mrb[0].mxu0 %v3951
        %v4255 = vpop.f32.mrb[0].mxu0
        %v4256 = vadd.f32 %v4019, %v4255
        %v4257 = vpop.f32.mrb[0].mxu0
        %v4258 = vpop.f32.mrb[0].mxu0
        %v4259 = vadd.f32 %v4019, %v4258
        %v4260 = vpop.f32.mrb[0].mxu0
        %4261 = vmatprep.mubr.bf16.mxu0 0
        %4262 = vmatmul.mubr.bf16.gmra.mrb[0].mxu0 %v3952
        %v4263 = vpop.f32.mrb[0].mxu0
        %v4264 = vadd.f32 %v4019, %v4263
        %v4265 = vpop.f32.mrb[0].mxu0
        %v4266 = vpop.f32.mrb[0].mxu0
        %v4267 = vadd.f32 %v4019, %v4266
        %v4268 = vpop.f32.mrb[0].mxu0
        %4269 = vmatprep.mubr.bf16.mxu0 0
        %4270 = vmatmul.mubr.bf16.gmra.mrb[0].mxu0 %v3953
        %v4271 = vpop.f32.mrb[0].mxu0
        %v4272 = vadd.f32 %v4019, %v4271
        %v4273 = vpop.f32.mrb[0].mxu0
        %v4274 = vpop.f32.mrb[0].mxu0
        %v4275 = vadd.f32 %v4019, %v4274
        %v4276 = vpop.f32.mrb[0].mxu0
        %4277 = vmatprep.mubr.bf16.mxu0 0
        %4278 = vmatmul.mubr.bf16.gmra.mrb[0].mxu0 %v3954
        %v4279 = vpop.f32.mrb[0].mxu0
        %v4280 = vadd.f32 %v4019, %v4279
        %v4281 = vpop.f32.mrb[0].mxu0
        %v4282 = vpop.f32.mrb[0].mxu0
        %v4283 = vadd.f32 %v4019, %v4282
        %v4284 = vpop.f32.mrb[0].mxu0
        %4285 = vmatprep.mubr.bf16.mxu0 0
        %4286 = vmatmul.mubr.bf16.gmra.mrb[0].mxu0 %v3955
        %v4287 = vpop.f32.mrb[0].mxu0
        %v4288 = vadd.f32 %v4019, %v4287
        %v4289 = vpop.f32.mrb[0].mxu0
        %v4290 = vpop.f32.mrb[0].mxu0
        %v4291 = vadd.f32 %v4019, %v4290
        %v4292 = vpop.f32.mrb[0].mxu0
        %4293 = vmatprep.mubr.bf16.mxu0 0
        %4294 = vmatmul.mubr.bf16.gmra.mrb[0].mxu0 %v3956
        %v4295 = vpop.f32.mrb[0].mxu0
        %v4296 = vadd.f32 %v4019, %v4295
        %v4297 = vpop.f32.mrb[0].mxu0
        %v4298 = vpop.f32.mrb[0].mxu0
        %v4299 = vadd.f32 %v4019, %v4298
        %v4300 = vpop.f32.mrb[0].mxu0
        %4301 = vmatprep.mubr.bf16.mxu0 0
        %4302 = vmatmul.mubr.bf16.gmra.mrb[0].mxu0 %v3957
        %v4303 = vpop.f32.mrb[0].mxu0
        %v4304 = vadd.f32 %v4019, %v4303
        %v4305 = vpop.f32.mrb[0].mxu0
        %v4306 = vpop.f32.mrb[0].mxu0
        %v4307 = vadd.f32 %v4019, %v4306
        %v4308 = vpop.f32.mrb[0].mxu0
        %4309 = vmatprep.mubr.bf16.mxu0 0
        %4310 = vmatmul.mubr.bf16.gmra.mrb[0].mxu0 %v3958
        %v4311 = vpop.f32.mrb[0].mxu0
        %v4312 = vadd.f32 %v4019, %v4311
        %v4313 = vpop.f32.mrb[0].mxu0
        %v4314 = vpop.f32.mrb[0].mxu0
        %v4315 = vadd.f32 %v4019, %v4314
        %v4316 = vpop.f32.mrb[0].mxu0
        %4317 = vmatprep.mubr.bf16.mxu0 0
        %4318 = vmatmul.mubr.bf16.gmra.mrb[0].mxu0 %v3959
        %v4319 = vpop.f32.mrb[0].mxu0
        %v4320 = vadd.f32 %v4019, %v4319
        %v4321 = vpop.f32.mrb[0].mxu0
        %v4322 = vpop.f32.mrb[0].mxu0
        %v4323 = vadd.f32 %v4019, %v4322
        %v4324 = vpop.f32.mrb[0].mxu0
        %4325 = vmatprep.mubr.bf16.mxu0 0
        %4326 = vmatmul.mubr.bf16.gmra.mrb[0].mxu0 %v3960
        %v4327 = vpop.f32.mrb[0].mxu0
        %v4328 = vadd.f32 %v4019, %v4327
        %v4329 = vpop.f32.mrb[0].mxu0
        %v4330 = vpop.f32.mrb[0].mxu0
        %v4331 = vadd.f32 %v4019, %v4330
        %v4332 = vpop.f32.mrb[0].mxu0
        %4333 = vmatprep.mubr.bf16.mxu0 0
        %4334 = vmatmul.mubr.bf16.gmra.mrb[0].mxu0 %v3961
        %v4335 = vpop.f32.mrb[0].mxu0
        %v4336 = vadd.f32 %v4019, %v4335
        %v4337 = vpop.f32.mrb[0].mxu0
        %v4338 = vpop.f32.mrb[0].mxu0
        %v4339 = vadd.f32 %v4019, %v4338
        %v4340 = vpop.f32.mrb[0].mxu0
        %4341 = vmatprep.mubr.bf16.mxu0 0
        %4342 = vmatmul.mubr.bf16.gmra.mrb[0].mxu0 %v3962
        %v4343 = vpop.f32.mrb[0].mxu0
        %v4344 = vadd.f32 %v4019, %v4343
        %v4345 = vpop.f32.mrb[0].mxu0
        %v4346 = vpop.f32.mrb[0].mxu0
        %v4347 = vadd.f32 %v4019, %v4346
        %v4348 = vpop.f32.mrb[0].mxu0
        %4349 = vmatprep.mubr.bf16.mxu0 0
        %4350 = vmatmul.mubr.bf16.gmra.mrb[0].mxu0 %v3963
        %v4351 = vpop.f32.mrb[0].mxu0
        %v4352 = vadd.f32 %v4019, %v4351
        %v4353 = vpop.f32.mrb[0].mxu0
        %v4354 = vpop.f32.mrb[0].mxu0
        %v4355 = vadd.f32 %v4019, %v4354
        %v4356 = vpop.f32.mrb[0].mxu0
        %4357 = vmatprep.mubr.bf16.mxu0 0
        %4358 = vmatmul.mubr.bf16.gmra.mrb[0].mxu0 %v3964
        %v4359 = vpop.f32.mrb[0].mxu0
        %v4360 = vadd.f32 %v4019, %v4359
        %v4361 = vpop.f32.mrb[0].mxu0
        %v4362 = vpop.f32.mrb[0].mxu0
        %v4363 = vadd.f32 %v4019, %v4362
        %v4364 = vpop.f32.mrb[0].mxu0
        %4365 = vmatprep.mubr.bf16.mxu0 0
        %4366 = vmatmul.mubr.bf16.gmra.mrb[0].mxu0 %v3965
        %v4367 = vpop.f32.mrb[0].mxu0
        %v4368 = vadd.f32 %v4019, %v4367
        %v4369 = vpop.f32.mrb[0].mxu0
        %v4370 = vpop.f32.mrb[0].mxu0
        %v4371 = vadd.f32 %v4019, %v4370
        %v4372 = vpop.f32.mrb[0].mxu0
        %4373 = vmatprep.mubr.bf16.mxu0 0
        %4374 = vmatmul.mubr.bf16.gmra.mrb[0].mxu0 %v3966
        %v4375 = vpop.f32.mrb[0].mxu0
        %v4376 = vadd.f32 %v4019, %v4375
        %v4377 = vpop.f32.mrb[0].mxu0
        %v4378 = vpop.f32.mrb[0].mxu0
        %v4379 = vadd.f32 %v4019, %v4378
        %v4380 = vpop.f32.mrb[0].mxu0
        %4381 = vmatprep.mubr.bf16.mxu0 0
        %4382 = vmatmul.mubr.bf16.gmra.mrb[0].mxu0 %v3967
        %v4383 = vpop.f32.mrb[0].mxu0
        %v4384 = vadd.f32 %v4019, %v4383
        %v4385 = vpop.f32.mrb[0].mxu0
        %v4386 = vpop.f32.mrb[0].mxu0
        %v4387 = vadd.f32 %v4019, %v4386
        %v4388 = vpop.f32.mrb[0].mxu0
        %4389 = vmatprep.mubr.bf16.mxu0 0
        %4390 = vmatmul.mubr.bf16.gmra.mrb[0].mxu0 %v3968
        %v4391 = vpop.f32.mrb[0].mxu0
        %v4392 = vadd.f32 %v4019, %v4391
        %v4393 = vpop.f32.mrb[0].mxu0
        %v4394 = vpop.f32.mrb[0].mxu0
        %v4395 = vadd.f32 %v4019, %v4394
        %v4396 = vpop.f32.mrb[0].mxu0
        %4397 = vmatprep.mubr.bf16.mxu0 0
        %4398 = vmatmul.mubr.bf16.gmra.mrb[0].mxu0 %v3969
        %v4399 = vpop.f32.mrb[0].mxu0
        %v4400 = vadd.f32 %v4019, %v4399
        %v4401 = vpop.f32.mrb[0].mxu0
        %v4402 = vpop.f32.mrb[0].mxu0
        %v4403 = vadd.f32 %v4019, %v4402
        %v4404 = vpop.f32.mrb[0].mxu0
        %4405 = vmatprep.mubr.bf16.mxu0 0
        %4406 = vmatmul.mubr.bf16.gmra.mrb[0].mxu0 %v3970
        %v4407 = vpop.f32.mrb[0].mxu0
        %v4408 = vadd.f32 %v4019, %v4407
        %v4409 = vpop.f32.mrb[0].mxu0
        %v4410 = vpop.f32.mrb[0].mxu0
        %v4411 = vadd.f32 %v4019, %v4410
        %v4412 = vpop.f32.mrb[0].mxu0
        %4413 = vmatprep.mubr.bf16.mxu0 0
        %4414 = vmatmul.mubr.bf16.gmra.mrb[0].mxu0 %v3971
        %v4415 = vpop.f32.mrb[0].mxu0
        %v4416 = vadd.f32 %v4019, %v4415
        %v4417 = vpop.f32.mrb[0].mxu0
        %v4418 = vpop.f32.mrb[0].mxu0
        %v4419 = vadd.f32 %v4019, %v4418
        %v4420 = vpop.f32.mrb[0].mxu0
        %4421 = vmatprep.mubr.bf16.mxu0 0
        %4422 = vmatmul.mubr.bf16.gmra.mrb[0].mxu0 %v3972
        %v4423 = vpop.f32.mrb[0].mxu0
        %v4424 = vadd.f32 %v4019, %v4423
        %v4425 = vpop.f32.mrb[0].mxu0
        %v4426 = vpop.f32.mrb[0].mxu0
        %v4427 = vadd.f32 %v4019, %v4426
        %v4428 = vpop.f32.mrb[0].mxu0
        %4429 = vmatprep.mubr.bf16.mxu0 0
        %4430 = vmatmul.mubr.bf16.gmra.mrb[0].mxu0 %v3973
        %v4431 = vpop.f32.mrb[0].mxu0
        %v4432 = vadd.f32 %v4019, %v4431
        %v4433 = vpop.f32.mrb[0].mxu0
        %v4434 = vpop.f32.mrb[0].mxu0
        %v4435 = vadd.f32 %v4019, %v4434
        %v4436 = vpop.f32.mrb[0].mxu0
        %4437 = vmatprep.mubr.bf16.mxu0 0
        %4438 = vmatmul.mubr.bf16.gmra.mrb[0].mxu0 %v3974
        %v4439 = vpop.f32.mrb[0].mxu0
        %v4440 = vadd.f32 %v4019, %v4439
        %v4441 = vpop.f32.mrb[0].mxu0
        %v4442 = vpop.f32.mrb[0].mxu0
        %v4443 = vadd.f32 %v4019, %v4442
        %v4444 = vpop.f32.mrb[0].mxu0
        %4445 = vmatprep.mubr.bf16.mxu0 0
        %4446 = vmatmul.mubr.bf16.gmra.mrb[0].mxu0 %v3975
        %v4447 = vpop.f32.mrb[0].mxu0
        %v4448 = vadd.f32 %v4019, %v4447
        %v4449 = vpop.f32.mrb[0].mxu0
        %v4450 = vpop.f32.mrb[0].mxu0
        %v4451 = vadd.f32 %v4019, %v4450
        %v4452 = vpop.f32.mrb[0].mxu0
        %4453 = vmatprep.mubr.bf16.mxu0 0
        %4454 = vmatmul.mubr.bf16.gmra.mrb[0].mxu0 %v3976
        %v4455 = vpop.f32.mrb[0].mxu0
        %v4456 = vadd.f32 %v4019, %v4455
        %v4457 = vpop.f32.mrb[0].mxu0
        %v4458 = vpop.f32.mrb[0].mxu0
        %v4459 = vadd.f32 %v4019, %v4458
        %v4460 = vpop.f32.mrb[0].mxu0
        %4461 = vmatprep.mubr.bf16.mxu0 0
        %4462 = vmatmul.mubr.bf16.gmra.mrb[0].mxu0 %v3977
        %v4463 = vpop.f32.mrb[0].mxu0
        %v4464 = vadd.f32 %v4019, %v4463
        %v4465 = vpop.f32.mrb[0].mxu0
        %v4466 = vpop.f32.mrb[0].mxu0
        %v4467 = vadd.f32 %v4019, %v4466
        %v4468 = vpop.f32.mrb[0].mxu0
        %4469 = vmatprep.mubr.bf16.mxu0 0
        %4470 = vmatmul.mubr.bf16.gmra.mrb[0].mxu0 %v3978
        %v4471 = vpop.f32.mrb[0].mxu0
        %v4472 = vadd.f32 %v4019, %v4471
        %v4473 = vpop.f32.mrb[0].mxu0
        %v4474 = vpop.f32.mrb[0].mxu0
        %v4475 = vadd.f32 %v4019, %v4474
        %v4476 = vpop.f32.mrb[0].mxu0
        %4477 = vmatprep.mubr.bf16.mxu0 0
        %4478 = vmatmul.mubr.bf16.gmra.mrb[0].mxu0 %v3979
        %v4479 = vpop.f32.mrb[0].mxu0
        %v4480 = vadd.f32 %v4019, %v4479
        %v4481 = vpop.f32.mrb[0].mxu0
        %v4482 = vpop.f32.mrb[0].mxu0
        %v4483 = vadd.f32 %v4019, %v4482
        %v4484 = vpop.f32.mrb[0].mxu0
        %4485 = vmatprep.mubr.bf16.mxu0 0
        %4486 = vmatmul.mubr.bf16.gmra.mrb[0].mxu0 %v3980
        %v4487 = vpop.f32.mrb[0].mxu0
        %v4488 = vadd.f32 %v4019, %v4487
        %v4489 = vpop.f32.mrb[0].mxu0
        %v4490 = vpop.f32.mrb[0].mxu0
        %v4491 = vadd.f32 %v4019, %v4490
        %v4492 = vpop.f32.mrb[0].mxu0
        %4493 = vmatprep.mubr.bf16.mxu0 0
        %4494 = vmatmul.mubr.bf16.gmra.mrb[0].mxu0 %v3981
        %v4495 = vpop.f32.mrb[0].mxu0
        %v4496 = vadd.f32 %v4019, %v4495
        %v4497 = vpop.f32.mrb[0].mxu0
        %v4498 = vpop.f32.mrb[0].mxu0
        %v4499 = vadd.f32 %v4019, %v4498
        %v4500 = vpop.f32.mrb[0].mxu0
        %4501 = vmatprep.mubr.bf16.mxu0 0
        %4502 = vmatmul.mubr.bf16.gmra.mrb[0].mxu0 %v3982
        %v4503 = vpop.f32.mrb[0].mxu0
        %v4504 = vadd.f32 %v4019, %v4503
        %v4505 = vpop.f32.mrb[0].mxu0
        %v4506 = vpop.f32.mrb[0].mxu0
        %v4507 = vadd.f32 %v4019, %v4506
        %v4508 = vpop.f32.mrb[0].mxu0
        %4509 = vmatprep.mubr.bf16.mxu0 0
        %4510 = vmatmul.mubr.bf16.gmra.mrb[0].mxu0 %v3983
        %v4511 = vpop.f32.mrb[0].mxu0
        %v4512 = vadd.f32 %v4019, %v4511
        %v4513 = vpop.f32.mrb[0].mxu0
        %v4514 = vpop.f32.mrb[0].mxu0
        %v4515 = vadd.f32 %v4019, %v4514
        %v4516 = vpop.f32.mrb[0].mxu0
        %4517 = vmatprep.mubr.bf16.mxu0 0
        %4518 = vmatmul.mubr.bf16.gmra.mrb[0].mxu0 %v3984
        %v4519 = vpop.f32.mrb[0].mxu0
        %v4520 = vadd.f32 %v4019, %v4519
        %v4521 = vpop.f32.mrb[0].mxu0
        %v4522 = vpop.f32.mrb[0].mxu0
        %v4523 = vadd.f32 %v4019, %v4522
        %v4524 = vpop.f32.mrb[0].mxu0
        %4525 = vmatprep.mubr.bf16.mxu0 0
        %4526 = vmatmul.mubr.bf16.gmra.mrb[0].mxu0 %v3985
        %v4527 = vpop.f32.mrb[0].mxu0
        %v4528 = vadd.f32 %v4019, %v4527
        %v4529 = vpop.f32.mrb[0].mxu0
        %v4530 = vpop.f32.mrb[0].mxu0
        %v4531 = vadd.f32 %v4019, %v4530
        %v4532 = vpop.f32.mrb[0].mxu0
        %4533 = vmatprep.mubr.bf16.mxu0 0
        %4534 = vmatmul.mubr.bf16.gmra.mrb[0].mxu0 %v3986
        %v4535 = vpop.f32.mrb[0].mxu0
        %v4536 = vadd.f32 %v4019, %v4535
        %v4537 = vpop.f32.mrb[0].mxu0
        %v4538 = vpop.f32.mrb[0].mxu0
        %v4539 = vadd.f32 %v4019, %v4538
        %v4540 = vpop.f32.mrb[0].mxu0
        %4541 = vmatprep.mubr.bf16.mxu0 0
        %4542 = vmatmul.mubr.bf16.gmra.mrb[0].mxu0 %v3987
        %v4543 = vpop.f32.mrb[0].mxu0
        %v4544 = vadd.f32 %v4019, %v4543
        %v4545 = vpop.f32.mrb[0].mxu0
        %v4546 = vpop.f32.mrb[0].mxu0
        %v4547 = vadd.f32 %v4019, %v4546
        %v4548 = vpop.f32.mrb[0].mxu0
        %4549 = vmatprep.mubr.bf16.mxu0 0
        %4550 = vmatmul.mubr.bf16.gmra.mrb[0].mxu0 %v3988
        %v4551 = vpop.f32.mrb[0].mxu0
        %v4552 = vadd.f32 %v4019, %v4551
        %v4553 = vpop.f32.mrb[0].mxu0
        %v4554 = vpop.f32.mrb[0].mxu0
        %v4555 = vadd.f32 %v4019, %v4554
        %v4556 = vpop.f32.mrb[0].mxu0
        %4557 = vmatprep.mubr.bf16.mxu0 0
        %4558 = vmatmul.mubr.bf16.gmra.mrb[0].mxu0 %v3989
        %v4559 = vpop.f32.mrb[0].mxu0
        %v4560 = vadd.f32 %v4019, %v4559
        %v4561 = vpop.f32.mrb[0].mxu0
        %v4562 = vpop.f32.mrb[0].mxu0
        %v4563 = vadd.f32 %v4019, %v4562
        %v4564 = vpop.f32.mrb[0].mxu0
        %4565 = vmatprep.mubr.bf16.mxu0 0
        %4566 = vmatmul.mubr.bf16.gmra.mrb[0].mxu0 %v3990
        %v4567 = vpop.f32.mrb[0].mxu0
        %v4568 = vadd.f32 %v4019, %v4567
        %v4569 = vpop.f32.mrb[0].mxu0
        %v4570 = vpop.f32.mrb[0].mxu0
        %v4571 = vadd.f32 %v4019, %v4570
        %v4572 = vpop.f32.mrb[0].mxu0
        %4573 = vmatprep.mubr.bf16.mxu0 0
        %4574 = vmatmul.mubr.bf16.gmra.mrb[0].mxu0 %v3991
        %v4575 = vpop.f32.mrb[0].mxu0
        %v4576 = vadd.f32 %v4019, %v4575
        %v4577 = vpop.f32.mrb[0].mxu0
        %v4578 = vpop.f32.mrb[0].mxu0
        %v4579 = vadd.f32 %v4019, %v4578
        %v4580 = vpop.f32.mrb[0].mxu0
        %4581 = vmatprep.mubr.bf16.mxu0 0
        %4582 = vmatmul.mubr.bf16.gmra.mrb[0].mxu0 %v3992
        %v4583 = vpop.f32.mrb[0].mxu0
        %v4584 = vadd.f32 %v4019, %v4583
        %v4585 = vpop.f32.mrb[0].mxu0
        %v4586 = vpop.f32.mrb[0].mxu0
        %v4587 = vadd.f32 %v4019, %v4586
        %v4588 = vpop.f32.mrb[0].mxu0
        %4589 = vmatprep.mubr.bf16.mxu0 0
        %4590 = vmatmul.mubr.bf16.gmra.mrb[0].mxu0 %v3993
        %v4591 = vpop.f32.mrb[0].mxu0
        %v4592 = vadd.f32 %v4019, %v4591
        %v4593 = vpop.f32.mrb[0].mxu0
        %v4594 = vpop.f32.mrb[0].mxu0
        %v4595 = vadd.f32 %v4019, %v4594
        %v4596 = vpop.f32.mrb[0].mxu0
        %4597 = vmatprep.mubr.bf16.mxu0 0
        %4598 = vmatmul.mubr.bf16.gmra.mrb[0].mxu0 %v3994
        %v4599 = vpop.f32.mrb[0].mxu0
        %v4600 = vadd.f32 %v4019, %v4599
        %v4601 = vpop.f32.mrb[0].mxu0
        %v4602 = vpop.f32.mrb[0].mxu0
        %v4603 = vadd.f32 %v4019, %v4602
        %v4604 = vpop.f32.mrb[0].mxu0
        %4605 = vmatprep.mubr.bf16.mxu0 0
        %4606 = vmatmul.mubr.bf16.gmra.mrb[0].mxu0 %v3995
        %v4607 = vpop.f32.mrb[0].mxu0
        %v4608 = vadd.f32 %v4019, %v4607
        %v4609 = vpop.f32.mrb[0].mxu0
        %v4610 = vpop.f32.mrb[0].mxu0
        %v4611 = vadd.f32 %v4019, %v4610
        %v4612 = vpop.f32.mrb[0].mxu0
        %4613 = vdwg.mxu0
        %v4614 = vadd.f32 %v2994, %v4104
        %v4615 = vadd.f32 %v2995, %v4107
        %v4616 = vadd.f32 %v2996, %v4112
        %v4617 = vadd.f32 %v2997, %v4115
        %v4618 = vadd.f32 %v2998, %v4120
        %v4619 = vadd.f32 %v2999, %v4123
        %v4620 = vadd.f32 %v3000, %v4128
        %v4621 = vadd.f32 %v3001, %v4131
        %v4622 = vadd.f32 %v3002, %v4136
        %v4623 = vadd.f32 %v3003, %v4139
        %v4624 = vadd.f32 %v3004, %v4144
        %v4625 = vadd.f32 %v3005, %v4147
        %v4626 = vadd.f32 %v3006, %v4152
        %v4627 = vadd.f32 %v3007, %v4155
        %v4628 = vadd.f32 %v3008, %v4160
        %v4629 = vadd.f32 %v3009, %v4163
        %v4630 = vadd.f32 %v3010, %v4168
        %v4631 = vadd.f32 %v3011, %v4171
        %v4632 = vadd.f32 %v3012, %v4176
        %v4633 = vadd.f32 %v3013, %v4179
        %v4634 = vadd.f32 %v3014, %v4184
        %v4635 = vadd.f32 %v3015, %v4187
        %v4636 = vadd.f32 %v3016, %v4192
        %v4637 = vadd.f32 %v3017, %v4195
        %v4638 = vadd.f32 %v3018, %v4200
        %v4639 = vadd.f32 %v3019, %v4203
        %v4640 = vadd.f32 %v3020, %v4208
        %v4641 = vadd.f32 %v3021, %v4211
        %v4642 = vadd.f32 %v3022, %v4216
        %v4643 = vadd.f32 %v3023, %v4219
        %v4644 = vadd.f32 %v3024, %v4224
        %v4645 = vadd.f32 %v3025, %v4227
        %v4646 = vadd.f32 %v3026, %v4232
        %v4647 = vadd.f32 %v3027, %v4235
        %v4648 = vadd.f32 %v3028, %v4240
        %v4649 = vadd.f32 %v3029, %v4243
        %v4650 = vadd.f32 %v3030, %v4248
        %v4651 = vadd.f32 %v3031, %v4251
        %v4652 = vadd.f32 %v3032, %v4256
        %v4653 = vadd.f32 %v3033, %v4259
        %v4654 = vadd.f32 %v3034, %v4264
        %v4655 = vadd.f32 %v3035, %v4267
        %v4656 = vadd.f32 %v3036, %v4272
        %v4657 = vadd.f32 %v3037, %v4275
        %v4658 = vadd.f32 %v3038, %v4280
        %v4659 = vadd.f32 %v3039, %v4283
        %v4660 = vadd.f32 %v3040, %v4288
        %v4661 = vadd.f32 %v3041, %v4291
        %v4662 = vadd.f32 %v3042, %v4296
        %v4663 = vadd.f32 %v3043, %v4299
        %v4664 = vadd.f32 %v3044, %v4304
        %v4665 = vadd.f32 %v3045, %v4307
        %v4666 = vadd.f32 %v3046, %v4312
        %v4667 = vadd.f32 %v3047, %v4315
        %v4668 = vadd.f32 %v3048, %v4320
        %v4669 = vadd.f32 %v3049, %v4323
        %v4670 = vadd.f32 %v3050, %v4328
        %v4671 = vadd.f32 %v3051, %v4331
        %v4672 = vadd.f32 %v3052, %v4336
        %v4673 = vadd.f32 %v3053, %v4339
        %v4674 = vadd.f32 %v3054, %v4344
        %v4675 = vadd.f32 %v3055, %v4347
        %v4676 = vadd.f32 %v3056, %v4352
        %v4677 = vadd.f32 %v3057, %v4355
        %v4678 = vadd.f32 %v3058, %v4360
        %v4679 = vadd.f32 %v3059, %v4363
        %v4680 = vadd.f32 %v3060, %v4368
        %v4681 = vadd.f32 %v3061, %v4371
        %v4682 = vadd.f32 %v3062, %v4376
        %v4683 = vadd.f32 %v3063, %v4379
        %v4684 = vadd.f32 %v3064, %v4384
        %v4685 = vadd.f32 %v3065, %v4387
        %v4686 = vadd.f32 %v3066, %v4392
        %v4687 = vadd.f32 %v3067, %v4395
        %v4688 = vadd.f32 %v3068, %v4400
        %v4689 = vadd.f32 %v3069, %v4403
        %v4690 = vadd.f32 %v3070, %v4408
        %v4691 = vadd.f32 %v3071, %v4411
        %v4692 = vadd.f32 %v3072, %v4416
        %v4693 = vadd.f32 %v3073, %v4419
        %v4694 = vadd.f32 %v3074, %v4424
        %v4695 = vadd.f32 %v3075, %v4427
        %v4696 = vadd.f32 %v3076, %v4432
        %v4697 = vadd.f32 %v3077, %v4435
        %v4698 = vadd.f32 %v3078, %v4440
        %v4699 = vadd.f32 %v3079, %v4443
        %v4700 = vadd.f32 %v3080, %v4448
        %v4701 = vadd.f32 %v3081, %v4451
        %v4702 = vadd.f32 %v3082, %v4456
        %v4703 = vadd.f32 %v3083, %v4459
        %v4704 = vadd.f32 %v3084, %v4464
        %v4705 = vadd.f32 %v3085, %v4467
        %v4706 = vadd.f32 %v3086, %v4472
        %v4707 = vadd.f32 %v3087, %v4475
        %v4708 = vadd.f32 %v3088, %v4480
        %v4709 = vadd.f32 %v3089, %v4483
        %v4710 = vadd.f32 %v3090, %v4488
        %v4711 = vadd.f32 %v3091, %v4491
        %v4712 = vadd.f32 %v3092, %v4496
        %v4713 = vadd.f32 %v3093, %v4499
        %v4714 = vadd.f32 %v3094, %v4504
        %v4715 = vadd.f32 %v3095, %v4507
        %v4716 = vadd.f32 %v3096, %v4512
        %v4717 = vadd.f32 %v3097, %v4515
        %v4718 = vadd.f32 %v3098, %v4520
        %v4719 = vadd.f32 %v3099, %v4523
        %v4720 = vadd.f32 %v3100, %v4528
        %v4721 = vadd.f32 %v3101, %v4531
        %v4722 = vadd.f32 %v3102, %v4536
        %v4723 = vadd.f32 %v3103, %v4539
        %v4724 = vadd.f32 %v3104, %v4544
        %v4725 = vadd.f32 %v3105, %v4547
        %v4726 = vadd.f32 %v3106, %v4552
        %v4727 = vadd.f32 %v3107, %v4555
        %v4728 = vadd.f32 %v3108, %v4560
        %v4729 = vadd.f32 %v3109, %v4563
        %v4730 = vadd.f32 %v3110, %v4568
        %v4731 = vadd.f32 %v3111, %v4571
        %v4732 = vadd.f32 %v3112, %v4576
        %v4733 = vadd.f32 %v3113, %v4579
        %v4734 = vadd.f32 %v3114, %v4584
        %v4735 = vadd.f32 %v3115, %v4587
        %v4736 = vadd.f32 %v3116, %v4592
        %v4737 = vadd.f32 %v3117, %v4595
        %v4738 = vadd.f32 %v3118, %v4600
        %v4739 = vadd.f32 %v3119, %v4603
        %v4740 = vadd.f32 %v3120, %v4608
        %v4741 = vadd.f32 %v3121, %v4611
        %v4742 = vpack.c.bf16 %v4615, %v4614
        %v4743 = vpack.c.bf16 %v4617, %v4616
        %v4744 = vpack.c.bf16 %v4619, %v4618
        %v4745 = vpack.c.bf16 %v4621, %v4620
        %v4746 = vpack.c.bf16 %v4623, %v4622
        %v4747 = vpack.c.bf16 %v4625, %v4624
        %v4748 = vpack.c.bf16 %v4627, %v4626
        %v4749 = vpack.c.bf16 %v4629, %v4628
        %v4750 = vpack.c.bf16 %v4631, %v4630
        %v4751 = vpack.c.bf16 %v4633, %v4632
        %v4752 = vpack.c.bf16 %v4635, %v4634
        %v4753 = vpack.c.bf16 %v4637, %v4636
        %v4754 = vpack.c.bf16 %v4639, %v4638
        %v4755 = vpack.c.bf16 %v4641, %v4640
        %v4756 = vpack.c.bf16 %v4643, %v4642
        %v4757 = vpack.c.bf16 %v4645, %v4644
        %v4758 = vpack.c.bf16 %v4647, %v4646
        %v4759 = vpack.c.bf16 %v4649, %v4648
        %v4760 = vpack.c.bf16 %v4651, %v4650
        %v4761 = vpack.c.bf16 %v4653, %v4652
        %v4762 = vpack.c.bf16 %v4655, %v4654
        %v4763 = vpack.c.bf16 %v4657, %v4656
        %v4764 = vpack.c.bf16 %v4659, %v4658
        %v4765 = vpack.c.bf16 %v4661, %v4660
        %v4766 = vpack.c.bf16 %v4663, %v4662
        %v4767 = vpack.c.bf16 %v4665, %v4664
        %v4768 = vpack.c.bf16 %v4667, %v4666
        %v4769 = vpack.c.bf16 %v4669, %v4668
        %v4770 = vpack.c.bf16 %v4671, %v4670
        %v4771 = vpack.c.bf16 %v4673, %v4672
        %v4772 = vpack.c.bf16 %v4675, %v4674
        %v4773 = vpack.c.bf16 %v4677, %v4676
        %v4774 = vpack.c.bf16 %v4679, %v4678
        %v4775 = vpack.c.bf16 %v4681, %v4680
        %v4776 = vpack.c.bf16 %v4683, %v4682
        %v4777 = vpack.c.bf16 %v4685, %v4684
        %v4778 = vpack.c.bf16 %v4687, %v4686
        %v4779 = vpack.c.bf16 %v4689, %v4688
        %v4780 = vpack.c.bf16 %v4691, %v4690
        %v4781 = vpack.c.bf16 %v4693, %v4692
        %v4782 = vpack.c.bf16 %v4695, %v4694
        %v4783 = vpack.c.bf16 %v4697, %v4696
        %v4784 = vpack.c.bf16 %v4699, %v4698
        %v4785 = vpack.c.bf16 %v4701, %v4700
        %v4786 = vpack.c.bf16 %v4703, %v4702
        %v4787 = vpack.c.bf16 %v4705, %v4704
        %v4788 = vpack.c.bf16 %v4707, %v4706
        %v4789 = vpack.c.bf16 %v4709, %v4708
        %v4790 = vpack.c.bf16 %v4711, %v4710
        %v4791 = vpack.c.bf16 %v4713, %v4712
        %v4792 = vpack.c.bf16 %v4715, %v4714
        %v4793 = vpack.c.bf16 %v4717, %v4716
        %v4794 = vpack.c.bf16 %v4719, %v4718
        %v4795 = vpack.c.bf16 %v4721, %v4720
        %v4796 = vpack.c.bf16 %v4723, %v4722
        %v4797 = vpack.c.bf16 %v4725, %v4724
        %v4798 = vpack.c.bf16 %v4727, %v4726
        %v4799 = vpack.c.bf16 %v4729, %v4728
        %v4800 = vpack.c.bf16 %v4731, %v4730
        %v4801 = vpack.c.bf16 %v4733, %v4732
        %v4802 = vpack.c.bf16 %v4735, %v4734
        %v4803 = vpack.c.bf16 %v4737, %v4736
        %v4804 = vpack.c.bf16 %v4739, %v4738
        %v4805 = vpack.c.bf16 %v4741, %v4740
        %s4806 = scalar_lea.vmem [#allocation7], 128
        %v4807 = vld [vmem:[%s4806] sm:$0xf]
        %v4808 = vld [vmem:[%s4806 + $0x4] sm:$0xf]
        %v4809 = vld [vmem:[%s4806 + $0x8] sm:$0xf]
        %v4810 = vld [vmem:[%s4806 + $0xc] sm:$0xf]
        %v4811 = vld [vmem:[%s4806 + $0x10] sm:$0xf]
        %v4812 = vld [vmem:[%s4806 + $0x14] sm:$0xf]
        %v4813 = vld [vmem:[%s4806 + $0x18] sm:$0xf]
        %v4814 = vld [vmem:[%s4806 + $0x1c] sm:$0xf]
        %v4815 = vld [vmem:[%s4806 + $0x20] sm:$0xf]
        %v4816 = vld [vmem:[%s4806 + $0x24] sm:$0xf]
        %v4817 = vld [vmem:[%s4806 + $0x28] sm:$0xf]
        %v4818 = vld [vmem:[%s4806 + $0x2c] sm:$0xf]
        %v4819 = vld [vmem:[%s4806 + $0x30] sm:$0xf]
        %v4820 = vld [vmem:[%s4806 + $0x34] sm:$0xf]
        %v4821 = vld [vmem:[%s4806 + $0x38] sm:$0xf]
        %v4822 = vld [vmem:[%s4806 + $0x3c] sm:$0xf]
        %s4823 = scalar_lea.vmem %s3, 2
        %v4824 = vld [vmem:[%s4823] sm:$0x1]
        %v4826 = vlaneseq
        %v4827 = vshrl.u32 %v4826, 7
        %v4828 = vsub.s32 0, %v4827
        %v4829 = vrot.slane %v4824, %v4828
        %v4847 = vunpack.c.l.b16 %v4807
        %v4848 = vunpack.c.l.b16 %v4808
        %v4849 = vunpack.c.l.b16 %v4809
        %v4850 = vunpack.c.l.b16 %v4810
        %v4851 = vunpack.c.l.b16 %v4811
        %v4852 = vunpack.c.l.b16 %v4812
        %v4853 = vunpack.c.l.b16 %v4813
        %v4854 = vunpack.c.l.b16 %v4814
        %v4855 = vunpack.c.l.b16 %v4815
        %v4856 = vunpack.c.l.b16 %v4816
        %v4857 = vunpack.c.l.b16 %v4817
        %v4858 = vunpack.c.l.b16 %v4818
        %v4859 = vunpack.c.l.b16 %v4819
        %v4860 = vunpack.c.l.b16 %v4820
        %v4861 = vunpack.c.l.b16 %v4821
        %v4862 = vunpack.c.l.b16 %v4822
        %v4863 = vpack.c.b16 %v4848, %v4847
        %v4864 = vpack.c.b16 %v4850, %v4849
        %v4865 = vpack.c.b16 %v4852, %v4851
        %v4866 = vpack.c.b16 %v4854, %v4853
        %v4867 = vpack.c.b16 %v4856, %v4855
        %v4868 = vpack.c.b16 %v4858, %v4857
        %v4869 = vpack.c.b16 %v4860, %v4859
        %v4870 = vpack.c.b16 %v4862, %v4861
        %4879 = vmatprep.subr.bf16.mxu0 0
        %4880 = vmatpush1.bf16.msra.mxu0 %v4863
        %4881 = vmatprep.subr.bf16.mxu0 0
        %4882 = vmatpush1.bf16.msra.mxu0 %v4864
        %4883 = vmatprep.subr.bf16.mxu0 0
        %4884 = vmatpush1.bf16.msra.mxu0 %v4865
        %4885 = vmatprep.subr.bf16.mxu0 0
        %4886 = vmatpush1.bf16.msra.mxu0 %v4866
        %4887 = vmatprep.subr.bf16.mxu0 0
        %4888 = vmatpush1.bf16.msra.mxu0 %v4867
        %4889 = vmatprep.subr.bf16.mxu0 0
        %4890 = vmatpush1.bf16.msra.mxu0 %v4868
        %4891 = vmatprep.subr.bf16.mxu0 0
        %4892 = vmatpush1.bf16.msra.mxu0 %v4869
        %4893 = vmatprep.subr.bf16.mxu0 0
        %4894 = vmatpush1.bf16.msra.mxu0 %v4870
        %4895 = vmatprep.subr.bf16.mxu0 0
        %4896 = vmatpush1.bf16.msra.mxu0 0
        %4897 = vmatprep.subr.bf16.mxu0 0
        %4898 = vmatpush1.bf16.msra.mxu0 0
        %4899 = vmatprep.subr.bf16.mxu0 0
        %4900 = vmatpush1.bf16.msra.mxu0 0
        %4901 = vmatprep.subr.bf16.mxu0 0
        %4902 = vmatpush1.bf16.msra.mxu0 0
        %4903 = vmatprep.subr.bf16.mxu0 0
        %4904 = vmatpush1.bf16.msra.mxu0 0
        %4905 = vmatprep.subr.bf16.mxu0 0
        %4906 = vmatpush1.bf16.msra.mxu0 0
        %4907 = vmatprep.subr.bf16.mxu0 0
        %4908 = vmatpush1.bf16.msra.mxu0 0
        %4909 = vmatprep.subr.bf16.mxu0 0
        %4910 = vmatpush1.bf16.msra.mxu0 0
        %4911 = vmatprep.mubr.bf16.mxu0 0
        %4912 = vmatmul.mubr.bf16.gmra.mrb[0].mxu0 %v4742
        %v4913 = vpop.f32.mrb[0].mxu0
        %v4914 = vadd.f32 %v4829, %v4913
        %v4915 = vpop.f32.mrb[0].mxu0
        %v4916 = vpop.f32.mrb[0].mxu0
        %v4917 = vadd.f32 %v4829, %v4916
        %v4918 = vpop.f32.mrb[0].mxu0
        %4919 = vmatprep.mubr.bf16.mxu0 0
        %4920 = vmatmul.mubr.bf16.gmra.mrb[0].mxu0 %v4743
        %v4921 = vpop.f32.mrb[0].mxu0
        %v4922 = vadd.f32 %v4829, %v4921
        %v4923 = vpop.f32.mrb[0].mxu0
        %v4924 = vpop.f32.mrb[0].mxu0
        %v4925 = vadd.f32 %v4829, %v4924
        %v4926 = vpop.f32.mrb[0].mxu0
        %4927 = vmatprep.mubr.bf16.mxu0 0
        %4928 = vmatmul.mubr.bf16.gmra.mrb[0].mxu0 %v4744
        %v4929 = vpop.f32.mrb[0].mxu0
        %v4930 = vadd.f32 %v4829, %v4929
        %v4931 = vpop.f32.mrb[0].mxu0
        %v4932 = vpop.f32.mrb[0].mxu0
        %v4933 = vadd.f32 %v4829, %v4932
        %v4934 = vpop.f32.mrb[0].mxu0
        %4935 = vmatprep.mubr.bf16.mxu0 0
        %4936 = vmatmul.mubr.bf16.gmra.mrb[0].mxu0 %v4745
        %v4937 = vpop.f32.mrb[0].mxu0
        %v4938 = vadd.f32 %v4829, %v4937
        %v4939 = vpop.f32.mrb[0].mxu0
        %v4940 = vpop.f32.mrb[0].mxu0
        %v4941 = vadd.f32 %v4829, %v4940
        %v4942 = vpop.f32.mrb[0].mxu0
        %4943 = vmatprep.mubr.bf16.mxu0 0
        %4944 = vmatmul.mubr.bf16.gmra.mrb[0].mxu0 %v4746
        %v4945 = vpop.f32.mrb[0].mxu0
        %v4946 = vadd.f32 %v4829, %v4945
        %v4947 = vpop.f32.mrb[0].mxu0
        %v4948 = vpop.f32.mrb[0].mxu0
        %v4949 = vadd.f32 %v4829, %v4948
        %v4950 = vpop.f32.mrb[0].mxu0
        %4951 = vmatprep.mubr.bf16.mxu0 0
        %4952 = vmatmul.mubr.bf16.gmra.mrb[0].mxu0 %v4747
        %v4953 = vpop.f32.mrb[0].mxu0
        %v4954 = vadd.f32 %v4829, %v4953
        %v4955 = vpop.f32.mrb[0].mxu0
        %v4956 = vpop.f32.mrb[0].mxu0
        %v4957 = vadd.f32 %v4829, %v4956
        %v4958 = vpop.f32.mrb[0].mxu0
        %4959 = vmatprep.mubr.bf16.mxu0 0
        %4960 = vmatmul.mubr.bf16.gmra.mrb[0].mxu0 %v4748
        %v4961 = vpop.f32.mrb[0].mxu0
        %v4962 = vadd.f32 %v4829, %v4961
        %v4963 = vpop.f32.mrb[0].mxu0
        %v4964 = vpop.f32.mrb[0].mxu0
        %v4965 = vadd.f32 %v4829, %v4964
        %v4966 = vpop.f32.mrb[0].mxu0
        %4967 = vmatprep.mubr.bf16.mxu0 0
        %4968 = vmatmul.mubr.bf16.gmra.mrb[0].mxu0 %v4749
        %v4969 = vpop.f32.mrb[0].mxu0
        %v4970 = vadd.f32 %v4829, %v4969
        %v4971 = vpop.f32.mrb[0].mxu0
        %v4972 = vpop.f32.mrb[0].mxu0
        %v4973 = vadd.f32 %v4829, %v4972
        %v4974 = vpop.f32.mrb[0].mxu0
        %4975 = vmatprep.mubr.bf16.mxu0 0
        %4976 = vmatmul.mubr.bf16.gmra.mrb[0].mxu0 %v4750
        %v4977 = vpop.f32.mrb[0].mxu0
        %v4978 = vadd.f32 %v4829, %v4977
        %v4979 = vpop.f32.mrb[0].mxu0
        %v4980 = vpop.f32.mrb[0].mxu0
        %v4981 = vadd.f32 %v4829, %v4980
        %v4982 = vpop.f32.mrb[0].mxu0
        %4983 = vmatprep.mubr.bf16.mxu0 0
        %4984 = vmatmul.mubr.bf16.gmra.mrb[0].mxu0 %v4751
        %v4985 = vpop.f32.mrb[0].mxu0
        %v4986 = vadd.f32 %v4829, %v4985
        %v4987 = vpop.f32.mrb[0].mxu0
        %v4988 = vpop.f32.mrb[0].mxu0
        %v4989 = vadd.f32 %v4829, %v4988
        %v4990 = vpop.f32.mrb[0].mxu0
        %4991 = vmatprep.mubr.bf16.mxu0 0
        %4992 = vmatmul.mubr.bf16.gmra.mrb[0].mxu0 %v4752
        %v4993 = vpop.f32.mrb[0].mxu0
        %v4994 = vadd.f32 %v4829, %v4993
        %v4995 = vpop.f32.mrb[0].mxu0
        %v4996 = vpop.f32.mrb[0].mxu0
        %v4997 = vadd.f32 %v4829, %v4996
        %v4998 = vpop.f32.mrb[0].mxu0
        %4999 = vmatprep.mubr.bf16.mxu0 0
        %5000 = vmatmul.mubr.bf16.gmra.mrb[0].mxu0 %v4753
        %v5001 = vpop.f32.mrb[0].mxu0
        %v5002 = vadd.f32 %v4829, %v5001
        %v5003 = vpop.f32.mrb[0].mxu0
        %v5004 = vpop.f32.mrb[0].mxu0
        %v5005 = vadd.f32 %v4829, %v5004
        %v5006 = vpop.f32.mrb[0].mxu0
        %5007 = vmatprep.mubr.bf16.mxu0 0
        %5008 = vmatmul.mubr.bf16.gmra.mrb[0].mxu0 %v4754
        %v5009 = vpop.f32.mrb[0].mxu0
        %v5010 = vadd.f32 %v4829, %v5009
        %v5011 = vpop.f32.mrb[0].mxu0
        %v5012 = vpop.f32.mrb[0].mxu0
        %v5013 = vadd.f32 %v4829, %v5012
        %v5014 = vpop.f32.mrb[0].mxu0
        %5015 = vmatprep.mubr.bf16.mxu0 0
        %5016 = vmatmul.mubr.bf16.gmra.mrb[0].mxu0 %v4755
        %v5017 = vpop.f32.mrb[0].mxu0
        %v5018 = vadd.f32 %v4829, %v5017
        %v5019 = vpop.f32.mrb[0].mxu0
        %v5020 = vpop.f32.mrb[0].mxu0
        %v5021 = vadd.f32 %v4829, %v5020
        %v5022 = vpop.f32.mrb[0].mxu0
        %5023 = vmatprep.mubr.bf16.mxu0 0
        %5024 = vmatmul.mubr.bf16.gmra.mrb[0].mxu0 %v4756
        %v5025 = vpop.f32.mrb[0].mxu0
        %v5026 = vadd.f32 %v4829, %v5025
        %v5027 = vpop.f32.mrb[0].mxu0
        %v5028 = vpop.f32.mrb[0].mxu0
        %v5029 = vadd.f32 %v4829, %v5028
        %v5030 = vpop.f32.mrb[0].mxu0
        %5031 = vmatprep.mubr.bf16.mxu0 0
        %5032 = vmatmul.mubr.bf16.gmra.mrb[0].mxu0 %v4757
        %v5033 = vpop.f32.mrb[0].mxu0
        %v5034 = vadd.f32 %v4829, %v5033
        %v5035 = vpop.f32.mrb[0].mxu0
        %v5036 = vpop.f32.mrb[0].mxu0
        %v5037 = vadd.f32 %v4829, %v5036
        %v5038 = vpop.f32.mrb[0].mxu0
        %5039 = vmatprep.mubr.bf16.mxu0 0
        %5040 = vmatmul.mubr.bf16.gmra.mrb[0].mxu0 %v4758
        %v5041 = vpop.f32.mrb[0].mxu0
        %v5042 = vadd.f32 %v4829, %v5041
        %v5043 = vpop.f32.mrb[0].mxu0
        %v5044 = vpop.f32.mrb[0].mxu0
        %v5045 = vadd.f32 %v4829, %v5044
        %v5046 = vpop.f32.mrb[0].mxu0
        %5047 = vmatprep.mubr.bf16.mxu0 0
        %5048 = vmatmul.mubr.bf16.gmra.mrb[0].mxu0 %v4759
        %v5049 = vpop.f32.mrb[0].mxu0
        %v5050 = vadd.f32 %v4829, %v5049
        %v5051 = vpop.f32.mrb[0].mxu0
        %v5052 = vpop.f32.mrb[0].mxu0
        %v5053 = vadd.f32 %v4829, %v5052
        %v5054 = vpop.f32.mrb[0].mxu0
        %5055 = vmatprep.mubr.bf16.mxu0 0
        %5056 = vmatmul.mubr.bf16.gmra.mrb[0].mxu0 %v4760
        %v5057 = vpop.f32.mrb[0].mxu0
        %v5058 = vadd.f32 %v4829, %v5057
        %v5059 = vpop.f32.mrb[0].mxu0
        %v5060 = vpop.f32.mrb[0].mxu0
        %v5061 = vadd.f32 %v4829, %v5060
        %v5062 = vpop.f32.mrb[0].mxu0
        %5063 = vmatprep.mubr.bf16.mxu0 0
        %5064 = vmatmul.mubr.bf16.gmra.mrb[0].mxu0 %v4761
        %v5065 = vpop.f32.mrb[0].mxu0
        %v5066 = vadd.f32 %v4829, %v5065
        %v5067 = vpop.f32.mrb[0].mxu0
        %v5068 = vpop.f32.mrb[0].mxu0
        %v5069 = vadd.f32 %v4829, %v5068
        %v5070 = vpop.f32.mrb[0].mxu0
        %5071 = vmatprep.mubr.bf16.mxu0 0
        %5072 = vmatmul.mubr.bf16.gmra.mrb[0].mxu0 %v4762
        %v5073 = vpop.f32.mrb[0].mxu0
        %v5074 = vadd.f32 %v4829, %v5073
        %v5075 = vpop.f32.mrb[0].mxu0
        %v5076 = vpop.f32.mrb[0].mxu0
        %v5077 = vadd.f32 %v4829, %v5076
        %v5078 = vpop.f32.mrb[0].mxu0
        %5079 = vmatprep.mubr.bf16.mxu0 0
        %5080 = vmatmul.mubr.bf16.gmra.mrb[0].mxu0 %v4763
        %v5081 = vpop.f32.mrb[0].mxu0
        %v5082 = vadd.f32 %v4829, %v5081
        %v5083 = vpop.f32.mrb[0].mxu0
        %v5084 = vpop.f32.mrb[0].mxu0
        %v5085 = vadd.f32 %v4829, %v5084
        %v5086 = vpop.f32.mrb[0].mxu0
        %5087 = vmatprep.mubr.bf16.mxu0 0
        %5088 = vmatmul.mubr.bf16.gmra.mrb[0].mxu0 %v4764
        %v5089 = vpop.f32.mrb[0].mxu0
        %v5090 = vadd.f32 %v4829, %v5089
        %v5091 = vpop.f32.mrb[0].mxu0
        %v5092 = vpop.f32.mrb[0].mxu0
        %v5093 = vadd.f32 %v4829, %v5092
        %v5094 = vpop.f32.mrb[0].mxu0
        %5095 = vmatprep.mubr.bf16.mxu0 0
        %5096 = vmatmul.mubr.bf16.gmra.mrb[0].mxu0 %v4765
        %v5097 = vpop.f32.mrb[0].mxu0
        %v5098 = vadd.f32 %v4829, %v5097
        %v5099 = vpop.f32.mrb[0].mxu0
        %v5100 = vpop.f32.mrb[0].mxu0
        %v5101 = vadd.f32 %v4829, %v5100
        %v5102 = vpop.f32.mrb[0].mxu0
        %5103 = vmatprep.mubr.bf16.mxu0 0
        %5104 = vmatmul.mubr.bf16.gmra.mrb[0].mxu0 %v4766
        %v5105 = vpop.f32.mrb[0].mxu0
        %v5106 = vadd.f32 %v4829, %v5105
        %v5107 = vpop.f32.mrb[0].mxu0
        %v5108 = vpop.f32.mrb[0].mxu0
        %v5109 = vadd.f32 %v4829, %v5108
        %v5110 = vpop.f32.mrb[0].mxu0
        %5111 = vmatprep.mubr.bf16.mxu0 0
        %5112 = vmatmul.mubr.bf16.gmra.mrb[0].mxu0 %v4767
        %v5113 = vpop.f32.mrb[0].mxu0
        %v5114 = vadd.f32 %v4829, %v5113
        %v5115 = vpop.f32.mrb[0].mxu0
        %v5116 = vpop.f32.mrb[0].mxu0
        %v5117 = vadd.f32 %v4829, %v5116
        %v5118 = vpop.f32.mrb[0].mxu0
        %5119 = vmatprep.mubr.bf16.mxu0 0
        %5120 = vmatmul.mubr.bf16.gmra.mrb[0].mxu0 %v4768
        %v5121 = vpop.f32.mrb[0].mxu0
        %v5122 = vadd.f32 %v4829, %v5121
        %v5123 = vpop.f32.mrb[0].mxu0
        %v5124 = vpop.f32.mrb[0].mxu0
        %v5125 = vadd.f32 %v4829, %v5124
        %v5126 = vpop.f32.mrb[0].mxu0
        %5127 = vmatprep.mubr.bf16.mxu0 0
        %5128 = vmatmul.mubr.bf16.gmra.mrb[0].mxu0 %v4769
        %v5129 = vpop.f32.mrb[0].mxu0
        %v5130 = vadd.f32 %v4829, %v5129
        %v5131 = vpop.f32.mrb[0].mxu0
        %v5132 = vpop.f32.mrb[0].mxu0
        %v5133 = vadd.f32 %v4829, %v5132
        %v5134 = vpop.f32.mrb[0].mxu0
        %5135 = vmatprep.mubr.bf16.mxu0 0
        %5136 = vmatmul.mubr.bf16.gmra.mrb[0].mxu0 %v4770
        %v5137 = vpop.f32.mrb[0].mxu0
        %v5138 = vadd.f32 %v4829, %v5137
        %v5139 = vpop.f32.mrb[0].mxu0
        %v5140 = vpop.f32.mrb[0].mxu0
        %v5141 = vadd.f32 %v4829, %v5140
        %v5142 = vpop.f32.mrb[0].mxu0
        %5143 = vmatprep.mubr.bf16.mxu0 0
        %5144 = vmatmul.mubr.bf16.gmra.mrb[0].mxu0 %v4771
        %v5145 = vpop.f32.mrb[0].mxu0
        %v5146 = vadd.f32 %v4829, %v5145
        %v5147 = vpop.f32.mrb[0].mxu0
        %v5148 = vpop.f32.mrb[0].mxu0
        %v5149 = vadd.f32 %v4829, %v5148
        %v5150 = vpop.f32.mrb[0].mxu0
        %5151 = vmatprep.mubr.bf16.mxu0 0
        %5152 = vmatmul.mubr.bf16.gmra.mrb[0].mxu0 %v4772
        %v5153 = vpop.f32.mrb[0].mxu0
        %v5154 = vadd.f32 %v4829, %v5153
        %v5155 = vpop.f32.mrb[0].mxu0
        %v5156 = vpop.f32.mrb[0].mxu0
        %v5157 = vadd.f32 %v4829, %v5156
        %v5158 = vpop.f32.mrb[0].mxu0
        %5159 = vmatprep.mubr.bf16.mxu0 0
        %5160 = vmatmul.mubr.bf16.gmra.mrb[0].mxu0 %v4773
        %v5161 = vpop.f32.mrb[0].mxu0
        %v5162 = vadd.f32 %v4829, %v5161
        %v5163 = vpop.f32.mrb[0].mxu0
        %v5164 = vpop.f32.mrb[0].mxu0
        %v5165 = vadd.f32 %v4829, %v5164
        %v5166 = vpop.f32.mrb[0].mxu0
        %5167 = vmatprep.mubr.bf16.mxu0 0
        %5168 = vmatmul.mubr.bf16.gmra.mrb[0].mxu0 %v4774
        %v5169 = vpop.f32.mrb[0].mxu0
        %v5170 = vadd.f32 %v4829, %v5169
        %v5171 = vpop.f32.mrb[0].mxu0
        %v5172 = vpop.f32.mrb[0].mxu0
        %v5173 = vadd.f32 %v4829, %v5172
        %v5174 = vpop.f32.mrb[0].mxu0
        %5175 = vmatprep.mubr.bf16.mxu0 0
        %5176 = vmatmul.mubr.bf16.gmra.mrb[0].mxu0 %v4775
        %v5177 = vpop.f32.mrb[0].mxu0
        %v5178 = vadd.f32 %v4829, %v5177
        %v5179 = vpop.f32.mrb[0].mxu0
        %v5180 = vpop.f32.mrb[0].mxu0
        %v5181 = vadd.f32 %v4829, %v5180
        %v5182 = vpop.f32.mrb[0].mxu0
        %5183 = vmatprep.mubr.bf16.mxu0 0
        %5184 = vmatmul.mubr.bf16.gmra.mrb[0].mxu0 %v4776
        %v5185 = vpop.f32.mrb[0].mxu0
        %v5186 = vadd.f32 %v4829, %v5185
        %v5187 = vpop.f32.mrb[0].mxu0
        %v5188 = vpop.f32.mrb[0].mxu0
        %v5189 = vadd.f32 %v4829, %v5188
        %v5190 = vpop.f32.mrb[0].mxu0
        %5191 = vmatprep.mubr.bf16.mxu0 0
        %5192 = vmatmul.mubr.bf16.gmra.mrb[0].mxu0 %v4777
        %v5193 = vpop.f32.mrb[0].mxu0
        %v5194 = vadd.f32 %v4829, %v5193
        %v5195 = vpop.f32.mrb[0].mxu0
        %v5196 = vpop.f32.mrb[0].mxu0
        %v5197 = vadd.f32 %v4829, %v5196
        %v5198 = vpop.f32.mrb[0].mxu0
        %5199 = vmatprep.mubr.bf16.mxu0 0
        %5200 = vmatmul.mubr.bf16.gmra.mrb[0].mxu0 %v4778
        %v5201 = vpop.f32.mrb[0].mxu0
        %v5202 = vadd.f32 %v4829, %v5201
        %v5203 = vpop.f32.mrb[0].mxu0
        %v5204 = vpop.f32.mrb[0].mxu0
        %v5205 = vadd.f32 %v4829, %v5204
        %v5206 = vpop.f32.mrb[0].mxu0
        %5207 = vmatprep.mubr.bf16.mxu0 0
        %5208 = vmatmul.mubr.bf16.gmra.mrb[0].mxu0 %v4779
        %v5209 = vpop.f32.mrb[0].mxu0
        %v5210 = vadd.f32 %v4829, %v5209
        %v5211 = vpop.f32.mrb[0].mxu0
        %v5212 = vpop.f32.mrb[0].mxu0
        %v5213 = vadd.f32 %v4829, %v5212
        %v5214 = vpop.f32.mrb[0].mxu0
        %5215 = vmatprep.mubr.bf16.mxu0 0
        %5216 = vmatmul.mubr.bf16.gmra.mrb[0].mxu0 %v4780
        %v5217 = vpop.f32.mrb[0].mxu0
        %v5218 = vadd.f32 %v4829, %v5217
        %v5219 = vpop.f32.mrb[0].mxu0
        %v5220 = vpop.f32.mrb[0].mxu0
        %v5221 = vadd.f32 %v4829, %v5220
        %v5222 = vpop.f32.mrb[0].mxu0
        %5223 = vmatprep.mubr.bf16.mxu0 0
        %5224 = vmatmul.mubr.bf16.gmra.mrb[0].mxu0 %v4781
        %v5225 = vpop.f32.mrb[0].mxu0
        %v5226 = vadd.f32 %v4829, %v5225
        %v5227 = vpop.f32.mrb[0].mxu0
        %v5228 = vpop.f32.mrb[0].mxu0
        %v5229 = vadd.f32 %v4829, %v5228
        %v5230 = vpop.f32.mrb[0].mxu0
        %5231 = vmatprep.mubr.bf16.mxu0 0
        %5232 = vmatmul.mubr.bf16.gmra.mrb[0].mxu0 %v4782
        %v5233 = vpop.f32.mrb[0].mxu0
        %v5234 = vadd.f32 %v4829, %v5233
        %v5235 = vpop.f32.mrb[0].mxu0
        %v5236 = vpop.f32.mrb[0].mxu0
        %v5237 = vadd.f32 %v4829, %v5236
        %v5238 = vpop.f32.mrb[0].mxu0
        %5239 = vmatprep.mubr.bf16.mxu0 0
        %5240 = vmatmul.mubr.bf16.gmra.mrb[0].mxu0 %v4783
        %v5241 = vpop.f32.mrb[0].mxu0
        %v5242 = vadd.f32 %v4829, %v5241
        %v5243 = vpop.f32.mrb[0].mxu0
        %v5244 = vpop.f32.mrb[0].mxu0
        %v5245 = vadd.f32 %v4829, %v5244
        %v5246 = vpop.f32.mrb[0].mxu0
        %5247 = vmatprep.mubr.bf16.mxu0 0
        %5248 = vmatmul.mubr.bf16.gmra.mrb[0].mxu0 %v4784
        %v5249 = vpop.f32.mrb[0].mxu0
        %v5250 = vadd.f32 %v4829, %v5249
        %v5251 = vpop.f32.mrb[0].mxu0
        %v5252 = vpop.f32.mrb[0].mxu0
        %v5253 = vadd.f32 %v4829, %v5252
        %v5254 = vpop.f32.mrb[0].mxu0
        %5255 = vmatprep.mubr.bf16.mxu0 0
        %5256 = vmatmul.mubr.bf16.gmra.mrb[0].mxu0 %v4785
        %v5257 = vpop.f32.mrb[0].mxu0
        %v5258 = vadd.f32 %v4829, %v5257
        %v5259 = vpop.f32.mrb[0].mxu0
        %v5260 = vpop.f32.mrb[0].mxu0
        %v5261 = vadd.f32 %v4829, %v5260
        %v5262 = vpop.f32.mrb[0].mxu0
        %5263 = vmatprep.mubr.bf16.mxu0 0
        %5264 = vmatmul.mubr.bf16.gmra.mrb[0].mxu0 %v4786
        %v5265 = vpop.f32.mrb[0].mxu0
        %v5266 = vadd.f32 %v4829, %v5265
        %v5267 = vpop.f32.mrb[0].mxu0
        %v5268 = vpop.f32.mrb[0].mxu0
        %v5269 = vadd.f32 %v4829, %v5268
        %v5270 = vpop.f32.mrb[0].mxu0
        %5271 = vmatprep.mubr.bf16.mxu0 0
        %5272 = vmatmul.mubr.bf16.gmra.mrb[0].mxu0 %v4787
        %v5273 = vpop.f32.mrb[0].mxu0
        %v5274 = vadd.f32 %v4829, %v5273
        %v5275 = vpop.f32.mrb[0].mxu0
        %v5276 = vpop.f32.mrb[0].mxu0
        %v5277 = vadd.f32 %v4829, %v5276
        %v5278 = vpop.f32.mrb[0].mxu0
        %5279 = vmatprep.mubr.bf16.mxu0 0
        %5280 = vmatmul.mubr.bf16.gmra.mrb[0].mxu0 %v4788
        %v5281 = vpop.f32.mrb[0].mxu0
        %v5282 = vadd.f32 %v4829, %v5281
        %v5283 = vpop.f32.mrb[0].mxu0
        %v5284 = vpop.f32.mrb[0].mxu0
        %v5285 = vadd.f32 %v4829, %v5284
        %v5286 = vpop.f32.mrb[0].mxu0
        %5287 = vmatprep.mubr.bf16.mxu0 0
        %5288 = vmatmul.mubr.bf16.gmra.mrb[0].mxu0 %v4789
        %v5289 = vpop.f32.mrb[0].mxu0
        %v5290 = vadd.f32 %v4829, %v5289
        %v5291 = vpop.f32.mrb[0].mxu0
        %v5292 = vpop.f32.mrb[0].mxu0
        %v5293 = vadd.f32 %v4829, %v5292
        %v5294 = vpop.f32.mrb[0].mxu0
        %5295 = vmatprep.mubr.bf16.mxu0 0
        %5296 = vmatmul.mubr.bf16.gmra.mrb[0].mxu0 %v4790
        %v5297 = vpop.f32.mrb[0].mxu0
        %v5298 = vadd.f32 %v4829, %v5297
        %v5299 = vpop.f32.mrb[0].mxu0
        %v5300 = vpop.f32.mrb[0].mxu0
        %v5301 = vadd.f32 %v4829, %v5300
        %v5302 = vpop.f32.mrb[0].mxu0
        %5303 = vmatprep.mubr.bf16.mxu0 0
        %5304 = vmatmul.mubr.bf16.gmra.mrb[0].mxu0 %v4791
        %v5305 = vpop.f32.mrb[0].mxu0
        %v5306 = vadd.f32 %v4829, %v5305
        %v5307 = vpop.f32.mrb[0].mxu0
        %v5308 = vpop.f32.mrb[0].mxu0
        %v5309 = vadd.f32 %v4829, %v5308
        %v5310 = vpop.f32.mrb[0].mxu0
        %5311 = vmatprep.mubr.bf16.mxu0 0
        %5312 = vmatmul.mubr.bf16.gmra.mrb[0].mxu0 %v4792
        %v5313 = vpop.f32.mrb[0].mxu0
        %v5314 = vadd.f32 %v4829, %v5313
        %v5315 = vpop.f32.mrb[0].mxu0
        %v5316 = vpop.f32.mrb[0].mxu0
        %v5317 = vadd.f32 %v4829, %v5316
        %v5318 = vpop.f32.mrb[0].mxu0
        %5319 = vmatprep.mubr.bf16.mxu0 0
        %5320 = vmatmul.mubr.bf16.gmra.mrb[0].mxu0 %v4793
        %v5321 = vpop.f32.mrb[0].mxu0
        %v5322 = vadd.f32 %v4829, %v5321
        %v5323 = vpop.f32.mrb[0].mxu0
        %v5324 = vpop.f32.mrb[0].mxu0
        %v5325 = vadd.f32 %v4829, %v5324
        %v5326 = vpop.f32.mrb[0].mxu0
        %5327 = vmatprep.mubr.bf16.mxu0 0
        %5328 = vmatmul.mubr.bf16.gmra.mrb[0].mxu0 %v4794
        %v5329 = vpop.f32.mrb[0].mxu0
        %v5330 = vadd.f32 %v4829, %v5329
        %v5331 = vpop.f32.mrb[0].mxu0
        %v5332 = vpop.f32.mrb[0].mxu0
        %v5333 = vadd.f32 %v4829, %v5332
        %v5334 = vpop.f32.mrb[0].mxu0
        %5335 = vmatprep.mubr.bf16.mxu0 0
        %5336 = vmatmul.mubr.bf16.gmra.mrb[0].mxu0 %v4795
        %v5337 = vpop.f32.mrb[0].mxu0
        %v5338 = vadd.f32 %v4829, %v5337
        %v5339 = vpop.f32.mrb[0].mxu0
        %v5340 = vpop.f32.mrb[0].mxu0
        %v5341 = vadd.f32 %v4829, %v5340
        %v5342 = vpop.f32.mrb[0].mxu0
        %5343 = vmatprep.mubr.bf16.mxu0 0
        %5344 = vmatmul.mubr.bf16.gmra.mrb[0].mxu0 %v4796
        %v5345 = vpop.f32.mrb[0].mxu0
        %v5346 = vadd.f32 %v4829, %v5345
        %v5347 = vpop.f32.mrb[0].mxu0
        %v5348 = vpop.f32.mrb[0].mxu0
        %v5349 = vadd.f32 %v4829, %v5348
        %v5350 = vpop.f32.mrb[0].mxu0
        %5351 = vmatprep.mubr.bf16.mxu0 0
        %5352 = vmatmul.mubr.bf16.gmra.mrb[0].mxu0 %v4797
        %v5353 = vpop.f32.mrb[0].mxu0
        %v5354 = vadd.f32 %v4829, %v5353
        %v5355 = vpop.f32.mrb[0].mxu0
        %v5356 = vpop.f32.mrb[0].mxu0
        %v5357 = vadd.f32 %v4829, %v5356
        %v5358 = vpop.f32.mrb[0].mxu0
        %5359 = vmatprep.mubr.bf16.mxu0 0
        %5360 = vmatmul.mubr.bf16.gmra.mrb[0].mxu0 %v4798
        %v5361 = vpop.f32.mrb[0].mxu0
        %v5362 = vadd.f32 %v4829, %v5361
        %v5363 = vpop.f32.mrb[0].mxu0
        %v5364 = vpop.f32.mrb[0].mxu0
        %v5365 = vadd.f32 %v4829, %v5364
        %v5366 = vpop.f32.mrb[0].mxu0
        %5367 = vmatprep.mubr.bf16.mxu0 0
        %5368 = vmatmul.mubr.bf16.gmra.mrb[0].mxu0 %v4799
        %v5369 = vpop.f32.mrb[0].mxu0
        %v5370 = vadd.f32 %v4829, %v5369
        %v5371 = vpop.f32.mrb[0].mxu0
        %v5372 = vpop.f32.mrb[0].mxu0
        %v5373 = vadd.f32 %v4829, %v5372
        %v5374 = vpop.f32.mrb[0].mxu0
        %5375 = vmatprep.mubr.bf16.mxu0 0
        %5376 = vmatmul.mubr.bf16.gmra.mrb[0].mxu0 %v4800
        %v5377 = vpop.f32.mrb[0].mxu0
        %v5378 = vadd.f32 %v4829, %v5377
        %v5379 = vpop.f32.mrb[0].mxu0
        %v5380 = vpop.f32.mrb[0].mxu0
        %v5381 = vadd.f32 %v4829, %v5380
        %v5382 = vpop.f32.mrb[0].mxu0
        %5383 = vmatprep.mubr.bf16.mxu0 0
        %5384 = vmatmul.mubr.bf16.gmra.mrb[0].mxu0 %v4801
        %v5385 = vpop.f32.mrb[0].mxu0
        %v5386 = vadd.f32 %v4829, %v5385
        %v5387 = vpop.f32.mrb[0].mxu0
        %v5388 = vpop.f32.mrb[0].mxu0
        %v5389 = vadd.f32 %v4829, %v5388
        %v5390 = vpop.f32.mrb[0].mxu0
        %5391 = vmatprep.mubr.bf16.mxu0 0
        %5392 = vmatmul.mubr.bf16.gmra.mrb[0].mxu0 %v4802
        %v5393 = vpop.f32.mrb[0].mxu0
        %v5394 = vadd.f32 %v4829, %v5393
        %v5395 = vpop.f32.mrb[0].mxu0
        %v5396 = vpop.f32.mrb[0].mxu0
        %v5397 = vadd.f32 %v4829, %v5396
        %v5398 = vpop.f32.mrb[0].mxu0
        %5399 = vmatprep.mubr.bf16.mxu0 0
        %5400 = vmatmul.mubr.bf16.gmra.mrb[0].mxu0 %v4803
        %v5401 = vpop.f32.mrb[0].mxu0
        %v5402 = vadd.f32 %v4829, %v5401
        %v5403 = vpop.f32.mrb[0].mxu0
        %v5404 = vpop.f32.mrb[0].mxu0
        %v5405 = vadd.f32 %v4829, %v5404
        %v5406 = vpop.f32.mrb[0].mxu0
        %5407 = vmatprep.mubr.bf16.mxu0 0
        %5408 = vmatmul.mubr.bf16.gmra.mrb[0].mxu0 %v4804
        %v5409 = vpop.f32.mrb[0].mxu0
        %v5410 = vadd.f32 %v4829, %v5409
        %v5411 = vpop.f32.mrb[0].mxu0
        %v5412 = vpop.f32.mrb[0].mxu0
        %v5413 = vadd.f32 %v4829, %v5412
        %v5414 = vpop.f32.mrb[0].mxu0
        %5415 = vmatprep.mubr.bf16.mxu0 0
        %5416 = vmatmul.mubr.bf16.gmra.mrb[0].mxu0 %v4805
        %v5417 = vpop.f32.mrb[0].mxu0
        %v5418 = vadd.f32 %v4829, %v5417
        %v5419 = vpop.f32.mrb[0].mxu0
        %v5420 = vpop.f32.mrb[0].mxu0
        %v5421 = vadd.f32 %v4829, %v5420
        %v5422 = vpop.f32.mrb[0].mxu0
        %5423 = vdwg.mxu0
        %v5424 = vmax.f32 %v4914, 0.0
        %v5425 = vmax.f32 %v4917, 0.0
        %v5426 = vmax.f32 %v4922, 0.0
        %v5427 = vmax.f32 %v4925, 0.0
        %v5428 = vmax.f32 %v4930, 0.0
        %v5429 = vmax.f32 %v4933, 0.0
        %v5430 = vmax.f32 %v4938, 0.0
        %v5431 = vmax.f32 %v4941, 0.0
        %v5432 = vmax.f32 %v4946, 0.0
        %v5433 = vmax.f32 %v4949, 0.0
        %v5434 = vmax.f32 %v4954, 0.0
        %v5435 = vmax.f32 %v4957, 0.0
        %v5436 = vmax.f32 %v4962, 0.0
        %v5437 = vmax.f32 %v4965, 0.0
        %v5438 = vmax.f32 %v4970, 0.0
        %v5439 = vmax.f32 %v4973, 0.0
        %v5440 = vmax.f32 %v4978, 0.0
        %v5441 = vmax.f32 %v4981, 0.0
        %v5442 = vmax.f32 %v4986, 0.0
        %v5443 = vmax.f32 %v4989, 0.0
        %v5444 = vmax.f32 %v4994, 0.0
        %v5445 = vmax.f32 %v4997, 0.0
        %v5446 = vmax.f32 %v5002, 0.0
        %v5447 = vmax.f32 %v5005, 0.0
        %v5448 = vmax.f32 %v5010, 0.0
        %v5449 = vmax.f32 %v5013, 0.0
        %v5450 = vmax.f32 %v5018, 0.0
        %v5451 = vmax.f32 %v5021, 0.0
        %v5452 = vmax.f32 %v5026, 0.0
        %v5453 = vmax.f32 %v5029, 0.0
        %v5454 = vmax.f32 %v5034, 0.0
        %v5455 = vmax.f32 %v5037, 0.0
        %v5456 = vmax.f32 %v5042, 0.0
        %v5457 = vmax.f32 %v5045, 0.0
        %v5458 = vmax.f32 %v5050, 0.0
        %v5459 = vmax.f32 %v5053, 0.0
        %v5460 = vmax.f32 %v5058, 0.0
        %v5461 = vmax.f32 %v5061, 0.0
        %v5462 = vmax.f32 %v5066, 0.0
        %v5463 = vmax.f32 %v5069, 0.0
        %v5464 = vmax.f32 %v5074, 0.0
        %v5465 = vmax.f32 %v5077, 0.0
        %v5466 = vmax.f32 %v5082, 0.0
        %v5467 = vmax.f32 %v5085, 0.0
        %v5468 = vmax.f32 %v5090, 0.0
        %v5469 = vmax.f32 %v5093, 0.0
        %v5470 = vmax.f32 %v5098, 0.0
        %v5471 = vmax.f32 %v5101, 0.0
        %v5472 = vmax.f32 %v5106, 0.0
        %v5473 = vmax.f32 %v5109, 0.0
        %v5474 = vmax.f32 %v5114, 0.0
        %v5475 = vmax.f32 %v5117, 0.0
        %v5476 = vmax.f32 %v5122, 0.0
        %v5477 = vmax.f32 %v5125, 0.0
        %v5478 = vmax.f32 %v5130, 0.0
        %v5479 = vmax.f32 %v5133, 0.0
        %v5480 = vmax.f32 %v5138, 0.0
        %v5481 = vmax.f32 %v5141, 0.0
        %v5482 = vmax.f32 %v5146, 0.0
        %v5483 = vmax.f32 %v5149, 0.0
        %v5484 = vmax.f32 %v5154, 0.0
        %v5485 = vmax.f32 %v5157, 0.0
        %v5486 = vmax.f32 %v5162, 0.0
        %v5487 = vmax.f32 %v5165, 0.0
        %v5488 = vmax.f32 %v5170, 0.0
        %v5489 = vmax.f32 %v5173, 0.0
        %v5490 = vmax.f32 %v5178, 0.0
        %v5491 = vmax.f32 %v5181, 0.0
        %v5492 = vmax.f32 %v5186, 0.0
        %v5493 = vmax.f32 %v5189, 0.0
        %v5494 = vmax.f32 %v5194, 0.0
        %v5495 = vmax.f32 %v5197, 0.0
        %v5496 = vmax.f32 %v5202, 0.0
        %v5497 = vmax.f32 %v5205, 0.0
        %v5498 = vmax.f32 %v5210, 0.0
        %v5499 = vmax.f32 %v5213, 0.0
        %v5500 = vmax.f32 %v5218, 0.0
        %v5501 = vmax.f32 %v5221, 0.0
        %v5502 = vmax.f32 %v5226, 0.0
        %v5503 = vmax.f32 %v5229, 0.0
        %v5504 = vmax.f32 %v5234, 0.0
        %v5505 = vmax.f32 %v5237, 0.0
        %v5506 = vmax.f32 %v5242, 0.0
        %v5507 = vmax.f32 %v5245, 0.0
        %v5508 = vmax.f32 %v5250, 0.0
        %v5509 = vmax.f32 %v5253, 0.0
        %v5510 = vmax.f32 %v5258, 0.0
        %v5511 = vmax.f32 %v5261, 0.0
        %v5512 = vmax.f32 %v5266, 0.0
        %v5513 = vmax.f32 %v5269, 0.0
        %v5514 = vmax.f32 %v5274, 0.0
        %v5515 = vmax.f32 %v5277, 0.0
        %v5516 = vmax.f32 %v5282, 0.0
        %v5517 = vmax.f32 %v5285, 0.0
        %v5518 = vmax.f32 %v5290, 0.0
        %v5519 = vmax.f32 %v5293, 0.0
        %v5520 = vmax.f32 %v5298, 0.0
        %v5521 = vmax.f32 %v5301, 0.0
        %v5522 = vmax.f32 %v5306, 0.0
        %v5523 = vmax.f32 %v5309, 0.0
        %v5524 = vmax.f32 %v5314, 0.0
        %v5525 = vmax.f32 %v5317, 0.0
        %v5526 = vmax.f32 %v5322, 0.0
        %v5527 = vmax.f32 %v5325, 0.0
        %v5528 = vmax.f32 %v5330, 0.0
        %v5529 = vmax.f32 %v5333, 0.0
        %v5530 = vmax.f32 %v5338, 0.0
        %v5531 = vmax.f32 %v5341, 0.0
        %v5532 = vmax.f32 %v5346, 0.0
        %v5533 = vmax.f32 %v5349, 0.0
        %v5534 = vmax.f32 %v5354, 0.0
        %v5535 = vmax.f32 %v5357, 0.0
        %v5536 = vmax.f32 %v5362, 0.0
        %v5537 = vmax.f32 %v5365, 0.0
        %v5538 = vmax.f32 %v5370, 0.0
        %v5539 = vmax.f32 %v5373, 0.0
        %v5540 = vmax.f32 %v5378, 0.0
        %v5541 = vmax.f32 %v5381, 0.0
        %v5542 = vmax.f32 %v5386, 0.0
        %v5543 = vmax.f32 %v5389, 0.0
        %v5544 = vmax.f32 %v5394, 0.0
        %v5545 = vmax.f32 %v5397, 0.0
        %v5546 = vmax.f32 %v5402, 0.0
        %v5547 = vmax.f32 %v5405, 0.0
        %v5548 = vmax.f32 %v5410, 0.0
        %v5549 = vmax.f32 %v5413, 0.0
        %v5550 = vmax.f32 %v5418, 0.0
        %v5551 = vmax.f32 %v5421, 0.0
        %v5552 = vpack.c.bf16 %v5425, %v5424
        %v5553 = vpack.c.bf16 %v5427, %v5426
        %v5554 = vpack.c.bf16 %v5429, %v5428
        %v5555 = vpack.c.bf16 %v5431, %v5430
        %v5556 = vpack.c.bf16 %v5433, %v5432
        %v5557 = vpack.c.bf16 %v5435, %v5434
        %v5558 = vpack.c.bf16 %v5437, %v5436
        %v5559 = vpack.c.bf16 %v5439, %v5438
        %v5560 = vpack.c.bf16 %v5441, %v5440
        %v5561 = vpack.c.bf16 %v5443, %v5442
        %v5562 = vpack.c.bf16 %v5445, %v5444
        %v5563 = vpack.c.bf16 %v5447, %v5446
        %v5564 = vpack.c.bf16 %v5449, %v5448
        %v5565 = vpack.c.bf16 %v5451, %v5450
        %v5566 = vpack.c.bf16 %v5453, %v5452
        %v5567 = vpack.c.bf16 %v5455, %v5454
        %v5568 = vpack.c.bf16 %v5457, %v5456
        %v5569 = vpack.c.bf16 %v5459, %v5458
        %v5570 = vpack.c.bf16 %v5461, %v5460
        %v5571 = vpack.c.bf16 %v5463, %v5462
        %v5572 = vpack.c.bf16 %v5465, %v5464
        %v5573 = vpack.c.bf16 %v5467, %v5466
        %v5574 = vpack.c.bf16 %v5469, %v5468
        %v5575 = vpack.c.bf16 %v5471, %v5470
        %v5576 = vpack.c.bf16 %v5473, %v5472
        %v5577 = vpack.c.bf16 %v5475, %v5474
        %v5578 = vpack.c.bf16 %v5477, %v5476
        %v5579 = vpack.c.bf16 %v5479, %v5478
        %v5580 = vpack.c.bf16 %v5481, %v5480
        %v5581 = vpack.c.bf16 %v5483, %v5482
        %v5582 = vpack.c.bf16 %v5485, %v5484
        %v5583 = vpack.c.bf16 %v5487, %v5486
        %v5584 = vpack.c.bf16 %v5489, %v5488
        %v5585 = vpack.c.bf16 %v5491, %v5490
        %v5586 = vpack.c.bf16 %v5493, %v5492
        %v5587 = vpack.c.bf16 %v5495, %v5494
        %v5588 = vpack.c.bf16 %v5497, %v5496
        %v5589 = vpack.c.bf16 %v5499, %v5498
        %v5590 = vpack.c.bf16 %v5501, %v5500
        %v5591 = vpack.c.bf16 %v5503, %v5502
        %v5592 = vpack.c.bf16 %v5505, %v5504
        %v5593 = vpack.c.bf16 %v5507, %v5506
        %v5594 = vpack.c.bf16 %v5509, %v5508
        %v5595 = vpack.c.bf16 %v5511, %v5510
        %v5596 = vpack.c.bf16 %v5513, %v5512
        %v5597 = vpack.c.bf16 %v5515, %v5514
        %v5598 = vpack.c.bf16 %v5517, %v5516
        %v5599 = vpack.c.bf16 %v5519, %v5518
        %v5600 = vpack.c.bf16 %v5521, %v5520
        %v5601 = vpack.c.bf16 %v5523, %v5522
        %v5602 = vpack.c.bf16 %v5525, %v5524
        %v5603 = vpack.c.bf16 %v5527, %v5526
        %v5604 = vpack.c.bf16 %v5529, %v5528
        %v5605 = vpack.c.bf16 %v5531, %v5530
        %v5606 = vpack.c.bf16 %v5533, %v5532
        %v5607 = vpack.c.bf16 %v5535, %v5534
        %v5608 = vpack.c.bf16 %v5537, %v5536
        %v5609 = vpack.c.bf16 %v5539, %v5538
        %v5610 = vpack.c.bf16 %v5541, %v5540
        %v5611 = vpack.c.bf16 %v5543, %v5542
        %v5612 = vpack.c.bf16 %v5545, %v5544
        %v5613 = vpack.c.bf16 %v5547, %v5546
        %v5614 = vpack.c.bf16 %v5549, %v5548
        %v5615 = vpack.c.bf16 %v5551, %v5550
        %s5616 = scalar_lea.vmem [#allocation8], 128
        %v5617 = vld [vmem:[%s5616] sm:$0xf]
        %v5618 = vld [vmem:[%s5616 + $0x4] sm:$0xf]
        %v5619 = vld [vmem:[%s5616 + $0x8] sm:$0xf]
        %v5620 = vld [vmem:[%s5616 + $0xc] sm:$0xf]
        %v5621 = vld [vmem:[%s5616 + $0x10] sm:$0xf]
        %v5622 = vld [vmem:[%s5616 + $0x14] sm:$0xf]
        %v5623 = vld [vmem:[%s5616 + $0x18] sm:$0xf]
        %v5624 = vld [vmem:[%s5616 + $0x1c] sm:$0xf]
        %v5625 = vld [vmem:[%s5616 + $0x20] sm:$0xf]
        %v5626 = vld [vmem:[%s5616 + $0x24] sm:$0xf]
        %v5627 = vld [vmem:[%s5616 + $0x28] sm:$0xf]
        %v5628 = vld [vmem:[%s5616 + $0x2c] sm:$0xf]
        %v5629 = vld [vmem:[%s5616 + $0x30] sm:$0xf]
        %v5630 = vld [vmem:[%s5616 + $0x34] sm:$0xf]
        %v5631 = vld [vmem:[%s5616 + $0x38] sm:$0xf]
        %v5632 = vld [vmem:[%s5616 + $0x3c] sm:$0xf]
        %s5633 = scalar_lea.vmem %s5, 2
        %v5634 = vld [vmem:[%s5633] sm:$0x1]
        %v5636 = vlaneseq
        %v5637 = vshrl.u32 %v5636, 7
        %v5638 = vsub.s32 0, %v5637
        %v5639 = vrot.slane %v5634, %v5638
        %v5657 = vunpack.c.l.b16 %v5617
        %v5658 = vunpack.c.l.b16 %v5618
        %v5659 = vunpack.c.l.b16 %v5619
        %v5660 = vunpack.c.l.b16 %v5620
        %v5661 = vunpack.c.l.b16 %v5621
        %v5662 = vunpack.c.l.b16 %v5622
        %v5663 = vunpack.c.l.b16 %v5623
        %v5664 = vunpack.c.l.b16 %v5624
        %v5665 = vunpack.c.l.b16 %v5625
        %v5666 = vunpack.c.l.b16 %v5626
        %v5667 = vunpack.c.l.b16 %v5627
        %v5668 = vunpack.c.l.b16 %v5628
        %v5669 = vunpack.c.l.b16 %v5629
        %v5670 = vunpack.c.l.b16 %v5630
        %v5671 = vunpack.c.l.b16 %v5631
        %v5672 = vunpack.c.l.b16 %v5632
        %v5673 = vpack.c.b16 %v5658, %v5657
        %v5674 = vpack.c.b16 %v5660, %v5659
        %v5675 = vpack.c.b16 %v5662, %v5661
        %v5676 = vpack.c.b16 %v5664, %v5663
        %v5677 = vpack.c.b16 %v5666, %v5665
        %v5678 = vpack.c.b16 %v5668, %v5667
        %v5679 = vpack.c.b16 %v5670, %v5669
        %v5680 = vpack.c.b16 %v5672, %v5671
        %5689 = vmatprep.subr.bf16.mxu0 0
        %5690 = vmatpush1.bf16.msra.mxu0 %v5673
        %5691 = vmatprep.subr.bf16.mxu0 0
        %5692 = vmatpush1.bf16.msra.mxu0 %v5674
        %5693 = vmatprep.subr.bf16.mxu0 0
        %5694 = vmatpush1.bf16.msra.mxu0 %v5675
        %5695 = vmatprep.subr.bf16.mxu0 0
        %5696 = vmatpush1.bf16.msra.mxu0 %v5676
        %5697 = vmatprep.subr.bf16.mxu0 0
        %5698 = vmatpush1.bf16.msra.mxu0 %v5677
        %5699 = vmatprep.subr.bf16.mxu0 0
        %5700 = vmatpush1.bf16.msra.mxu0 %v5678
        %5701 = vmatprep.subr.bf16.mxu0 0
        %5702 = vmatpush1.bf16.msra.mxu0 %v5679
        %5703 = vmatprep.subr.bf16.mxu0 0
        %5704 = vmatpush1.bf16.msra.mxu0 %v5680
        %5705 = vmatprep.subr.bf16.mxu0 0
        %5706 = vmatpush1.bf16.msra.mxu0 0
        %5707 = vmatprep.subr.bf16.mxu0 0
        %5708 = vmatpush1.bf16.msra.mxu0 0
        %5709 = vmatprep.subr.bf16.mxu0 0
        %5710 = vmatpush1.bf16.msra.mxu0 0
        %5711 = vmatprep.subr.bf16.mxu0 0
        %5712 = vmatpush1.bf16.msra.mxu0 0
        %5713 = vmatprep.subr.bf16.mxu0 0
        %5714 = vmatpush1.bf16.msra.mxu0 0
        %5715 = vmatprep.subr.bf16.mxu0 0
        %5716 = vmatpush1.bf16.msra.mxu0 0
        %5717 = vmatprep.subr.bf16.mxu0 0
        %5718 = vmatpush1.bf16.msra.mxu0 0
        %5719 = vmatprep.subr.bf16.mxu0 0
        %5720 = vmatpush1.bf16.msra.mxu0 0
        %5721 = vmatprep.mubr.bf16.mxu0 0
        %5722 = vmatmul.mubr.bf16.gmra.mrb[0].mxu0 %v5552
        %v5723 = vpop.f32.mrb[0].mxu0
        %v5724 = vadd.f32 %v5639, %v5723
        %v5725 = vpop.f32.mrb[0].mxu0
        %v5726 = vpop.f32.mrb[0].mxu0
        %v5727 = vadd.f32 %v5639, %v5726
        %v5728 = vpop.f32.mrb[0].mxu0
        %5729 = vmatprep.mubr.bf16.mxu0 0
        %5730 = vmatmul.mubr.bf16.gmra.mrb[0].mxu0 %v5553
        %v5731 = vpop.f32.mrb[0].mxu0
        %v5732 = vadd.f32 %v5639, %v5731
        %v5733 = vpop.f32.mrb[0].mxu0
        %v5734 = vpop.f32.mrb[0].mxu0
        %v5735 = vadd.f32 %v5639, %v5734
        %v5736 = vpop.f32.mrb[0].mxu0
        %5737 = vmatprep.mubr.bf16.mxu0 0
        %5738 = vmatmul.mubr.bf16.gmra.mrb[0].mxu0 %v5554
        %v5739 = vpop.f32.mrb[0].mxu0
        %v5740 = vadd.f32 %v5639, %v5739
        %v5741 = vpop.f32.mrb[0].mxu0
        %v5742 = vpop.f32.mrb[0].mxu0
        %v5743 = vadd.f32 %v5639, %v5742
        %v5744 = vpop.f32.mrb[0].mxu0
        %5745 = vmatprep.mubr.bf16.mxu0 0
        %5746 = vmatmul.mubr.bf16.gmra.mrb[0].mxu0 %v5555
        %v5747 = vpop.f32.mrb[0].mxu0
        %v5748 = vadd.f32 %v5639, %v5747
        %v5749 = vpop.f32.mrb[0].mxu0
        %v5750 = vpop.f32.mrb[0].mxu0
        %v5751 = vadd.f32 %v5639, %v5750
        %v5752 = vpop.f32.mrb[0].mxu0
        %5753 = vmatprep.mubr.bf16.mxu0 0
        %5754 = vmatmul.mubr.bf16.gmra.mrb[0].mxu0 %v5556
        %v5755 = vpop.f32.mrb[0].mxu0
        %v5756 = vadd.f32 %v5639, %v5755
        %v5757 = vpop.f32.mrb[0].mxu0
        %v5758 = vpop.f32.mrb[0].mxu0
        %v5759 = vadd.f32 %v5639, %v5758
        %v5760 = vpop.f32.mrb[0].mxu0
        %5761 = vmatprep.mubr.bf16.mxu0 0
        %5762 = vmatmul.mubr.bf16.gmra.mrb[0].mxu0 %v5557
        %v5763 = vpop.f32.mrb[0].mxu0
        %v5764 = vadd.f32 %v5639, %v5763
        %v5765 = vpop.f32.mrb[0].mxu0
        %v5766 = vpop.f32.mrb[0].mxu0
        %v5767 = vadd.f32 %v5639, %v5766
        %v5768 = vpop.f32.mrb[0].mxu0
        %5769 = vmatprep.mubr.bf16.mxu0 0
        %5770 = vmatmul.mubr.bf16.gmra.mrb[0].mxu0 %v5558
        %v5771 = vpop.f32.mrb[0].mxu0
        %v5772 = vadd.f32 %v5639, %v5771
        %v5773 = vpop.f32.mrb[0].mxu0
        %v5774 = vpop.f32.mrb[0].mxu0
        %v5775 = vadd.f32 %v5639, %v5774
        %v5776 = vpop.f32.mrb[0].mxu0
        %5777 = vmatprep.mubr.bf16.mxu0 0
        %5778 = vmatmul.mubr.bf16.gmra.mrb[0].mxu0 %v5559
        %v5779 = vpop.f32.mrb[0].mxu0
        %v5780 = vadd.f32 %v5639, %v5779
        %v5781 = vpop.f32.mrb[0].mxu0
        %v5782 = vpop.f32.mrb[0].mxu0
        %v5783 = vadd.f32 %v5639, %v5782
        %v5784 = vpop.f32.mrb[0].mxu0
        %5785 = vmatprep.mubr.bf16.mxu0 0
        %5786 = vmatmul.mubr.bf16.gmra.mrb[0].mxu0 %v5560
        %v5787 = vpop.f32.mrb[0].mxu0
        %v5788 = vadd.f32 %v5639, %v5787
        %v5789 = vpop.f32.mrb[0].mxu0
        %v5790 = vpop.f32.mrb[0].mxu0
        %v5791 = vadd.f32 %v5639, %v5790
        %v5792 = vpop.f32.mrb[0].mxu0
        %5793 = vmatprep.mubr.bf16.mxu0 0
        %5794 = vmatmul.mubr.bf16.gmra.mrb[0].mxu0 %v5561
        %v5795 = vpop.f32.mrb[0].mxu0
        %v5796 = vadd.f32 %v5639, %v5795
        %v5797 = vpop.f32.mrb[0].mxu0
        %v5798 = vpop.f32.mrb[0].mxu0
        %v5799 = vadd.f32 %v5639, %v5798
        %v5800 = vpop.f32.mrb[0].mxu0
        %5801 = vmatprep.mubr.bf16.mxu0 0
        %5802 = vmatmul.mubr.bf16.gmra.mrb[0].mxu0 %v5562
        %v5803 = vpop.f32.mrb[0].mxu0
        %v5804 = vadd.f32 %v5639, %v5803
        %v5805 = vpop.f32.mrb[0].mxu0
        %v5806 = vpop.f32.mrb[0].mxu0
        %v5807 = vadd.f32 %v5639, %v5806
        %v5808 = vpop.f32.mrb[0].mxu0
        %5809 = vmatprep.mubr.bf16.mxu0 0
        %5810 = vmatmul.mubr.bf16.gmra.mrb[0].mxu0 %v5563
        %v5811 = vpop.f32.mrb[0].mxu0
        %v5812 = vadd.f32 %v5639, %v5811
        %v5813 = vpop.f32.mrb[0].mxu0
        %v5814 = vpop.f32.mrb[0].mxu0
        %v5815 = vadd.f32 %v5639, %v5814
        %v5816 = vpop.f32.mrb[0].mxu0
        %5817 = vmatprep.mubr.bf16.mxu0 0
        %5818 = vmatmul.mubr.bf16.gmra.mrb[0].mxu0 %v5564
        %v5819 = vpop.f32.mrb[0].mxu0
        %v5820 = vadd.f32 %v5639, %v5819
        %v5821 = vpop.f32.mrb[0].mxu0
        %v5822 = vpop.f32.mrb[0].mxu0
        %v5823 = vadd.f32 %v5639, %v5822
        %v5824 = vpop.f32.mrb[0].mxu0
        %5825 = vmatprep.mubr.bf16.mxu0 0
        %5826 = vmatmul.mubr.bf16.gmra.mrb[0].mxu0 %v5565
        %v5827 = vpop.f32.mrb[0].mxu0
        %v5828 = vadd.f32 %v5639, %v5827
        %v5829 = vpop.f32.mrb[0].mxu0
        %v5830 = vpop.f32.mrb[0].mxu0
        %v5831 = vadd.f32 %v5639, %v5830
        %v5832 = vpop.f32.mrb[0].mxu0
        %5833 = vmatprep.mubr.bf16.mxu0 0
        %5834 = vmatmul.mubr.bf16.gmra.mrb[0].mxu0 %v5566
        %v5835 = vpop.f32.mrb[0].mxu0
        %v5836 = vadd.f32 %v5639, %v5835
        %v5837 = vpop.f32.mrb[0].mxu0
        %v5838 = vpop.f32.mrb[0].mxu0
        %v5839 = vadd.f32 %v5639, %v5838
        %v5840 = vpop.f32.mrb[0].mxu0
        %5841 = vmatprep.mubr.bf16.mxu0 0
        %5842 = vmatmul.mubr.bf16.gmra.mrb[0].mxu0 %v5567
        %v5843 = vpop.f32.mrb[0].mxu0
        %v5844 = vadd.f32 %v5639, %v5843
        %v5845 = vpop.f32.mrb[0].mxu0
        %v5846 = vpop.f32.mrb[0].mxu0
        %v5847 = vadd.f32 %v5639, %v5846
        %v5848 = vpop.f32.mrb[0].mxu0
        %5849 = vmatprep.mubr.bf16.mxu0 0
        %5850 = vmatmul.mubr.bf16.gmra.mrb[0].mxu0 %v5568
        %v5851 = vpop.f32.mrb[0].mxu0
        %v5852 = vadd.f32 %v5639, %v5851
        %v5853 = vpop.f32.mrb[0].mxu0
        %v5854 = vpop.f32.mrb[0].mxu0
        %v5855 = vadd.f32 %v5639, %v5854
        %v5856 = vpop.f32.mrb[0].mxu0
        %5857 = vmatprep.mubr.bf16.mxu0 0
        %5858 = vmatmul.mubr.bf16.gmra.mrb[0].mxu0 %v5569
        %v5859 = vpop.f32.mrb[0].mxu0
        %v5860 = vadd.f32 %v5639, %v5859
        %v5861 = vpop.f32.mrb[0].mxu0
        %v5862 = vpop.f32.mrb[0].mxu0
        %v5863 = vadd.f32 %v5639, %v5862
        %v5864 = vpop.f32.mrb[0].mxu0
        %5865 = vmatprep.mubr.bf16.mxu0 0
        %5866 = vmatmul.mubr.bf16.gmra.mrb[0].mxu0 %v5570
        %v5867 = vpop.f32.mrb[0].mxu0
        %v5868 = vadd.f32 %v5639, %v5867
        %v5869 = vpop.f32.mrb[0].mxu0
        %v5870 = vpop.f32.mrb[0].mxu0
        %v5871 = vadd.f32 %v5639, %v5870
        %v5872 = vpop.f32.mrb[0].mxu0
        %5873 = vmatprep.mubr.bf16.mxu0 0
        %5874 = vmatmul.mubr.bf16.gmra.mrb[0].mxu0 %v5571
        %v5875 = vpop.f32.mrb[0].mxu0
        %v5876 = vadd.f32 %v5639, %v5875
        %v5877 = vpop.f32.mrb[0].mxu0
        %v5878 = vpop.f32.mrb[0].mxu0
        %v5879 = vadd.f32 %v5639, %v5878
        %v5880 = vpop.f32.mrb[0].mxu0
        %5881 = vmatprep.mubr.bf16.mxu0 0
        %5882 = vmatmul.mubr.bf16.gmra.mrb[0].mxu0 %v5572
        %v5883 = vpop.f32.mrb[0].mxu0
        %v5884 = vadd.f32 %v5639, %v5883
        %v5885 = vpop.f32.mrb[0].mxu0
        %v5886 = vpop.f32.mrb[0].mxu0
        %v5887 = vadd.f32 %v5639, %v5886
        %v5888 = vpop.f32.mrb[0].mxu0
        %5889 = vmatprep.mubr.bf16.mxu0 0
        %5890 = vmatmul.mubr.bf16.gmra.mrb[0].mxu0 %v5573
        %v5891 = vpop.f32.mrb[0].mxu0
        %v5892 = vadd.f32 %v5639, %v5891
        %v5893 = vpop.f32.mrb[0].mxu0
        %v5894 = vpop.f32.mrb[0].mxu0
        %v5895 = vadd.f32 %v5639, %v5894
        %v5896 = vpop.f32.mrb[0].mxu0
        %5897 = vmatprep.mubr.bf16.mxu0 0
        %5898 = vmatmul.mubr.bf16.gmra.mrb[0].mxu0 %v5574
        %v5899 = vpop.f32.mrb[0].mxu0
        %v5900 = vadd.f32 %v5639, %v5899
        %v5901 = vpop.f32.mrb[0].mxu0
        %v5902 = vpop.f32.mrb[0].mxu0
        %v5903 = vadd.f32 %v5639, %v5902
        %v5904 = vpop.f32.mrb[0].mxu0
        %5905 = vmatprep.mubr.bf16.mxu0 0
        %5906 = vmatmul.mubr.bf16.gmra.mrb[0].mxu0 %v5575
        %v5907 = vpop.f32.mrb[0].mxu0
        %v5908 = vadd.f32 %v5639, %v5907
        %v5909 = vpop.f32.mrb[0].mxu0
        %v5910 = vpop.f32.mrb[0].mxu0
        %v5911 = vadd.f32 %v5639, %v5910
        %v5912 = vpop.f32.mrb[0].mxu0
        %5913 = vmatprep.mubr.bf16.mxu0 0
        %5914 = vmatmul.mubr.bf16.gmra.mrb[0].mxu0 %v5576
        %v5915 = vpop.f32.mrb[0].mxu0
        %v5916 = vadd.f32 %v5639, %v5915
        %v5917 = vpop.f32.mrb[0].mxu0
        %v5918 = vpop.f32.mrb[0].mxu0
        %v5919 = vadd.f32 %v5639, %v5918
        %v5920 = vpop.f32.mrb[0].mxu0
        %5921 = vmatprep.mubr.bf16.mxu0 0
        %5922 = vmatmul.mubr.bf16.gmra.mrb[0].mxu0 %v5577
        %v5923 = vpop.f32.mrb[0].mxu0
        %v5924 = vadd.f32 %v5639, %v5923
        %v5925 = vpop.f32.mrb[0].mxu0
        %v5926 = vpop.f32.mrb[0].mxu0
        %v5927 = vadd.f32 %v5639, %v5926
        %v5928 = vpop.f32.mrb[0].mxu0
        %5929 = vmatprep.mubr.bf16.mxu0 0
        %5930 = vmatmul.mubr.bf16.gmra.mrb[0].mxu0 %v5578
        %v5931 = vpop.f32.mrb[0].mxu0
        %v5932 = vadd.f32 %v5639, %v5931
        %v5933 = vpop.f32.mrb[0].mxu0
        %v5934 = vpop.f32.mrb[0].mxu0
        %v5935 = vadd.f32 %v5639, %v5934
        %v5936 = vpop.f32.mrb[0].mxu0
        %5937 = vmatprep.mubr.bf16.mxu0 0
        %5938 = vmatmul.mubr.bf16.gmra.mrb[0].mxu0 %v5579
        %v5939 = vpop.f32.mrb[0].mxu0
        %v5940 = vadd.f32 %v5639, %v5939
        %v5941 = vpop.f32.mrb[0].mxu0
        %v5942 = vpop.f32.mrb[0].mxu0
        %v5943 = vadd.f32 %v5639, %v5942
        %v5944 = vpop.f32.mrb[0].mxu0
        %5945 = vmatprep.mubr.bf16.mxu0 0
        %5946 = vmatmul.mubr.bf16.gmra.mrb[0].mxu0 %v5580
        %v5947 = vpop.f32.mrb[0].mxu0
        %v5948 = vadd.f32 %v5639, %v5947
        %v5949 = vpop.f32.mrb[0].mxu0
        %v5950 = vpop.f32.mrb[0].mxu0
        %v5951 = vadd.f32 %v5639, %v5950
        %v5952 = vpop.f32.mrb[0].mxu0
        %5953 = vmatprep.mubr.bf16.mxu0 0
        %5954 = vmatmul.mubr.bf16.gmra.mrb[0].mxu0 %v5581
        %v5955 = vpop.f32.mrb[0].mxu0
        %v5956 = vadd.f32 %v5639, %v5955
        %v5957 = vpop.f32.mrb[0].mxu0
        %v5958 = vpop.f32.mrb[0].mxu0
        %v5959 = vadd.f32 %v5639, %v5958
        %v5960 = vpop.f32.mrb[0].mxu0
        %5961 = vmatprep.mubr.bf16.mxu0 0
        %5962 = vmatmul.mubr.bf16.gmra.mrb[0].mxu0 %v5582
        %v5963 = vpop.f32.mrb[0].mxu0
        %v5964 = vadd.f32 %v5639, %v5963
        %v5965 = vpop.f32.mrb[0].mxu0
        %v5966 = vpop.f32.mrb[0].mxu0
        %v5967 = vadd.f32 %v5639, %v5966
        %v5968 = vpop.f32.mrb[0].mxu0
        %5969 = vmatprep.mubr.bf16.mxu0 0
        %5970 = vmatmul.mubr.bf16.gmra.mrb[0].mxu0 %v5583
        %v5971 = vpop.f32.mrb[0].mxu0
        %v5972 = vadd.f32 %v5639, %v5971
        %v5973 = vpop.f32.mrb[0].mxu0
        %v5974 = vpop.f32.mrb[0].mxu0
        %v5975 = vadd.f32 %v5639, %v5974
        %v5976 = vpop.f32.mrb[0].mxu0
        %5977 = vmatprep.mubr.bf16.mxu0 0
        %5978 = vmatmul.mubr.bf16.gmra.mrb[0].mxu0 %v5584
        %v5979 = vpop.f32.mrb[0].mxu0
        %v5980 = vadd.f32 %v5639, %v5979
        %v5981 = vpop.f32.mrb[0].mxu0
        %v5982 = vpop.f32.mrb[0].mxu0
        %v5983 = vadd.f32 %v5639, %v5982
        %v5984 = vpop.f32.mrb[0].mxu0
        %5985 = vmatprep.mubr.bf16.mxu0 0
        %5986 = vmatmul.mubr.bf16.gmra.mrb[0].mxu0 %v5585
        %v5987 = vpop.f32.mrb[0].mxu0
        %v5988 = vadd.f32 %v5639, %v5987
        %v5989 = vpop.f32.mrb[0].mxu0
        %v5990 = vpop.f32.mrb[0].mxu0
        %v5991 = vadd.f32 %v5639, %v5990
        %v5992 = vpop.f32.mrb[0].mxu0
        %5993 = vmatprep.mubr.bf16.mxu0 0
        %5994 = vmatmul.mubr.bf16.gmra.mrb[0].mxu0 %v5586
        %v5995 = vpop.f32.mrb[0].mxu0
        %v5996 = vadd.f32 %v5639, %v5995
        %v5997 = vpop.f32.mrb[0].mxu0
        %v5998 = vpop.f32.mrb[0].mxu0
        %v5999 = vadd.f32 %v5639, %v5998
        %v6000 = vpop.f32.mrb[0].mxu0
        %6001 = vmatprep.mubr.bf16.mxu0 0
        %6002 = vmatmul.mubr.bf16.gmra.mrb[0].mxu0 %v5587
        %v6003 = vpop.f32.mrb[0].mxu0
        %v6004 = vadd.f32 %v5639, %v6003
        %v6005 = vpop.f32.mrb[0].mxu0
        %v6006 = vpop.f32.mrb[0].mxu0
        %v6007 = vadd.f32 %v5639, %v6006
        %v6008 = vpop.f32.mrb[0].mxu0
        %6009 = vmatprep.mubr.bf16.mxu0 0
        %6010 = vmatmul.mubr.bf16.gmra.mrb[0].mxu0 %v5588
        %v6011 = vpop.f32.mrb[0].mxu0
        %v6012 = vadd.f32 %v5639, %v6011
        %v6013 = vpop.f32.mrb[0].mxu0
        %v6014 = vpop.f32.mrb[0].mxu0
        %v6015 = vadd.f32 %v5639, %v6014
        %v6016 = vpop.f32.mrb[0].mxu0
        %6017 = vmatprep.mubr.bf16.mxu0 0
        %6018 = vmatmul.mubr.bf16.gmra.mrb[0].mxu0 %v5589
        %v6019 = vpop.f32.mrb[0].mxu0
        %v6020 = vadd.f32 %v5639, %v6019
        %v6021 = vpop.f32.mrb[0].mxu0
        %v6022 = vpop.f32.mrb[0].mxu0
        %v6023 = vadd.f32 %v5639, %v6022
        %v6024 = vpop.f32.mrb[0].mxu0
        %6025 = vmatprep.mubr.bf16.mxu0 0
        %6026 = vmatmul.mubr.bf16.gmra.mrb[0].mxu0 %v5590
        %v6027 = vpop.f32.mrb[0].mxu0
        %v6028 = vadd.f32 %v5639, %v6027
        %v6029 = vpop.f32.mrb[0].mxu0
        %v6030 = vpop.f32.mrb[0].mxu0
        %v6031 = vadd.f32 %v5639, %v6030
        %v6032 = vpop.f32.mrb[0].mxu0
        %6033 = vmatprep.mubr.bf16.mxu0 0
        %6034 = vmatmul.mubr.bf16.gmra.mrb[0].mxu0 %v5591
        %v6035 = vpop.f32.mrb[0].mxu0
        %v6036 = vadd.f32 %v5639, %v6035
        %v6037 = vpop.f32.mrb[0].mxu0
        %v6038 = vpop.f32.mrb[0].mxu0
        %v6039 = vadd.f32 %v5639, %v6038
        %v6040 = vpop.f32.mrb[0].mxu0
        %6041 = vmatprep.mubr.bf16.mxu0 0
        %6042 = vmatmul.mubr.bf16.gmra.mrb[0].mxu0 %v5592
        %v6043 = vpop.f32.mrb[0].mxu0
        %v6044 = vadd.f32 %v5639, %v6043
        %v6045 = vpop.f32.mrb[0].mxu0
        %v6046 = vpop.f32.mrb[0].mxu0
        %v6047 = vadd.f32 %v5639, %v6046
        %v6048 = vpop.f32.mrb[0].mxu0
        %6049 = vmatprep.mubr.bf16.mxu0 0
        %6050 = vmatmul.mubr.bf16.gmra.mrb[0].mxu0 %v5593
        %v6051 = vpop.f32.mrb[0].mxu0
        %v6052 = vadd.f32 %v5639, %v6051
        %v6053 = vpop.f32.mrb[0].mxu0
        %v6054 = vpop.f32.mrb[0].mxu0
        %v6055 = vadd.f32 %v5639, %v6054
        %v6056 = vpop.f32.mrb[0].mxu0
        %6057 = vmatprep.mubr.bf16.mxu0 0
        %6058 = vmatmul.mubr.bf16.gmra.mrb[0].mxu0 %v5594
        %v6059 = vpop.f32.mrb[0].mxu0
        %v6060 = vadd.f32 %v5639, %v6059
        %v6061 = vpop.f32.mrb[0].mxu0
        %v6062 = vpop.f32.mrb[0].mxu0
        %v6063 = vadd.f32 %v5639, %v6062
        %v6064 = vpop.f32.mrb[0].mxu0
        %6065 = vmatprep.mubr.bf16.mxu0 0
        %6066 = vmatmul.mubr.bf16.gmra.mrb[0].mxu0 %v5595
        %v6067 = vpop.f32.mrb[0].mxu0
        %v6068 = vadd.f32 %v5639, %v6067
        %v6069 = vpop.f32.mrb[0].mxu0
        %v6070 = vpop.f32.mrb[0].mxu0
        %v6071 = vadd.f32 %v5639, %v6070
        %v6072 = vpop.f32.mrb[0].mxu0
        %6073 = vmatprep.mubr.bf16.mxu0 0
        %6074 = vmatmul.mubr.bf16.gmra.mrb[0].mxu0 %v5596
        %v6075 = vpop.f32.mrb[0].mxu0
        %v6076 = vadd.f32 %v5639, %v6075
        %v6077 = vpop.f32.mrb[0].mxu0
        %v6078 = vpop.f32.mrb[0].mxu0
        %v6079 = vadd.f32 %v5639, %v6078
        %v6080 = vpop.f32.mrb[0].mxu0
        %6081 = vmatprep.mubr.bf16.mxu0 0
        %6082 = vmatmul.mubr.bf16.gmra.mrb[0].mxu0 %v5597
        %v6083 = vpop.f32.mrb[0].mxu0
        %v6084 = vadd.f32 %v5639, %v6083
        %v6085 = vpop.f32.mrb[0].mxu0
        %v6086 = vpop.f32.mrb[0].mxu0
        %v6087 = vadd.f32 %v5639, %v6086
        %v6088 = vpop.f32.mrb[0].mxu0
        %6089 = vmatprep.mubr.bf16.mxu0 0
        %6090 = vmatmul.mubr.bf16.gmra.mrb[0].mxu0 %v5598
        %v6091 = vpop.f32.mrb[0].mxu0
        %v6092 = vadd.f32 %v5639, %v6091
        %v6093 = vpop.f32.mrb[0].mxu0
        %v6094 = vpop.f32.mrb[0].mxu0
        %v6095 = vadd.f32 %v5639, %v6094
        %v6096 = vpop.f32.mrb[0].mxu0
        %6097 = vmatprep.mubr.bf16.mxu0 0
        %6098 = vmatmul.mubr.bf16.gmra.mrb[0].mxu0 %v5599
        %v6099 = vpop.f32.mrb[0].mxu0
        %v6100 = vadd.f32 %v5639, %v6099
        %v6101 = vpop.f32.mrb[0].mxu0
        %v6102 = vpop.f32.mrb[0].mxu0
        %v6103 = vadd.f32 %v5639, %v6102
        %v6104 = vpop.f32.mrb[0].mxu0
        %6105 = vmatprep.mubr.bf16.mxu0 0
        %6106 = vmatmul.mubr.bf16.gmra.mrb[0].mxu0 %v5600
        %v6107 = vpop.f32.mrb[0].mxu0
        %v6108 = vadd.f32 %v5639, %v6107
        %v6109 = vpop.f32.mrb[0].mxu0
        %v6110 = vpop.f32.mrb[0].mxu0
        %v6111 = vadd.f32 %v5639, %v6110
        %v6112 = vpop.f32.mrb[0].mxu0
        %6113 = vmatprep.mubr.bf16.mxu0 0
        %6114 = vmatmul.mubr.bf16.gmra.mrb[0].mxu0 %v5601
        %v6115 = vpop.f32.mrb[0].mxu0
        %v6116 = vadd.f32 %v5639, %v6115
        %v6117 = vpop.f32.mrb[0].mxu0
        %v6118 = vpop.f32.mrb[0].mxu0
        %v6119 = vadd.f32 %v5639, %v6118
        %v6120 = vpop.f32.mrb[0].mxu0
        %6121 = vmatprep.mubr.bf16.mxu0 0
        %6122 = vmatmul.mubr.bf16.gmra.mrb[0].mxu0 %v5602
        %v6123 = vpop.f32.mrb[0].mxu0
        %v6124 = vadd.f32 %v5639, %v6123
        %v6125 = vpop.f32.mrb[0].mxu0
        %v6126 = vpop.f32.mrb[0].mxu0
        %v6127 = vadd.f32 %v5639, %v6126
        %v6128 = vpop.f32.mrb[0].mxu0
        %6129 = vmatprep.mubr.bf16.mxu0 0
        %6130 = vmatmul.mubr.bf16.gmra.mrb[0].mxu0 %v5603
        %v6131 = vpop.f32.mrb[0].mxu0
        %v6132 = vadd.f32 %v5639, %v6131
        %v6133 = vpop.f32.mrb[0].mxu0
        %v6134 = vpop.f32.mrb[0].mxu0
        %v6135 = vadd.f32 %v5639, %v6134
        %v6136 = vpop.f32.mrb[0].mxu0
        %6137 = vmatprep.mubr.bf16.mxu0 0
        %6138 = vmatmul.mubr.bf16.gmra.mrb[0].mxu0 %v5604
        %v6139 = vpop.f32.mrb[0].mxu0
        %v6140 = vadd.f32 %v5639, %v6139
        %v6141 = vpop.f32.mrb[0].mxu0
        %v6142 = vpop.f32.mrb[0].mxu0
        %v6143 = vadd.f32 %v5639, %v6142
        %v6144 = vpop.f32.mrb[0].mxu0
        %6145 = vmatprep.mubr.bf16.mxu0 0
        %6146 = vmatmul.mubr.bf16.gmra.mrb[0].mxu0 %v5605
        %v6147 = vpop.f32.mrb[0].mxu0
        %v6148 = vadd.f32 %v5639, %v6147
        %v6149 = vpop.f32.mrb[0].mxu0
        %v6150 = vpop.f32.mrb[0].mxu0
        %v6151 = vadd.f32 %v5639, %v6150
        %v6152 = vpop.f32.mrb[0].mxu0
        %6153 = vmatprep.mubr.bf16.mxu0 0
        %6154 = vmatmul.mubr.bf16.gmra.mrb[0].mxu0 %v5606
        %v6155 = vpop.f32.mrb[0].mxu0
        %v6156 = vadd.f32 %v5639, %v6155
        %v6157 = vpop.f32.mrb[0].mxu0
        %v6158 = vpop.f32.mrb[0].mxu0
        %v6159 = vadd.f32 %v5639, %v6158
        %v6160 = vpop.f32.mrb[0].mxu0
        %6161 = vmatprep.mubr.bf16.mxu0 0
        %6162 = vmatmul.mubr.bf16.gmra.mrb[0].mxu0 %v5607
        %v6163 = vpop.f32.mrb[0].mxu0
        %v6164 = vadd.f32 %v5639, %v6163
        %v6165 = vpop.f32.mrb[0].mxu0
        %v6166 = vpop.f32.mrb[0].mxu0
        %v6167 = vadd.f32 %v5639, %v6166
        %v6168 = vpop.f32.mrb[0].mxu0
        %6169 = vmatprep.mubr.bf16.mxu0 0
        %6170 = vmatmul.mubr.bf16.gmra.mrb[0].mxu0 %v5608
        %v6171 = vpop.f32.mrb[0].mxu0
        %v6172 = vadd.f32 %v5639, %v6171
        %v6173 = vpop.f32.mrb[0].mxu0
        %v6174 = vpop.f32.mrb[0].mxu0
        %v6175 = vadd.f32 %v5639, %v6174
        %v6176 = vpop.f32.mrb[0].mxu0
        %6177 = vmatprep.mubr.bf16.mxu0 0
        %6178 = vmatmul.mubr.bf16.gmra.mrb[0].mxu0 %v5609
        %v6179 = vpop.f32.mrb[0].mxu0
        %v6180 = vadd.f32 %v5639, %v6179
        %v6181 = vpop.f32.mrb[0].mxu0
        %v6182 = vpop.f32.mrb[0].mxu0
        %v6183 = vadd.f32 %v5639, %v6182
        %v6184 = vpop.f32.mrb[0].mxu0
        %6185 = vmatprep.mubr.bf16.mxu0 0
        %6186 = vmatmul.mubr.bf16.gmra.mrb[0].mxu0 %v5610
        %v6187 = vpop.f32.mrb[0].mxu0
        %v6188 = vadd.f32 %v5639, %v6187
        %v6189 = vpop.f32.mrb[0].mxu0
        %v6190 = vpop.f32.mrb[0].mxu0
        %v6191 = vadd.f32 %v5639, %v6190
        %v6192 = vpop.f32.mrb[0].mxu0
        %6193 = vmatprep.mubr.bf16.mxu0 0
        %6194 = vmatmul.mubr.bf16.gmra.mrb[0].mxu0 %v5611
        %v6195 = vpop.f32.mrb[0].mxu0
        %v6196 = vadd.f32 %v5639, %v6195
        %v6197 = vpop.f32.mrb[0].mxu0
        %v6198 = vpop.f32.mrb[0].mxu0
        %v6199 = vadd.f32 %v5639, %v6198
        %v6200 = vpop.f32.mrb[0].mxu0
        %6201 = vmatprep.mubr.bf16.mxu0 0
        %6202 = vmatmul.mubr.bf16.gmra.mrb[0].mxu0 %v5612
        %v6203 = vpop.f32.mrb[0].mxu0
        %v6204 = vadd.f32 %v5639, %v6203
        %v6205 = vpop.f32.mrb[0].mxu0
        %v6206 = vpop.f32.mrb[0].mxu0
        %v6207 = vadd.f32 %v5639, %v6206
        %v6208 = vpop.f32.mrb[0].mxu0
        %6209 = vmatprep.mubr.bf16.mxu0 0
        %6210 = vmatmul.mubr.bf16.gmra.mrb[0].mxu0 %v5613
        %v6211 = vpop.f32.mrb[0].mxu0
        %v6212 = vadd.f32 %v5639, %v6211
        %v6213 = vpop.f32.mrb[0].mxu0
        %v6214 = vpop.f32.mrb[0].mxu0
        %v6215 = vadd.f32 %v5639, %v6214
        %v6216 = vpop.f32.mrb[0].mxu0
        %6217 = vmatprep.mubr.bf16.mxu0 0
        %6218 = vmatmul.mubr.bf16.gmra.mrb[0].mxu0 %v5614
        %v6219 = vpop.f32.mrb[0].mxu0
        %v6220 = vadd.f32 %v5639, %v6219
        %v6221 = vpop.f32.mrb[0].mxu0
        %v6222 = vpop.f32.mrb[0].mxu0
        %v6223 = vadd.f32 %v5639, %v6222
        %v6224 = vpop.f32.mrb[0].mxu0
        %6225 = vmatprep.mubr.bf16.mxu0 0
        %6226 = vmatmul.mubr.bf16.gmra.mrb[0].mxu0 %v5615
        %v6227 = vpop.f32.mrb[0].mxu0
        %v6228 = vadd.f32 %v5639, %v6227
        %v6229 = vpop.f32.mrb[0].mxu0
        %v6230 = vpop.f32.mrb[0].mxu0
        %v6231 = vadd.f32 %v5639, %v6230
        %v6232 = vpop.f32.mrb[0].mxu0
        %6233 = vdwg.mxu0
        %v6234 = vadd.f32 %v4614, %v5724
        %v6235 = vadd.f32 %v4615, %v5727
        %v6236 = vadd.f32 %v4616, %v5732
        %v6237 = vadd.f32 %v4617, %v5735
        %v6238 = vadd.f32 %v4618, %v5740
        %v6239 = vadd.f32 %v4619, %v5743
        %v6240 = vadd.f32 %v4620, %v5748
        %v6241 = vadd.f32 %v4621, %v5751
        %v6242 = vadd.f32 %v4622, %v5756
        %v6243 = vadd.f32 %v4623, %v5759
        %v6244 = vadd.f32 %v4624, %v5764
        %v6245 = vadd.f32 %v4625, %v5767
        %v6246 = vadd.f32 %v4626, %v5772
        %v6247 = vadd.f32 %v4627, %v5775
        %v6248 = vadd.f32 %v4628, %v5780
        %v6249 = vadd.f32 %v4629, %v5783
        %v6250 = vadd.f32 %v4630, %v5788
        %v6251 = vadd.f32 %v4631, %v5791
        %v6252 = vadd.f32 %v4632, %v5796
        %v6253 = vadd.f32 %v4633, %v5799
        %v6254 = vadd.f32 %v4634, %v5804
        %v6255 = vadd.f32 %v4635, %v5807
        %v6256 = vadd.f32 %v4636, %v5812
        %v6257 = vadd.f32 %v4637, %v5815
        %v6258 = vadd.f32 %v4638, %v5820
        %v6259 = vadd.f32 %v4639, %v5823
        %v6260 = vadd.f32 %v4640, %v5828
        %v6261 = vadd.f32 %v4641, %v5831
        %v6262 = vadd.f32 %v4642, %v5836
        %v6263 = vadd.f32 %v4643, %v5839
        %v6264 = vadd.f32 %v4644, %v5844
        %v6265 = vadd.f32 %v4645, %v5847
        %v6266 = vadd.f32 %v4646, %v5852
        %v6267 = vadd.f32 %v4647, %v5855
        %v6268 = vadd.f32 %v4648, %v5860
        %v6269 = vadd.f32 %v4649, %v5863
        %v6270 = vadd.f32 %v4650, %v5868
        %v6271 = vadd.f32 %v4651, %v5871
        %v6272 = vadd.f32 %v4652, %v5876
        %v6273 = vadd.f32 %v4653, %v5879
        %v6274 = vadd.f32 %v4654, %v5884
        %v6275 = vadd.f32 %v4655, %v5887
        %v6276 = vadd.f32 %v4656, %v5892
        %v6277 = vadd.f32 %v4657, %v5895
        %v6278 = vadd.f32 %v4658, %v5900
        %v6279 = vadd.f32 %v4659, %v5903
        %v6280 = vadd.f32 %v4660, %v5908
        %v6281 = vadd.f32 %v4661, %v5911
        %v6282 = vadd.f32 %v4662, %v5916
        %v6283 = vadd.f32 %v4663, %v5919
        %v6284 = vadd.f32 %v4664, %v5924
        %v6285 = vadd.f32 %v4665, %v5927
        %v6286 = vadd.f32 %v4666, %v5932
        %v6287 = vadd.f32 %v4667, %v5935
        %v6288 = vadd.f32 %v4668, %v5940
        %v6289 = vadd.f32 %v4669, %v5943
        %v6290 = vadd.f32 %v4670, %v5948
        %v6291 = vadd.f32 %v4671, %v5951
        %v6292 = vadd.f32 %v4672, %v5956
        %v6293 = vadd.f32 %v4673, %v5959
        %v6294 = vadd.f32 %v4674, %v5964
        %v6295 = vadd.f32 %v4675, %v5967
        %v6296 = vadd.f32 %v4676, %v5972
        %v6297 = vadd.f32 %v4677, %v5975
        %v6298 = vadd.f32 %v4678, %v5980
        %v6299 = vadd.f32 %v4679, %v5983
        %v6300 = vadd.f32 %v4680, %v5988
        %v6301 = vadd.f32 %v4681, %v5991
        %v6302 = vadd.f32 %v4682, %v5996
        %v6303 = vadd.f32 %v4683, %v5999
        %v6304 = vadd.f32 %v4684, %v6004
        %v6305 = vadd.f32 %v4685, %v6007
        %v6306 = vadd.f32 %v4686, %v6012
        %v6307 = vadd.f32 %v4687, %v6015
        %v6308 = vadd.f32 %v4688, %v6020
        %v6309 = vadd.f32 %v4689, %v6023
        %v6310 = vadd.f32 %v4690, %v6028
        %v6311 = vadd.f32 %v4691, %v6031
        %v6312 = vadd.f32 %v4692, %v6036
        %v6313 = vadd.f32 %v4693, %v6039
        %v6314 = vadd.f32 %v4694, %v6044
        %v6315 = vadd.f32 %v4695, %v6047
        %v6316 = vadd.f32 %v4696, %v6052
        %v6317 = vadd.f32 %v4697, %v6055
        %v6318 = vadd.f32 %v4698, %v6060
        %v6319 = vadd.f32 %v4699, %v6063
        %v6320 = vadd.f32 %v4700, %v6068
        %v6321 = vadd.f32 %v4701, %v6071
        %v6322 = vadd.f32 %v4702, %v6076
        %v6323 = vadd.f32 %v4703, %v6079
        %v6324 = vadd.f32 %v4704, %v6084
        %v6325 = vadd.f32 %v4705, %v6087
        %v6326 = vadd.f32 %v4706, %v6092
        %v6327 = vadd.f32 %v4707, %v6095
        %v6328 = vadd.f32 %v4708, %v6100
        %v6329 = vadd.f32 %v4709, %v6103
        %v6330 = vadd.f32 %v4710, %v6108
        %v6331 = vadd.f32 %v4711, %v6111
        %v6332 = vadd.f32 %v4712, %v6116
        %v6333 = vadd.f32 %v4713, %v6119
        %v6334 = vadd.f32 %v4714, %v6124
        %v6335 = vadd.f32 %v4715, %v6127
        %v6336 = vadd.f32 %v4716, %v6132
        %v6337 = vadd.f32 %v4717, %v6135
        %v6338 = vadd.f32 %v4718, %v6140
        %v6339 = vadd.f32 %v4719, %v6143
        %v6340 = vadd.f32 %v4720, %v6148
        %v6341 = vadd.f32 %v4721, %v6151
        %v6342 = vadd.f32 %v4722, %v6156
        %v6343 = vadd.f32 %v4723, %v6159
        %v6344 = vadd.f32 %v4724, %v6164
        %v6345 = vadd.f32 %v4725, %v6167
        %v6346 = vadd.f32 %v4726, %v6172
        %v6347 = vadd.f32 %v4727, %v6175
        %v6348 = vadd.f32 %v4728, %v6180
        %v6349 = vadd.f32 %v4729, %v6183
        %v6350 = vadd.f32 %v4730, %v6188
        %v6351 = vadd.f32 %v4731, %v6191
        %v6352 = vadd.f32 %v4732, %v6196
        %v6353 = vadd.f32 %v4733, %v6199
        %v6354 = vadd.f32 %v4734, %v6204
        %v6355 = vadd.f32 %v4735, %v6207
        %v6356 = vadd.f32 %v4736, %v6212
        %v6357 = vadd.f32 %v4737, %v6215
        %v6358 = vadd.f32 %v4738, %v6220
        %v6359 = vadd.f32 %v4739, %v6223
        %v6360 = vadd.f32 %v4740, %v6228
        %v6361 = vadd.f32 %v4741, %v6231
        %v6362 = vpack.c.bf16 %v6235, %v6234
        %v6363 = vpack.c.bf16 %v6237, %v6236
        %v6364 = vpack.c.bf16 %v6239, %v6238
        %v6365 = vpack.c.bf16 %v6241, %v6240
        %v6366 = vpack.c.bf16 %v6243, %v6242
        %v6367 = vpack.c.bf16 %v6245, %v6244
        %v6368 = vpack.c.bf16 %v6247, %v6246
        %v6369 = vpack.c.bf16 %v6249, %v6248
        %v6370 = vpack.c.bf16 %v6251, %v6250
        %v6371 = vpack.c.bf16 %v6253, %v6252
        %v6372 = vpack.c.bf16 %v6255, %v6254
        %v6373 = vpack.c.bf16 %v6257, %v6256
        %v6374 = vpack.c.bf16 %v6259, %v6258
        %v6375 = vpack.c.bf16 %v6261, %v6260
        %v6376 = vpack.c.bf16 %v6263, %v6262
        %v6377 = vpack.c.bf16 %v6265, %v6264
        %v6378 = vpack.c.bf16 %v6267, %v6266
        %v6379 = vpack.c.bf16 %v6269, %v6268
        %v6380 = vpack.c.bf16 %v6271, %v6270
        %v6381 = vpack.c.bf16 %v6273, %v6272
        %v6382 = vpack.c.bf16 %v6275, %v6274
        %v6383 = vpack.c.bf16 %v6277, %v6276
        %v6384 = vpack.c.bf16 %v6279, %v6278
        %v6385 = vpack.c.bf16 %v6281, %v6280
        %v6386 = vpack.c.bf16 %v6283, %v6282
        %v6387 = vpack.c.bf16 %v6285, %v6284
        %v6388 = vpack.c.bf16 %v6287, %v6286
        %v6389 = vpack.c.bf16 %v6289, %v6288
        %v6390 = vpack.c.bf16 %v6291, %v6290
        %v6391 = vpack.c.bf16 %v6293, %v6292
        %v6392 = vpack.c.bf16 %v6295, %v6294
        %v6393 = vpack.c.bf16 %v6297, %v6296
        %v6394 = vpack.c.bf16 %v6299, %v6298
        %v6395 = vpack.c.bf16 %v6301, %v6300
        %v6396 = vpack.c.bf16 %v6303, %v6302
        %v6397 = vpack.c.bf16 %v6305, %v6304
        %v6398 = vpack.c.bf16 %v6307, %v6306
        %v6399 = vpack.c.bf16 %v6309, %v6308
        %v6400 = vpack.c.bf16 %v6311, %v6310
        %v6401 = vpack.c.bf16 %v6313, %v6312
        %v6402 = vpack.c.bf16 %v6315, %v6314
        %v6403 = vpack.c.bf16 %v6317, %v6316
        %v6404 = vpack.c.bf16 %v6319, %v6318
        %v6405 = vpack.c.bf16 %v6321, %v6320
        %v6406 = vpack.c.bf16 %v6323, %v6322
        %v6407 = vpack.c.bf16 %v6325, %v6324
        %v6408 = vpack.c.bf16 %v6327, %v6326
        %v6409 = vpack.c.bf16 %v6329, %v6328
        %v6410 = vpack.c.bf16 %v6331, %v6330
        %v6411 = vpack.c.bf16 %v6333, %v6332
        %v6412 = vpack.c.bf16 %v6335, %v6334
        %v6413 = vpack.c.bf16 %v6337, %v6336
        %v6414 = vpack.c.bf16 %v6339, %v6338
        %v6415 = vpack.c.bf16 %v6341, %v6340
        %v6416 = vpack.c.bf16 %v6343, %v6342
        %v6417 = vpack.c.bf16 %v6345, %v6344
        %v6418 = vpack.c.bf16 %v6347, %v6346
        %v6419 = vpack.c.bf16 %v6349, %v6348
        %v6420 = vpack.c.bf16 %v6351, %v6350
        %v6421 = vpack.c.bf16 %v6353, %v6352
        %v6422 = vpack.c.bf16 %v6355, %v6354
        %v6423 = vpack.c.bf16 %v6357, %v6356
        %v6424 = vpack.c.bf16 %v6359, %v6358
        %v6425 = vpack.c.bf16 %v6361, %v6360
        %v6426 = vld [vmem:[#allocation10] sm:$0xf]
        %v6427 = vld [vmem:[#allocation10 + $0x4] sm:$0xf]
        %v6428 = vld [vmem:[#allocation10 + $0x8] sm:$0xf]
        %v6429 = vld [vmem:[#allocation10 + $0xc] sm:$0xf]
        %v6430 = vld [vmem:[#allocation10 + $0x10] sm:$0xf]
        %v6431 = vld [vmem:[#allocation10 + $0x14] sm:$0xf]
        %v6432 = vld [vmem:[#allocation10 + $0x18] sm:$0xf]
        %v6433 = vld [vmem:[#allocation10 + $0x1c] sm:$0xf]
        %v6434 = vld [vmem:[#allocation10 + $0x20] sm:$0xf]
        %v6435 = vld [vmem:[#allocation10 + $0x24] sm:$0xf]
        %v6436 = vld [vmem:[#allocation10 + $0x28] sm:$0xf]
        %v6437 = vld [vmem:[#allocation10 + $0x2c] sm:$0xf]
        %v6438 = vld [vmem:[#allocation10 + $0x30] sm:$0xf]
        %v6439 = vld [vmem:[#allocation10 + $0x34] sm:$0xf]
        %v6440 = vld [vmem:[#allocation10 + $0x38] sm:$0xf]
        %v6441 = vld [vmem:[#allocation10 + $0x3c] sm:$0xf]
        %v6442 = vld [vmem:[%s7] sm:$0x1]
        %v6444 = vlaneseq
        %v6445 = vshrl.u32 %v6444, 7
        %v6446 = vsub.s32 0, %v6445
        %v6447 = vrot.slane %v6442, %v6446
        %v6465 = vunpack.c.l.b16 %v6426
        %v6466 = vunpack.c.l.b16 %v6427
        %v6467 = vunpack.c.l.b16 %v6428
        %v6468 = vunpack.c.l.b16 %v6429
        %v6469 = vunpack.c.l.b16 %v6430
        %v6470 = vunpack.c.l.b16 %v6431
        %v6471 = vunpack.c.l.b16 %v6432
        %v6472 = vunpack.c.l.b16 %v6433
        %v6473 = vunpack.c.l.b16 %v6434
        %v6474 = vunpack.c.l.b16 %v6435
        %v6475 = vunpack.c.l.b16 %v6436
        %v6476 = vunpack.c.l.b16 %v6437
        %v6477 = vunpack.c.l.b16 %v6438
        %v6478 = vunpack.c.l.b16 %v6439
        %v6479 = vunpack.c.l.b16 %v6440
        %v6480 = vunpack.c.l.b16 %v6441
        %v6481 = vpack.c.b16 %v6466, %v6465
        %v6482 = vpack.c.b16 %v6468, %v6467
        %v6483 = vpack.c.b16 %v6470, %v6469
        %v6484 = vpack.c.b16 %v6472, %v6471
        %v6485 = vpack.c.b16 %v6474, %v6473
        %v6486 = vpack.c.b16 %v6476, %v6475
        %v6487 = vpack.c.b16 %v6478, %v6477
        %v6488 = vpack.c.b16 %v6480, %v6479
        %6497 = vmatprep.subr.bf16.mxu0 0
        %6498 = vmatpush1.bf16.msra.mxu0 %v6481
        %6499 = vmatprep.subr.bf16.mxu0 0
        %6500 = vmatpush1.bf16.msra.mxu0 %v6482
        %6501 = vmatprep.subr.bf16.mxu0 0
        %6502 = vmatpush1.bf16.msra.mxu0 %v6483
        %6503 = vmatprep.subr.bf16.mxu0 0
        %6504 = vmatpush1.bf16.msra.mxu0 %v6484
        %6505 = vmatprep.subr.bf16.mxu0 0
        %6506 = vmatpush1.bf16.msra.mxu0 %v6485
        %6507 = vmatprep.subr.bf16.mxu0 0
        %6508 = vmatpush1.bf16.msra.mxu0 %v6486
        %6509 = vmatprep.subr.bf16.mxu0 0
        %6510 = vmatpush1.bf16.msra.mxu0 %v6487
        %6511 = vmatprep.subr.bf16.mxu0 0
        %6512 = vmatpush1.bf16.msra.mxu0 %v6488
        %6513 = vmatprep.subr.bf16.mxu0 0
        %6514 = vmatpush1.bf16.msra.mxu0 0
        %6515 = vmatprep.subr.bf16.mxu0 0
        %6516 = vmatpush1.bf16.msra.mxu0 0
        %6517 = vmatprep.subr.bf16.mxu0 0
        %6518 = vmatpush1.bf16.msra.mxu0 0
        %6519 = vmatprep.subr.bf16.mxu0 0
        %6520 = vmatpush1.bf16.msra.mxu0 0
        %6521 = vmatprep.subr.bf16.mxu0 0
        %6522 = vmatpush1.bf16.msra.mxu0 0
        %6523 = vmatprep.subr.bf16.mxu0 0
        %6524 = vmatpush1.bf16.msra.mxu0 0
        %6525 = vmatprep.subr.bf16.mxu0 0
        %6526 = vmatpush1.bf16.msra.mxu0 0
        %6527 = vmatprep.subr.bf16.mxu0 0
        %6528 = vmatpush1.bf16.msra.mxu0 0
        %6529 = vmatprep.mubr.bf16.mxu0 0
        %6530 = vmatmul.mubr.bf16.gmra.mrb[0].mxu0 %v6362
        %v6531 = vpop.f32.mrb[0].mxu0
        %v6532 = vadd.f32 %v6447, %v6531
        %v6533 = vpop.f32.mrb[0].mxu0
        %v6534 = vpop.f32.mrb[0].mxu0
        %v6535 = vadd.f32 %v6447, %v6534
        %v6536 = vpop.f32.mrb[0].mxu0
        %6537 = vmatprep.mubr.bf16.mxu0 0
        %6538 = vmatmul.mubr.bf16.gmra.mrb[0].mxu0 %v6363
        %v6539 = vpop.f32.mrb[0].mxu0
        %v6540 = vadd.f32 %v6447, %v6539
        %v6541 = vpop.f32.mrb[0].mxu0
        %v6542 = vpop.f32.mrb[0].mxu0
        %v6543 = vadd.f32 %v6447, %v6542
        %v6544 = vpop.f32.mrb[0].mxu0
        %6545 = vmatprep.mubr.bf16.mxu0 0
        %6546 = vmatmul.mubr.bf16.gmra.mrb[0].mxu0 %v6364
        %v6547 = vpop.f32.mrb[0].mxu0
        %v6548 = vadd.f32 %v6447, %v6547
        %v6549 = vpop.f32.mrb[0].mxu0
        %v6550 = vpop.f32.mrb[0].mxu0
        %v6551 = vadd.f32 %v6447, %v6550
        %v6552 = vpop.f32.mrb[0].mxu0
        %6553 = vmatprep.mubr.bf16.mxu0 0
        %6554 = vmatmul.mubr.bf16.gmra.mrb[0].mxu0 %v6365
        %v6555 = vpop.f32.mrb[0].mxu0
        %v6556 = vadd.f32 %v6447, %v6555
        %v6557 = vpop.f32.mrb[0].mxu0
        %v6558 = vpop.f32.mrb[0].mxu0
        %v6559 = vadd.f32 %v6447, %v6558
        %v6560 = vpop.f32.mrb[0].mxu0
        %6561 = vmatprep.mubr.bf16.mxu0 0
        %6562 = vmatmul.mubr.bf16.gmra.mrb[0].mxu0 %v6366
        %v6563 = vpop.f32.mrb[0].mxu0
        %v6564 = vadd.f32 %v6447, %v6563
        %v6565 = vpop.f32.mrb[0].mxu0
        %v6566 = vpop.f32.mrb[0].mxu0
        %v6567 = vadd.f32 %v6447, %v6566
        %v6568 = vpop.f32.mrb[0].mxu0
        %6569 = vmatprep.mubr.bf16.mxu0 0
        %6570 = vmatmul.mubr.bf16.gmra.mrb[0].mxu0 %v6367
        %v6571 = vpop.f32.mrb[0].mxu0
        %v6572 = vadd.f32 %v6447, %v6571
        %v6573 = vpop.f32.mrb[0].mxu0
        %v6574 = vpop.f32.mrb[0].mxu0
        %v6575 = vadd.f32 %v6447, %v6574
        %v6576 = vpop.f32.mrb[0].mxu0
        %6577 = vmatprep.mubr.bf16.mxu0 0
        %6578 = vmatmul.mubr.bf16.gmra.mrb[0].mxu0 %v6368
        %v6579 = vpop.f32.mrb[0].mxu0
        %v6580 = vadd.f32 %v6447, %v6579
        %v6581 = vpop.f32.mrb[0].mxu0
        %v6582 = vpop.f32.mrb[0].mxu0
        %v6583 = vadd.f32 %v6447, %v6582
        %v6584 = vpop.f32.mrb[0].mxu0
        %6585 = vmatprep.mubr.bf16.mxu0 0
        %6586 = vmatmul.mubr.bf16.gmra.mrb[0].mxu0 %v6369
        %v6587 = vpop.f32.mrb[0].mxu0
        %v6588 = vadd.f32 %v6447, %v6587
        %v6589 = vpop.f32.mrb[0].mxu0
        %v6590 = vpop.f32.mrb[0].mxu0
        %v6591 = vadd.f32 %v6447, %v6590
        %v6592 = vpop.f32.mrb[0].mxu0
        %6593 = vmatprep.mubr.bf16.mxu0 0
        %6594 = vmatmul.mubr.bf16.gmra.mrb[0].mxu0 %v6370
        %v6595 = vpop.f32.mrb[0].mxu0
        %v6596 = vadd.f32 %v6447, %v6595
        %v6597 = vpop.f32.mrb[0].mxu0
        %v6598 = vpop.f32.mrb[0].mxu0
        %v6599 = vadd.f32 %v6447, %v6598
        %v6600 = vpop.f32.mrb[0].mxu0
        %6601 = vmatprep.mubr.bf16.mxu0 0
        %6602 = vmatmul.mubr.bf16.gmra.mrb[0].mxu0 %v6371
        %v6603 = vpop.f32.mrb[0].mxu0
        %v6604 = vadd.f32 %v6447, %v6603
        %v6605 = vpop.f32.mrb[0].mxu0
        %v6606 = vpop.f32.mrb[0].mxu0
        %v6607 = vadd.f32 %v6447, %v6606
        %v6608 = vpop.f32.mrb[0].mxu0
        %6609 = vmatprep.mubr.bf16.mxu0 0
        %6610 = vmatmul.mubr.bf16.gmra.mrb[0].mxu0 %v6372
        %v6611 = vpop.f32.mrb[0].mxu0
        %v6612 = vadd.f32 %v6447, %v6611
        %v6613 = vpop.f32.mrb[0].mxu0
        %v6614 = vpop.f32.mrb[0].mxu0
        %v6615 = vadd.f32 %v6447, %v6614
        %v6616 = vpop.f32.mrb[0].mxu0
        %6617 = vmatprep.mubr.bf16.mxu0 0
        %6618 = vmatmul.mubr.bf16.gmra.mrb[0].mxu0 %v6373
        %v6619 = vpop.f32.mrb[0].mxu0
        %v6620 = vadd.f32 %v6447, %v6619
        %v6621 = vpop.f32.mrb[0].mxu0
        %v6622 = vpop.f32.mrb[0].mxu0
        %v6623 = vadd.f32 %v6447, %v6622
        %v6624 = vpop.f32.mrb[0].mxu0
        %6625 = vmatprep.mubr.bf16.mxu0 0
        %6626 = vmatmul.mubr.bf16.gmra.mrb[0].mxu0 %v6374
        %v6627 = vpop.f32.mrb[0].mxu0
        %v6628 = vadd.f32 %v6447, %v6627
        %v6629 = vpop.f32.mrb[0].mxu0
        %v6630 = vpop.f32.mrb[0].mxu0
        %v6631 = vadd.f32 %v6447, %v6630
        %v6632 = vpop.f32.mrb[0].mxu0
        %6633 = vmatprep.mubr.bf16.mxu0 0
        %6634 = vmatmul.mubr.bf16.gmra.mrb[0].mxu0 %v6375
        %v6635 = vpop.f32.mrb[0].mxu0
        %v6636 = vadd.f32 %v6447, %v6635
        %v6637 = vpop.f32.mrb[0].mxu0
        %v6638 = vpop.f32.mrb[0].mxu0
        %v6639 = vadd.f32 %v6447, %v6638
        %v6640 = vpop.f32.mrb[0].mxu0
        %6641 = vmatprep.mubr.bf16.mxu0 0
        %6642 = vmatmul.mubr.bf16.gmra.mrb[0].mxu0 %v6376
        %v6643 = vpop.f32.mrb[0].mxu0
        %v6644 = vadd.f32 %v6447, %v6643
        %v6645 = vpop.f32.mrb[0].mxu0
        %v6646 = vpop.f32.mrb[0].mxu0
        %v6647 = vadd.f32 %v6447, %v6646
        %v6648 = vpop.f32.mrb[0].mxu0
        %6649 = vmatprep.mubr.bf16.mxu0 0
        %6650 = vmatmul.mubr.bf16.gmra.mrb[0].mxu0 %v6377
        %v6651 = vpop.f32.mrb[0].mxu0
        %v6652 = vadd.f32 %v6447, %v6651
        %v6653 = vpop.f32.mrb[0].mxu0
        %v6654 = vpop.f32.mrb[0].mxu0
        %v6655 = vadd.f32 %v6447, %v6654
        %v6656 = vpop.f32.mrb[0].mxu0
        %6657 = vmatprep.mubr.bf16.mxu0 0
        %6658 = vmatmul.mubr.bf16.gmra.mrb[0].mxu0 %v6378
        %v6659 = vpop.f32.mrb[0].mxu0
        %v6660 = vadd.f32 %v6447, %v6659
        %v6661 = vpop.f32.mrb[0].mxu0
        %v6662 = vpop.f32.mrb[0].mxu0
        %v6663 = vadd.f32 %v6447, %v6662
        %v6664 = vpop.f32.mrb[0].mxu0
        %6665 = vmatprep.mubr.bf16.mxu0 0
        %6666 = vmatmul.mubr.bf16.gmra.mrb[0].mxu0 %v6379
        %v6667 = vpop.f32.mrb[0].mxu0
        %v6668 = vadd.f32 %v6447, %v6667
        %v6669 = vpop.f32.mrb[0].mxu0
        %v6670 = vpop.f32.mrb[0].mxu0
        %v6671 = vadd.f32 %v6447, %v6670
        %v6672 = vpop.f32.mrb[0].mxu0
        %6673 = vmatprep.mubr.bf16.mxu0 0
        %6674 = vmatmul.mubr.bf16.gmra.mrb[0].mxu0 %v6380
        %v6675 = vpop.f32.mrb[0].mxu0
        %v6676 = vadd.f32 %v6447, %v6675
        %v6677 = vpop.f32.mrb[0].mxu0
        %v6678 = vpop.f32.mrb[0].mxu0
        %v6679 = vadd.f32 %v6447, %v6678
        %v6680 = vpop.f32.mrb[0].mxu0
        %6681 = vmatprep.mubr.bf16.mxu0 0
        %6682 = vmatmul.mubr.bf16.gmra.mrb[0].mxu0 %v6381
        %v6683 = vpop.f32.mrb[0].mxu0
        %v6684 = vadd.f32 %v6447, %v6683
        %v6685 = vpop.f32.mrb[0].mxu0
        %v6686 = vpop.f32.mrb[0].mxu0
        %v6687 = vadd.f32 %v6447, %v6686
        %v6688 = vpop.f32.mrb[0].mxu0
        %6689 = vmatprep.mubr.bf16.mxu0 0
        %6690 = vmatmul.mubr.bf16.gmra.mrb[0].mxu0 %v6382
        %v6691 = vpop.f32.mrb[0].mxu0
        %v6692 = vadd.f32 %v6447, %v6691
        %v6693 = vpop.f32.mrb[0].mxu0
        %v6694 = vpop.f32.mrb[0].mxu0
        %v6695 = vadd.f32 %v6447, %v6694
        %v6696 = vpop.f32.mrb[0].mxu0
        %6697 = vmatprep.mubr.bf16.mxu0 0
        %6698 = vmatmul.mubr.bf16.gmra.mrb[0].mxu0 %v6383
        %v6699 = vpop.f32.mrb[0].mxu0
        %v6700 = vadd.f32 %v6447, %v6699
        %v6701 = vpop.f32.mrb[0].mxu0
        %v6702 = vpop.f32.mrb[0].mxu0
        %v6703 = vadd.f32 %v6447, %v6702
        %v6704 = vpop.f32.mrb[0].mxu0
        %6705 = vmatprep.mubr.bf16.mxu0 0
        %6706 = vmatmul.mubr.bf16.gmra.mrb[0].mxu0 %v6384
        %v6707 = vpop.f32.mrb[0].mxu0
        %v6708 = vadd.f32 %v6447, %v6707
        %v6709 = vpop.f32.mrb[0].mxu0
        %v6710 = vpop.f32.mrb[0].mxu0
        %v6711 = vadd.f32 %v6447, %v6710
        %v6712 = vpop.f32.mrb[0].mxu0
        %6713 = vmatprep.mubr.bf16.mxu0 0
        %6714 = vmatmul.mubr.bf16.gmra.mrb[0].mxu0 %v6385
        %v6715 = vpop.f32.mrb[0].mxu0
        %v6716 = vadd.f32 %v6447, %v6715
        %v6717 = vpop.f32.mrb[0].mxu0
        %v6718 = vpop.f32.mrb[0].mxu0
        %v6719 = vadd.f32 %v6447, %v6718
        %v6720 = vpop.f32.mrb[0].mxu0
        %6721 = vmatprep.mubr.bf16.mxu0 0
        %6722 = vmatmul.mubr.bf16.gmra.mrb[0].mxu0 %v6386
        %v6723 = vpop.f32.mrb[0].mxu0
        %v6724 = vadd.f32 %v6447, %v6723
        %v6725 = vpop.f32.mrb[0].mxu0
        %v6726 = vpop.f32.mrb[0].mxu0
        %v6727 = vadd.f32 %v6447, %v6726
        %v6728 = vpop.f32.mrb[0].mxu0
        %6729 = vmatprep.mubr.bf16.mxu0 0
        %6730 = vmatmul.mubr.bf16.gmra.mrb[0].mxu0 %v6387
        %v6731 = vpop.f32.mrb[0].mxu0
        %v6732 = vadd.f32 %v6447, %v6731
        %v6733 = vpop.f32.mrb[0].mxu0
        %v6734 = vpop.f32.mrb[0].mxu0
        %v6735 = vadd.f32 %v6447, %v6734
        %v6736 = vpop.f32.mrb[0].mxu0
        %6737 = vmatprep.mubr.bf16.mxu0 0
        %6738 = vmatmul.mubr.bf16.gmra.mrb[0].mxu0 %v6388
        %v6739 = vpop.f32.mrb[0].mxu0
        %v6740 = vadd.f32 %v6447, %v6739
        %v6741 = vpop.f32.mrb[0].mxu0
        %v6742 = vpop.f32.mrb[0].mxu0
        %v6743 = vadd.f32 %v6447, %v6742
        %v6744 = vpop.f32.mrb[0].mxu0
        %6745 = vmatprep.mubr.bf16.mxu0 0
        %6746 = vmatmul.mubr.bf16.gmra.mrb[0].mxu0 %v6389
        %v6747 = vpop.f32.mrb[0].mxu0
        %v6748 = vadd.f32 %v6447, %v6747
        %v6749 = vpop.f32.mrb[0].mxu0
        %v6750 = vpop.f32.mrb[0].mxu0
        %v6751 = vadd.f32 %v6447, %v6750
        %v6752 = vpop.f32.mrb[0].mxu0
        %6753 = vmatprep.mubr.bf16.mxu0 0
        %6754 = vmatmul.mubr.bf16.gmra.mrb[0].mxu0 %v6390
        %v6755 = vpop.f32.mrb[0].mxu0
        %v6756 = vadd.f32 %v6447, %v6755
        %v6757 = vpop.f32.mrb[0].mxu0
        %v6758 = vpop.f32.mrb[0].mxu0
        %v6759 = vadd.f32 %v6447, %v6758
        %v6760 = vpop.f32.mrb[0].mxu0
        %6761 = vmatprep.mubr.bf16.mxu0 0
        %6762 = vmatmul.mubr.bf16.gmra.mrb[0].mxu0 %v6391
        %v6763 = vpop.f32.mrb[0].mxu0
        %v6764 = vadd.f32 %v6447, %v6763
        %v6765 = vpop.f32.mrb[0].mxu0
        %v6766 = vpop.f32.mrb[0].mxu0
        %v6767 = vadd.f32 %v6447, %v6766
        %v6768 = vpop.f32.mrb[0].mxu0
        %6769 = vmatprep.mubr.bf16.mxu0 0
        %6770 = vmatmul.mubr.bf16.gmra.mrb[0].mxu0 %v6392
        %v6771 = vpop.f32.mrb[0].mxu0
        %v6772 = vadd.f32 %v6447, %v6771
        %v6773 = vpop.f32.mrb[0].mxu0
        %v6774 = vpop.f32.mrb[0].mxu0
        %v6775 = vadd.f32 %v6447, %v6774
        %v6776 = vpop.f32.mrb[0].mxu0
        %6777 = vmatprep.mubr.bf16.mxu0 0
        %6778 = vmatmul.mubr.bf16.gmra.mrb[0].mxu0 %v6393
        %v6779 = vpop.f32.mrb[0].mxu0
        %v6780 = vadd.f32 %v6447, %v6779
        %v6781 = vpop.f32.mrb[0].mxu0
        %v6782 = vpop.f32.mrb[0].mxu0
        %v6783 = vadd.f32 %v6447, %v6782
        %v6784 = vpop.f32.mrb[0].mxu0
        %6785 = vmatprep.mubr.bf16.mxu0 0
        %6786 = vmatmul.mubr.bf16.gmra.mrb[0].mxu0 %v6394
        %v6787 = vpop.f32.mrb[0].mxu0
        %v6788 = vadd.f32 %v6447, %v6787
        %v6789 = vpop.f32.mrb[0].mxu0
        %v6790 = vpop.f32.mrb[0].mxu0
        %v6791 = vadd.f32 %v6447, %v6790
        %v6792 = vpop.f32.mrb[0].mxu0
        %6793 = vmatprep.mubr.bf16.mxu0 0
        %6794 = vmatmul.mubr.bf16.gmra.mrb[0].mxu0 %v6395
        %v6795 = vpop.f32.mrb[0].mxu0
        %v6796 = vadd.f32 %v6447, %v6795
        %v6797 = vpop.f32.mrb[0].mxu0
        %v6798 = vpop.f32.mrb[0].mxu0
        %v6799 = vadd.f32 %v6447, %v6798
        %v6800 = vpop.f32.mrb[0].mxu0
        %6801 = vmatprep.mubr.bf16.mxu0 0
        %6802 = vmatmul.mubr.bf16.gmra.mrb[0].mxu0 %v6396
        %v6803 = vpop.f32.mrb[0].mxu0
        %v6804 = vadd.f32 %v6447, %v6803
        %v6805 = vpop.f32.mrb[0].mxu0
        %v6806 = vpop.f32.mrb[0].mxu0
        %v6807 = vadd.f32 %v6447, %v6806
        %v6808 = vpop.f32.mrb[0].mxu0
        %6809 = vmatprep.mubr.bf16.mxu0 0
        %6810 = vmatmul.mubr.bf16.gmra.mrb[0].mxu0 %v6397
        %v6811 = vpop.f32.mrb[0].mxu0
        %v6812 = vadd.f32 %v6447, %v6811
        %v6813 = vpop.f32.mrb[0].mxu0
        %v6814 = vpop.f32.mrb[0].mxu0
        %v6815 = vadd.f32 %v6447, %v6814
        %v6816 = vpop.f32.mrb[0].mxu0
        %6817 = vmatprep.mubr.bf16.mxu0 0
        %6818 = vmatmul.mubr.bf16.gmra.mrb[0].mxu0 %v6398
        %v6819 = vpop.f32.mrb[0].mxu0
        %v6820 = vadd.f32 %v6447, %v6819
        %v6821 = vpop.f32.mrb[0].mxu0
        %v6822 = vpop.f32.mrb[0].mxu0
        %v6823 = vadd.f32 %v6447, %v6822
        %v6824 = vpop.f32.mrb[0].mxu0
        %6825 = vmatprep.mubr.bf16.mxu0 0
        %6826 = vmatmul.mubr.bf16.gmra.mrb[0].mxu0 %v6399
        %v6827 = vpop.f32.mrb[0].mxu0
        %v6828 = vadd.f32 %v6447, %v6827
        %v6829 = vpop.f32.mrb[0].mxu0
        %v6830 = vpop.f32.mrb[0].mxu0
        %v6831 = vadd.f32 %v6447, %v6830
        %v6832 = vpop.f32.mrb[0].mxu0
        %6833 = vmatprep.mubr.bf16.mxu0 0
        %6834 = vmatmul.mubr.bf16.gmra.mrb[0].mxu0 %v6400
        %v6835 = vpop.f32.mrb[0].mxu0
        %v6836 = vadd.f32 %v6447, %v6835
        %v6837 = vpop.f32.mrb[0].mxu0
        %v6838 = vpop.f32.mrb[0].mxu0
        %v6839 = vadd.f32 %v6447, %v6838
        %v6840 = vpop.f32.mrb[0].mxu0
        %6841 = vmatprep.mubr.bf16.mxu0 0
        %6842 = vmatmul.mubr.bf16.gmra.mrb[0].mxu0 %v6401
        %v6843 = vpop.f32.mrb[0].mxu0
        %v6844 = vadd.f32 %v6447, %v6843
        %v6845 = vpop.f32.mrb[0].mxu0
        %v6846 = vpop.f32.mrb[0].mxu0
        %v6847 = vadd.f32 %v6447, %v6846
        %v6848 = vpop.f32.mrb[0].mxu0
        %6849 = vmatprep.mubr.bf16.mxu0 0
        %6850 = vmatmul.mubr.bf16.gmra.mrb[0].mxu0 %v6402
        %v6851 = vpop.f32.mrb[0].mxu0
        %v6852 = vadd.f32 %v6447, %v6851
        %v6853 = vpop.f32.mrb[0].mxu0
        %v6854 = vpop.f32.mrb[0].mxu0
        %v6855 = vadd.f32 %v6447, %v6854
        %v6856 = vpop.f32.mrb[0].mxu0
        %6857 = vmatprep.mubr.bf16.mxu0 0
        %6858 = vmatmul.mubr.bf16.gmra.mrb[0].mxu0 %v6403
        %v6859 = vpop.f32.mrb[0].mxu0
        %v6860 = vadd.f32 %v6447, %v6859
        %v6861 = vpop.f32.mrb[0].mxu0
        %v6862 = vpop.f32.mrb[0].mxu0
        %v6863 = vadd.f32 %v6447, %v6862
        %v6864 = vpop.f32.mrb[0].mxu0
        %6865 = vmatprep.mubr.bf16.mxu0 0
        %6866 = vmatmul.mubr.bf16.gmra.mrb[0].mxu0 %v6404
        %v6867 = vpop.f32.mrb[0].mxu0
        %v6868 = vadd.f32 %v6447, %v6867
        %v6869 = vpop.f32.mrb[0].mxu0
        %v6870 = vpop.f32.mrb[0].mxu0
        %v6871 = vadd.f32 %v6447, %v6870
        %v6872 = vpop.f32.mrb[0].mxu0
        %6873 = vmatprep.mubr.bf16.mxu0 0
        %6874 = vmatmul.mubr.bf16.gmra.mrb[0].mxu0 %v6405
        %v6875 = vpop.f32.mrb[0].mxu0
        %v6876 = vadd.f32 %v6447, %v6875
        %v6877 = vpop.f32.mrb[0].mxu0
        %v6878 = vpop.f32.mrb[0].mxu0
        %v6879 = vadd.f32 %v6447, %v6878
        %v6880 = vpop.f32.mrb[0].mxu0
        %6881 = vmatprep.mubr.bf16.mxu0 0
        %6882 = vmatmul.mubr.bf16.gmra.mrb[0].mxu0 %v6406
        %v6883 = vpop.f32.mrb[0].mxu0
        %v6884 = vadd.f32 %v6447, %v6883
        %v6885 = vpop.f32.mrb[0].mxu0
        %v6886 = vpop.f32.mrb[0].mxu0
        %v6887 = vadd.f32 %v6447, %v6886
        %v6888 = vpop.f32.mrb[0].mxu0
        %6889 = vmatprep.mubr.bf16.mxu0 0
        %6890 = vmatmul.mubr.bf16.gmra.mrb[0].mxu0 %v6407
        %v6891 = vpop.f32.mrb[0].mxu0
        %v6892 = vadd.f32 %v6447, %v6891
        %v6893 = vpop.f32.mrb[0].mxu0
        %v6894 = vpop.f32.mrb[0].mxu0
        %v6895 = vadd.f32 %v6447, %v6894
        %v6896 = vpop.f32.mrb[0].mxu0
        %6897 = vmatprep.mubr.bf16.mxu0 0
        %6898 = vmatmul.mubr.bf16.gmra.mrb[0].mxu0 %v6408
        %v6899 = vpop.f32.mrb[0].mxu0
        %v6900 = vadd.f32 %v6447, %v6899
        %v6901 = vpop.f32.mrb[0].mxu0
        %v6902 = vpop.f32.mrb[0].mxu0
        %v6903 = vadd.f32 %v6447, %v6902
        %v6904 = vpop.f32.mrb[0].mxu0
        %6905 = vmatprep.mubr.bf16.mxu0 0
        %6906 = vmatmul.mubr.bf16.gmra.mrb[0].mxu0 %v6409
        %v6907 = vpop.f32.mrb[0].mxu0
        %v6908 = vadd.f32 %v6447, %v6907
        %v6909 = vpop.f32.mrb[0].mxu0
        %v6910 = vpop.f32.mrb[0].mxu0
        %v6911 = vadd.f32 %v6447, %v6910
        %v6912 = vpop.f32.mrb[0].mxu0
        %6913 = vmatprep.mubr.bf16.mxu0 0
        %6914 = vmatmul.mubr.bf16.gmra.mrb[0].mxu0 %v6410
        %v6915 = vpop.f32.mrb[0].mxu0
        %v6916 = vadd.f32 %v6447, %v6915
        %v6917 = vpop.f32.mrb[0].mxu0
        %v6918 = vpop.f32.mrb[0].mxu0
        %v6919 = vadd.f32 %v6447, %v6918
        %v6920 = vpop.f32.mrb[0].mxu0
        %6921 = vmatprep.mubr.bf16.mxu0 0
        %6922 = vmatmul.mubr.bf16.gmra.mrb[0].mxu0 %v6411
        %v6923 = vpop.f32.mrb[0].mxu0
        %v6924 = vadd.f32 %v6447, %v6923
        %v6925 = vpop.f32.mrb[0].mxu0
        %v6926 = vpop.f32.mrb[0].mxu0
        %v6927 = vadd.f32 %v6447, %v6926
        %v6928 = vpop.f32.mrb[0].mxu0
        %6929 = vmatprep.mubr.bf16.mxu0 0
        %6930 = vmatmul.mubr.bf16.gmra.mrb[0].mxu0 %v6412
        %v6931 = vpop.f32.mrb[0].mxu0
        %v6932 = vadd.f32 %v6447, %v6931
        %v6933 = vpop.f32.mrb[0].mxu0
        %v6934 = vpop.f32.mrb[0].mxu0
        %v6935 = vadd.f32 %v6447, %v6934
        %v6936 = vpop.f32.mrb[0].mxu0
        %6937 = vmatprep.mubr.bf16.mxu0 0
        %6938 = vmatmul.mubr.bf16.gmra.mrb[0].mxu0 %v6413
        %v6939 = vpop.f32.mrb[0].mxu0
        %v6940 = vadd.f32 %v6447, %v6939
        %v6941 = vpop.f32.mrb[0].mxu0
        %v6942 = vpop.f32.mrb[0].mxu0
        %v6943 = vadd.f32 %v6447, %v6942
        %v6944 = vpop.f32.mrb[0].mxu0
        %6945 = vmatprep.mubr.bf16.mxu0 0
        %6946 = vmatmul.mubr.bf16.gmra.mrb[0].mxu0 %v6414
        %v6947 = vpop.f32.mrb[0].mxu0
        %v6948 = vadd.f32 %v6447, %v6947
        %v6949 = vpop.f32.mrb[0].mxu0
        %v6950 = vpop.f32.mrb[0].mxu0
        %v6951 = vadd.f32 %v6447, %v6950
        %v6952 = vpop.f32.mrb[0].mxu0
        %6953 = vmatprep.mubr.bf16.mxu0 0
        %6954 = vmatmul.mubr.bf16.gmra.mrb[0].mxu0 %v6415
        %v6955 = vpop.f32.mrb[0].mxu0
        %v6956 = vadd.f32 %v6447, %v6955
        %v6957 = vpop.f32.mrb[0].mxu0
        %v6958 = vpop.f32.mrb[0].mxu0
        %v6959 = vadd.f32 %v6447, %v6958
        %v6960 = vpop.f32.mrb[0].mxu0
        %6961 = vmatprep.mubr.bf16.mxu0 0
        %6962 = vmatmul.mubr.bf16.gmra.mrb[0].mxu0 %v6416
        %v6963 = vpop.f32.mrb[0].mxu0
        %v6964 = vadd.f32 %v6447, %v6963
        %v6965 = vpop.f32.mrb[0].mxu0
        %v6966 = vpop.f32.mrb[0].mxu0
        %v6967 = vadd.f32 %v6447, %v6966
        %v6968 = vpop.f32.mrb[0].mxu0
        %6969 = vmatprep.mubr.bf16.mxu0 0
        %6970 = vmatmul.mubr.bf16.gmra.mrb[0].mxu0 %v6417
        %v6971 = vpop.f32.mrb[0].mxu0
        %v6972 = vadd.f32 %v6447, %v6971
        %v6973 = vpop.f32.mrb[0].mxu0
        %v6974 = vpop.f32.mrb[0].mxu0
        %v6975 = vadd.f32 %v6447, %v6974
        %v6976 = vpop.f32.mrb[0].mxu0
        %6977 = vmatprep.mubr.bf16.mxu0 0
        %6978 = vmatmul.mubr.bf16.gmra.mrb[0].mxu0 %v6418
        %v6979 = vpop.f32.mrb[0].mxu0
        %v6980 = vadd.f32 %v6447, %v6979
        %v6981 = vpop.f32.mrb[0].mxu0
        %v6982 = vpop.f32.mrb[0].mxu0
        %v6983 = vadd.f32 %v6447, %v6982
        %v6984 = vpop.f32.mrb[0].mxu0
        %6985 = vmatprep.mubr.bf16.mxu0 0
        %6986 = vmatmul.mubr.bf16.gmra.mrb[0].mxu0 %v6419
        %v6987 = vpop.f32.mrb[0].mxu0
        %v6988 = vadd.f32 %v6447, %v6987
        %v6989 = vpop.f32.mrb[0].mxu0
        %v6990 = vpop.f32.mrb[0].mxu0
        %v6991 = vadd.f32 %v6447, %v6990
        %v6992 = vpop.f32.mrb[0].mxu0
        %6993 = vmatprep.mubr.bf16.mxu0 0
        %6994 = vmatmul.mubr.bf16.gmra.mrb[0].mxu0 %v6420
        %v6995 = vpop.f32.mrb[0].mxu0
        %v6996 = vadd.f32 %v6447, %v6995
        %v6997 = vpop.f32.mrb[0].mxu0
        %v6998 = vpop.f32.mrb[0].mxu0
        %v6999 = vadd.f32 %v6447, %v6998
        %v7000 = vpop.f32.mrb[0].mxu0
        %7001 = vmatprep.mubr.bf16.mxu0 0
        %7002 = vmatmul.mubr.bf16.gmra.mrb[0].mxu0 %v6421
        %v7003 = vpop.f32.mrb[0].mxu0
        %v7004 = vadd.f32 %v6447, %v7003
        %v7005 = vpop.f32.mrb[0].mxu0
        %v7006 = vpop.f32.mrb[0].mxu0
        %v7007 = vadd.f32 %v6447, %v7006
        %v7008 = vpop.f32.mrb[0].mxu0
        %7009 = vmatprep.mubr.bf16.mxu0 0
        %7010 = vmatmul.mubr.bf16.gmra.mrb[0].mxu0 %v6422
        %v7011 = vpop.f32.mrb[0].mxu0
        %v7012 = vadd.f32 %v6447, %v7011
        %v7013 = vpop.f32.mrb[0].mxu0
        %v7014 = vpop.f32.mrb[0].mxu0
        %v7015 = vadd.f32 %v6447, %v7014
        %v7016 = vpop.f32.mrb[0].mxu0
        %7017 = vmatprep.mubr.bf16.mxu0 0
        %7018 = vmatmul.mubr.bf16.gmra.mrb[0].mxu0 %v6423
        %v7019 = vpop.f32.mrb[0].mxu0
        %v7020 = vadd.f32 %v6447, %v7019
        %v7021 = vpop.f32.mrb[0].mxu0
        %v7022 = vpop.f32.mrb[0].mxu0
        %v7023 = vadd.f32 %v6447, %v7022
        %v7024 = vpop.f32.mrb[0].mxu0
        %7025 = vmatprep.mubr.bf16.mxu0 0
        %7026 = vmatmul.mubr.bf16.gmra.mrb[0].mxu0 %v6424
        %v7027 = vpop.f32.mrb[0].mxu0
        %v7028 = vadd.f32 %v6447, %v7027
        %v7029 = vpop.f32.mrb[0].mxu0
        %v7030 = vpop.f32.mrb[0].mxu0
        %v7031 = vadd.f32 %v6447, %v7030
        %v7032 = vpop.f32.mrb[0].mxu0
        %7033 = vmatprep.mubr.bf16.mxu0 0
        %7034 = vmatmul.mubr.bf16.gmra.mrb[0].mxu0 %v6425
        %v7035 = vpop.f32.mrb[0].mxu0
        %v7036 = vadd.f32 %v6447, %v7035
        %v7037 = vpop.f32.mrb[0].mxu0
        %v7038 = vpop.f32.mrb[0].mxu0
        %v7039 = vadd.f32 %v6447, %v7038
        %v7040 = vpop.f32.mrb[0].mxu0
        %7041 = vdwg.mxu0
        %v7042 = vpack.c.bf16 %v6535, %v6532
        %v7043 = vpack.c.bf16 %v6543, %v6540
        %v7044 = vpack.c.bf16 %v6551, %v6548
        %v7045 = vpack.c.bf16 %v6559, %v6556
        %v7046 = vpack.c.bf16 %v6567, %v6564
        %v7047 = vpack.c.bf16 %v6575, %v6572
        %v7048 = vpack.c.bf16 %v6583, %v6580
        %v7049 = vpack.c.bf16 %v6591, %v6588
        %v7050 = vpack.c.bf16 %v6599, %v6596
        %v7051 = vpack.c.bf16 %v6607, %v6604
        %v7052 = vpack.c.bf16 %v6615, %v6612
        %v7053 = vpack.c.bf16 %v6623, %v6620
        %v7054 = vpack.c.bf16 %v6631, %v6628
        %v7055 = vpack.c.bf16 %v6639, %v6636
        %v7056 = vpack.c.bf16 %v6647, %v6644
        %v7057 = vpack.c.bf16 %v6655, %v6652
        %v7058 = vpack.c.bf16 %v6663, %v6660
        %v7059 = vpack.c.bf16 %v6671, %v6668
        %v7060 = vpack.c.bf16 %v6679, %v6676
        %v7061 = vpack.c.bf16 %v6687, %v6684
        %v7062 = vpack.c.bf16 %v6695, %v6692
        %v7063 = vpack.c.bf16 %v6703, %v6700
        %v7064 = vpack.c.bf16 %v6711, %v6708
        %v7065 = vpack.c.bf16 %v6719, %v6716
        %v7066 = vpack.c.bf16 %v6727, %v6724
        %v7067 = vpack.c.bf16 %v6735, %v6732
        %v7068 = vpack.c.bf16 %v6743, %v6740
        %v7069 = vpack.c.bf16 %v6751, %v6748
        %v7070 = vpack.c.bf16 %v6759, %v6756
        %v7071 = vpack.c.bf16 %v6767, %v6764
        %v7072 = vpack.c.bf16 %v6775, %v6772
        %v7073 = vpack.c.bf16 %v6783, %v6780
        %v7074 = vpack.c.bf16 %v6791, %v6788
        %v7075 = vpack.c.bf16 %v6799, %v6796
        %v7076 = vpack.c.bf16 %v6807, %v6804
        %v7077 = vpack.c.bf16 %v6815, %v6812
        %v7078 = vpack.c.bf16 %v6823, %v6820
        %v7079 = vpack.c.bf16 %v6831, %v6828
        %v7080 = vpack.c.bf16 %v6839, %v6836
        %v7081 = vpack.c.bf16 %v6847, %v6844
        %v7082 = vpack.c.bf16 %v6855, %v6852
        %v7083 = vpack.c.bf16 %v6863, %v6860
        %v7084 = vpack.c.bf16 %v6871, %v6868
        %v7085 = vpack.c.bf16 %v6879, %v6876
        %v7086 = vpack.c.bf16 %v6887, %v6884
        %v7087 = vpack.c.bf16 %v6895, %v6892
        %v7088 = vpack.c.bf16 %v6903, %v6900
        %v7089 = vpack.c.bf16 %v6911, %v6908
        %v7090 = vpack.c.bf16 %v6919, %v6916
        %v7091 = vpack.c.bf16 %v6927, %v6924
        %v7092 = vpack.c.bf16 %v6935, %v6932
        %v7093 = vpack.c.bf16 %v6943, %v6940
        %v7094 = vpack.c.bf16 %v6951, %v6948
        %v7095 = vpack.c.bf16 %v6959, %v6956
        %v7096 = vpack.c.bf16 %v6967, %v6964
        %v7097 = vpack.c.bf16 %v6975, %v6972
        %v7098 = vpack.c.bf16 %v6983, %v6980
        %v7099 = vpack.c.bf16 %v6991, %v6988
        %v7100 = vpack.c.bf16 %v6999, %v6996
        %v7101 = vpack.c.bf16 %v7007, %v7004
        %v7102 = vpack.c.bf16 %v7015, %v7012
        %v7103 = vpack.c.bf16 %v7023, %v7020
        %v7104 = vpack.c.bf16 %v7031, %v7028
        %v7105 = vpack.c.bf16 %v7039, %v7036
        %v7170 = vunpack.c.l.b16 %v7042
        %v7171 = vunpack.c.h.b16 %v7042
        %v7172 = vunpack.c.l.b16 %v7043
        %v7173 = vunpack.c.h.b16 %v7043
        %v7174 = vunpack.c.l.b16 %v7044
        %v7175 = vunpack.c.h.b16 %v7044
        %v7176 = vunpack.c.l.b16 %v7045
        %v7177 = vunpack.c.h.b16 %v7045
        %v7178 = vunpack.c.l.b16 %v7046
        %v7179 = vunpack.c.h.b16 %v7046
        %v7180 = vunpack.c.l.b16 %v7047
        %v7181 = vunpack.c.h.b16 %v7047
        %v7182 = vunpack.c.l.b16 %v7048
        %v7183 = vunpack.c.h.b16 %v7048
        %v7184 = vunpack.c.l.b16 %v7049
        %v7185 = vunpack.c.h.b16 %v7049
        %v7186 = vunpack.c.l.b16 %v7050
        %v7187 = vunpack.c.h.b16 %v7050
        %v7188 = vunpack.c.l.b16 %v7051
        %v7189 = vunpack.c.h.b16 %v7051
        %v7190 = vunpack.c.l.b16 %v7052
        %v7191 = vunpack.c.h.b16 %v7052
        %v7192 = vunpack.c.l.b16 %v7053
        %v7193 = vunpack.c.h.b16 %v7053
        %v7194 = vunpack.c.l.b16 %v7054
        %v7195 = vunpack.c.h.b16 %v7054
        %v7196 = vunpack.c.l.b16 %v7055
        %v7197 = vunpack.c.h.b16 %v7055
        %v7198 = vunpack.c.l.b16 %v7056
        %v7199 = vunpack.c.h.b16 %v7056
        %v7200 = vunpack.c.l.b16 %v7057
        %v7201 = vunpack.c.h.b16 %v7057
        %v7202 = vunpack.c.l.b16 %v7058
        %v7203 = vunpack.c.h.b16 %v7058
        %v7204 = vunpack.c.l.b16 %v7059
        %v7205 = vunpack.c.h.b16 %v7059
        %v7206 = vunpack.c.l.b16 %v7060
        %v7207 = vunpack.c.h.b16 %v7060
        %v7208 = vunpack.c.l.b16 %v7061
        %v7209 = vunpack.c.h.b16 %v7061
        %v7210 = vunpack.c.l.b16 %v7062
        %v7211 = vunpack.c.h.b16 %v7062
        %v7212 = vunpack.c.l.b16 %v7063
        %v7213 = vunpack.c.h.b16 %v7063
        %v7214 = vunpack.c.l.b16 %v7064
        %v7215 = vunpack.c.h.b16 %v7064
        %v7216 = vunpack.c.l.b16 %v7065
        %v7217 = vunpack.c.h.b16 %v7065
        %v7218 = vunpack.c.l.b16 %v7066
        %v7219 = vunpack.c.h.b16 %v7066
        %v7220 = vunpack.c.l.b16 %v7067
        %v7221 = vunpack.c.h.b16 %v7067
        %v7222 = vunpack.c.l.b16 %v7068
        %v7223 = vunpack.c.h.b16 %v7068
        %v7224 = vunpack.c.l.b16 %v7069
        %v7225 = vunpack.c.h.b16 %v7069
        %v7226 = vunpack.c.l.b16 %v7070
        %v7227 = vunpack.c.h.b16 %v7070
        %v7228 = vunpack.c.l.b16 %v7071
        %v7229 = vunpack.c.h.b16 %v7071
        %v7230 = vunpack.c.l.b16 %v7072
        %v7231 = vunpack.c.h.b16 %v7072
        %v7232 = vunpack.c.l.b16 %v7073
        %v7233 = vunpack.c.h.b16 %v7073
        %v7234 = vunpack.c.l.b16 %v7074
        %v7235 = vunpack.c.h.b16 %v7074
        %v7236 = vunpack.c.l.b16 %v7075
        %v7237 = vunpack.c.h.b16 %v7075
        %v7238 = vunpack.c.l.b16 %v7076
        %v7239 = vunpack.c.h.b16 %v7076
        %v7240 = vunpack.c.l.b16 %v7077
        %v7241 = vunpack.c.h.b16 %v7077
        %v7242 = vunpack.c.l.b16 %v7078
        %v7243 = vunpack.c.h.b16 %v7078
        %v7244 = vunpack.c.l.b16 %v7079
        %v7245 = vunpack.c.h.b16 %v7079
        %v7246 = vunpack.c.l.b16 %v7080
        %v7247 = vunpack.c.h.b16 %v7080
        %v7248 = vunpack.c.l.b16 %v7081
        %v7249 = vunpack.c.h.b16 %v7081
        %v7250 = vunpack.c.l.b16 %v7082
        %v7251 = vunpack.c.h.b16 %v7082
        %v7252 = vunpack.c.l.b16 %v7083
        %v7253 = vunpack.c.h.b16 %v7083
        %v7254 = vunpack.c.l.b16 %v7084
        %v7255 = vunpack.c.h.b16 %v7084
        %v7256 = vunpack.c.l.b16 %v7085
        %v7257 = vunpack.c.h.b16 %v7085
        %v7258 = vunpack.c.l.b16 %v7086
        %v7259 = vunpack.c.h.b16 %v7086
        %v7260 = vunpack.c.l.b16 %v7087
        %v7261 = vunpack.c.h.b16 %v7087
        %v7262 = vunpack.c.l.b16 %v7088
        %v7263 = vunpack.c.h.b16 %v7088
        %v7264 = vunpack.c.l.b16 %v7089
        %v7265 = vunpack.c.h.b16 %v7089
        %v7266 = vunpack.c.l.b16 %v7090
        %v7267 = vunpack.c.h.b16 %v7090
        %v7268 = vunpack.c.l.b16 %v7091
        %v7269 = vunpack.c.h.b16 %v7091
        %v7270 = vunpack.c.l.b16 %v7092
        %v7271 = vunpack.c.h.b16 %v7092
        %v7272 = vunpack.c.l.b16 %v7093
        %v7273 = vunpack.c.h.b16 %v7093
        %v7274 = vunpack.c.l.b16 %v7094
        %v7275 = vunpack.c.h.b16 %v7094
        %v7276 = vunpack.c.l.b16 %v7095
        %v7277 = vunpack.c.h.b16 %v7095
        %v7278 = vunpack.c.l.b16 %v7096
        %v7279 = vunpack.c.h.b16 %v7096
        %v7280 = vunpack.c.l.b16 %v7097
        %v7281 = vunpack.c.h.b16 %v7097
        %v7282 = vunpack.c.l.b16 %v7098
        %v7283 = vunpack.c.h.b16 %v7098
        %v7284 = vunpack.c.l.b16 %v7099
        %v7285 = vunpack.c.h.b16 %v7099
        %v7286 = vunpack.c.l.b16 %v7100
        %v7287 = vunpack.c.h.b16 %v7100
        %v7288 = vunpack.c.l.b16 %v7101
        %v7289 = vunpack.c.h.b16 %v7101
        %v7290 = vunpack.c.l.b16 %v7102
        %v7291 = vunpack.c.h.b16 %v7102
        %v7292 = vunpack.c.l.b16 %v7103
        %v7293 = vunpack.c.h.b16 %v7103
        %v7294 = vunpack.c.l.b16 %v7104
        %v7295 = vunpack.c.h.b16 %v7104
        %v7296 = vunpack.c.l.b16 %v7105
        %v7297 = vunpack.c.h.b16 %v7105
        %v7298 = vpack.c.b16 %v7170, %v7170
        %v7299 = vpack.c.b16 %v7171, %v7171
        %v7300 = vpack.c.b16 %v7172, %v7172
        %v7301 = vpack.c.b16 %v7173, %v7173
        %v7302 = vpack.c.b16 %v7174, %v7174
        %v7303 = vpack.c.b16 %v7175, %v7175
        %v7304 = vpack.c.b16 %v7176, %v7176
        %v7305 = vpack.c.b16 %v7177, %v7177
        %v7306 = vpack.c.b16 %v7178, %v7178
        %v7307 = vpack.c.b16 %v7179, %v7179
        %v7308 = vpack.c.b16 %v7180, %v7180
        %v7309 = vpack.c.b16 %v7181, %v7181
        %v7310 = vpack.c.b16 %v7182, %v7182
        %v7311 = vpack.c.b16 %v7183, %v7183
        %v7312 = vpack.c.b16 %v7184, %v7184
        %v7313 = vpack.c.b16 %v7185, %v7185
        %v7314 = vpack.c.b16 %v7186, %v7186
        %v7315 = vpack.c.b16 %v7187, %v7187
        %v7316 = vpack.c.b16 %v7188, %v7188
        %v7317 = vpack.c.b16 %v7189, %v7189
        %v7318 = vpack.c.b16 %v7190, %v7190
        %v7319 = vpack.c.b16 %v7191, %v7191
        %v7320 = vpack.c.b16 %v7192, %v7192
        %v7321 = vpack.c.b16 %v7193, %v7193
        %v7322 = vpack.c.b16 %v7194, %v7194
        %v7323 = vpack.c.b16 %v7195, %v7195
        %v7324 = vpack.c.b16 %v7196, %v7196
        %v7325 = vpack.c.b16 %v7197, %v7197
        %v7326 = vpack.c.b16 %v7198, %v7198
        %v7327 = vpack.c.b16 %v7199, %v7199
        %v7328 = vpack.c.b16 %v7200, %v7200
        %v7329 = vpack.c.b16 %v7201, %v7201
        %v7330 = vpack.c.b16 %v7202, %v7202
        %v7331 = vpack.c.b16 %v7203, %v7203
        %v7332 = vpack.c.b16 %v7204, %v7204
        %v7333 = vpack.c.b16 %v7205, %v7205
        %v7334 = vpack.c.b16 %v7206, %v7206
        %v7335 = vpack.c.b16 %v7207, %v7207
        %v7336 = vpack.c.b16 %v7208, %v7208
        %v7337 = vpack.c.b16 %v7209, %v7209
        %v7338 = vpack.c.b16 %v7210, %v7210
        %v7339 = vpack.c.b16 %v7211, %v7211
        %v7340 = vpack.c.b16 %v7212, %v7212
        %v7341 = vpack.c.b16 %v7213, %v7213
        %v7342 = vpack.c.b16 %v7214, %v7214
        %v7343 = vpack.c.b16 %v7215, %v7215
        %v7344 = vpack.c.b16 %v7216, %v7216
        %v7345 = vpack.c.b16 %v7217, %v7217
        %v7346 = vpack.c.b16 %v7218, %v7218
        %v7347 = vpack.c.b16 %v7219, %v7219
        %v7348 = vpack.c.b16 %v7220, %v7220
        %v7349 = vpack.c.b16 %v7221, %v7221
        %v7350 = vpack.c.b16 %v7222, %v7222
        %v7351 = vpack.c.b16 %v7223, %v7223
        %v7352 = vpack.c.b16 %v7224, %v7224
        %v7353 = vpack.c.b16 %v7225, %v7225
        %v7354 = vpack.c.b16 %v7226, %v7226
        %v7355 = vpack.c.b16 %v7227, %v7227
        %v7356 = vpack.c.b16 %v7228, %v7228
        %v7357 = vpack.c.b16 %v7229, %v7229
        %v7358 = vpack.c.b16 %v7230, %v7230
        %v7359 = vpack.c.b16 %v7231, %v7231
        %v7360 = vpack.c.b16 %v7232, %v7232
        %v7361 = vpack.c.b16 %v7233, %v7233
        %v7362 = vpack.c.b16 %v7234, %v7234
        %v7363 = vpack.c.b16 %v7235, %v7235
        %v7364 = vpack.c.b16 %v7236, %v7236
        %v7365 = vpack.c.b16 %v7237, %v7237
        %v7366 = vpack.c.b16 %v7238, %v7238
        %v7367 = vpack.c.b16 %v7239, %v7239
        %v7368 = vpack.c.b16 %v7240, %v7240
        %v7369 = vpack.c.b16 %v7241, %v7241
        %v7370 = vpack.c.b16 %v7242, %v7242
        %v7371 = vpack.c.b16 %v7243, %v7243
        %v7372 = vpack.c.b16 %v7244, %v7244
        %v7373 = vpack.c.b16 %v7245, %v7245
        %v7374 = vpack.c.b16 %v7246, %v7246
        %v7375 = vpack.c.b16 %v7247, %v7247
        %v7376 = vpack.c.b16 %v7248, %v7248
        %v7377 = vpack.c.b16 %v7249, %v7249
        %v7378 = vpack.c.b16 %v7250, %v7250
        %v7379 = vpack.c.b16 %v7251, %v7251
        %v7380 = vpack.c.b16 %v7252, %v7252
        %v7381 = vpack.c.b16 %v7253, %v7253
        %v7382 = vpack.c.b16 %v7254, %v7254
        %v7383 = vpack.c.b16 %v7255, %v7255
        %v7384 = vpack.c.b16 %v7256, %v7256
        %v7385 = vpack.c.b16 %v7257, %v7257
        %v7386 = vpack.c.b16 %v7258, %v7258
        %v7387 = vpack.c.b16 %v7259, %v7259
        %v7388 = vpack.c.b16 %v7260, %v7260
        %v7389 = vpack.c.b16 %v7261, %v7261
        %v7390 = vpack.c.b16 %v7262, %v7262
        %v7391 = vpack.c.b16 %v7263, %v7263
        %v7392 = vpack.c.b16 %v7264, %v7264
        %v7393 = vpack.c.b16 %v7265, %v7265
        %v7394 = vpack.c.b16 %v7266, %v7266
        %v7395 = vpack.c.b16 %v7267, %v7267
        %v7396 = vpack.c.b16 %v7268, %v7268
        %v7397 = vpack.c.b16 %v7269, %v7269
        %v7398 = vpack.c.b16 %v7270, %v7270
        %v7399 = vpack.c.b16 %v7271, %v7271
        %v7400 = vpack.c.b16 %v7272, %v7272
        %v7401 = vpack.c.b16 %v7273, %v7273
        %v7402 = vpack.c.b16 %v7274, %v7274
        %v7403 = vpack.c.b16 %v7275, %v7275
        %v7404 = vpack.c.b16 %v7276, %v7276
        %v7405 = vpack.c.b16 %v7277, %v7277
        %v7406 = vpack.c.b16 %v7278, %v7278
        %v7407 = vpack.c.b16 %v7279, %v7279
        %v7408 = vpack.c.b16 %v7280, %v7280
        %v7409 = vpack.c.b16 %v7281, %v7281
        %v7410 = vpack.c.b16 %v7282, %v7282
        %v7411 = vpack.c.b16 %v7283, %v7283
        %v7412 = vpack.c.b16 %v7284, %v7284
        %v7413 = vpack.c.b16 %v7285, %v7285
        %v7414 = vpack.c.b16 %v7286, %v7286
        %v7415 = vpack.c.b16 %v7287, %v7287
        %v7416 = vpack.c.b16 %v7288, %v7288
        %v7417 = vpack.c.b16 %v7289, %v7289
        %v7418 = vpack.c.b16 %v7290, %v7290
        %v7419 = vpack.c.b16 %v7291, %v7291
        %v7420 = vpack.c.b16 %v7292, %v7292
        %v7421 = vpack.c.b16 %v7293, %v7293
        %v7422 = vpack.c.b16 %v7294, %v7294
        %v7423 = vpack.c.b16 %v7295, %v7295
        %v7424 = vpack.c.b16 %v7296, %v7296
        %v7425 = vpack.c.b16 %v7297, %v7297
        %7554 = vst [vmem:[%s381] sm:$0xf] %v7298
        %7555 = vst [vmem:[%s381 + $0x4] sm:$0xf] %v7299
        %7556 = vst [vmem:[%s381 + $0x8] sm:$0xf] %v7300
        %7557 = vst [vmem:[%s381 + $0xc] sm:$0xf] %v7301
        %7558 = vst [vmem:[%s381 + $0x10] sm:$0xf] %v7302
        %7559 = vst [vmem:[%s381 + $0x14] sm:$0xf] %v7303
        %7560 = vst [vmem:[%s381 + $0x18] sm:$0xf] %v7304
        %7561 = vst [vmem:[%s381 + $0x1c] sm:$0xf] %v7305
        %7562 = vst [vmem:[%s381 + $0x20] sm:$0xf] %v7306
        %7563 = vst [vmem:[%s381 + $0x24] sm:$0xf] %v7307
        %7564 = vst [vmem:[%s381 + $0x28] sm:$0xf] %v7308
        %7565 = vst [vmem:[%s381 + $0x2c] sm:$0xf] %v7309
        %7566 = vst [vmem:[%s381 + $0x30] sm:$0xf] %v7310
        %7567 = vst [vmem:[%s381 + $0x34] sm:$0xf] %v7311
        %7568 = vst [vmem:[%s381 + $0x38] sm:$0xf] %v7312
        %7569 = vst [vmem:[%s381 + $0x3c] sm:$0xf] %v7313
        %7570 = vst [vmem:[%s381 + $0x40] sm:$0xf] %v7314
        %7571 = vst [vmem:[%s381 + $0x44] sm:$0xf] %v7315
        %7572 = vst [vmem:[%s381 + $0x48] sm:$0xf] %v7316
        %7573 = vst [vmem:[%s381 + $0x4c] sm:$0xf] %v7317
        %7574 = vst [vmem:[%s381 + $0x50] sm:$0xf] %v7318
        %7575 = vst [vmem:[%s381 + $0x54] sm:$0xf] %v7319
        %7576 = vst [vmem:[%s381 + $0x58] sm:$0xf] %v7320
        %7577 = vst [vmem:[%s381 + $0x5c] sm:$0xf] %v7321
        %7578 = vst [vmem:[%s381 + $0x60] sm:$0xf] %v7322
        %7579 = vst [vmem:[%s381 + $0x64] sm:$0xf] %v7323
        %7580 = vst [vmem:[%s381 + $0x68] sm:$0xf] %v7324
        %7581 = vst [vmem:[%s381 + $0x6c] sm:$0xf] %v7325
        %7582 = vst [vmem:[%s381 + $0x70] sm:$0xf] %v7326
        %7583 = vst [vmem:[%s381 + $0x74] sm:$0xf] %v7327
        %7584 = vst [vmem:[%s381 + $0x78] sm:$0xf] %v7328
        %7585 = vst [vmem:[%s381 + $0x7c] sm:$0xf] %v7329
        %7586 = vst [vmem:[%s381 + $0x80] sm:$0xf] %v7330
        %7587 = vst [vmem:[%s381 + $0x84] sm:$0xf] %v7331
        %7588 = vst [vmem:[%s381 + $0x88] sm:$0xf] %v7332
        %7589 = vst [vmem:[%s381 + $0x8c] sm:$0xf] %v7333
        %7590 = vst [vmem:[%s381 + $0x90] sm:$0xf] %v7334
        %7591 = vst [vmem:[%s381 + $0x94] sm:$0xf] %v7335
        %7592 = vst [vmem:[%s381 + $0x98] sm:$0xf] %v7336
        %7593 = vst [vmem:[%s381 + $0x9c] sm:$0xf] %v7337
        %7594 = vst [vmem:[%s381 + $0xa0] sm:$0xf] %v7338
        %7595 = vst [vmem:[%s381 + $0xa4] sm:$0xf] %v7339
        %7596 = vst [vmem:[%s381 + $0xa8] sm:$0xf] %v7340
        %7597 = vst [vmem:[%s381 + $0xac] sm:$0xf] %v7341
        %7598 = vst [vmem:[%s381 + $0xb0] sm:$0xf] %v7342
        %7599 = vst [vmem:[%s381 + $0xb4] sm:$0xf] %v7343
        %7600 = vst [vmem:[%s381 + $0xb8] sm:$0xf] %v7344
        %7601 = vst [vmem:[%s381 + $0xbc] sm:$0xf] %v7345
        %7602 = vst [vmem:[%s381 + $0xc0] sm:$0xf] %v7346
        %7603 = vst [vmem:[%s381 + $0xc4] sm:$0xf] %v7347
        %7604 = vst [vmem:[%s381 + $0xc8] sm:$0xf] %v7348
        %7605 = vst [vmem:[%s381 + $0xcc] sm:$0xf] %v7349
        %7606 = vst [vmem:[%s381 + $0xd0] sm:$0xf] %v7350
        %7607 = vst [vmem:[%s381 + $0xd4] sm:$0xf] %v7351
        %7608 = vst [vmem:[%s381 + $0xd8] sm:$0xf] %v7352
        %7609 = vst [vmem:[%s381 + $0xdc] sm:$0xf] %v7353
        %7610 = vst [vmem:[%s381 + $0xe0] sm:$0xf] %v7354
        %7611 = vst [vmem:[%s381 + $0xe4] sm:$0xf] %v7355
        %7612 = vst [vmem:[%s381 + $0xe8] sm:$0xf] %v7356
        %7613 = vst [vmem:[%s381 + $0xec] sm:$0xf] %v7357
        %7614 = vst [vmem:[%s381 + $0xf0] sm:$0xf] %v7358
        %7615 = vst [vmem:[%s381 + $0xf4] sm:$0xf] %v7359
        %7616 = vst [vmem:[%s381 + $0xf8] sm:$0xf] %v7360
        %7617 = vst [vmem:[%s381 + $0xfc] sm:$0xf] %v7361
        %7618 = vst [vmem:[%s381 + $0x100] sm:$0xf] %v7362
        %7619 = vst [vmem:[%s381 + $0x104] sm:$0xf] %v7363
        %7620 = vst [vmem:[%s381 + $0x108] sm:$0xf] %v7364
        %7621 = vst [vmem:[%s381 + $0x10c] sm:$0xf] %v7365
        %7622 = vst [vmem:[%s381 + $0x110] sm:$0xf] %v7366
        %7623 = vst [vmem:[%s381 + $0x114] sm:$0xf] %v7367
        %7624 = vst [vmem:[%s381 + $0x118] sm:$0xf] %v7368
        %7625 = vst [vmem:[%s381 + $0x11c] sm:$0xf] %v7369
        %7626 = vst [vmem:[%s381 + $0x120] sm:$0xf] %v7370
        %7627 = vst [vmem:[%s381 + $0x124] sm:$0xf] %v7371
        %7628 = vst [vmem:[%s381 + $0x128] sm:$0xf] %v7372
        %7629 = vst [vmem:[%s381 + $0x12c] sm:$0xf] %v7373
        %7630 = vst [vmem:[%s381 + $0x130] sm:$0xf] %v7374
        %7631 = vst [vmem:[%s381 + $0x134] sm:$0xf] %v7375
        %7632 = vst [vmem:[%s381 + $0x138] sm:$0xf] %v7376
        %7633 = vst [vmem:[%s381 + $0x13c] sm:$0xf] %v7377
        %7634 = vst [vmem:[%s381 + $0x140] sm:$0xf] %v7378
        %7635 = vst [vmem:[%s381 + $0x144] sm:$0xf] %v7379
        %7636 = vst [vmem:[%s381 + $0x148] sm:$0xf] %v7380
        %7637 = vst [vmem:[%s381 + $0x14c] sm:$0xf] %v7381
        %7638 = vst [vmem:[%s381 + $0x150] sm:$0xf] %v7382
        %7639 = vst [vmem:[%s381 + $0x154] sm:$0xf] %v7383
        %7640 = vst [vmem:[%s381 + $0x158] sm:$0xf] %v7384
        %7641 = vst [vmem:[%s381 + $0x15c] sm:$0xf] %v7385
        %7642 = vst [vmem:[%s381 + $0x160] sm:$0xf] %v7386
        %7643 = vst [vmem:[%s381 + $0x164] sm:$0xf] %v7387
        %7644 = vst [vmem:[%s381 + $0x168] sm:$0xf] %v7388
        %7645 = vst [vmem:[%s381 + $0x16c] sm:$0xf] %v7389
        %7646 = vst [vmem:[%s381 + $0x170] sm:$0xf] %v7390
        %7647 = vst [vmem:[%s381 + $0x174] sm:$0xf] %v7391
        %7648 = vst [vmem:[%s381 + $0x178] sm:$0xf] %v7392
        %7649 = vst [vmem:[%s381 + $0x17c] sm:$0xf] %v7393
        %7650 = vst [vmem:[%s381 + $0x180] sm:$0xf] %v7394
        %7651 = vst [vmem:[%s381 + $0x184] sm:$0xf] %v7395
        %7652 = vst [vmem:[%s381 + $0x188] sm:$0xf] %v7396
        %7653 = vst [vmem:[%s381 + $0x18c] sm:$0xf] %v7397
        %7654 = vst [vmem:[%s381 + $0x190] sm:$0xf] %v7398
        %7655 = vst [vmem:[%s381 + $0x194] sm:$0xf] %v7399
        %7656 = vst [vmem:[%s381 + $0x198] sm:$0xf] %v7400
        %7657 = vst [vmem:[%s381 + $0x19c] sm:$0xf] %v7401
        %7658 = vst [vmem:[%s381 + $0x1a0] sm:$0xf] %v7402
        %7659 = vst [vmem:[%s381 + $0x1a4] sm:$0xf] %v7403
        %7660 = vst [vmem:[%s381 + $0x1a8] sm:$0xf] %v7404
        %7661 = vst [vmem:[%s381 + $0x1ac] sm:$0xf] %v7405
        %7662 = vst [vmem:[%s381 + $0x1b0] sm:$0xf] %v7406
        %7663 = vst [vmem:[%s381 + $0x1b4] sm:$0xf] %v7407
        %7664 = vst [vmem:[%s381 + $0x1b8] sm:$0xf] %v7408
        %7665 = vst [vmem:[%s381 + $0x1bc] sm:$0xf] %v7409
        %7666 = vst [vmem:[%s381 + $0x1c0] sm:$0xf] %v7410
        %7667 = vst [vmem:[%s381 + $0x1c4] sm:$0xf] %v7411
        %7668 = vst [vmem:[%s381 + $0x1c8] sm:$0xf] %v7412
        %7669 = vst [vmem:[%s381 + $0x1cc] sm:$0xf] %v7413
        %7670 = vst [vmem:[%s381 + $0x1d0] sm:$0xf] %v7414
        %7671 = vst [vmem:[%s381 + $0x1d4] sm:$0xf] %v7415
        %7672 = vst [vmem:[%s381 + $0x1d8] sm:$0xf] %v7416
        %7673 = vst [vmem:[%s381 + $0x1dc] sm:$0xf] %v7417
        %7674 = vst [vmem:[%s381 + $0x1e0] sm:$0xf] %v7418
        %7675 = vst [vmem:[%s381 + $0x1e4] sm:$0xf] %v7419
        %7676 = vst [vmem:[%s381 + $0x1e8] sm:$0xf] %v7420
        %7677 = vst [vmem:[%s381 + $0x1ec] sm:$0xf] %v7421
        %7678 = vst [vmem:[%s381 + $0x1f0] sm:$0xf] %v7422
        %7679 = vst [vmem:[%s381 + $0x1f4] sm:$0xf] %v7423
        %7680 = vst [vmem:[%s381 + $0x1f8] sm:$0xf] %v7424
        %7681 = vst [vmem:[%s381 + $0x1fc] sm:$0xf] %v7425
        %s7682 = sand.u32 %s208, 1
        %s7683 = scalar_lea.sflag [#allocation4], %s7682
        %s7684 = sand.u32 %s208, 1
        %s7685 = smul.addr %s7684, 512
        %s7686 = scalar_lea.vmem [#allocation11], %s7685
        // Predicated region
        $region73: #{tpu_custom_call.1} parent=51 // pred_check
          %p7687 = pneg %p218
        $region74: #{tpu_custom_call.1} parent=51 // pred_check_branch
          %7689 = sbr.rel (%p7687) target = $region76
        $region75: #{tpu_custom_call.1} parent=51 // pred_region
          %s7690 = smul.u32 128, %s27
          %s7692 = ssub.s32 8192, 8192
          %7693 = vsyncadd %s7683, %s7692
          %s7694 = smul.addr %s7690, 64
          %s7695 = scalar_lea.hbm %s8, %s7694
          %s7696 = sshll.u32 %s7686, 4
          %s7697 = int_to_ptr.vmem [resolvable:$true] %s7696
          %7702 = dma.vmem_to_hbm [thread:$0]  %s7697, 8192, %s7695, %s7683, 64, 64, 4
        $region76: #{tpu_custom_call.1} parent=51 // pred_fallthru
          _
      $region52: #{tpu_custom_call.1} parent=5 // pred_fallthru
        _
      %p7703 = scmp.le.s32.totalorder 2, %s22
      // Predicated region
      $region77: #{tpu_custom_call.1} parent=5 // pred_check
        %p7704 = pneg %p7703
      $region78: #{tpu_custom_call.1} parent=5 // pred_check_branch
        %7706 = sbr.rel (%p7704) target = $region80
      $region79: #{tpu_custom_call.1} parent=5 // pred_region
        %s7707 = ssub.s32 %s22, 2
        // Predicated region
        $region81: #{tpu_custom_call.1} parent=79 // pred_check
          %p7708 = pneg %p224
        $region82: #{tpu_custom_call.1} parent=79 // pred_check_branch
          %7710 = sbr.rel (%p7708) target = $region84
        $region83: #{tpu_custom_call.1} parent=79 // pred_region
          %s7711 = sand.u32 %s209, 1
          %s7712 = scalar_lea.sflag [#allocation4], %s7711
          %s7713 = sand.u32 %s209, 1
          %s7714 = smul.addr %s7713, 512
          %s7715 = scalar_lea.vmem [#allocation11], %s7714
          %7716 = dma.done %s7712, 8192
        $region84: #{tpu_custom_call.1} parent=79 // pred_fallthru
          _
      $region80: #{tpu_custom_call.1} parent=5 // pred_fallthru
        _
    $region6: #{tpu_custom_call.1} parent=1 // loop_footer
      %s26 = sadd.s32 1, %s22
    $region7: #{tpu_custom_call.1} parent=1 // loop_footer_branch
      %21 = sbr.rel target = $region3
    $region8: #{tpu_custom_call.1} parent=1 // loop_exit
      _
    %7717 = vsyncpa [#allocation3], 1
    %s7718 = scalar_lea.sflag [#allocation3], 1
    %7719 = vsyncpa %s7718, 1
    %7720 = vsyncpa [#allocation6], 1
    %7721 = vsyncpa [#allocation9], 1
    %7722 = vsyncpa [#allocation4], 1
    %s7723 = scalar_lea.sflag [#allocation4], 1
    %7724 = vsyncpa %s7723, 1

</llo_original>
